<compile_context>
chip_gen: v7x
topology: tpu7x:2x2x1
jax: 0.10.0
libtpu: 0.0.40
codegen_flags: <defaults>
</compile_context>

<pallas_src>
import numpy as np
import jax
import jax.numpy as jnp
from jax.experimental import pallas as pl
from jax.experimental.pallas import tpu as pltpu


# ----------------------------- fused Pallas kernel ---------------------------


def make_fused_block_kernel(H, W, Wpad, col0, row0, rows_total, Cin, Cout,
                            rh, compute_dtype):
    """initial(1x1+ReLU) -> conv3x3(d=1)+BN+ReLU -> conv3x3(d=2)+BN+ReLU -> +residual."""

    def conv3x3_band(p_s, w_ref, shift, mask, d, y0, r):
        # 3x3 conv (dilation d) over output image rows y0..y0+r-1 on the flat
        # (rows*Wpad, C) slab `p_s`.  The band is produced at full padded
        # width: element rr*Wpad + c is the conv output at (y0+rr, c-col0).
        # Columns outside [col0, col0+W) are garbage: zeroed via `mask` when
        # the band feeds the next conv, or sliced away by the host otherwise.
        L = r * Wpad
        base = (row0 + y0 - d) * Wpad - d            # tap (ky=0, kx=0)
        acc = None
        for ky in range(3):
            for kx in range(3):
                off = base + (ky * Wpad + kx) * d
                tap = p_s[off:off + L, :]
                if tap.dtype != compute_dtype:       # only the f32 p1 slab
                    tap = tap.astype(compute_dtype)
                part = jnp.dot(tap, w_ref[ky, kx],
                               preferred_element_type=jnp.float32)
                acc = part if acc is None else acc + part
        y = jnp.maximum(acc + shift, 0.0)
        if mask is not None:
            y = jnp.where(mask > 0.0, y, 0.0)
        return y

    def kernel(x_ref, mask_ref, w0_ref, b0_ref, w1_ref, sh1_ref, w2_ref,
               sh2_ref, o_ref, p1_s, p2_s):
        # x_ref   : (H*Wpad, Cin)           compute_dtype, padded-slab layout
        # mask_ref: (rh*Wpad, 1)            f32 {0,1}, 1.0 on image columns
        # w0_ref  : (Cin, Cout)             compute_dtype
        # b0_ref  : (1, Cout)               f32
        # w1/w2   : (3, 3, Cout, Cout)      compute_dtype (BN scale folded in)
        # sh1/sh2 : (1, Cout)               f32 (conv bias*scale + BN shift)
        # o_ref   : (H*Wpad, Cout)          compute_dtype (host strips pad cols)
        # p1_s    : (rows_total*Wpad, Cout) f32  padded `initial` slab (+residual)
        # p2_s    : (rows_total*Wpad, Cout) bf16 padded trunk[0] slab

        # Hoisted once-per-invocation reads (JAX does not CSE per-band reads).
        w0 = w0_ref[...]
        b0 = b0_ref[...]
        sh1 = sh1_ref[...]
        sh2 = sh2_ref[...]
        maskv = mask_ref[...]

        # Zero only the padding-ring rows (top + bottom).  Interior rows --
        # including their left/right pad columns -- are fully overwritten by
        # the masked whole-band stores each grid step, so no full-slab zeroing
        # (and no program_id==0 trick, unsafe under megacore 'parallel').
        top = row0 * Wpad
        bot = (row0 + H) * Wpad
        end = rows_total * Wpad
        p1_s[0:top, :] = jnp.zeros((top, Cout), jnp.float32)
        p2_s[0:top, :] = jnp.zeros((top, Cout), compute_dtype)
        p1_s[bot:end, :] = jnp.zeros((end - bot, Cout), jnp.float32)
        p2_s[bot:end, :] = jnp.zeros((end - bot, Cout), compute_dtype)

        # ---- initial: 1x1 conv + bias + ReLU --------------------------------
        # One aligned whole-band (r*Wpad, Cout) store per band; pad columns are
        # forced to 0 (they act as zero-padding for trunk[0]).
        for y0 in range(0, H, rh):
            r = min(rh, H - y0)
            L = r * Wpad
            m = maskv if r == rh else maskv[:L]
            xb = x_ref[y0 * Wpad:y0 * Wpad + L, :]
            ib = jnp.dot(xb, w0, preferred_element_type=jnp.float32)
            ib = jnp.where(m > 0.0, jnp.maximum(ib + b0, 0.0), 0.0)
            dst = (row0 + y0) * Wpad
            p1_s[dst:dst + L, :] = ib                      # f32, also residual

        # ---- trunk[0]: 3x3, pad 1, dilation 1, folded bias/BN, ReLU ---------
        for y0 in range(0, H, rh):
            r = min(rh, H - y0)
            L = r * Wpad
            m = maskv if r == rh else maskv[:L]
            t1 = conv3x3_band(p1_s, w1_ref, sh1, m, 1, y0, r)
            dst = (row0 + y0) * Wpad
            p2_s[dst:dst + L, :] = t1.astype(compute_dtype)

        # ---- trunk[1]: 3x3, pad 2, dilation 2, ReLU, fused residual add -----
        # No mask needed: garbage columns go to o_ref and the host slices them
        # away inside the NHWC->NCHW transpose it performs anyway.
        for y0 in range(0, H, rh):
            r = min(rh, H - y0)
            L = r * Wpad
            t2 = conv3x3_band(p2_s, w2_ref, sh2, None, 2, y0, r)
            src = (row0 + y0) * Wpad
            res = p1_s[src:src + L, :]                     # residual (f32)
            o_ref[y0 * Wpad:y0 * Wpad + L, :] = (t2 + res).astype(o_ref.dtype)

    return kernel


# ------------------------------ wrapper --------------------------------------


def refinement_stage_block(x_nchw, params, *, compute_dtype=jnp.bfloat16,
                           rows_per_band=8):
    """Forward pass matching RefinementStageBlock. x_nchw: (B, Cin, H, W)."""
    x = jnp.transpose(x_nchw, (0, 2, 3, 1))                  # NCHW -> NHWC
    B, H, W, Cin = x.shape
    Cout = params["w0"].shape[1]

    # Shared padded-slab layout: image col x at slab col col0+x, image row y at
    # slab row row0+y.  Wpad is a multiple of 8 so every whole-band store starts
    # on an (8,128)/(16,128) tile boundary.
    d_max = 2
    col0 = 2
    Wpad = ((W + col0 + d_max + 7) // 8) * 8
    row0 = 4                                 # >= d_max+1 (OOB-safe taps), even
    rows_total = row0 + H + d_max + 1        # +1 row soaks up the +/-d column spill
    rh = max(1, min(rows_per_band, H))
    if rh > 1:
        rh -= rh % 2                         # even band starts -> 16-row-aligned bf16 stores

    # Host-side folding: BN scale into the conv weights, conv bias + BN shift
    # into a single per-channel shift (eval-mode BN).
    w0 = params["w0"].astype(compute_dtype)
    b0 = params["b0"].astype(jnp.float32)
    w1 = (params["w1"] * params["s1"].reshape(1, 1, 1, Cout)).astype(compute_dtype)
    sh1 = (params["b1"] * params["s1"] + params["sh1"]).astype(jnp.float32)
    w2 = (params["w2"] * params["s2"].reshape(1, 1, 1, Cout)).astype(compute_dtype)
    sh2 = (params["b2"] * params["s2"] + params["sh2"]).astype(jnp.float32)

    # Input pre-laid-out in the padded-slab layout (fuses with the transpose).
    xp = jnp.pad(x, ((0, 0), (0, 0), (col0, Wpad - col0 - W), (0, 0)))
    x_flat = xp.reshape(B, H * Wpad, Cin).astype(compute_dtype)

    # Column mask for one full band: 1.0 on image columns, 0.0 on pad/garbage.
    col = np.arange(Wpad)
    row_mask = ((col >= col0) & (col < col0 + W)).astype(np.float32)
    band_mask = jnp.asarray(np.tile(row_mask, rh).reshape(rh * Wpad, 1))

    kernel = make_fused_block_kernel(H, W, Wpad, col0, row0, rows_total,
                                     Cin, Cout, rh, compute_dtype)

    out_flat = pl.pallas_call(
        kernel,
        out_shape=jax.ShapeDtypeStruct((B, H * Wpad, Cout), compute_dtype),
        grid=(B,),
        in_specs=[
            pl.BlockSpec((pl.Squeezed(), H * Wpad, Cin), lambda b: (b, 0, 0)),
            pl.BlockSpec((rh * Wpad, 1), lambda b: (0, 0)),
            # NOTE: weights/biases are grid-invariant; pl.Buffered(1) would drop
            # their second pipeline buffer (~0.6 MiB at C=128) but is left at
            # the default to keep the lowering path conservative.
            pl.BlockSpec((Cin, Cout), lambda b: (0, 0)),
            pl.BlockSpec((1, Cout), lambda b: (0, 0)),
            pl.BlockSpec((3, 3, Cout, Cout), lambda b: (0, 0, 0, 0)),
            pl.BlockSpec((1, Cout), lambda b: (0, 0)),
            pl.BlockSpec((3, 3, Cout, Cout), lambda b: (0, 0, 0, 0)),
            pl.BlockSpec((1, Cout), lambda b: (0, 0)),
        ],
        out_specs=pl.BlockSpec((pl.Squeezed(), H * Wpad, Cout),
                               lambda b: (b, 0, 0)),
        scratch_shapes=[
            # p1: padded `initial` slab, f32 (dilation-1 conv taps sit at odd
            # sublane offsets -> keep them on the unpacked path); also residual.
            pltpu.VMEM((rows_total * Wpad, Cout), jnp.float32),
            # p2: padded trunk[0] slab, bf16 (dilation-2 tap offsets are all
            # even, so packed loads need no sub-sublane shifts and no casts).
            pltpu.VMEM((rows_total * Wpad, Cout), compute_dtype),
        ],
        # Batch axis "parallel" so megacore / v7x's two TensorCores split it.
        # TODO(synk): for B==1 on v7x add a second parallel grid axis splitting
        # H in halves (3-row halo recompute) so the second core isn't idle.
        compiler_params=pltpu.CompilerParams(
            dimension_semantics=("parallel",)),
    )(x_flat, band_mask, w0, b0, w1, sh1, w2, sh2)

    # Strip padded columns, restore f32 + NCHW (one fused XLA pass).
    out = out_flat.reshape(B, H, Wpad, Cout)[:, :, col0:col0 + W, :]
    return jnp.transpose(out.astype(jnp.float32), (0, 3, 1, 2))


# ------------------------------ params ---------------------------------------


def init_params(key, in_channels, out_channels):
    ks = jax.random.split(key, 8)

    def norm(k, shape, scale=0.1):
        return (scale * jax.random.normal(k, shape)).astype(jnp.float32)

    # TODO(synk): BatchNorm uses eval-mode running stats folded into an affine
    # scale/shift; training-mode batch statistics are not implemented.
    eps = 1e-5

    def bn_fold(k):
        k1, k2, k3, k4 = jax.random.split(k, 4)
        gamma = 1.0 + 0.1 * jax.random.normal(k1, (1, out_channels))
        beta = 0.1 * jax.random.normal(k2, (1, out_channels))
        mean = 0.1 * jax.random.normal(k3, (1, out_channels))
        var = jnp.abs(jax.random.normal(k4, (1, out_channels))) + 0.5
        scale = gamma / jnp.sqrt(var + eps)
        shift = beta - mean * scale
        return scale.astype(jnp.float32), shift.astype(jnp.float32)

    s1, sh1 = bn_fold(ks[6])
    s2, sh2 = bn_fold(ks[7])
    return dict(
        w0=norm(ks[0], (in_channels, out_channels)),
        b0=norm(ks[1], (1, out_channels)),
        w1=norm(ks[2], (3, 3, out_channels, out_channels)),
        b1=norm(ks[3], (1, out_channels)),
        w2=norm(ks[4], (3, 3, out_channels, out_channels)),
        b2=norm(ks[5], (1, out_channels)),
        s1=s1, sh1=sh1, s2=s2, sh2=sh2,
    )


# ------------------------------ reference & test ------------------------------


def _reference_forward(x_nchw, params):
    """Pure-JAX f32 reference mirroring the PyTorch module."""
    x = jnp.transpose(x_nchw, (0, 2, 3, 1)).astype(jnp.float32)
    init = jax.nn.relu(jnp.einsum("bhwi,io->bhwo", x, params["w0"])
                       + params["b0"][0])

    def conv3x3(a, w, b, s, sh, d):
        H, W = a.shape[1], a.shape[2]
        ap = jnp.pad(a, ((0, 0), (d, d), (d, d), (0, 0)))
        acc = 0.0
        for ky in range(3):
            for kx in range(3):
                acc = acc + jnp.einsum(
                    "bhwi,io->bhwo",
                    ap[:, ky * d:ky * d + H, kx * d:kx * d + W, :], w[ky, kx])
        return jax.nn.relu((acc + b[0]) * s[0] + sh[0])

    t1 = conv3x3(init, params["w1"], params["b1"], params["s1"], params["sh1"], 1)
    t2 = conv3x3(t1, params["w2"], params["b2"], params["s2"], params["sh2"], 2)
    return jnp.transpose(init + t2, (0, 3, 1, 2))


if __name__ == "__main__":
    key = jax.random.PRNGKey(0)
    kx_, kp = jax.random.split(key)
    B, Cin, Cout, H, W = 2, 4, 8, 16, 16

    x = jax.random.normal(kx_, (B, Cin, H, W), dtype=jnp.float32)  # NCHW like PyTorch
    params = init_params(kp, Cin, Cout)

    out = jax.block_until_ready(refinement_stage_block(x, params))
    assert out.shape == (B, Cout, H, W) and out.dtype == jnp.float32

    ref = jax.block_until_ready(_reference_forward(x, params))
    max_err = float(jnp.max(jnp.abs(out - ref)))
    assert max_err < 0.1, f"kernel/reference mismatch: max abs err {max_err}"

    print("KERNEL_OK")
</pallas_src>

<mosaic_0001>
module attributes {stable_mosaic.version = 11 : i64} {
  func.func @kernel(%arg0: i32, %arg1: memref<1x384x4xbf16, #tpu.memory_space<vmem>>, %arg2: memref<192x1xf32, #tpu.memory_space<vmem>>, %arg3: memref<4x8xbf16, #tpu.memory_space<vmem>>, %arg4: memref<1x8xf32, #tpu.memory_space<vmem>>, %arg5: memref<3x3x8x8xbf16, #tpu.memory_space<vmem>>, %arg6: memref<1x8xf32, #tpu.memory_space<vmem>>, %arg7: memref<3x3x8x8xbf16, #tpu.memory_space<vmem>>, %arg8: memref<1x8xf32, #tpu.memory_space<vmem>>, %arg9: memref<1x384x8xbf16, #tpu.memory_space<vmem>>, %arg10: memref<552x8xf32, #tpu.memory_space<vmem>>, %arg11: memref<552x8xbf16, #tpu.memory_space<vmem>>) attributes {dimension_semantics = [#tpu.dimension_semantics<parallel>], iteration_bounds = array<i64: 2>, scalar_prefetch = 0 : i64, scratch_operands = 2 : i64, tpu.core_type = #tpu.core_type<tc>, window_params = [{transform_indices = @transform_0, window_bounds = array<i64: 1, 384, 4>}, {pipeline_mode = #tpu.pipeline_mode<synchronous>, transform_indices = @transform_1, window_bounds = array<i64: 192, 1>}, {pipeline_mode = #tpu.pipeline_mode<synchronous>, transform_indices = @transform_2, window_bounds = array<i64: 4, 8>}, {pipeline_mode = #tpu.pipeline_mode<synchronous>, transform_indices = @transform_3, window_bounds = array<i64: 1, 8>}, {pipeline_mode = #tpu.pipeline_mode<synchronous>, transform_indices = @transform_4, window_bounds = array<i64: 3, 3, 8, 8>}, {pipeline_mode = #tpu.pipeline_mode<synchronous>, transform_indices = @transform_5, window_bounds = array<i64: 1, 8>}, {pipeline_mode = #tpu.pipeline_mode<synchronous>, transform_indices = @transform_6, window_bounds = array<i64: 3, 3, 8, 8>}, {pipeline_mode = #tpu.pipeline_mode<synchronous>, transform_indices = @transform_7, window_bounds = array<i64: 1, 8>}, {transform_indices = @transform_8, window_bounds = array<i64: 1, 384, 8>}]} {
    %c0 = arith.constant 0 : index
    %c0_0 = arith.constant 0 : index
    %0 = vector.load %arg3[%c0, %c0_0] : memref<4x8xbf16, #tpu.memory_space<vmem>>, vector<4x8xbf16>
    %c0_1 = arith.constant 0 : index
    %c0_2 = arith.constant 0 : index
    %1 = vector.load %arg4[%c0_1, %c0_2] : memref<1x8xf32, #tpu.memory_space<vmem>>, vector<1x8xf32>
    %c0_3 = arith.constant 0 : index
    %c0_4 = arith.constant 0 : index
    %2 = vector.load %arg6[%c0_3, %c0_4] : memref<1x8xf32, #tpu.memory_space<vmem>>, vector<1x8xf32>
    %c0_5 = arith.constant 0 : index
    %c0_6 = arith.constant 0 : index
    %3 = vector.load %arg8[%c0_5, %c0_6] : memref<1x8xf32, #tpu.memory_space<vmem>>, vector<1x8xf32>
    %c0_7 = arith.constant 0 : index
    %c0_8 = arith.constant 0 : index
    %4 = vector.load %arg2[%c0_7, %c0_8] : memref<192x1xf32, #tpu.memory_space<vmem>>, vector<192x1xf32>
    %cst = arith.constant 0.000000e+00 : f32
    %5 = vector.broadcast %cst : f32 to vector<96x8xf32>
    %c0_9 = arith.constant 0 : index
    %c0_10 = arith.constant 0 : index
    %6 = vector.load %arg10[%c0_9, %c0_10] : memref<552x8xf32, #tpu.memory_space<vmem>>, vector<96x8xf32>
    tpu.vector_store %arg10[%c0_9, %c0_10], %5 {strides = array<i32>} : memref<552x8xf32, #tpu.memory_space<vmem>>, vector<96x8xf32>,
    %cst_11 = arith.constant 0.000000e+00 : bf16
    %7 = vector.broadcast %cst_11 : bf16 to vector<96x8xbf16>
    %c0_12 = arith.constant 0 : index
    %c0_13 = arith.constant 0 : index
    %8 = vector.load %arg11[%c0_12, %c0_13] : memref<552x8xbf16, #tpu.memory_space<vmem>>, vector<96x8xbf16>
    tpu.vector_store %arg11[%c0_12, %c0_13], %7 {strides = array<i32>} : memref<552x8xbf16, #tpu.memory_space<vmem>>, vector<96x8xbf16>,
    %cst_14 = arith.constant 0.000000e+00 : f32
    %9 = vector.broadcast %cst_14 : f32 to vector<72x8xf32>
    %c480 = arith.constant 480 : index
    %c0_15 = arith.constant 0 : index
    %10 = vector.load %arg10[%c480, %c0_15] : memref<552x8xf32, #tpu.memory_space<vmem>>, vector<72x8xf32>
    tpu.vector_store %arg10[%c480, %c0_15], %9 {strides = array<i32>} : memref<552x8xf32, #tpu.memory_space<vmem>>, vector<72x8xf32>,
    %cst_16 = arith.constant 0.000000e+00 : bf16
    %11 = vector.broadcast %cst_16 : bf16 to vector<72x8xbf16>
    %c480_17 = arith.constant 480 : index
    %c0_18 = arith.constant 0 : index
    %12 = vector.load %arg11[%c480_17, %c0_18] : memref<552x8xbf16, #tpu.memory_space<vmem>>, vector<72x8xbf16>
    tpu.vector_store %arg11[%c480_17, %c0_18], %11 {strides = array<i32>} : memref<552x8xbf16, #tpu.memory_space<vmem>>, vector<72x8xbf16>,
    %c0_19 = arith.constant 0 : index
    %c0_20 = arith.constant 0 : index
    %c0_21 = arith.constant 0 : index
    %13 = vector.load %arg1[%c0_19, %c0_20, %c0_21] : memref<1x384x4xbf16, #tpu.memory_space<vmem>>, vector<1x192x4xbf16>
    %14 = vector.shape_cast %13 : vector<1x192x4xbf16> to vector<192x4xbf16>
    %cst_22 = arith.constant dense<0.000000e+00> : vector<192x8xf32>
    %15 = tpu.matmul %14, %0, %cst_22 {dimension_numbers = #tpu.dot_dimension_numbers<[1], [0], [0], [1], [0, 0, 1, 1], [], []>} : vector<192x4xbf16>, vector<4x8xbf16>, vector<192x8xf32> -> vector<192x8xf32>
    %cst_23 = arith.constant 0.000000e+00 : f32
    %16 = vector.broadcast %cst_23 : f32 to vector<192x1xf32>
    %17 = arith.cmpf ogt, %4, %16 : vector<192x1xf32>
    %18 = vector.broadcast %1 : vector<1x8xf32> to vector<192x8xf32>
    %19 = arith.addf %15, %18 : vector<192x8xf32>
    %cst_24 = arith.constant 0.000000e+00 : f32
    %20 = vector.broadcast %cst_24 : f32 to vector<192x8xf32>
    %21 = arith.maximumf %19, %20 : vector<192x8xf32>
    %cst_25 = arith.constant 0.000000e+00 : f32
    %22 = vector.shape_cast %17 : vector<192x1xi1> to vector<192x1xi1>
    %23 = vector.broadcast %22 : vector<192x1xi1> to vector<192x8xi1>
    %24 = vector.broadcast %cst_25 : f32 to vector<192x8xf32>
    %25 = arith.select %23, %21, %24 : vector<192x8xi1>, vector<192x8xf32>
    %c96 = arith.constant 96 : index
    %c0_26 = arith.constant 0 : index
    %26 = vector.load %arg10[%c96, %c0_26] : memref<552x8xf32, #tpu.memory_space<vmem>>, vector<192x8xf32>
    tpu.vector_store %arg10[%c96, %c0_26], %25 {strides = array<i32>} : memref<552x8xf32, #tpu.memory_space<vmem>>, vector<192x8xf32>,
    %c0_27 = arith.constant 0 : index
    %c192 = arith.constant 192 : index
    %c0_28 = arith.constant 0 : index
    %27 = vector.load %arg1[%c0_27, %c192, %c0_28] : memref<1x384x4xbf16, #tpu.memory_space<vmem>>, vector<1x192x4xbf16>
    %28 = vector.shape_cast %27 : vector<1x192x4xbf16> to vector<192x4xbf16>
    %cst_29 = arith.constant dense<0.000000e+00> : vector<192x8xf32>
    %29 = tpu.matmul %28, %0, %cst_29 {dimension_numbers = #tpu.dot_dimension_numbers<[1], [0], [0], [1], [0, 0, 1, 1], [], []>} : vector<192x4xbf16>, vector<4x8xbf16>, vector<192x8xf32> -> vector<192x8xf32>
    %cst_30 = arith.constant 0.000000e+00 : f32
    %30 = vector.broadcast %cst_30 : f32 to vector<192x1xf32>
    %31 = arith.cmpf ogt, %4, %30 : vector<192x1xf32>
    %32 = vector.broadcast %1 : vector<1x8xf32> to vector<192x8xf32>
    %33 = arith.addf %29, %32 : vector<192x8xf32>
    %cst_31 = arith.constant 0.000000e+00 : f32
    %34 = vector.broadcast %cst_31 : f32 to vector<192x8xf32>
    %35 = arith.maximumf %33, %34 : vector<192x8xf32>
    %cst_32 = arith.constant 0.000000e+00 : f32
    %36 = vector.shape_cast %31 : vector<192x1xi1> to vector<192x1xi1>
    %37 = vector.broadcast %36 : vector<192x1xi1> to vector<192x8xi1>
    %38 = vector.broadcast %cst_32 : f32 to vector<192x8xf32>
    %39 = arith.select %37, %35, %38 : vector<192x8xi1>, vector<192x8xf32>
    %c288 = arith.constant 288 : index
    %c0_33 = arith.constant 0 : index
    %40 = vector.load %arg10[%c288, %c0_33] : memref<552x8xf32, #tpu.memory_space<vmem>>, vector<192x8xf32>
    tpu.vector_store %arg10[%c288, %c0_33], %39 {strides = array<i32>} : memref<552x8xf32, #tpu.memory_space<vmem>>, vector<192x8xf32>,
    %c71 = arith.constant 71 : index
    %c0_34 = arith.constant 0 : index
    %41 = vector.load %arg10[%c71, %c0_34] : memref<552x8xf32, #tpu.memory_space<vmem>>, vector<192x8xf32>
    %42 = arith.truncf %41 : vector<192x8xf32> to vector<192x8xbf16>
    %c0_35 = arith.constant 0 : index
    %c0_36 = arith.constant 0 : index
    %c0_37 = arith.constant 0 : index
    %c0_38 = arith.constant 0 : index
    %43 = vector.load %arg5[%c0_35, %c0_36, %c0_37, %c0_38] : memref<3x3x8x8xbf16, #tpu.memory_space<vmem>>, vector<1x1x8x8xbf16>
    %44 = vector.shape_cast %43 : vector<1x1x8x8xbf16> to vector<8x8xbf16>
    %cst_39 = arith.constant dense<0.000000e+00> : vector<192x8xf32>
    %45 = tpu.matmul %42, %44, %cst_39 {dimension_numbers = #tpu.dot_dimension_numbers<[1], [0], [0], [1], [0, 0, 1, 1], [], []>} : vector<192x8xbf16>, vector<8x8xbf16>, vector<192x8xf32> -> vector<192x8xf32>
    %c72 = arith.constant 72 : index
    %c0_40 = arith.constant 0 : index
    %46 = vector.load %arg10[%c72, %c0_40] : memref<552x8xf32, #tpu.memory_space<vmem>>, vector<192x8xf32>
    %47 = arith.truncf %46 : vector<192x8xf32> to vector<192x8xbf16>
    %c0_41 = arith.constant 0 : index
    %c1 = arith.constant 1 : index
    %c0_42 = arith.constant 0 : index
    %c0_43 = arith.constant 0 : index
    %48 = vector.load %arg5[%c0_41, %c1, %c0_42, %c0_43] : memref<3x3x8x8xbf16, #tpu.memory_space<vmem>>, vector<1x1x8x8xbf16>
    %49 = vector.shape_cast %48 : vector<1x1x8x8xbf16> to vector<8x8xbf16>
    %cst_44 = arith.constant dense<0.000000e+00> : vector<192x8xf32>
    %50 = tpu.matmul %47, %49, %cst_44 {dimension_numbers = #tpu.dot_dimension_numbers<[1], [0], [0], [1], [0, 0, 1, 1], [], []>} : vector<192x8xbf16>, vector<8x8xbf16>, vector<192x8xf32> -> vector<192x8xf32>
    %51 = arith.addf %45, %50 : vector<192x8xf32>
    %c73 = arith.constant 73 : index
    %c0_45 = arith.constant 0 : index
    %52 = vector.load %arg10[%c73, %c0_45] : memref<552x8xf32, #tpu.memory_space<vmem>>, vector<192x8xf32>
    %53 = arith.truncf %52 : vector<192x8xf32> to vector<192x8xbf16>
    %c0_46 = arith.constant 0 : index
    %c2 = arith.constant 2 : index
    %c0_47 = arith.constant 0 : index
    %c0_48 = arith.constant 0 : index
    %54 = vector.load %arg5[%c0_46, %c2, %c0_47, %c0_48] : memref<3x3x8x8xbf16, #tpu.memory_space<vmem>>, vector<1x1x8x8xbf16>
    %55 = vector.shape_cast %54 : vector<1x1x8x8xbf16> to vector<8x8xbf16>
    %cst_49 = arith.constant dense<0.000000e+00> : vector<192x8xf32>
    %56 = tpu.matmul %53, %55, %cst_49 {dimension_numbers = #tpu.dot_dimension_numbers<[1], [0], [0], [1], [0, 0, 1, 1], [], []>} : vector<192x8xbf16>, vector<8x8xbf16>, vector<192x8xf32> -> vector<192x8xf32>
    %57 = arith.addf %51, %56 : vector<192x8xf32>
    %c95 = arith.constant 95 : index
    %c0_50 = arith.constant 0 : index
    %58 = vector.load %arg10[%c95, %c0_50] : memref<552x8xf32, #tpu.memory_space<vmem>>, vector<192x8xf32>
    %59 = arith.truncf %58 : vector<192x8xf32> to vector<192x8xbf16>
    %c1_51 = arith.constant 1 : index
    %c0_52 = arith.constant 0 : index
    %c0_53 = arith.constant 0 : index
    %c0_54 = arith.constant 0 : index
    %60 = vector.load %arg5[%c1_51, %c0_52, %c0_53, %c0_54] : memref<3x3x8x8xbf16, #tpu.memory_space<vmem>>, vector<1x1x8x8xbf16>
    %61 = vector.shape_cast %60 : vector<1x1x8x8xbf16> to vector<8x8xbf16>
    %cst_55 = arith.constant dense<0.000000e+00> : vector<192x8xf32>
    %62 = tpu.matmul %59, %61, %cst_55 {dimension_numbers = #tpu.dot_dimension_numbers<[1], [0], [0], [1], [0, 0, 1, 1], [], []>} : vector<192x8xbf16>, vector<8x8xbf16>, vector<192x8xf32> -> vector<192x8xf32>
    %63 = arith.addf %57, %62 : vector<192x8xf32>
    %c96_56 = arith.constant 96 : index
    %c0_57 = arith.constant 0 : index
    %64 = vector.load %arg10[%c96_56, %c0_57] : memref<552x8xf32, #tpu.memory_space<vmem>>, vector<192x8xf32>
    %65 = arith.truncf %64 : vector<192x8xf32> to vector<192x8xbf16>
    %c1_58 = arith.constant 1 : index
    %c1_59 = arith.constant 1 : index
    %c0_60 = arith.constant 0 : index
    %c0_61 = arith.constant 0 : index
    %66 = vector.load %arg5[%c1_58, %c1_59, %c0_60, %c0_61] : memref<3x3x8x8xbf16, #tpu.memory_space<vmem>>, vector<1x1x8x8xbf16>
    %67 = vector.shape_cast %66 : vector<1x1x8x8xbf16> to vector<8x8xbf16>
    %cst_62 = arith.constant dense<0.000000e+00> : vector<192x8xf32>
    %68 = tpu.matmul %65, %67, %cst_62 {dimension_numbers = #tpu.dot_dimension_numbers<[1], [0], [0], [1], [0, 0, 1, 1], [], []>} : vector<192x8xbf16>, vector<8x8xbf16>, vector<192x8xf32> -> vector<192x8xf32>
    %69 = arith.addf %63, %68 : vector<192x8xf32>
    %c97 = arith.constant 97 : index
    %c0_63 = arith.constant 0 : index
    %70 = vector.load %arg10[%c97, %c0_63] : memref<552x8xf32, #tpu.memory_space<vmem>>, vector<192x8xf32>
    %71 = arith.truncf %70 : vector<192x8xf32> to vector<192x8xbf16>
    %c1_64 = arith.constant 1 : index
    %c2_65 = arith.constant 2 : index
    %c0_66 = arith.constant 0 : index
    %c0_67 = arith.constant 0 : index
    %72 = vector.load %arg5[%c1_64, %c2_65, %c0_66, %c0_67] : memref<3x3x8x8xbf16, #tpu.memory_space<vmem>>, vector<1x1x8x8xbf16>
    %73 = vector.shape_cast %72 : vector<1x1x8x8xbf16> to vector<8x8xbf16>
    %cst_68 = arith.constant dense<0.000000e+00> : vector<192x8xf32>
    %74 = tpu.matmul %71, %73, %cst_68 {dimension_numbers = #tpu.dot_dimension_numbers<[1], [0], [0], [1], [0, 0, 1, 1], [], []>} : vector<192x8xbf16>, vector<8x8xbf16>, vector<192x8xf32> -> vector<192x8xf32>
    %75 = arith.addf %69, %74 : vector<192x8xf32>
    %c119 = arith.constant 119 : index
    %c0_69 = arith.constant 0 : index
    %76 = vector.load %arg10[%c119, %c0_69] : memref<552x8xf32, #tpu.memory_space<vmem>>, vector<192x8xf32>
    %77 = arith.truncf %76 : vector<192x8xf32> to vector<192x8xbf16>
    %c2_70 = arith.constant 2 : index
    %c0_71 = arith.constant 0 : index
    %c0_72 = arith.constant 0 : index
    %c0_73 = arith.constant 0 : index
    %78 = vector.load %arg5[%c2_70, %c0_71, %c0_72, %c0_73] : memref<3x3x8x8xbf16, #tpu.memory_space<vmem>>, vector<1x1x8x8xbf16>
    %79 = vector.shape_cast %78 : vector<1x1x8x8xbf16> to vector<8x8xbf16>
    %cst_74 = arith.constant dense<0.000000e+00> : vector<192x8xf32>
    %80 = tpu.matmul %77, %79, %cst_74 {dimension_numbers = #tpu.dot_dimension_numbers<[1], [0], [0], [1], [0, 0, 1, 1], [], []>} : vector<192x8xbf16>, vector<8x8xbf16>, vector<192x8xf32> -> vector<192x8xf32>
    %81 = arith.addf %75, %80 : vector<192x8xf32>
    %c120 = arith.constant 120 : index
    %c0_75 = arith.constant 0 : index
    %82 = vector.load %arg10[%c120, %c0_75] : memref<552x8xf32, #tpu.memory_space<vmem>>, vector<192x8xf32>
    %83 = arith.truncf %82 : vector<192x8xf32> to vector<192x8xbf16>
    %c2_76 = arith.constant 2 : index
    %c1_77 = arith.constant 1 : index
    %c0_78 = arith.constant 0 : index
    %c0_79 = arith.constant 0 : index
    %84 = vector.load %arg5[%c2_76, %c1_77, %c0_78, %c0_79] : memref<3x3x8x8xbf16, #tpu.memory_space<vmem>>, vector<1x1x8x8xbf16>
    %85 = vector.shape_cast %84 : vector<1x1x8x8xbf16> to vector<8x8xbf16>
    %cst_80 = arith.constant dense<0.000000e+00> : vector<192x8xf32>
    %86 = tpu.matmul %83, %85, %cst_80 {dimension_numbers = #tpu.dot_dimension_numbers<[1], [0], [0], [1], [0, 0, 1, 1], [], []>} : vector<192x8xbf16>, vector<8x8xbf16>, vector<192x8xf32> -> vector<192x8xf32>
    %87 = arith.addf %81, %86 : vector<192x8xf32>
    %c121 = arith.constant 121 : index
    %c0_81 = arith.constant 0 : index
    %88 = vector.load %arg10[%c121, %c0_81] : memref<552x8xf32, #tpu.memory_space<vmem>>, vector<192x8xf32>
    %89 = arith.truncf %88 : vector<192x8xf32> to vector<192x8xbf16>
    %c2_82 = arith.constant 2 : index
    %c2_83 = arith.constant 2 : index
    %c0_84 = arith.constant 0 : index
    %c0_85 = arith.constant 0 : index
    %90 = vector.load %arg5[%c2_82, %c2_83, %c0_84, %c0_85] : memref<3x3x8x8xbf16, #tpu.memory_space<vmem>>, vector<1x1x8x8xbf16>
    %91 = vector.shape_cast %90 : vector<1x1x8x8xbf16> to vector<8x8xbf16>
    %cst_86 = arith.constant dense<0.000000e+00> : vector<192x8xf32>
    %92 = tpu.matmul %89, %91, %cst_86 {dimension_numbers = #tpu.dot_dimension_numbers<[1], [0], [0], [1], [0, 0, 1, 1], [], []>} : vector<192x8xbf16>, vector<8x8xbf16>, vector<192x8xf32> -> vector<192x8xf32>
    %93 = arith.addf %87, %92 : vector<192x8xf32>
    %94 = vector.broadcast %2 : vector<1x8xf32> to vector<192x8xf32>
    %95 = arith.addf %93, %94 : vector<192x8xf32>
    %cst_87 = arith.constant 0.000000e+00 : f32
    %96 = vector.broadcast %cst_87 : f32 to vector<192x8xf32>
    %97 = arith.maximumf %95, %96 : vector<192x8xf32>
    %cst_88 = arith.constant 0.000000e+00 : f32
    %98 = vector.broadcast %cst_88 : f32 to vector<192x1xf32>
    %99 = arith.cmpf ogt, %4, %98 : vector<192x1xf32>
    %cst_89 = arith.constant 0.000000e+00 : f32
    %100 = vector.shape_cast %99 : vector<192x1xi1> to vector<192x1xi1>
    %101 = vector.broadcast %100 : vector<192x1xi1> to vector<192x8xi1>
    %102 = vector.broadcast %cst_89 : f32 to vector<192x8xf32>
    %103 = arith.select %101, %97, %102 : vector<192x8xi1>, vector<192x8xf32>
    %104 = arith.truncf %103 : vector<192x8xf32> to vector<192x8xbf16>
    %c96_90 = arith.constant 96 : index
    %c0_91 = arith.constant 0 : index
    %105 = vector.load %arg11[%c96_90, %c0_91] : memref<552x8xbf16, #tpu.memory_space<vmem>>, vector<192x8xbf16>
    tpu.vector_store %arg11[%c96_90, %c0_91], %104 {strides = array<i32>} : memref<552x8xbf16, #tpu.memory_space<vmem>>, vector<192x8xbf16>,
    %c263 = arith.constant 263 : index
    %c0_92 = arith.constant 0 : index
    %106 = vector.load %arg10[%c263, %c0_92] : memref<552x8xf32, #tpu.memory_space<vmem>>, vector<192x8xf32>
    %107 = arith.truncf %106 : vector<192x8xf32> to vector<192x8xbf16>
    %c0_93 = arith.constant 0 : index
    %c0_94 = arith.constant 0 : index
    %c0_95 = arith.constant 0 : index
    %c0_96 = arith.constant 0 : index
    %108 = vector.load %arg5[%c0_93, %c0_94, %c0_95, %c0_96] : memref<3x3x8x8xbf16, #tpu.memory_space<vmem>>, vector<1x1x8x8xbf16>
    %109 = vector.shape_cast %108 : vector<1x1x8x8xbf16> to vector<8x8xbf16>
    %cst_97 = arith.constant dense<0.000000e+00> : vector<192x8xf32>
    %110 = tpu.matmul %107, %109, %cst_97 {dimension_numbers = #tpu.dot_dimension_numbers<[1], [0], [0], [1], [0, 0, 1, 1], [], []>} : vector<192x8xbf16>, vector<8x8xbf16>, vector<192x8xf32> -> vector<192x8xf32>
    %c264 = arith.constant 264 : index
    %c0_98 = arith.constant 0 : index
    %111 = vector.load %arg10[%c264, %c0_98] : memref<552x8xf32, #tpu.memory_space<vmem>>, vector<192x8xf32>
    %112 = arith.truncf %111 : vector<192x8xf32> to vector<192x8xbf16>
    %c0_99 = arith.constant 0 : index
    %c1_100 = arith.constant 1 : index
    %c0_101 = arith.constant 0 : index
    %c0_102 = arith.constant 0 : index
    %113 = vector.load %arg5[%c0_99, %c1_100, %c0_101, %c0_102] : memref<3x3x8x8xbf16, #tpu.memory_space<vmem>>, vector<1x1x8x8xbf16>
    %114 = vector.shape_cast %113 : vector<1x1x8x8xbf16> to vector<8x8xbf16>
    %cst_103 = arith.constant dense<0.000000e+00> : vector<192x8xf32>
    %115 = tpu.matmul %112, %114, %cst_103 {dimension_numbers = #tpu.dot_dimension_numbers<[1], [0], [0], [1], [0, 0, 1, 1], [], []>} : vector<192x8xbf16>, vector<8x8xbf16>, vector<192x8xf32> -> vector<192x8xf32>
    %116 = arith.addf %110, %115 : vector<192x8xf32>
    %c265 = arith.constant 265 : index
    %c0_104 = arith.constant 0 : index
    %117 = vector.load %arg10[%c265, %c0_104] : memref<552x8xf32, #tpu.memory_space<vmem>>, vector<192x8xf32>
    %118 = arith.truncf %117 : vector<192x8xf32> to vector<192x8xbf16>
    %c0_105 = arith.constant 0 : index
    %c2_106 = arith.constant 2 : index
    %c0_107 = arith.constant 0 : index
    %c0_108 = arith.constant 0 : index
    %119 = vector.load %arg5[%c0_105, %c2_106, %c0_107, %c0_108] : memref<3x3x8x8xbf16, #tpu.memory_space<vmem>>, vector<1x1x8x8xbf16>
    %120 = vector.shape_cast %119 : vector<1x1x8x8xbf16> to vector<8x8xbf16>
    %cst_109 = arith.constant dense<0.000000e+00> : vector<192x8xf32>
    %121 = tpu.matmul %118, %120, %cst_109 {dimension_numbers = #tpu.dot_dimension_numbers<[1], [0], [0], [1], [0, 0, 1, 1], [], []>} : vector<192x8xbf16>, vector<8x8xbf16>, vector<192x8xf32> -> vector<192x8xf32>
    %122 = arith.addf %116, %121 : vector<192x8xf32>
    %c287 = arith.constant 287 : index
    %c0_110 = arith.constant 0 : index
    %123 = vector.load %arg10[%c287, %c0_110] : memref<552x8xf32, #tpu.memory_space<vmem>>, vector<192x8xf32>
    %124 = arith.truncf %123 : vector<192x8xf32> to vector<192x8xbf16>
    %c1_111 = arith.constant 1 : index
    %c0_112 = arith.constant 0 : index
    %c0_113 = arith.constant 0 : index
    %c0_114 = arith.constant 0 : index
    %125 = vector.load %arg5[%c1_111, %c0_112, %c0_113, %c0_114] : memref<3x3x8x8xbf16, #tpu.memory_space<vmem>>, vector<1x1x8x8xbf16>
    %126 = vector.shape_cast %125 : vector<1x1x8x8xbf16> to vector<8x8xbf16>
    %cst_115 = arith.constant dense<0.000000e+00> : vector<192x8xf32>
    %127 = tpu.matmul %124, %126, %cst_115 {dimension_numbers = #tpu.dot_dimension_numbers<[1], [0], [0], [1], [0, 0, 1, 1], [], []>} : vector<192x8xbf16>, vector<8x8xbf16>, vector<192x8xf32> -> vector<192x8xf32>
    %128 = arith.addf %122, %127 : vector<192x8xf32>
    %c288_116 = arith.constant 288 : index
    %c0_117 = arith.constant 0 : index
    %129 = vector.load %arg10[%c288_116, %c0_117] : memref<552x8xf32, #tpu.memory_space<vmem>>, vector<192x8xf32>
    %130 = arith.truncf %129 : vector<192x8xf32> to vector<192x8xbf16>
    %c1_118 = arith.constant 1 : index
    %c1_119 = arith.constant 1 : index
    %c0_120 = arith.constant 0 : index
    %c0_121 = arith.constant 0 : index
    %131 = vector.load %arg5[%c1_118, %c1_119, %c0_120, %c0_121] : memref<3x3x8x8xbf16, #tpu.memory_space<vmem>>, vector<1x1x8x8xbf16>
    %132 = vector.shape_cast %131 : vector<1x1x8x8xbf16> to vector<8x8xbf16>
    %cst_122 = arith.constant dense<0.000000e+00> : vector<192x8xf32>
    %133 = tpu.matmul %130, %132, %cst_122 {dimension_numbers = #tpu.dot_dimension_numbers<[1], [0], [0], [1], [0, 0, 1, 1], [], []>} : vector<192x8xbf16>, vector<8x8xbf16>, vector<192x8xf32> -> vector<192x8xf32>
    %134 = arith.addf %128, %133 : vector<192x8xf32>
    %c289 = arith.constant 289 : index
    %c0_123 = arith.constant 0 : index
    %135 = vector.load %arg10[%c289, %c0_123] : memref<552x8xf32, #tpu.memory_space<vmem>>, vector<192x8xf32>
    %136 = arith.truncf %135 : vector<192x8xf32> to vector<192x8xbf16>
    %c1_124 = arith.constant 1 : index
    %c2_125 = arith.constant 2 : index
    %c0_126 = arith.constant 0 : index
    %c0_127 = arith.constant 0 : index
    %137 = vector.load %arg5[%c1_124, %c2_125, %c0_126, %c0_127] : memref<3x3x8x8xbf16, #tpu.memory_space<vmem>>, vector<1x1x8x8xbf16>
    %138 = vector.shape_cast %137 : vector<1x1x8x8xbf16> to vector<8x8xbf16>
    %cst_128 = arith.constant dense<0.000000e+00> : vector<192x8xf32>
    %139 = tpu.matmul %136, %138, %cst_128 {dimension_numbers = #tpu.dot_dimension_numbers<[1], [0], [0], [1], [0, 0, 1, 1], [], []>} : vector<192x8xbf16>, vector<8x8xbf16>, vector<192x8xf32> -> vector<192x8xf32>
    %140 = arith.addf %134, %139 : vector<192x8xf32>
    %c311 = arith.constant 311 : index
    %c0_129 = arith.constant 0 : index
    %141 = vector.load %arg10[%c311, %c0_129] : memref<552x8xf32, #tpu.memory_space<vmem>>, vector<192x8xf32>
    %142 = arith.truncf %141 : vector<192x8xf32> to vector<192x8xbf16>
    %c2_130 = arith.constant 2 : index
    %c0_131 = arith.constant 0 : index
    %c0_132 = arith.constant 0 : index
    %c0_133 = arith.constant 0 : index
    %143 = vector.load %arg5[%c2_130, %c0_131, %c0_132, %c0_133] : memref<3x3x8x8xbf16, #tpu.memory_space<vmem>>, vector<1x1x8x8xbf16>
    %144 = vector.shape_cast %143 : vector<1x1x8x8xbf16> to vector<8x8xbf16>
    %cst_134 = arith.constant dense<0.000000e+00> : vector<192x8xf32>
    %145 = tpu.matmul %142, %144, %cst_134 {dimension_numbers = #tpu.dot_dimension_numbers<[1], [0], [0], [1], [0, 0, 1, 1], [], []>} : vector<192x8xbf16>, vector<8x8xbf16>, vector<192x8xf32> -> vector<192x8xf32>
    %146 = arith.addf %140, %145 : vector<192x8xf32>
    %c312 = arith.constant 312 : index
    %c0_135 = arith.constant 0 : index
    %147 = vector.load %arg10[%c312, %c0_135] : memref<552x8xf32, #tpu.memory_space<vmem>>, vector<192x8xf32>
    %148 = arith.truncf %147 : vector<192x8xf32> to vector<192x8xbf16>
    %c2_136 = arith.constant 2 : index
    %c1_137 = arith.constant 1 : index
    %c0_138 = arith.constant 0 : index
    %c0_139 = arith.constant 0 : index
    %149 = vector.load %arg5[%c2_136, %c1_137, %c0_138, %c0_139] : memref<3x3x8x8xbf16, #tpu.memory_space<vmem>>, vector<1x1x8x8xbf16>
    %150 = vector.shape_cast %149 : vector<1x1x8x8xbf16> to vector<8x8xbf16>
    %cst_140 = arith.constant dense<0.000000e+00> : vector<192x8xf32>
    %151 = tpu.matmul %148, %150, %cst_140 {dimension_numbers = #tpu.dot_dimension_numbers<[1], [0], [0], [1], [0, 0, 1, 1], [], []>} : vector<192x8xbf16>, vector<8x8xbf16>, vector<192x8xf32> -> vector<192x8xf32>
    %152 = arith.addf %146, %151 : vector<192x8xf32>
    %c313 = arith.constant 313 : index
    %c0_141 = arith.constant 0 : index
    %153 = vector.load %arg10[%c313, %c0_141] : memref<552x8xf32, #tpu.memory_space<vmem>>, vector<192x8xf32>
    %154 = arith.truncf %153 : vector<192x8xf32> to vector<192x8xbf16>
    %c2_142 = arith.constant 2 : index
    %c2_143 = arith.constant 2 : index
    %c0_144 = arith.constant 0 : index
    %c0_145 = arith.constant 0 : index
    %155 = vector.load %arg5[%c2_142, %c2_143, %c0_144, %c0_145] : memref<3x3x8x8xbf16, #tpu.memory_space<vmem>>, vector<1x1x8x8xbf16>
    %156 = vector.shape_cast %155 : vector<1x1x8x8xbf16> to vector<8x8xbf16>
    %cst_146 = arith.constant dense<0.000000e+00> : vector<192x8xf32>
    %157 = tpu.matmul %154, %156, %cst_146 {dimension_numbers = #tpu.dot_dimension_numbers<[1], [0], [0], [1], [0, 0, 1, 1], [], []>} : vector<192x8xbf16>, vector<8x8xbf16>, vector<192x8xf32> -> vector<192x8xf32>
    %158 = arith.addf %152, %157 : vector<192x8xf32>
    %159 = vector.broadcast %2 : vector<1x8xf32> to vector<192x8xf32>
    %160 = arith.addf %158, %159 : vector<192x8xf32>
    %cst_147 = arith.constant 0.000000e+00 : f32
    %161 = vector.broadcast %cst_147 : f32 to vector<192x8xf32>
    %162 = arith.maximumf %160, %161 : vector<192x8xf32>
    %cst_148 = arith.constant 0.000000e+00 : f32
    %163 = vector.broadcast %cst_148 : f32 to vector<192x1xf32>
    %164 = arith.cmpf ogt, %4, %163 : vector<192x1xf32>
    %cst_149 = arith.constant 0.000000e+00 : f32
    %165 = vector.shape_cast %164 : vector<192x1xi1> to vector<192x1xi1>
    %166 = vector.broadcast %165 : vector<192x1xi1> to vector<192x8xi1>
    %167 = vector.broadcast %cst_149 : f32 to vector<192x8xf32>
    %168 = arith.select %166, %162, %167 : vector<192x8xi1>, vector<192x8xf32>
    %169 = arith.truncf %168 : vector<192x8xf32> to vector<192x8xbf16>
    %c288_150 = arith.constant 288 : index
    %c0_151 = arith.constant 0 : index
    %170 = vector.load %arg11[%c288_150, %c0_151] : memref<552x8xbf16, #tpu.memory_space<vmem>>, vector<192x8xbf16>
    tpu.vector_store %arg11[%c288_150, %c0_151], %169 {strides = array<i32>} : memref<552x8xbf16, #tpu.memory_space<vmem>>, vector<192x8xbf16>,
    %c46 = arith.constant 46 : index
    %c0_152 = arith.constant 0 : index
    %171 = vector.load %arg11[%c46, %c0_152] : memref<552x8xbf16, #tpu.memory_space<vmem>>, vector<192x8xbf16>
    %c0_153 = arith.constant 0 : index
    %c0_154 = arith.constant 0 : index
    %c0_155 = arith.constant 0 : index
    %c0_156 = arith.constant 0 : index
    %172 = vector.load %arg7[%c0_153, %c0_154, %c0_155, %c0_156] : memref<3x3x8x8xbf16, #tpu.memory_space<vmem>>, vector<1x1x8x8xbf16>
    %173 = vector.shape_cast %172 : vector<1x1x8x8xbf16> to vector<8x8xbf16>
    %cst_157 = arith.constant dense<0.000000e+00> : vector<192x8xf32>
    %174 = tpu.matmul %171, %173, %cst_157 {dimension_numbers = #tpu.dot_dimension_numbers<[1], [0], [0], [1], [0, 0, 1, 1], [], []>} : vector<192x8xbf16>, vector<8x8xbf16>, vector<192x8xf32> -> vector<192x8xf32>
    %c48 = arith.constant 48 : index
    %c0_158 = arith.constant 0 : index
    %175 = vector.load %arg11[%c48, %c0_158] : memref<552x8xbf16, #tpu.memory_space<vmem>>, vector<192x8xbf16>
    %c0_159 = arith.constant 0 : index
    %c1_160 = arith.constant 1 : index
    %c0_161 = arith.constant 0 : index
    %c0_162 = arith.constant 0 : index
    %176 = vector.load %arg7[%c0_159, %c1_160, %c0_161, %c0_162] : memref<3x3x8x8xbf16, #tpu.memory_space<vmem>>, vector<1x1x8x8xbf16>
    %177 = vector.shape_cast %176 : vector<1x1x8x8xbf16> to vector<8x8xbf16>
    %cst_163 = arith.constant dense<0.000000e+00> : vector<192x8xf32>
    %178 = tpu.matmul %175, %177, %cst_163 {dimension_numbers = #tpu.dot_dimension_numbers<[1], [0], [0], [1], [0, 0, 1, 1], [], []>} : vector<192x8xbf16>, vector<8x8xbf16>, vector<192x8xf32> -> vector<192x8xf32>
    %179 = arith.addf %174, %178 : vector<192x8xf32>
    %c50 = arith.constant 50 : index
    %c0_164 = arith.constant 0 : index
    %180 = vector.load %arg11[%c50, %c0_164] : memref<552x8xbf16, #tpu.memory_space<vmem>>, vector<192x8xbf16>
    %c0_165 = arith.constant 0 : index
    %c2_166 = arith.constant 2 : index
    %c0_167 = arith.constant 0 : index
    %c0_168 = arith.constant 0 : index
    %181 = vector.load %arg7[%c0_165, %c2_166, %c0_167, %c0_168] : memref<3x3x8x8xbf16, #tpu.memory_space<vmem>>, vector<1x1x8x8xbf16>
    %182 = vector.shape_cast %181 : vector<1x1x8x8xbf16> to vector<8x8xbf16>
    %cst_169 = arith.constant dense<0.000000e+00> : vector<192x8xf32>
    %183 = tpu.matmul %180, %182, %cst_169 {dimension_numbers = #tpu.dot_dimension_numbers<[1], [0], [0], [1], [0, 0, 1, 1], [], []>} : vector<192x8xbf16>, vector<8x8xbf16>, vector<192x8xf32> -> vector<192x8xf32>
    %184 = arith.addf %179, %183 : vector<192x8xf32>
    %c94 = arith.constant 94 : index
    %c0_170 = arith.constant 0 : index
    %185 = vector.load %arg11[%c94, %c0_170] : memref<552x8xbf16, #tpu.memory_space<vmem>>, vector<192x8xbf16>
    %c1_171 = arith.constant 1 : index
    %c0_172 = arith.constant 0 : index
    %c0_173 = arith.constant 0 : index
    %c0_174 = arith.constant 0 : index
    %186 = vector.load %arg7[%c1_171, %c0_172, %c0_173, %c0_174] : memref<3x3x8x8xbf16, #tpu.memory_space<vmem>>, vector<1x1x8x8xbf16>
    %187 = vector.shape_cast %186 : vector<1x1x8x8xbf16> to vector<8x8xbf16>
    %cst_175 = arith.constant dense<0.000000e+00> : vector<192x8xf32>
    %188 = tpu.matmul %185, %187, %cst_175 {dimension_numbers = #tpu.dot_dimension_numbers<[1], [0], [0], [1], [0, 0, 1, 1], [], []>} : vector<192x8xbf16>, vector<8x8xbf16>, vector<192x8xf32> -> vector<192x8xf32>
    %189 = arith.addf %184, %188 : vector<192x8xf32>
    %c96_176 = arith.constant 96 : index
    %c0_177 = arith.constant 0 : index
    %190 = vector.load %arg11[%c96_176, %c0_177] : memref<552x8xbf16, #tpu.memory_space<vmem>>, vector<192x8xbf16>
    %c1_178 = arith.constant 1 : index
    %c1_179 = arith.constant 1 : index
    %c0_180 = arith.constant 0 : index
    %c0_181 = arith.constant 0 : index
    %191 = vector.load %arg7[%c1_178, %c1_179, %c0_180, %c0_181] : memref<3x3x8x8xbf16, #tpu.memory_space<vmem>>, vector<1x1x8x8xbf16>
    %192 = vector.shape_cast %191 : vector<1x1x8x8xbf16> to vector<8x8xbf16>
    %cst_182 = arith.constant dense<0.000000e+00> : vector<192x8xf32>
    %193 = tpu.matmul %190, %192, %cst_182 {dimension_numbers = #tpu.dot_dimension_numbers<[1], [0], [0], [1], [0, 0, 1, 1], [], []>} : vector<192x8xbf16>, vector<8x8xbf16>, vector<192x8xf32> -> vector<192x8xf32>
    %194 = arith.addf %189, %193 : vector<192x8xf32>
    %c98 = arith.constant 98 : index
    %c0_183 = arith.constant 0 : index
    %195 = vector.load %arg11[%c98, %c0_183] : memref<552x8xbf16, #tpu.memory_space<vmem>>, vector<192x8xbf16>
    %c1_184 = arith.constant 1 : index
    %c2_185 = arith.constant 2 : index
    %c0_186 = arith.constant 0 : index
    %c0_187 = arith.constant 0 : index
    %196 = vector.load %arg7[%c1_184, %c2_185, %c0_186, %c0_187] : memref<3x3x8x8xbf16, #tpu.memory_space<vmem>>, vector<1x1x8x8xbf16>
    %197 = vector.shape_cast %196 : vector<1x1x8x8xbf16> to vector<8x8xbf16>
    %cst_188 = arith.constant dense<0.000000e+00> : vector<192x8xf32>
    %198 = tpu.matmul %195, %197, %cst_188 {dimension_numbers = #tpu.dot_dimension_numbers<[1], [0], [0], [1], [0, 0, 1, 1], [], []>} : vector<192x8xbf16>, vector<8x8xbf16>, vector<192x8xf32> -> vector<192x8xf32>
    %199 = arith.addf %194, %198 : vector<192x8xf32>
    %c142 = arith.constant 142 : index
    %c0_189 = arith.constant 0 : index
    %200 = vector.load %arg11[%c142, %c0_189] : memref<552x8xbf16, #tpu.memory_space<vmem>>, vector<192x8xbf16>
    %c2_190 = arith.constant 2 : index
    %c0_191 = arith.constant 0 : index
    %c0_192 = arith.constant 0 : index
    %c0_193 = arith.constant 0 : index
    %201 = vector.load %arg7[%c2_190, %c0_191, %c0_192, %c0_193] : memref<3x3x8x8xbf16, #tpu.memory_space<vmem>>, vector<1x1x8x8xbf16>
    %202 = vector.shape_cast %201 : vector<1x1x8x8xbf16> to vector<8x8xbf16>
    %cst_194 = arith.constant dense<0.000000e+00> : vector<192x8xf32>
    %203 = tpu.matmul %200, %202, %cst_194 {dimension_numbers = #tpu.dot_dimension_numbers<[1], [0], [0], [1], [0, 0, 1, 1], [], []>} : vector<192x8xbf16>, vector<8x8xbf16>, vector<192x8xf32> -> vector<192x8xf32>
    %204 = arith.addf %199, %203 : vector<192x8xf32>
    %c144 = arith.constant 144 : index
    %c0_195 = arith.constant 0 : index
    %205 = vector.load %arg11[%c144, %c0_195] : memref<552x8xbf16, #tpu.memory_space<vmem>>, vector<192x8xbf16>
    %c2_196 = arith.constant 2 : index
    %c1_197 = arith.constant 1 : index
    %c0_198 = arith.constant 0 : index
    %c0_199 = arith.constant 0 : index
    %206 = vector.load %arg7[%c2_196, %c1_197, %c0_198, %c0_199] : memref<3x3x8x8xbf16, #tpu.memory_space<vmem>>, vector<1x1x8x8xbf16>
    %207 = vector.shape_cast %206 : vector<1x1x8x8xbf16> to vector<8x8xbf16>
    %cst_200 = arith.constant dense<0.000000e+00> : vector<192x8xf32>
    %208 = tpu.matmul %205, %207, %cst_200 {dimension_numbers = #tpu.dot_dimension_numbers<[1], [0], [0], [1], [0, 0, 1, 1], [], []>} : vector<192x8xbf16>, vector<8x8xbf16>, vector<192x8xf32> -> vector<192x8xf32>
    %209 = arith.addf %204, %208 : vector<192x8xf32>
    %c146 = arith.constant 146 : index
    %c0_201 = arith.constant 0 : index
    %210 = vector.load %arg11[%c146, %c0_201] : memref<552x8xbf16, #tpu.memory_space<vmem>>, vector<192x8xbf16>
    %c2_202 = arith.constant 2 : index
    %c2_203 = arith.constant 2 : index
    %c0_204 = arith.constant 0 : index
    %c0_205 = arith.constant 0 : index
    %211 = vector.load %arg7[%c2_202, %c2_203, %c0_204, %c0_205] : memref<3x3x8x8xbf16, #tpu.memory_space<vmem>>, vector<1x1x8x8xbf16>
    %212 = vector.shape_cast %211 : vector<1x1x8x8xbf16> to vector<8x8xbf16>
    %cst_206 = arith.constant dense<0.000000e+00> : vector<192x8xf32>
    %213 = tpu.matmul %210, %212, %cst_206 {dimension_numbers = #tpu.dot_dimension_numbers<[1], [0], [0], [1], [0, 0, 1, 1], [], []>} : vector<192x8xbf16>, vector<8x8xbf16>, vector<192x8xf32> -> vector<192x8xf32>
    %214 = arith.addf %209, %213 : vector<192x8xf32>
    %215 = vector.broadcast %3 : vector<1x8xf32> to vector<192x8xf32>
    %216 = arith.addf %214, %215 : vector<192x8xf32>
    %cst_207 = arith.constant 0.000000e+00 : f32
    %217 = vector.broadcast %cst_207 : f32 to vector<192x8xf32>
    %218 = arith.maximumf %216, %217 : vector<192x8xf32>
    %c96_208 = arith.constant 96 : index
    %c0_209 = arith.constant 0 : index
    %219 = vector.load %arg10[%c96_208, %c0_209] : memref<552x8xf32, #tpu.memory_space<vmem>>, vector<192x8xf32>
    %220 = arith.addf %218, %219 : vector<192x8xf32>
    %221 = arith.truncf %220 : vector<192x8xf32> to vector<192x8xbf16>
    %c0_210 = arith.constant 0 : index
    %c0_211 = arith.constant 0 : index
    %c0_212 = arith.constant 0 : index
    %222 = vector.load %arg9[%c0_210, %c0_211, %c0_212] : memref<1x384x8xbf16, #tpu.memory_space<vmem>>, vector<1x192x8xbf16>
    %223 = vector.shape_cast %222 : vector<1x192x8xbf16> to vector<192x8xbf16>
    %224 = vector.shape_cast %221 : vector<192x8xbf16> to vector<1x192x8xbf16>
    tpu.vector_store %arg9[%c0_210, %c0_211, %c0_212], %224 {strides = array<i32>} : memref<1x384x8xbf16, #tpu.memory_space<vmem>>, vector<1x192x8xbf16>,
    %c238 = arith.constant 238 : index
    %c0_213 = arith.constant 0 : index
    %225 = vector.load %arg11[%c238, %c0_213] : memref<552x8xbf16, #tpu.memory_space<vmem>>, vector<192x8xbf16>
    %c0_214 = arith.constant 0 : index
    %c0_215 = arith.constant 0 : index
    %c0_216 = arith.constant 0 : index
    %c0_217 = arith.constant 0 : index
    %226 = vector.load %arg7[%c0_214, %c0_215, %c0_216, %c0_217] : memref<3x3x8x8xbf16, #tpu.memory_space<vmem>>, vector<1x1x8x8xbf16>
    %227 = vector.shape_cast %226 : vector<1x1x8x8xbf16> to vector<8x8xbf16>
    %cst_218 = arith.constant dense<0.000000e+00> : vector<192x8xf32>
    %228 = tpu.matmul %225, %227, %cst_218 {dimension_numbers = #tpu.dot_dimension_numbers<[1], [0], [0], [1], [0, 0, 1, 1], [], []>} : vector<192x8xbf16>, vector<8x8xbf16>, vector<192x8xf32> -> vector<192x8xf32>
    %c240 = arith.constant 240 : index
    %c0_219 = arith.constant 0 : index
    %229 = vector.load %arg11[%c240, %c0_219] : memref<552x8xbf16, #tpu.memory_space<vmem>>, vector<192x8xbf16>
    %c0_220 = arith.constant 0 : index
    %c1_221 = arith.constant 1 : index
    %c0_222 = arith.constant 0 : index
    %c0_223 = arith.constant 0 : index
    %230 = vector.load %arg7[%c0_220, %c1_221, %c0_222, %c0_223] : memref<3x3x8x8xbf16, #tpu.memory_space<vmem>>, vector<1x1x8x8xbf16>
    %231 = vector.shape_cast %230 : vector<1x1x8x8xbf16> to vector<8x8xbf16>
    %cst_224 = arith.constant dense<0.000000e+00> : vector<192x8xf32>
    %232 = tpu.matmul %229, %231, %cst_224 {dimension_numbers = #tpu.dot_dimension_numbers<[1], [0], [0], [1], [0, 0, 1, 1], [], []>} : vector<192x8xbf16>, vector<8x8xbf16>, vector<192x8xf32> -> vector<192x8xf32>
    %233 = arith.addf %228, %232 : vector<192x8xf32>
    %c242 = arith.constant 242 : index
    %c0_225 = arith.constant 0 : index
    %234 = vector.load %arg11[%c242, %c0_225] : memref<552x8xbf16, #tpu.memory_space<vmem>>, vector<192x8xbf16>
    %c0_226 = arith.constant 0 : index
    %c2_227 = arith.constant 2 : index
    %c0_228 = arith.constant 0 : index
    %c0_229 = arith.constant 0 : index
    %235 = vector.load %arg7[%c0_226, %c2_227, %c0_228, %c0_229] : memref<3x3x8x8xbf16, #tpu.memory_space<vmem>>, vector<1x1x8x8xbf16>
    %236 = vector.shape_cast %235 : vector<1x1x8x8xbf16> to vector<8x8xbf16>
    %cst_230 = arith.constant dense<0.000000e+00> : vector<192x8xf32>
    %237 = tpu.matmul %234, %236, %cst_230 {dimension_numbers = #tpu.dot_dimension_numbers<[1], [0], [0], [1], [0, 0, 1, 1], [], []>} : vector<192x8xbf16>, vector<8x8xbf16>, vector<192x8xf32> -> vector<192x8xf32>
    %238 = arith.addf %233, %237 : vector<192x8xf32>
    %c286 = arith.constant 286 : index
    %c0_231 = arith.constant 0 : index
    %239 = vector.load %arg11[%c286, %c0_231] : memref<552x8xbf16, #tpu.memory_space<vmem>>, vector<192x8xbf16>
    %c1_232 = arith.constant 1 : index
    %c0_233 = arith.constant 0 : index
    %c0_234 = arith.constant 0 : index
    %c0_235 = arith.constant 0 : index
    %240 = vector.load %arg7[%c1_232, %c0_233, %c0_234, %c0_235] : memref<3x3x8x8xbf16, #tpu.memory_space<vmem>>, vector<1x1x8x8xbf16>
    %241 = vector.shape_cast %240 : vector<1x1x8x8xbf16> to vector<8x8xbf16>
    %cst_236 = arith.constant dense<0.000000e+00> : vector<192x8xf32>
    %242 = tpu.matmul %239, %241, %cst_236 {dimension_numbers = #tpu.dot_dimension_numbers<[1], [0], [0], [1], [0, 0, 1, 1], [], []>} : vector<192x8xbf16>, vector<8x8xbf16>, vector<192x8xf32> -> vector<192x8xf32>
    %243 = arith.addf %238, %242 : vector<192x8xf32>
    %c288_237 = arith.constant 288 : index
    %c0_238 = arith.constant 0 : index
    %244 = vector.load %arg11[%c288_237, %c0_238] : memref<552x8xbf16, #tpu.memory_space<vmem>>, vector<192x8xbf16>
    %c1_239 = arith.constant 1 : index
    %c1_240 = arith.constant 1 : index
    %c0_241 = arith.constant 0 : index
    %c0_242 = arith.constant 0 : index
    %245 = vector.load %arg7[%c1_239, %c1_240, %c0_241, %c0_242] : memref<3x3x8x8xbf16, #tpu.memory_space<vmem>>, vector<1x1x8x8xbf16>
    %246 = vector.shape_cast %245 : vector<1x1x8x8xbf16> to vector<8x8xbf16>
    %cst_243 = arith.constant dense<0.000000e+00> : vector<192x8xf32>
    %247 = tpu.matmul %244, %246, %cst_243 {dimension_numbers = #tpu.dot_dimension_numbers<[1], [0], [0], [1], [0, 0, 1, 1], [], []>} : vector<192x8xbf16>, vector<8x8xbf16>, vector<192x8xf32> -> vector<192x8xf32>
    %248 = arith.addf %243, %247 : vector<192x8xf32>
    %c290 = arith.constant 290 : index
    %c0_244 = arith.constant 0 : index
    %249 = vector.load %arg11[%c290, %c0_244] : memref<552x8xbf16, #tpu.memory_space<vmem>>, vector<192x8xbf16>
    %c1_245 = arith.constant 1 : index
    %c2_246 = arith.constant 2 : index
    %c0_247 = arith.constant 0 : index
    %c0_248 = arith.constant 0 : index
    %250 = vector.load %arg7[%c1_245, %c2_246, %c0_247, %c0_248] : memref<3x3x8x8xbf16, #tpu.memory_space<vmem>>, vector<1x1x8x8xbf16>
    %251 = vector.shape_cast %250 : vector<1x1x8x8xbf16> to vector<8x8xbf16>
    %cst_249 = arith.constant dense<0.000000e+00> : vector<192x8xf32>
    %252 = tpu.matmul %249, %251, %cst_249 {dimension_numbers = #tpu.dot_dimension_numbers<[1], [0], [0], [1], [0, 0, 1, 1], [], []>} : vector<192x8xbf16>, vector<8x8xbf16>, vector<192x8xf32> -> vector<192x8xf32>
    %253 = arith.addf %248, %252 : vector<192x8xf32>
    %c334 = arith.constant 334 : index
    %c0_250 = arith.constant 0 : index
    %254 = vector.load %arg11[%c334, %c0_250] : memref<552x8xbf16, #tpu.memory_space<vmem>>, vector<192x8xbf16>
    %c2_251 = arith.constant 2 : index
    %c0_252 = arith.constant 0 : index
    %c0_253 = arith.constant 0 : index
    %c0_254 = arith.constant 0 : index
    %255 = vector.load %arg7[%c2_251, %c0_252, %c0_253, %c0_254] : memref<3x3x8x8xbf16, #tpu.memory_space<vmem>>, vector<1x1x8x8xbf16>
    %256 = vector.shape_cast %255 : vector<1x1x8x8xbf16> to vector<8x8xbf16>
    %cst_255 = arith.constant dense<0.000000e+00> : vector<192x8xf32>
    %257 = tpu.matmul %254, %256, %cst_255 {dimension_numbers = #tpu.dot_dimension_numbers<[1], [0], [0], [1], [0, 0, 1, 1], [], []>} : vector<192x8xbf16>, vector<8x8xbf16>, vector<192x8xf32> -> vector<192x8xf32>
    %258 = arith.addf %253, %257 : vector<192x8xf32>
    %c336 = arith.constant 336 : index
    %c0_256 = arith.constant 0 : index
    %259 = vector.load %arg11[%c336, %c0_256] : memref<552x8xbf16, #tpu.memory_space<vmem>>, vector<192x8xbf16>
    %c2_257 = arith.constant 2 : index
    %c1_258 = arith.constant 1 : index
    %c0_259 = arith.constant 0 : index
    %c0_260 = arith.constant 0 : index
    %260 = vector.load %arg7[%c2_257, %c1_258, %c0_259, %c0_260] : memref<3x3x8x8xbf16, #tpu.memory_space<vmem>>, vector<1x1x8x8xbf16>
    %261 = vector.shape_cast %260 : vector<1x1x8x8xbf16> to vector<8x8xbf16>
    %cst_261 = arith.constant dense<0.000000e+00> : vector<192x8xf32>
    %262 = tpu.matmul %259, %261, %cst_261 {dimension_numbers = #tpu.dot_dimension_numbers<[1], [0], [0], [1], [0, 0, 1, 1], [], []>} : vector<192x8xbf16>, vector<8x8xbf16>, vector<192x8xf32> -> vector<192x8xf32>
    %263 = arith.addf %258, %262 : vector<192x8xf32>
    %c338 = arith.constant 338 : index
    %c0_262 = arith.constant 0 : index
    %264 = vector.load %arg11[%c338, %c0_262] : memref<552x8xbf16, #tpu.memory_space<vmem>>, vector<192x8xbf16>
    %c2_263 = arith.constant 2 : index
    %c2_264 = arith.constant 2 : index
    %c0_265 = arith.constant 0 : index
    %c0_266 = arith.constant 0 : index
    %265 = vector.load %arg7[%c2_263, %c2_264, %c0_265, %c0_266] : memref<3x3x8x8xbf16, #tpu.memory_space<vmem>>, vector<1x1x8x8xbf16>
    %266 = vector.shape_cast %265 : vector<1x1x8x8xbf16> to vector<8x8xbf16>
    %cst_267 = arith.constant dense<0.000000e+00> : vector<192x8xf32>
    %267 = tpu.matmul %264, %266, %cst_267 {dimension_numbers = #tpu.dot_dimension_numbers<[1], [0], [0], [1], [0, 0, 1, 1], [], []>} : vector<192x8xbf16>, vector<8x8xbf16>, vector<192x8xf32> -> vector<192x8xf32>
    %268 = arith.addf %263, %267 : vector<192x8xf32>
    %269 = vector.broadcast %3 : vector<1x8xf32> to vector<192x8xf32>
    %270 = arith.addf %268, %269 : vector<192x8xf32>
    %cst_268 = arith.constant 0.000000e+00 : f32
    %271 = vector.broadcast %cst_268 : f32 to vector<192x8xf32>
    %272 = arith.maximumf %270, %271 : vector<192x8xf32>
    %c288_269 = arith.constant 288 : index
    %c0_270 = arith.constant 0 : index
    %273 = vector.load %arg10[%c288_269, %c0_270] : memref<552x8xf32, #tpu.memory_space<vmem>>, vector<192x8xf32>
    %274 = arith.addf %272, %273 : vector<192x8xf32>
    %275 = arith.truncf %274 : vector<192x8xf32> to vector<192x8xbf16>
    %c0_271 = arith.constant 0 : index
    %c192_272 = arith.constant 192 : index
    %c0_273 = arith.constant 0 : index
    %276 = vector.load %arg9[%c0_271, %c192_272, %c0_273] : memref<1x384x8xbf16, #tpu.memory_space<vmem>>, vector<1x192x8xbf16>
    %277 = vector.shape_cast %276 : vector<1x192x8xbf16> to vector<192x8xbf16>
    %278 = vector.shape_cast %275 : vector<192x8xbf16> to vector<1x192x8xbf16>
    tpu.vector_store %arg9[%c0_271, %c192_272, %c0_273], %278 {strides = array<i32>} : memref<1x384x8xbf16, #tpu.memory_space<vmem>>, vector<1x192x8xbf16>,
    return
  }
  func.func @transform_0(%arg0: i32) -> (i32, i32, i32) {
    %c0_i32 = arith.constant 0 : i32
    %c0_i32_0 = arith.constant 0 : i32
    %c0_i32_1 = arith.constant 0 : i32
    return %arg0, %c0_i32, %c0_i32_0 : i32, i32, i32
  }
  func.func @transform_1(%arg0: i32) -> (i32, i32) {
    %c0_i32 = arith.constant 0 : i32
    %c0_i32_0 = arith.constant 0 : i32
    %c0_i32_1 = arith.constant 0 : i32
    return %c0_i32, %c0_i32_0 : i32, i32
  }
  func.func @transform_2(%arg0: i32) -> (i32, i32) {
    %c0_i32 = arith.constant 0 : i32
    %c0_i32_0 = arith.constant 0 : i32
    %c0_i32_1 = arith.constant 0 : i32
    return %c0_i32, %c0_i32_0 : i32, i32
  }
  func.func @transform_3(%arg0: i32) -> (i32, i32) {
    %c0_i32 = arith.constant 0 : i32
    %c0_i32_0 = arith.constant 0 : i32
    %c0_i32_1 = arith.constant 0 : i32
    return %c0_i32, %c0_i32_0 : i32, i32
  }
  func.func @transform_4(%arg0: i32) -> (i32, i32, i32, i32) {
    %c0_i32 = arith.constant 0 : i32
    %c0_i32_0 = arith.constant 0 : i32
    %c0_i32_1 = arith.constant 0 : i32
    %c0_i32_2 = arith.constant 0 : i32
    %c0_i32_3 = arith.constant 0 : i32
    return %c0_i32, %c0_i32_0, %c0_i32_1, %c0_i32_2 : i32, i32, i32, i32
  }
  func.func @transform_5(%arg0: i32) -> (i32, i32) {
    %c0_i32 = arith.constant 0 : i32
    %c0_i32_0 = arith.constant 0 : i32
    %c0_i32_1 = arith.constant 0 : i32
    return %c0_i32, %c0_i32_0 : i32, i32
  }
  func.func @transform_6(%arg0: i32) -> (i32, i32, i32, i32) {
    %c0_i32 = arith.constant 0 : i32
    %c0_i32_0 = arith.constant 0 : i32
    %c0_i32_1 = arith.constant 0 : i32
    %c0_i32_2 = arith.constant 0 : i32
    %c0_i32_3 = arith.constant 0 : i32
    return %c0_i32, %c0_i32_0, %c0_i32_1, %c0_i32_2 : i32, i32, i32, i32
  }
  func.func @transform_7(%arg0: i32) -> (i32, i32) {
    %c0_i32 = arith.constant 0 : i32
    %c0_i32_0 = arith.constant 0 : i32
    %c0_i32_1 = arith.constant 0 : i32
    return %c0_i32, %c0_i32_0 : i32, i32
  }
  func.func @transform_8(%arg0: i32) -> (i32, i32, i32) {
    %c0_i32 = arith.constant 0 : i32
    %c0_i32_0 = arith.constant 0 : i32
    %c0_i32_1 = arith.constant 0 : i32
    return %arg0, %c0_i32, %c0_i32_0 : i32, i32, i32
  }
}

</mosaic_0001>

<llo_original>
// kernel: tpu_custom_call.1
$region0: #{tpu_custom_call.1}
  #allocation0 [shape = 'u32[]', space=smem, size = 0x4, offset = 0x4, fixed_abs, tag = 'smem constant byte address 0x4 - core index']
  #allocation1 [shape = 'u32[144,128]{1,0:T(1,128)}', space=vmem, size = 0x12000, scoped, tag = 'internal scratch']
  #allocation2 [shape = 'f32[552,8]{1,0:T(8,128)}', space=vmem, size = 0x45000, scoped, tag = 'scratch operand']
  #allocation3 [shape = 'bf16[552,8]{1,0:T(8,128)(2,1)}', space=vmem, size = 0x22800, scoped, tag = 'scratch operand']
  %s0 = inlined_call_operand.vmem [shape: bf16[2,384,4], index: 0, kind: input, shape index: {}]
  %s1 = inlined_call_operand.vmem [shape: f32[192,1], index: 1, kind: input, shape index: {}]
  %s2 = inlined_call_operand.vmem [shape: bf16[4,8], index: 2, kind: input, shape index: {}]
  %s3 = inlined_call_operand.vmem [shape: f32[1,8], index: 3, kind: input, shape index: {}]
  %s4 = inlined_call_operand.vmem [shape: bf16[3,3,8,8], index: 4, kind: input, shape index: {}]
  %s5 = inlined_call_operand.vmem [shape: f32[1,8], index: 5, kind: input, shape index: {}]
  %s6 = inlined_call_operand.vmem [shape: bf16[3,3,8,8], index: 6, kind: input, shape index: {}]
  %s7 = inlined_call_operand.vmem [shape: f32[1,8], index: 7, kind: input, shape index: {}]
  %s8 = inlined_call_operand.vmem [shape: bf16[2,384,8], index: 8, kind: output, shape index: {}]
  %s9 = sld [smem:[#allocation0]]
  $region65: #{tpu_custom_call.1} parent=0
    _
  %s11 = ssub.s32 1, %s9
  %s12 = scalar_select 0, %s11, %s9
  loop: start=0, step=1, limit=4
  $region2: #{tpu_custom_call.1} parent=0 // loop_pre_header
    _
  $region3: #{tpu_custom_call.1} parent=0 // loop_header
    %s14 = sphi 0, %s18
    %p15 = scmp.ge.s32.totalorder %s14, 4
    %s24 = sphi 0, %s26
    %s27 = sphi 0, %s24
    %s28 = sphi 0, %s27
    %s44 = sphi 0, %s28
    %s48 = sphi 0, %s48
    %s50 = sphi 0, %s48
    %s51 = sphi 0, %s50
    %s65 = sphi 0, %s51
    %s69 = sphi 0, %s69
    %s71 = sphi 0, %s69
    %s72 = sphi 0, %s71
    %s86 = sphi 0, %s72
    %s90 = sphi 0, %s90
    %s92 = sphi 0, %s90
    %s93 = sphi 0, %s92
    %s107 = sphi 0, %s93
    %s111 = sphi 0, %s111
    %s113 = sphi 0, %s111
    %s114 = sphi 0, %s113
    %s128 = sphi 0, %s114
    %s132 = sphi 0, %s132
    %s134 = sphi 0, %s132
    %s135 = sphi 0, %s134
    %s149 = sphi 0, %s135
    %s153 = sphi 0, %s153
    %s155 = sphi 0, %s153
    %s156 = sphi 0, %s155
    %s170 = sphi 0, %s156
    %s174 = sphi 0, %s174
    %s176 = sphi 0, %s174
    %s177 = sphi 0, %s176
    %s191 = sphi 0, %s177
    %s197 = sphi 0, %s199
    %s200 = sphi 0, %s197
    %s201 = sphi 0, %s200
    %s217 = sphi 0, %s201
  $region4: #{tpu_custom_call.1} parent=0 // loop_header_branch
    %17 = sbr.rel (%p15) target = $region8
  $region5: #{tpu_custom_call.1} parent=0 // loop_body
    %s19 = ssub.s32 %s14, 1
    %s20 = ssub.s32 %s14, 2
    %s21 = sadd.s32 %s14, 1
    %s22 = ssub.s32 %s14, %s21
    %p23 = scmp.eq.s32.totalorder %s22, 0
    %s25 = sadd.s32 %s24, 1
    %s26 = scalar_select %p23, %s24, %s25
    %p29 = pneg %p23
    %p30 = scmp.eq.s32.totalorder %s14, 1
    %p31 = por %p29, %p30
    %p32 = scmp.ne.s32.totalorder %s24, %s27
    %p33 = scmp.eq.s32.totalorder %s14, 0
    %p34 = por %p32, %p33
    %p35 = scmp.ne.s32.totalorder %s24, %s27
    %p36 = scmp.eq.s32.totalorder %s19, 1
    %p37 = por %p35, %p36
    %p38 = scmp.ne.s32.totalorder %s27, %s28
    %p39 = scmp.eq.s32.totalorder %s19, 0
    %p40 = por %p38, %p39
    %p41 = scmp.ne.s32.totalorder %s27, %s28
    %p42 = scmp.eq.s32.totalorder %s20, 1
    %p43 = por %p41, %p42
    %p45 = scmp.ne.s32.totalorder %s28, %s44
    %p46 = scmp.eq.s32.totalorder %s20, 0
    %p47 = por %p45, %p46
    %s49 = sadd.s32 %s48, 1
    %p52 = scmp.eq.s32.totalorder %s14, 1
    %p53 = scmp.ne.s32.totalorder %s48, %s50
    %p54 = scmp.eq.s32.totalorder %s14, 0
    %p55 = por %p53, %p54
    %p56 = scmp.ne.s32.totalorder %s48, %s50
    %p57 = scmp.eq.s32.totalorder %s19, 1
    %p58 = por %p56, %p57
    %p59 = scmp.ne.s32.totalorder %s50, %s51
    %p60 = scmp.eq.s32.totalorder %s19, 0
    %p61 = por %p59, %p60
    %p62 = scmp.ne.s32.totalorder %s50, %s51
    %p63 = scmp.eq.s32.totalorder %s20, 1
    %p64 = por %p62, %p63
    %p66 = scmp.ne.s32.totalorder %s51, %s65
    %p67 = scmp.eq.s32.totalorder %s20, 0
    %p68 = por %p66, %p67
    %s70 = sadd.s32 %s69, 1
    %p73 = scmp.eq.s32.totalorder %s14, 1
    %p74 = scmp.ne.s32.totalorder %s69, %s71
    %p75 = scmp.eq.s32.totalorder %s14, 0
    %p76 = por %p74, %p75
    %p77 = scmp.ne.s32.totalorder %s69, %s71
    %p78 = scmp.eq.s32.totalorder %s19, 1
    %p79 = por %p77, %p78
    %p80 = scmp.ne.s32.totalorder %s71, %s72
    %p81 = scmp.eq.s32.totalorder %s19, 0
    %p82 = por %p80, %p81
    %p83 = scmp.ne.s32.totalorder %s71, %s72
    %p84 = scmp.eq.s32.totalorder %s20, 1
    %p85 = por %p83, %p84
    %p87 = scmp.ne.s32.totalorder %s72, %s86
    %p88 = scmp.eq.s32.totalorder %s20, 0
    %p89 = por %p87, %p88
    %s91 = sadd.s32 %s90, 1
    %p94 = scmp.eq.s32.totalorder %s14, 1
    %p95 = scmp.ne.s32.totalorder %s90, %s92
    %p96 = scmp.eq.s32.totalorder %s14, 0
    %p97 = por %p95, %p96
    %p98 = scmp.ne.s32.totalorder %s90, %s92
    %p99 = scmp.eq.s32.totalorder %s19, 1
    %p100 = por %p98, %p99
    %p101 = scmp.ne.s32.totalorder %s92, %s93
    %p102 = scmp.eq.s32.totalorder %s19, 0
    %p103 = por %p101, %p102
    %p104 = scmp.ne.s32.totalorder %s92, %s93
    %p105 = scmp.eq.s32.totalorder %s20, 1
    %p106 = por %p104, %p105
    %p108 = scmp.ne.s32.totalorder %s93, %s107
    %p109 = scmp.eq.s32.totalorder %s20, 0
    %p110 = por %p108, %p109
    %s112 = sadd.s32 %s111, 1
    %p115 = scmp.eq.s32.totalorder %s14, 1
    %p116 = scmp.ne.s32.totalorder %s111, %s113
    %p117 = scmp.eq.s32.totalorder %s14, 0
    %p118 = por %p116, %p117
    %p119 = scmp.ne.s32.totalorder %s111, %s113
    %p120 = scmp.eq.s32.totalorder %s19, 1
    %p121 = por %p119, %p120
    %p122 = scmp.ne.s32.totalorder %s113, %s114
    %p123 = scmp.eq.s32.totalorder %s19, 0
    %p124 = por %p122, %p123
    %p125 = scmp.ne.s32.totalorder %s113, %s114
    %p126 = scmp.eq.s32.totalorder %s20, 1
    %p127 = por %p125, %p126
    %p129 = scmp.ne.s32.totalorder %s114, %s128
    %p130 = scmp.eq.s32.totalorder %s20, 0
    %p131 = por %p129, %p130
    %s133 = sadd.s32 %s132, 1
    %p136 = scmp.eq.s32.totalorder %s14, 1
    %p137 = scmp.ne.s32.totalorder %s132, %s134
    %p138 = scmp.eq.s32.totalorder %s14, 0
    %p139 = por %p137, %p138
    %p140 = scmp.ne.s32.totalorder %s132, %s134
    %p141 = scmp.eq.s32.totalorder %s19, 1
    %p142 = por %p140, %p141
    %p143 = scmp.ne.s32.totalorder %s134, %s135
    %p144 = scmp.eq.s32.totalorder %s19, 0
    %p145 = por %p143, %p144
    %p146 = scmp.ne.s32.totalorder %s134, %s135
    %p147 = scmp.eq.s32.totalorder %s20, 1
    %p148 = por %p146, %p147
    %p150 = scmp.ne.s32.totalorder %s135, %s149
    %p151 = scmp.eq.s32.totalorder %s20, 0
    %p152 = por %p150, %p151
    %s154 = sadd.s32 %s153, 1
    %p157 = scmp.eq.s32.totalorder %s14, 1
    %p158 = scmp.ne.s32.totalorder %s153, %s155
    %p159 = scmp.eq.s32.totalorder %s14, 0
    %p160 = por %p158, %p159
    %p161 = scmp.ne.s32.totalorder %s153, %s155
    %p162 = scmp.eq.s32.totalorder %s19, 1
    %p163 = por %p161, %p162
    %p164 = scmp.ne.s32.totalorder %s155, %s156
    %p165 = scmp.eq.s32.totalorder %s19, 0
    %p166 = por %p164, %p165
    %p167 = scmp.ne.s32.totalorder %s155, %s156
    %p168 = scmp.eq.s32.totalorder %s20, 1
    %p169 = por %p167, %p168
    %p171 = scmp.ne.s32.totalorder %s156, %s170
    %p172 = scmp.eq.s32.totalorder %s20, 0
    %p173 = por %p171, %p172
    %s175 = sadd.s32 %s174, 1
    %p178 = scmp.eq.s32.totalorder %s14, 1
    %p179 = scmp.ne.s32.totalorder %s174, %s176
    %p180 = scmp.eq.s32.totalorder %s14, 0
    %p181 = por %p179, %p180
    %p182 = scmp.ne.s32.totalorder %s174, %s176
    %p183 = scmp.eq.s32.totalorder %s19, 1
    %p184 = por %p182, %p183
    %p185 = scmp.ne.s32.totalorder %s176, %s177
    %p186 = scmp.eq.s32.totalorder %s19, 0
    %p187 = por %p185, %p186
    %p188 = scmp.ne.s32.totalorder %s176, %s177
    %p189 = scmp.eq.s32.totalorder %s20, 1
    %p190 = por %p188, %p189
    %p192 = scmp.ne.s32.totalorder %s177, %s191
    %p193 = scmp.eq.s32.totalorder %s20, 0
    %p194 = por %p192, %p193
    %s195 = ssub.s32 %s14, %s21
    %p196 = scmp.eq.s32.totalorder %s195, 0
    %s198 = sadd.s32 %s197, 1
    %s199 = scalar_select %p196, %s197, %s198
    %p202 = pneg %p196
    %p203 = scmp.eq.s32.totalorder %s14, 1
    %p204 = por %p202, %p203
    %p205 = scmp.ne.s32.totalorder %s197, %s200
    %p206 = scmp.eq.s32.totalorder %s14, 0
    %p207 = por %p205, %p206
    %p208 = scmp.ne.s32.totalorder %s197, %s200
    %p209 = scmp.eq.s32.totalorder %s19, 1
    %p210 = por %p208, %p209
    %p211 = scmp.ne.s32.totalorder %s200, %s201
    %p212 = scmp.eq.s32.totalorder %s19, 0
    %p213 = por %p211, %p212
    %p214 = scmp.ne.s32.totalorder %s200, %s201
    %p215 = scmp.eq.s32.totalorder %s20, 1
    %p216 = por %p214, %p215
    %p218 = scmp.ne.s32.totalorder %s201, %s217
    %p219 = scmp.eq.s32.totalorder %s20, 0
    %p220 = por %p218, %p219
    %p221 = scmp.le.s32.totalorder 1, %s14
    %p222 = scmp.lt.s32.totalorder %s14, 3
    %p223 = pnand %p221, %p222
    %p224 = pneg %p223
    // Predicated region
    $region9: #{tpu_custom_call.1} parent=5 // pred_check
      _
    $region10: #{tpu_custom_call.1} parent=5 // pred_check_branch
      %226 = sbr.rel (%p223) target = $region12
    $region11: #{tpu_custom_call.1} parent=5 // pred_region
      %s227 = ssub.s32 %s14, 1
      // Predicated region
      $region13: #{tpu_custom_call.1} parent=11 // pred_check
        %p228 = pneg %p61
      $region14: #{tpu_custom_call.1} parent=11 // pred_check_branch
        %230 = sbr.rel (%p228) target = $region16
      $region15: #{tpu_custom_call.1} parent=11 // pred_region
        _
      $region16: #{tpu_custom_call.1} parent=11 // pred_fallthru
        _
      // Predicated region
      $region17: #{tpu_custom_call.1} parent=11 // pred_check
        %p231 = pneg %p82
      $region18: #{tpu_custom_call.1} parent=11 // pred_check_branch
        %233 = sbr.rel (%p231) target = $region20
      $region19: #{tpu_custom_call.1} parent=11 // pred_region
        _
      $region20: #{tpu_custom_call.1} parent=11 // pred_fallthru
        _
      // Predicated region
      $region21: #{tpu_custom_call.1} parent=11 // pred_check
        %p234 = pneg %p103
      $region22: #{tpu_custom_call.1} parent=11 // pred_check_branch
        %236 = sbr.rel (%p234) target = $region24
      $region23: #{tpu_custom_call.1} parent=11 // pred_region
        _
      $region24: #{tpu_custom_call.1} parent=11 // pred_fallthru
        _
      // Predicated region
      $region25: #{tpu_custom_call.1} parent=11 // pred_check
        %p237 = pneg %p124
      $region26: #{tpu_custom_call.1} parent=11 // pred_check_branch
        %239 = sbr.rel (%p237) target = $region28
      $region27: #{tpu_custom_call.1} parent=11 // pred_region
        _
      $region28: #{tpu_custom_call.1} parent=11 // pred_fallthru
        _
      // Predicated region
      $region29: #{tpu_custom_call.1} parent=11 // pred_check
        %p240 = pneg %p145
      $region30: #{tpu_custom_call.1} parent=11 // pred_check_branch
        %242 = sbr.rel (%p240) target = $region32
      $region31: #{tpu_custom_call.1} parent=11 // pred_region
        _
      $region32: #{tpu_custom_call.1} parent=11 // pred_fallthru
        _
      // Predicated region
      $region33: #{tpu_custom_call.1} parent=11 // pred_check
        %p243 = pneg %p166
      $region34: #{tpu_custom_call.1} parent=11 // pred_check_branch
        %245 = sbr.rel (%p243) target = $region36
      $region35: #{tpu_custom_call.1} parent=11 // pred_region
        _
      $region36: #{tpu_custom_call.1} parent=11 // pred_fallthru
        _
      // Predicated region
      $region37: #{tpu_custom_call.1} parent=11 // pred_check
        %p246 = pneg %p187
      $region38: #{tpu_custom_call.1} parent=11 // pred_check_branch
        %248 = sbr.rel (%p246) target = $region40
      $region39: #{tpu_custom_call.1} parent=11 // pred_region
        _
      $region40: #{tpu_custom_call.1} parent=11 // pred_fallthru
        _
    $region12: #{tpu_custom_call.1} parent=5 // pred_fallthru
      _
    %p249 = scmp.lt.s32.totalorder %s14, 2
    // Predicated region
    $region41: #{tpu_custom_call.1} parent=5 // pred_check
      %p250 = pneg %p249
    $region42: #{tpu_custom_call.1} parent=5 // pred_check_branch
      %252 = sbr.rel (%p250) target = $region44
    $region43: #{tpu_custom_call.1} parent=5 // pred_region
      // Predicated region
      $region45: #{tpu_custom_call.1} parent=43 // pred_check
        %p253 = pneg %p34
      $region46: #{tpu_custom_call.1} parent=43 // pred_check_branch
        %255 = sbr.rel (%p253) target = $region48
      $region47: #{tpu_custom_call.1} parent=43 // pred_region
        %p256 = scmp.lt.s32.totalorder %s14, 1
        %s257 = scalar_select %p256, %s14, 1
        %s258 = smul.addr %s257, 48
        %s259 = smul.addr %s258, 4
        %s260 = scalar_lea.vmem %s0, %s259
      $region48: #{tpu_custom_call.1} parent=43 // pred_fallthru
        _
    $region44: #{tpu_custom_call.1} parent=5 // pred_fallthru
      _
    %p261 = scmp.le.s32.totalorder 1, %s14
    %p262 = scmp.lt.s32.totalorder %s14, 3
    %p263 = pnand %p261, %p262
    %p264 = pneg %p263
    // Predicated region
    $region49: #{tpu_custom_call.1} parent=5 // pred_check
      _
    $region50: #{tpu_custom_call.1} parent=5 // pred_check_branch
      %266 = sbr.rel (%p263) target = $region52
    $region51: #{tpu_custom_call.1} parent=5 // pred_region
      %s267 = ssub.s32 %s14, 1
      %p268 = scmp.lt.s32.totalorder %s19, 1
      %s269 = scalar_select %p268, %s19, 1
      %s270 = smul.addr %s269, 48
      %s271 = smul.addr %s270, 4
      %s272 = scalar_lea.vmem %s0, %s271
      %p273 = pneg %p40
      %p274 = pneg %p37
      %p275 = pneg %p61
      %p276 = pneg %p58
      %p277 = pneg %p82
      %p278 = pneg %p79
      %p279 = pneg %p103
      %p280 = pneg %p100
      %p281 = pneg %p124
      %p282 = pneg %p121
      %p283 = pneg %p145
      %p284 = pneg %p142
      %p285 = pneg %p166
      %p286 = pneg %p163
      %p287 = pneg %p187
      %p288 = pneg %p184
      %p289 = pneg %p213
      %p290 = pneg %p210
      %p291 = scmp.lt.s32.totalorder %s19, 1
      %s292 = scalar_select %p291, %s19, 1
      %s293 = smul.addr %s292, 48
      %s294 = smul.addr %s293, 4
      %s295 = scalar_lea.vmem %s8, %s294
      %p296 = scmp.lt.s32.totalorder %s19, 1
      %s297 = scalar_select %p296, %s19, 1
      %s298 = smul.addr %s297, 48
      %s299 = smul.addr %s298, 4
      %s300 = scalar_lea.vmem %s0, %s299
      %p301 = scmp.lt.s32.totalorder %s19, 1
      %s302 = scalar_select %p301, %s19, 1
      %s303 = smul.addr %s302, 48
      %s304 = smul.addr %s303, 4
      %s305 = scalar_lea.vmem %s8, %s304
      %v307 = vld [vmem:[%s2] sm:$0x3]
      %v308 = vld [vmem:[%s3] sm:$0x1]
      %v309 = vld [vmem:[%s5] sm:$0x1]
      %v310 = vld [vmem:[%s7] sm:$0x1]
      %v311 = vld [vmem:[%s1] sm:$0xff]
      %v312 = vld [vmem:[%s1 + $0x8] sm:$0xff]
      %v313 = vld [vmem:[%s1 + $0x10] sm:$0xff]
      %v314 = vld [vmem:[%s1 + $0x18] sm:$0xff]
      %v315 = vld [vmem:[%s1 + $0x20] sm:$0xff]
      %v316 = vld [vmem:[%s1 + $0x28] sm:$0xff]
      %v317 = vld [vmem:[%s1 + $0x30] sm:$0xff]
      %v318 = vld [vmem:[%s1 + $0x38] sm:$0xff]
      %v319 = vld [vmem:[%s1 + $0x40] sm:$0xff]
      %v320 = vld [vmem:[%s1 + $0x48] sm:$0xff]
      %v321 = vld [vmem:[%s1 + $0x50] sm:$0xff]
      %v322 = vld [vmem:[%s1 + $0x58] sm:$0xff]
      %v323 = vld [vmem:[%s1 + $0x60] sm:$0xff]
      %v324 = vld [vmem:[%s1 + $0x68] sm:$0xff]
      %v325 = vld [vmem:[%s1 + $0x70] sm:$0xff]
      %v326 = vld [vmem:[%s1 + $0x78] sm:$0xff]
      %v327 = vld [vmem:[%s1 + $0x80] sm:$0xff]
      %v328 = vld [vmem:[%s1 + $0x88] sm:$0xff]
      %v329 = vld [vmem:[%s1 + $0x90] sm:$0xff]
      %v330 = vld [vmem:[%s1 + $0x98] sm:$0xff]
      %v331 = vld [vmem:[%s1 + $0xa0] sm:$0xff]
      %v332 = vld [vmem:[%s1 + $0xa8] sm:$0xff]
      %v333 = vld [vmem:[%s1 + $0xb0] sm:$0xff]
      %v334 = vld [vmem:[%s1 + $0xb8] sm:$0xff]
      %vm335 = vcmask 64512
      %336 = vst.msk [vmem:[#allocation2] sm:$0xff] %vm335, 0.0
      %337 = vst.msk [vmem:[#allocation2 + $0x8] sm:$0xff] %vm335, 0.0
      %338 = vst.msk [vmem:[#allocation2 + $0x10] sm:$0xff] %vm335, 0.0
      %339 = vst.msk [vmem:[#allocation2 + $0x18] sm:$0xff] %vm335, 0.0
      %340 = vst.msk [vmem:[#allocation2 + $0x20] sm:$0xff] %vm335, 0.0
      %341 = vst.msk [vmem:[#allocation2 + $0x28] sm:$0xff] %vm335, 0.0
      %342 = vst.msk [vmem:[#allocation2 + $0x30] sm:$0xff] %vm335, 0.0
      %343 = vst.msk [vmem:[#allocation2 + $0x38] sm:$0xff] %vm335, 0.0
      %344 = vst.msk [vmem:[#allocation2 + $0x40] sm:$0xff] %vm335, 0.0
      %345 = vst.msk [vmem:[#allocation2 + $0x48] sm:$0xff] %vm335, 0.0
      %346 = vst.msk [vmem:[#allocation2 + $0x50] sm:$0xff] %vm335, 0.0
      %347 = vst.msk [vmem:[#allocation2 + $0x58] sm:$0xff] %vm335, 0.0
      %vm348 = vcmask 60416
      %349 = vst.msk [vmem:[#allocation3] sm:$0xf] %vm348, 0
      %350 = vst.msk [vmem:[#allocation3 + $0x4] sm:$0xf] %vm348, 0
      %351 = vst.msk [vmem:[#allocation3 + $0x8] sm:$0xf] %vm348, 0
      %352 = vst.msk [vmem:[#allocation3 + $0xc] sm:$0xf] %vm348, 0
      %353 = vst.msk [vmem:[#allocation3 + $0x10] sm:$0xf] %vm348, 0
      %354 = vst.msk [vmem:[#allocation3 + $0x14] sm:$0xf] %vm348, 0
      %355 = vst.msk [vmem:[#allocation3 + $0x18] sm:$0xf] %vm348, 0
      %356 = vst.msk [vmem:[#allocation3 + $0x1c] sm:$0xf] %vm348, 0
      %357 = vst.msk [vmem:[#allocation3 + $0x20] sm:$0xf] %vm348, 0
      %358 = vst.msk [vmem:[#allocation3 + $0x24] sm:$0xf] %vm348, 0
      %359 = vst.msk [vmem:[#allocation3 + $0x28] sm:$0xf] %vm348, 0
      %360 = vst.msk [vmem:[#allocation3 + $0x2c] sm:$0xf] %vm348, 0
      %361 = vst.msk [vmem:[#allocation2 + $0x1e0] sm:$0xff] %vm335, 0.0
      %362 = vst.msk [vmem:[#allocation2 + $0x1e8] sm:$0xff] %vm335, 0.0
      %363 = vst.msk [vmem:[#allocation2 + $0x1f0] sm:$0xff] %vm335, 0.0
      %364 = vst.msk [vmem:[#allocation2 + $0x1f8] sm:$0xff] %vm335, 0.0
      %365 = vst.msk [vmem:[#allocation2 + $0x200] sm:$0xff] %vm335, 0.0
      %366 = vst.msk [vmem:[#allocation2 + $0x208] sm:$0xff] %vm335, 0.0
      %367 = vst.msk [vmem:[#allocation2 + $0x210] sm:$0xff] %vm335, 0.0
      %368 = vst.msk [vmem:[#allocation2 + $0x218] sm:$0xff] %vm335, 0.0
      %369 = vst.msk [vmem:[#allocation2 + $0x220] sm:$0xff] %vm335, 0.0
      %370 = vst.msk [vmem:[#allocation3 + $0xf0] sm:$0xf] %vm348, 0
      %371 = vst.msk [vmem:[#allocation3 + $0xf4] sm:$0xf] %vm348, 0
      %372 = vst.msk [vmem:[#allocation3 + $0xf8] sm:$0xf] %vm348, 0
      %373 = vst.msk [vmem:[#allocation3 + $0xfc] sm:$0xf] %vm348, 0
      %374 = vst.msk [vmem:[#allocation3 + $0x100] sm:$0xf] %vm348, 0
      %375 = vst.msk [vmem:[#allocation3 + $0x104] sm:$0xf] %vm348, 0
      %376 = vst.msk [vmem:[#allocation3 + $0x108] sm:$0xf] %vm348, 0
      %377 = vst.msk [vmem:[#allocation3 + $0x10c] sm:$0xf] %vm348, 0
      %378 = vst.msk [vmem:[#allocation3 + $0x110] sm:$0xf] %vm348, 0
      %v379 = vld [vmem:[%s300] sm:$0xf]
      %v380 = vld [vmem:[%s300 + $0x4] sm:$0xf]
      %v381 = vld [vmem:[%s300 + $0x8] sm:$0xf]
      %v382 = vld [vmem:[%s300 + $0xc] sm:$0xf]
      %v383 = vld [vmem:[%s300 + $0x10] sm:$0xf]
      %v384 = vld [vmem:[%s300 + $0x14] sm:$0xf]
      %v385 = vld [vmem:[%s300 + $0x18] sm:$0xf]
      %v386 = vld [vmem:[%s300 + $0x1c] sm:$0xf]
      %v387 = vld [vmem:[%s300 + $0x20] sm:$0xf]
      %v388 = vld [vmem:[%s300 + $0x24] sm:$0xf]
      %v389 = vld [vmem:[%s300 + $0x28] sm:$0xf]
      %v390 = vld [vmem:[%s300 + $0x2c] sm:$0xf]
      %v391 = vld [vmem:[%s300 + $0x30] sm:$0xf]
      %v392 = vld [vmem:[%s300 + $0x34] sm:$0xf]
      %v393 = vld [vmem:[%s300 + $0x38] sm:$0xf]
      %v394 = vld [vmem:[%s300 + $0x3c] sm:$0xf]
      %v395 = vld [vmem:[%s300 + $0x40] sm:$0xf]
      %v396 = vld [vmem:[%s300 + $0x44] sm:$0xf]
      %v397 = vld [vmem:[%s300 + $0x48] sm:$0xf]
      %v398 = vld [vmem:[%s300 + $0x4c] sm:$0xf]
      %v399 = vld [vmem:[%s300 + $0x50] sm:$0xf]
      %v400 = vld [vmem:[%s300 + $0x54] sm:$0xf]
      %v401 = vld [vmem:[%s300 + $0x58] sm:$0xf]
      %v402 = vld [vmem:[%s300 + $0x5c] sm:$0xf]
      %vm403 = vcmp.gt.f32.partialorder %v311, 0.0
      %vm404 = vcmp.gt.f32.partialorder %v312, 0.0
      %vm405 = vcmp.gt.f32.partialorder %v313, 0.0
      %vm406 = vcmp.gt.f32.partialorder %v314, 0.0
      %vm407 = vcmp.gt.f32.partialorder %v315, 0.0
      %vm408 = vcmp.gt.f32.partialorder %v316, 0.0
      %vm409 = vcmp.gt.f32.partialorder %v317, 0.0
      %vm410 = vcmp.gt.f32.partialorder %v318, 0.0
      %vm411 = vcmp.gt.f32.partialorder %v319, 0.0
      %vm412 = vcmp.gt.f32.partialorder %v320, 0.0
      %vm413 = vcmp.gt.f32.partialorder %v321, 0.0
      %vm414 = vcmp.gt.f32.partialorder %v322, 0.0
      %vm415 = vcmp.gt.f32.partialorder %v323, 0.0
      %vm416 = vcmp.gt.f32.partialorder %v324, 0.0
      %vm417 = vcmp.gt.f32.partialorder %v325, 0.0
      %vm418 = vcmp.gt.f32.partialorder %v326, 0.0
      %vm419 = vcmp.gt.f32.partialorder %v327, 0.0
      %vm420 = vcmp.gt.f32.partialorder %v328, 0.0
      %vm421 = vcmp.gt.f32.partialorder %v329, 0.0
      %vm422 = vcmp.gt.f32.partialorder %v330, 0.0
      %vm423 = vcmp.gt.f32.partialorder %v331, 0.0
      %vm424 = vcmp.gt.f32.partialorder %v332, 0.0
      %vm425 = vcmp.gt.f32.partialorder %v333, 0.0
      %vm426 = vcmp.gt.f32.partialorder %v334, 0.0
      %v428 = vlaneseq
      %v429 = vshrl.u32 %v428, 7
      %v430 = vsub.s32 0, %v429
      %v431 = vrot.slane %v308, %v430
      %v457 = vunpack.c.l.b16 %v379
      %v458 = vunpack.c.l.b16 %v380
      %v459 = vunpack.c.l.b16 %v381
      %v460 = vunpack.c.l.b16 %v382
      %v461 = vunpack.c.l.b16 %v383
      %v462 = vunpack.c.l.b16 %v384
      %v463 = vunpack.c.l.b16 %v385
      %v464 = vunpack.c.l.b16 %v386
      %v465 = vunpack.c.l.b16 %v387
      %v466 = vunpack.c.l.b16 %v388
      %v467 = vunpack.c.l.b16 %v389
      %v468 = vunpack.c.l.b16 %v390
      %v469 = vunpack.c.l.b16 %v391
      %v470 = vunpack.c.l.b16 %v392
      %v471 = vunpack.c.l.b16 %v393
      %v472 = vunpack.c.l.b16 %v394
      %v473 = vunpack.c.l.b16 %v395
      %v474 = vunpack.c.l.b16 %v396
      %v475 = vunpack.c.l.b16 %v397
      %v476 = vunpack.c.l.b16 %v398
      %v477 = vunpack.c.l.b16 %v399
      %v478 = vunpack.c.l.b16 %v400
      %v479 = vunpack.c.l.b16 %v401
      %v480 = vunpack.c.l.b16 %v402
      %v481 = vpack.c.b16 %v458, %v457
      %v482 = vpack.c.b16 %v460, %v459
      %v483 = vpack.c.b16 %v462, %v461
      %v484 = vpack.c.b16 %v464, %v463
      %v485 = vpack.c.b16 %v466, %v465
      %v486 = vpack.c.b16 %v468, %v467
      %v487 = vpack.c.b16 %v470, %v469
      %v488 = vpack.c.b16 %v472, %v471
      %v489 = vpack.c.b16 %v474, %v473
      %v490 = vpack.c.b16 %v476, %v475
      %v491 = vpack.c.b16 %v478, %v477
      %v492 = vpack.c.b16 %v480, %v479
      %vm493 = vcmask 31744
      %v495 = vsel %vm493, %v481, 0
      %v498 = vsel %vm493, %v482, 0
      %v501 = vsel %vm493, %v483, 0
      %v504 = vsel %vm493, %v484, 0
      %v507 = vsel %vm493, %v485, 0
      %v510 = vsel %vm493, %v486, 0
      %v513 = vsel %vm493, %v487, 0
      %v516 = vsel %vm493, %v488, 0
      %v519 = vsel %vm493, %v489, 0
      %v522 = vsel %vm493, %v490, 0
      %v525 = vsel %vm493, %v491, 0
      %v528 = vsel %vm493, %v492, 0
      %vm530 = vcmask 1041408
      %v532 = vsel %vm530, %v307, 0
      %534 = vmatprep.subr.bf16.mxu0 0
      %535 = vmatpush1.bf16.msra.mxu0 %v532
      %536 = vmatprep.subr.bf16.mxu0 0
      %537 = vmatpush1.bf16.msra.mxu0 0
      %538 = vmatprep.subr.bf16.mxu0 0
      %539 = vmatpush1.bf16.msra.mxu0 0
      %540 = vmatprep.subr.bf16.mxu0 0
      %541 = vmatpush1.bf16.msra.mxu0 0
      %542 = vmatprep.subr.bf16.mxu0 0
      %543 = vmatpush1.bf16.msra.mxu0 0
      %544 = vmatprep.subr.bf16.mxu0 0
      %545 = vmatpush1.bf16.msra.mxu0 0
      %546 = vmatprep.subr.bf16.mxu0 0
      %547 = vmatpush1.bf16.msra.mxu0 0
      %548 = vmatprep.subr.bf16.mxu0 0
      %549 = vmatpush1.bf16.msra.mxu0 0
      %550 = vmatprep.subr.bf16.mxu0 0
      %551 = vmatpush1.bf16.msra.mxu0 0
      %552 = vmatprep.subr.bf16.mxu0 0
      %553 = vmatpush1.bf16.msra.mxu0 0
      %554 = vmatprep.subr.bf16.mxu0 0
      %555 = vmatpush1.bf16.msra.mxu0 0
      %556 = vmatprep.subr.bf16.mxu0 0
      %557 = vmatpush1.bf16.msra.mxu0 0
      %558 = vmatprep.subr.bf16.mxu0 0
      %559 = vmatpush1.bf16.msra.mxu0 0
      %560 = vmatprep.subr.bf16.mxu0 0
      %561 = vmatpush1.bf16.msra.mxu0 0
      %562 = vmatprep.subr.bf16.mxu0 0
      %563 = vmatpush1.bf16.msra.mxu0 0
      %564 = vmatprep.subr.bf16.mxu0 0
      %565 = vmatpush1.bf16.msra.mxu0 0
      %566 = vmatprep.mubr.bf16.mxu0 0
      %567 = vmatmul.mubr.bf16.gmra.mrb[0].mxu0 %v495
      %v568 = vpop.f32.mrb[0].mxu0
      %v569 = vadd.f32 %v431, %v568
      %v570 = vpop.f32.mrb[0].mxu0
      %v571 = vpop.f32.mrb[0].mxu0
      %v572 = vadd.f32 %v431, %v571
      %v573 = vpop.f32.mrb[0].mxu0
      %574 = vmatprep.mubr.bf16.mxu0 0
      %575 = vmatmul.mubr.bf16.gmra.mrb[0].mxu0 %v498
      %v576 = vpop.f32.mrb[0].mxu0
      %v577 = vadd.f32 %v431, %v576
      %v578 = vpop.f32.mrb[0].mxu0
      %v579 = vpop.f32.mrb[0].mxu0
      %v580 = vadd.f32 %v431, %v579
      %v581 = vpop.f32.mrb[0].mxu0
      %582 = vmatprep.mubr.bf16.mxu0 0
      %583 = vmatmul.mubr.bf16.gmra.mrb[0].mxu0 %v501
      %v584 = vpop.f32.mrb[0].mxu0
      %v585 = vadd.f32 %v431, %v584
      %v586 = vpop.f32.mrb[0].mxu0
      %v587 = vpop.f32.mrb[0].mxu0
      %v588 = vadd.f32 %v431, %v587
      %v589 = vpop.f32.mrb[0].mxu0
      %590 = vmatprep.mubr.bf16.mxu0 0
      %591 = vmatmul.mubr.bf16.gmra.mrb[0].mxu0 %v504
      %v592 = vpop.f32.mrb[0].mxu0
      %v593 = vadd.f32 %v431, %v592
      %v594 = vpop.f32.mrb[0].mxu0
      %v595 = vpop.f32.mrb[0].mxu0
      %v596 = vadd.f32 %v431, %v595
      %v597 = vpop.f32.mrb[0].mxu0
      %598 = vmatprep.mubr.bf16.mxu0 0
      %599 = vmatmul.mubr.bf16.gmra.mrb[0].mxu0 %v507
      %v600 = vpop.f32.mrb[0].mxu0
      %v601 = vadd.f32 %v431, %v600
      %v602 = vpop.f32.mrb[0].mxu0
      %v603 = vpop.f32.mrb[0].mxu0
      %v604 = vadd.f32 %v431, %v603
      %v605 = vpop.f32.mrb[0].mxu0
      %606 = vmatprep.mubr.bf16.mxu0 0
      %607 = vmatmul.mubr.bf16.gmra.mrb[0].mxu0 %v510
      %v608 = vpop.f32.mrb[0].mxu0
      %v609 = vadd.f32 %v431, %v608
      %v610 = vpop.f32.mrb[0].mxu0
      %v611 = vpop.f32.mrb[0].mxu0
      %v612 = vadd.f32 %v431, %v611
      %v613 = vpop.f32.mrb[0].mxu0
      %614 = vmatprep.mubr.bf16.mxu0 0
      %615 = vmatmul.mubr.bf16.gmra.mrb[0].mxu0 %v513
      %v616 = vpop.f32.mrb[0].mxu0
      %v617 = vadd.f32 %v431, %v616
      %v618 = vpop.f32.mrb[0].mxu0
      %v619 = vpop.f32.mrb[0].mxu0
      %v620 = vadd.f32 %v431, %v619
      %v621 = vpop.f32.mrb[0].mxu0
      %622 = vmatprep.mubr.bf16.mxu0 0
      %623 = vmatmul.mubr.bf16.gmra.mrb[0].mxu0 %v516
      %v624 = vpop.f32.mrb[0].mxu0
      %v625 = vadd.f32 %v431, %v624
      %v626 = vpop.f32.mrb[0].mxu0
      %v627 = vpop.f32.mrb[0].mxu0
      %v628 = vadd.f32 %v431, %v627
      %v629 = vpop.f32.mrb[0].mxu0
      %630 = vmatprep.mubr.bf16.mxu0 0
      %631 = vmatmul.mubr.bf16.gmra.mrb[0].mxu0 %v519
      %v632 = vpop.f32.mrb[0].mxu0
      %v633 = vadd.f32 %v431, %v632
      %v634 = vpop.f32.mrb[0].mxu0
      %v635 = vpop.f32.mrb[0].mxu0
      %v636 = vadd.f32 %v431, %v635
      %v637 = vpop.f32.mrb[0].mxu0
      %638 = vmatprep.mubr.bf16.mxu0 0
      %639 = vmatmul.mubr.bf16.gmra.mrb[0].mxu0 %v522
      %v640 = vpop.f32.mrb[0].mxu0
      %v641 = vadd.f32 %v431, %v640
      %v642 = vpop.f32.mrb[0].mxu0
      %v643 = vpop.f32.mrb[0].mxu0
      %v644 = vadd.f32 %v431, %v643
      %v645 = vpop.f32.mrb[0].mxu0
      %646 = vmatprep.mubr.bf16.mxu0 0
      %647 = vmatmul.mubr.bf16.gmra.mrb[0].mxu0 %v525
      %v648 = vpop.f32.mrb[0].mxu0
      %v649 = vadd.f32 %v431, %v648
      %v650 = vpop.f32.mrb[0].mxu0
      %v651 = vpop.f32.mrb[0].mxu0
      %v652 = vadd.f32 %v431, %v651
      %v653 = vpop.f32.mrb[0].mxu0
      %654 = vmatprep.mubr.bf16.mxu0 0
      %655 = vmatmul.mubr.bf16.gmra.mrb[0].mxu0 %v528
      %v656 = vpop.f32.mrb[0].mxu0
      %v657 = vadd.f32 %v431, %v656
      %v658 = vpop.f32.mrb[0].mxu0
      %v659 = vpop.f32.mrb[0].mxu0
      %v660 = vadd.f32 %v431, %v659
      %v661 = vpop.f32.mrb[0].mxu0
      %662 = vdwg.mxu0
      %v663 = vmax.f32 %v569, 0.0
      %v664 = vmax.f32 %v572, 0.0
      %v665 = vmax.f32 %v577, 0.0
      %v666 = vmax.f32 %v580, 0.0
      %v667 = vmax.f32 %v585, 0.0
      %v668 = vmax.f32 %v588, 0.0
      %v669 = vmax.f32 %v593, 0.0
      %v670 = vmax.f32 %v596, 0.0
      %v671 = vmax.f32 %v601, 0.0
      %v672 = vmax.f32 %v604, 0.0
      %v673 = vmax.f32 %v609, 0.0
      %v674 = vmax.f32 %v612, 0.0
      %v675 = vmax.f32 %v617, 0.0
      %v676 = vmax.f32 %v620, 0.0
      %v677 = vmax.f32 %v625, 0.0
      %v678 = vmax.f32 %v628, 0.0
      %v679 = vmax.f32 %v633, 0.0
      %v680 = vmax.f32 %v636, 0.0
      %v681 = vmax.f32 %v641, 0.0
      %v682 = vmax.f32 %v644, 0.0
      %v683 = vmax.f32 %v649, 0.0
      %v684 = vmax.f32 %v652, 0.0
      %v685 = vmax.f32 %v657, 0.0
      %v686 = vmax.f32 %v660, 0.0
      %v687 = vsel %vm403, 1, 0
      %v688 = vsel %vm404, 1, 0
      %v689 = vsel %vm405, 1, 0
      %v690 = vsel %vm406, 1, 0
      %v691 = vsel %vm407, 1, 0
      %v692 = vsel %vm408, 1, 0
      %v693 = vsel %vm409, 1, 0
      %v694 = vsel %vm410, 1, 0
      %v695 = vsel %vm411, 1, 0
      %v696 = vsel %vm412, 1, 0
      %v697 = vsel %vm413, 1, 0
      %v698 = vsel %vm414, 1, 0
      %v699 = vsel %vm415, 1, 0
      %v700 = vsel %vm416, 1, 0
      %v701 = vsel %vm417, 1, 0
      %v702 = vsel %vm418, 1, 0
      %v703 = vsel %vm419, 1, 0
      %v704 = vsel %vm420, 1, 0
      %v705 = vsel %vm421, 1, 0
      %v706 = vsel %vm422, 1, 0
      %v707 = vsel %vm423, 1, 0
      %v708 = vsel %vm424, 1, 0
      %v709 = vsel %vm425, 1, 0
      %v710 = vsel %vm426, 1, 0
      %711 = vset.pattern.permute.xlu0 0
      %712 = vperm.xlu0 %711, %v687
      %v713 = vpop.permute.xlu0 %712
      %714 = vset.pattern.permute.xlu0 0
      %715 = vperm.xlu0 %714, %v688
      %v716 = vpop.permute.xlu0 %715
      %717 = vset.pattern.permute.xlu0 0
      %718 = vperm.xlu0 %717, %v689
      %v719 = vpop.permute.xlu0 %718
      %720 = vset.pattern.permute.xlu0 0
      %721 = vperm.xlu0 %720, %v690
      %v722 = vpop.permute.xlu0 %721
      %723 = vset.pattern.permute.xlu0 0
      %724 = vperm.xlu0 %723, %v691
      %v725 = vpop.permute.xlu0 %724
      %726 = vset.pattern.permute.xlu0 0
      %727 = vperm.xlu0 %726, %v692
      %v728 = vpop.permute.xlu0 %727
      %729 = vset.pattern.permute.xlu0 0
      %730 = vperm.xlu0 %729, %v693
      %v731 = vpop.permute.xlu0 %730
      %732 = vset.pattern.permute.xlu0 0
      %733 = vperm.xlu0 %732, %v694
      %v734 = vpop.permute.xlu0 %733
      %735 = vset.pattern.permute.xlu0 0
      %736 = vperm.xlu0 %735, %v695
      %v737 = vpop.permute.xlu0 %736
      %738 = vset.pattern.permute.xlu0 0
      %739 = vperm.xlu0 %738, %v696
      %v740 = vpop.permute.xlu0 %739
      %741 = vset.pattern.permute.xlu0 0
      %742 = vperm.xlu0 %741, %v697
      %v743 = vpop.permute.xlu0 %742
      %744 = vset.pattern.permute.xlu0 0
      %745 = vperm.xlu0 %744, %v698
      %v746 = vpop.permute.xlu0 %745
      %747 = vset.pattern.permute.xlu0 0
      %748 = vperm.xlu0 %747, %v699
      %v749 = vpop.permute.xlu0 %748
      %750 = vset.pattern.permute.xlu0 0
      %751 = vperm.xlu0 %750, %v700
      %v752 = vpop.permute.xlu0 %751
      %753 = vset.pattern.permute.xlu0 0
      %754 = vperm.xlu0 %753, %v701
      %v755 = vpop.permute.xlu0 %754
      %756 = vset.pattern.permute.xlu0 0
      %757 = vperm.xlu0 %756, %v702
      %v758 = vpop.permute.xlu0 %757
      %759 = vset.pattern.permute.xlu0 0
      %760 = vperm.xlu0 %759, %v703
      %v761 = vpop.permute.xlu0 %760
      %762 = vset.pattern.permute.xlu0 0
      %763 = vperm.xlu0 %762, %v704
      %v764 = vpop.permute.xlu0 %763
      %765 = vset.pattern.permute.xlu0 0
      %766 = vperm.xlu0 %765, %v705
      %v767 = vpop.permute.xlu0 %766
      %768 = vset.pattern.permute.xlu0 0
      %769 = vperm.xlu0 %768, %v706
      %v770 = vpop.permute.xlu0 %769
      %771 = vset.pattern.permute.xlu0 0
      %772 = vperm.xlu0 %771, %v707
      %v773 = vpop.permute.xlu0 %772
      %774 = vset.pattern.permute.xlu0 0
      %775 = vperm.xlu0 %774, %v708
      %v776 = vpop.permute.xlu0 %775
      %777 = vset.pattern.permute.xlu0 0
      %778 = vperm.xlu0 %777, %v709
      %v779 = vpop.permute.xlu0 %778
      %780 = vset.pattern.permute.xlu0 0
      %781 = vperm.xlu0 %780, %v710
      %v782 = vpop.permute.xlu0 %781
      %vm783 = vcmp.eq.s32.totalorder %v713, 1
      %vm784 = vcmp.eq.s32.totalorder %v716, 1
      %vm785 = vcmp.eq.s32.totalorder %v719, 1
      %vm786 = vcmp.eq.s32.totalorder %v722, 1
      %vm787 = vcmp.eq.s32.totalorder %v725, 1
      %vm788 = vcmp.eq.s32.totalorder %v728, 1
      %vm789 = vcmp.eq.s32.totalorder %v731, 1
      %vm790 = vcmp.eq.s32.totalorder %v734, 1
      %vm791 = vcmp.eq.s32.totalorder %v737, 1
      %vm792 = vcmp.eq.s32.totalorder %v740, 1
      %vm793 = vcmp.eq.s32.totalorder %v743, 1
      %vm794 = vcmp.eq.s32.totalorder %v746, 1
      %vm795 = vcmp.eq.s32.totalorder %v749, 1
      %vm796 = vcmp.eq.s32.totalorder %v752, 1
      %vm797 = vcmp.eq.s32.totalorder %v755, 1
      %vm798 = vcmp.eq.s32.totalorder %v758, 1
      %vm799 = vcmp.eq.s32.totalorder %v761, 1
      %vm800 = vcmp.eq.s32.totalorder %v764, 1
      %vm801 = vcmp.eq.s32.totalorder %v767, 1
      %vm802 = vcmp.eq.s32.totalorder %v770, 1
      %vm803 = vcmp.eq.s32.totalorder %v773, 1
      %vm804 = vcmp.eq.s32.totalorder %v776, 1
      %vm805 = vcmp.eq.s32.totalorder %v779, 1
      %vm806 = vcmp.eq.s32.totalorder %v782, 1
      %v807 = vsel %vm783, %v663, 0.0
      %v808 = vsel %vm784, %v664, 0.0
      %v809 = vsel %vm785, %v665, 0.0
      %v810 = vsel %vm786, %v666, 0.0
      %v811 = vsel %vm787, %v667, 0.0
      %v812 = vsel %vm788, %v668, 0.0
      %v813 = vsel %vm789, %v669, 0.0
      %v814 = vsel %vm790, %v670, 0.0
      %v815 = vsel %vm791, %v671, 0.0
      %v816 = vsel %vm792, %v672, 0.0
      %v817 = vsel %vm793, %v673, 0.0
      %v818 = vsel %vm794, %v674, 0.0
      %v819 = vsel %vm795, %v675, 0.0
      %v820 = vsel %vm796, %v676, 0.0
      %v821 = vsel %vm797, %v677, 0.0
      %v822 = vsel %vm798, %v678, 0.0
      %v823 = vsel %vm799, %v679, 0.0
      %v824 = vsel %vm800, %v680, 0.0
      %v825 = vsel %vm801, %v681, 0.0
      %v826 = vsel %vm802, %v682, 0.0
      %v827 = vsel %vm803, %v683, 0.0
      %v828 = vsel %vm804, %v684, 0.0
      %v829 = vsel %vm805, %v685, 0.0
      %v830 = vsel %vm806, %v686, 0.0
      %831 = vst.msk [vmem:[#allocation2 + $0x60] sm:$0xff] %vm335, %v807
      %832 = vst.msk [vmem:[#allocation2 + $0x68] sm:$0xff] %vm335, %v808
      %833 = vst.msk [vmem:[#allocation2 + $0x70] sm:$0xff] %vm335, %v809
      %834 = vst.msk [vmem:[#allocation2 + $0x78] sm:$0xff] %vm335, %v810
      %835 = vst.msk [vmem:[#allocation2 + $0x80] sm:$0xff] %vm335, %v811
      %836 = vst.msk [vmem:[#allocation2 + $0x88] sm:$0xff] %vm335, %v812
      %837 = vst.msk [vmem:[#allocation2 + $0x90] sm:$0xff] %vm335, %v813
      %838 = vst.msk [vmem:[#allocation2 + $0x98] sm:$0xff] %vm335, %v814
      %839 = vst.msk [vmem:[#allocation2 + $0xa0] sm:$0xff] %vm335, %v815
      %840 = vst.msk [vmem:[#allocation2 + $0xa8] sm:$0xff] %vm335, %v816
      %841 = vst.msk [vmem:[#allocation2 + $0xb0] sm:$0xff] %vm335, %v817
      %842 = vst.msk [vmem:[#allocation2 + $0xb8] sm:$0xff] %vm335, %v818
      %843 = vst.msk [vmem:[#allocation2 + $0xc0] sm:$0xff] %vm335, %v819
      %844 = vst.msk [vmem:[#allocation2 + $0xc8] sm:$0xff] %vm335, %v820
      %845 = vst.msk [vmem:[#allocation2 + $0xd0] sm:$0xff] %vm335, %v821
      %846 = vst.msk [vmem:[#allocation2 + $0xd8] sm:$0xff] %vm335, %v822
      %847 = vst.msk [vmem:[#allocation2 + $0xe0] sm:$0xff] %vm335, %v823
      %848 = vst.msk [vmem:[#allocation2 + $0xe8] sm:$0xff] %vm335, %v824
      %849 = vst.msk [vmem:[#allocation2 + $0xf0] sm:$0xff] %vm335, %v825
      %850 = vst.msk [vmem:[#allocation2 + $0xf8] sm:$0xff] %vm335, %v826
      %851 = vst.msk [vmem:[#allocation2 + $0x100] sm:$0xff] %vm335, %v827
      %852 = vst.msk [vmem:[#allocation2 + $0x108] sm:$0xff] %vm335, %v828
      %853 = vst.msk [vmem:[#allocation2 + $0x110] sm:$0xff] %vm335, %v829
      %854 = vst.msk [vmem:[#allocation2 + $0x118] sm:$0xff] %vm335, %v830
      %v855 = vld [vmem:[%s300 + $0x60] sm:$0xf]
      %v856 = vld [vmem:[%s300 + $0x64] sm:$0xf]
      %v857 = vld [vmem:[%s300 + $0x68] sm:$0xf]
      %v858 = vld [vmem:[%s300 + $0x6c] sm:$0xf]
      %v859 = vld [vmem:[%s300 + $0x70] sm:$0xf]
      %v860 = vld [vmem:[%s300 + $0x74] sm:$0xf]
      %v861 = vld [vmem:[%s300 + $0x78] sm:$0xf]
      %v862 = vld [vmem:[%s300 + $0x7c] sm:$0xf]
      %v863 = vld [vmem:[%s300 + $0x80] sm:$0xf]
      %v864 = vld [vmem:[%s300 + $0x84] sm:$0xf]
      %v865 = vld [vmem:[%s300 + $0x88] sm:$0xf]
      %v866 = vld [vmem:[%s300 + $0x8c] sm:$0xf]
      %v867 = vld [vmem:[%s300 + $0x90] sm:$0xf]
      %v868 = vld [vmem:[%s300 + $0x94] sm:$0xf]
      %v869 = vld [vmem:[%s300 + $0x98] sm:$0xf]
      %v870 = vld [vmem:[%s300 + $0x9c] sm:$0xf]
      %v871 = vld [vmem:[%s300 + $0xa0] sm:$0xf]
      %v872 = vld [vmem:[%s300 + $0xa4] sm:$0xf]
      %v873 = vld [vmem:[%s300 + $0xa8] sm:$0xf]
      %v874 = vld [vmem:[%s300 + $0xac] sm:$0xf]
      %v875 = vld [vmem:[%s300 + $0xb0] sm:$0xf]
      %v876 = vld [vmem:[%s300 + $0xb4] sm:$0xf]
      %v877 = vld [vmem:[%s300 + $0xb8] sm:$0xf]
      %v878 = vld [vmem:[%s300 + $0xbc] sm:$0xf]
      %v903 = vunpack.c.l.b16 %v855
      %v904 = vunpack.c.l.b16 %v856
      %v905 = vunpack.c.l.b16 %v857
      %v906 = vunpack.c.l.b16 %v858
      %v907 = vunpack.c.l.b16 %v859
      %v908 = vunpack.c.l.b16 %v860
      %v909 = vunpack.c.l.b16 %v861
      %v910 = vunpack.c.l.b16 %v862
      %v911 = vunpack.c.l.b16 %v863
      %v912 = vunpack.c.l.b16 %v864
      %v913 = vunpack.c.l.b16 %v865
      %v914 = vunpack.c.l.b16 %v866
      %v915 = vunpack.c.l.b16 %v867
      %v916 = vunpack.c.l.b16 %v868
      %v917 = vunpack.c.l.b16 %v869
      %v918 = vunpack.c.l.b16 %v870
      %v919 = vunpack.c.l.b16 %v871
      %v920 = vunpack.c.l.b16 %v872
      %v921 = vunpack.c.l.b16 %v873
      %v922 = vunpack.c.l.b16 %v874
      %v923 = vunpack.c.l.b16 %v875
      %v924 = vunpack.c.l.b16 %v876
      %v925 = vunpack.c.l.b16 %v877
      %v926 = vunpack.c.l.b16 %v878
      %v927 = vpack.c.b16 %v904, %v903
      %v928 = vpack.c.b16 %v906, %v905
      %v929 = vpack.c.b16 %v908, %v907
      %v930 = vpack.c.b16 %v910, %v909
      %v931 = vpack.c.b16 %v912, %v911
      %v932 = vpack.c.b16 %v914, %v913
      %v933 = vpack.c.b16 %v916, %v915
      %v934 = vpack.c.b16 %v918, %v917
      %v935 = vpack.c.b16 %v920, %v919
      %v936 = vpack.c.b16 %v922, %v921
      %v937 = vpack.c.b16 %v924, %v923
      %v938 = vpack.c.b16 %v926, %v925
      %v940 = vsel %vm493, %v927, 0
      %v943 = vsel %vm493, %v928, 0
      %v946 = vsel %vm493, %v929, 0
      %v949 = vsel %vm493, %v930, 0
      %v952 = vsel %vm493, %v931, 0
      %v955 = vsel %vm493, %v932, 0
      %v958 = vsel %vm493, %v933, 0
      %v961 = vsel %vm493, %v934, 0
      %v964 = vsel %vm493, %v935, 0
      %v967 = vsel %vm493, %v936, 0
      %v970 = vsel %vm493, %v937, 0
      %v973 = vsel %vm493, %v938, 0
      %975 = vmatprep.subr.bf16.mxu0 0
      %976 = vmatpush1.bf16.msra.mxu0 %v532
      %977 = vmatprep.subr.bf16.mxu0 0
      %978 = vmatpush1.bf16.msra.mxu0 0
      %979 = vmatprep.subr.bf16.mxu0 0
      %980 = vmatpush1.bf16.msra.mxu0 0
      %981 = vmatprep.subr.bf16.mxu0 0
      %982 = vmatpush1.bf16.msra.mxu0 0
      %983 = vmatprep.subr.bf16.mxu0 0
      %984 = vmatpush1.bf16.msra.mxu0 0
      %985 = vmatprep.subr.bf16.mxu0 0
      %986 = vmatpush1.bf16.msra.mxu0 0
      %987 = vmatprep.subr.bf16.mxu0 0
      %988 = vmatpush1.bf16.msra.mxu0 0
      %989 = vmatprep.subr.bf16.mxu0 0
      %990 = vmatpush1.bf16.msra.mxu0 0
      %991 = vmatprep.subr.bf16.mxu0 0
      %992 = vmatpush1.bf16.msra.mxu0 0
      %993 = vmatprep.subr.bf16.mxu0 0
      %994 = vmatpush1.bf16.msra.mxu0 0
      %995 = vmatprep.subr.bf16.mxu0 0
      %996 = vmatpush1.bf16.msra.mxu0 0
      %997 = vmatprep.subr.bf16.mxu0 0
      %998 = vmatpush1.bf16.msra.mxu0 0
      %999 = vmatprep.subr.bf16.mxu0 0
      %1000 = vmatpush1.bf16.msra.mxu0 0
      %1001 = vmatprep.subr.bf16.mxu0 0
      %1002 = vmatpush1.bf16.msra.mxu0 0
      %1003 = vmatprep.subr.bf16.mxu0 0
      %1004 = vmatpush1.bf16.msra.mxu0 0
      %1005 = vmatprep.subr.bf16.mxu0 0
      %1006 = vmatpush1.bf16.msra.mxu0 0
      %1007 = vmatprep.mubr.bf16.mxu0 0
      %1008 = vmatmul.mubr.bf16.gmra.mrb[0].mxu0 %v940
      %v1009 = vpop.f32.mrb[0].mxu0
      %v1010 = vadd.f32 %v431, %v1009
      %v1011 = vpop.f32.mrb[0].mxu0
      %v1012 = vpop.f32.mrb[0].mxu0
      %v1013 = vadd.f32 %v431, %v1012
      %v1014 = vpop.f32.mrb[0].mxu0
      %1015 = vmatprep.mubr.bf16.mxu0 0
      %1016 = vmatmul.mubr.bf16.gmra.mrb[0].mxu0 %v943
      %v1017 = vpop.f32.mrb[0].mxu0
      %v1018 = vadd.f32 %v431, %v1017
      %v1019 = vpop.f32.mrb[0].mxu0
      %v1020 = vpop.f32.mrb[0].mxu0
      %v1021 = vadd.f32 %v431, %v1020
      %v1022 = vpop.f32.mrb[0].mxu0
      %1023 = vmatprep.mubr.bf16.mxu0 0
      %1024 = vmatmul.mubr.bf16.gmra.mrb[0].mxu0 %v946
      %v1025 = vpop.f32.mrb[0].mxu0
      %v1026 = vadd.f32 %v431, %v1025
      %v1027 = vpop.f32.mrb[0].mxu0
      %v1028 = vpop.f32.mrb[0].mxu0
      %v1029 = vadd.f32 %v431, %v1028
      %v1030 = vpop.f32.mrb[0].mxu0
      %1031 = vmatprep.mubr.bf16.mxu0 0
      %1032 = vmatmul.mubr.bf16.gmra.mrb[0].mxu0 %v949
      %v1033 = vpop.f32.mrb[0].mxu0
      %v1034 = vadd.f32 %v431, %v1033
      %v1035 = vpop.f32.mrb[0].mxu0
      %v1036 = vpop.f32.mrb[0].mxu0
      %v1037 = vadd.f32 %v431, %v1036
      %v1038 = vpop.f32.mrb[0].mxu0
      %1039 = vmatprep.mubr.bf16.mxu0 0
      %1040 = vmatmul.mubr.bf16.gmra.mrb[0].mxu0 %v952
      %v1041 = vpop.f32.mrb[0].mxu0
      %v1042 = vadd.f32 %v431, %v1041
      %v1043 = vpop.f32.mrb[0].mxu0
      %v1044 = vpop.f32.mrb[0].mxu0
      %v1045 = vadd.f32 %v431, %v1044
      %v1046 = vpop.f32.mrb[0].mxu0
      %1047 = vmatprep.mubr.bf16.mxu0 0
      %1048 = vmatmul.mubr.bf16.gmra.mrb[0].mxu0 %v955
      %v1049 = vpop.f32.mrb[0].mxu0
      %v1050 = vadd.f32 %v431, %v1049
      %v1051 = vpop.f32.mrb[0].mxu0
      %v1052 = vpop.f32.mrb[0].mxu0
      %v1053 = vadd.f32 %v431, %v1052
      %v1054 = vpop.f32.mrb[0].mxu0
      %1055 = vmatprep.mubr.bf16.mxu0 0
      %1056 = vmatmul.mubr.bf16.gmra.mrb[0].mxu0 %v958
      %v1057 = vpop.f32.mrb[0].mxu0
      %v1058 = vadd.f32 %v431, %v1057
      %v1059 = vpop.f32.mrb[0].mxu0
      %v1060 = vpop.f32.mrb[0].mxu0
      %v1061 = vadd.f32 %v431, %v1060
      %v1062 = vpop.f32.mrb[0].mxu0
      %1063 = vmatprep.mubr.bf16.mxu0 0
      %1064 = vmatmul.mubr.bf16.gmra.mrb[0].mxu0 %v961
      %v1065 = vpop.f32.mrb[0].mxu0
      %v1066 = vadd.f32 %v431, %v1065
      %v1067 = vpop.f32.mrb[0].mxu0
      %v1068 = vpop.f32.mrb[0].mxu0
      %v1069 = vadd.f32 %v431, %v1068
      %v1070 = vpop.f32.mrb[0].mxu0
      %1071 = vmatprep.mubr.bf16.mxu0 0
      %1072 = vmatmul.mubr.bf16.gmra.mrb[0].mxu0 %v964
      %v1073 = vpop.f32.mrb[0].mxu0
      %v1074 = vadd.f32 %v431, %v1073
      %v1075 = vpop.f32.mrb[0].mxu0
      %v1076 = vpop.f32.mrb[0].mxu0
      %v1077 = vadd.f32 %v431, %v1076
      %v1078 = vpop.f32.mrb[0].mxu0
      %1079 = vmatprep.mubr.bf16.mxu0 0
      %1080 = vmatmul.mubr.bf16.gmra.mrb[0].mxu0 %v967
      %v1081 = vpop.f32.mrb[0].mxu0
      %v1082 = vadd.f32 %v431, %v1081
      %v1083 = vpop.f32.mrb[0].mxu0
      %v1084 = vpop.f32.mrb[0].mxu0
      %v1085 = vadd.f32 %v431, %v1084
      %v1086 = vpop.f32.mrb[0].mxu0
      %1087 = vmatprep.mubr.bf16.mxu0 0
      %1088 = vmatmul.mubr.bf16.gmra.mrb[0].mxu0 %v970
      %v1089 = vpop.f32.mrb[0].mxu0
      %v1090 = vadd.f32 %v431, %v1089
      %v1091 = vpop.f32.mrb[0].mxu0
      %v1092 = vpop.f32.mrb[0].mxu0
      %v1093 = vadd.f32 %v431, %v1092
      %v1094 = vpop.f32.mrb[0].mxu0
      %1095 = vmatprep.mubr.bf16.mxu0 0
      %1096 = vmatmul.mubr.bf16.gmra.mrb[0].mxu0 %v973
      %v1097 = vpop.f32.mrb[0].mxu0
      %v1098 = vadd.f32 %v431, %v1097
      %v1099 = vpop.f32.mrb[0].mxu0
      %v1100 = vpop.f32.mrb[0].mxu0
      %v1101 = vadd.f32 %v431, %v1100
      %v1102 = vpop.f32.mrb[0].mxu0
      %1103 = vdwg.mxu0
      %v1104 = vmax.f32 %v1010, 0.0
      %v1105 = vmax.f32 %v1013, 0.0
      %v1106 = vmax.f32 %v1018, 0.0
      %v1107 = vmax.f32 %v1021, 0.0
      %v1108 = vmax.f32 %v1026, 0.0
      %v1109 = vmax.f32 %v1029, 0.0
      %v1110 = vmax.f32 %v1034, 0.0
      %v1111 = vmax.f32 %v1037, 0.0
      %v1112 = vmax.f32 %v1042, 0.0
      %v1113 = vmax.f32 %v1045, 0.0
      %v1114 = vmax.f32 %v1050, 0.0
      %v1115 = vmax.f32 %v1053, 0.0
      %v1116 = vmax.f32 %v1058, 0.0
      %v1117 = vmax.f32 %v1061, 0.0
      %v1118 = vmax.f32 %v1066, 0.0
      %v1119 = vmax.f32 %v1069, 0.0
      %v1120 = vmax.f32 %v1074, 0.0
      %v1121 = vmax.f32 %v1077, 0.0
      %v1122 = vmax.f32 %v1082, 0.0
      %v1123 = vmax.f32 %v1085, 0.0
      %v1124 = vmax.f32 %v1090, 0.0
      %v1125 = vmax.f32 %v1093, 0.0
      %v1126 = vmax.f32 %v1098, 0.0
      %v1127 = vmax.f32 %v1101, 0.0
      %v1128 = vsel %vm783, %v1104, 0.0
      %v1129 = vsel %vm784, %v1105, 0.0
      %v1130 = vsel %vm785, %v1106, 0.0
      %v1131 = vsel %vm786, %v1107, 0.0
      %v1132 = vsel %vm787, %v1108, 0.0
      %v1133 = vsel %vm788, %v1109, 0.0
      %v1134 = vsel %vm789, %v1110, 0.0
      %v1135 = vsel %vm790, %v1111, 0.0
      %v1136 = vsel %vm791, %v1112, 0.0
      %v1137 = vsel %vm792, %v1113, 0.0
      %v1138 = vsel %vm793, %v1114, 0.0
      %v1139 = vsel %vm794, %v1115, 0.0
      %v1140 = vsel %vm795, %v1116, 0.0
      %v1141 = vsel %vm796, %v1117, 0.0
      %v1142 = vsel %vm797, %v1118, 0.0
      %v1143 = vsel %vm798, %v1119, 0.0
      %v1144 = vsel %vm799, %v1120, 0.0
      %v1145 = vsel %vm800, %v1121, 0.0
      %v1146 = vsel %vm801, %v1122, 0.0
      %v1147 = vsel %vm802, %v1123, 0.0
      %v1148 = vsel %vm803, %v1124, 0.0
      %v1149 = vsel %vm804, %v1125, 0.0
      %v1150 = vsel %vm805, %v1126, 0.0
      %v1151 = vsel %vm806, %v1127, 0.0
      %1152 = vst.msk [vmem:[#allocation2 + $0x120] sm:$0xff] %vm335, %v1128
      %1153 = vst.msk [vmem:[#allocation2 + $0x128] sm:$0xff] %vm335, %v1129
      %1154 = vst.msk [vmem:[#allocation2 + $0x130] sm:$0xff] %vm335, %v1130
      %1155 = vst.msk [vmem:[#allocation2 + $0x138] sm:$0xff] %vm335, %v1131
      %1156 = vst.msk [vmem:[#allocation2 + $0x140] sm:$0xff] %vm335, %v1132
      %1157 = vst.msk [vmem:[#allocation2 + $0x148] sm:$0xff] %vm335, %v1133
      %1158 = vst.msk [vmem:[#allocation2 + $0x150] sm:$0xff] %vm335, %v1134
      %1159 = vst.msk [vmem:[#allocation2 + $0x158] sm:$0xff] %vm335, %v1135
      %1160 = vst.msk [vmem:[#allocation2 + $0x160] sm:$0xff] %vm335, %v1136
      %1161 = vst.msk [vmem:[#allocation2 + $0x168] sm:$0xff] %vm335, %v1137
      %1162 = vst.msk [vmem:[#allocation2 + $0x170] sm:$0xff] %vm335, %v1138
      %1163 = vst.msk [vmem:[#allocation2 + $0x178] sm:$0xff] %vm335, %v1139
      %1164 = vst.msk [vmem:[#allocation2 + $0x180] sm:$0xff] %vm335, %v1140
      %1165 = vst.msk [vmem:[#allocation2 + $0x188] sm:$0xff] %vm335, %v1141
      %1166 = vst.msk [vmem:[#allocation2 + $0x190] sm:$0xff] %vm335, %v1142
      %1167 = vst.msk [vmem:[#allocation2 + $0x198] sm:$0xff] %vm335, %v1143
      %1168 = vst.msk [vmem:[#allocation2 + $0x1a0] sm:$0xff] %vm335, %v1144
      %1169 = vst.msk [vmem:[#allocation2 + $0x1a8] sm:$0xff] %vm335, %v1145
      %1170 = vst.msk [vmem:[#allocation2 + $0x1b0] sm:$0xff] %vm335, %v1146
      %1171 = vst.msk [vmem:[#allocation2 + $0x1b8] sm:$0xff] %vm335, %v1147
      %1172 = vst.msk [vmem:[#allocation2 + $0x1c0] sm:$0xff] %vm335, %v1148
      %1173 = vst.msk [vmem:[#allocation2 + $0x1c8] sm:$0xff] %vm335, %v1149
      %1174 = vst.msk [vmem:[#allocation2 + $0x1d0] sm:$0xff] %vm335, %v1150
      %1175 = vst.msk [vmem:[#allocation2 + $0x1d8] sm:$0xff] %vm335, %v1151
      %v1176 = vld [vmem:[#allocation2 + $0x47] sm:$0xff]
      %v1177 = vld [vmem:[#allocation2 + $0x4f] sm:$0xff]
      %v1178 = vld [vmem:[#allocation2 + $0x57] sm:$0xff]
      %v1179 = vld [vmem:[#allocation2 + $0x5f] sm:$0xff]
      %v1180 = vld [vmem:[#allocation2 + $0x67] sm:$0xff]
      %v1181 = vld [vmem:[#allocation2 + $0x6f] sm:$0xff]
      %v1182 = vld [vmem:[#allocation2 + $0x77] sm:$0xff]
      %v1183 = vld [vmem:[#allocation2 + $0x7f] sm:$0xff]
      %v1184 = vld [vmem:[#allocation2 + $0x87] sm:$0xff]
      %v1185 = vld [vmem:[#allocation2 + $0x8f] sm:$0xff]
      %v1186 = vld [vmem:[#allocation2 + $0x97] sm:$0xff]
      %v1187 = vld [vmem:[#allocation2 + $0x9f] sm:$0xff]
      %v1188 = vld [vmem:[#allocation2 + $0xa7] sm:$0xff]
      %v1189 = vld [vmem:[#allocation2 + $0xaf] sm:$0xff]
      %v1190 = vld [vmem:[#allocation2 + $0xb7] sm:$0xff]
      %v1191 = vld [vmem:[#allocation2 + $0xbf] sm:$0xff]
      %v1192 = vld [vmem:[#allocation2 + $0xc7] sm:$0xff]
      %v1193 = vld [vmem:[#allocation2 + $0xcf] sm:$0xff]
      %v1194 = vld [vmem:[#allocation2 + $0xd7] sm:$0xff]
      %v1195 = vld [vmem:[#allocation2 + $0xdf] sm:$0xff]
      %v1196 = vld [vmem:[#allocation2 + $0xe7] sm:$0xff]
      %v1197 = vld [vmem:[#allocation2 + $0xef] sm:$0xff]
      %v1198 = vld [vmem:[#allocation2 + $0xf7] sm:$0xff]
      %v1199 = vld [vmem:[#allocation2 + $0xff] sm:$0xff]
      %v1200 = vpack.c.bf16 %v1177, %v1176
      %v1201 = vpack.c.bf16 %v1179, %v1178
      %v1202 = vpack.c.bf16 %v1181, %v1180
      %v1203 = vpack.c.bf16 %v1183, %v1182
      %v1204 = vpack.c.bf16 %v1185, %v1184
      %v1205 = vpack.c.bf16 %v1187, %v1186
      %v1206 = vpack.c.bf16 %v1189, %v1188
      %v1207 = vpack.c.bf16 %v1191, %v1190
      %v1208 = vpack.c.bf16 %v1193, %v1192
      %v1209 = vpack.c.bf16 %v1195, %v1194
      %v1210 = vpack.c.bf16 %v1197, %v1196
      %v1211 = vpack.c.bf16 %v1199, %v1198
      %v1212 = vld [vmem:[%s4] sm:$0xf]
      %v1213 = vld [vmem:[#allocation2 + $0x48] sm:$0xff]
      %v1214 = vld [vmem:[#allocation2 + $0x50] sm:$0xff]
      %v1215 = vld [vmem:[#allocation2 + $0x58] sm:$0xff]
      %v1216 = vld [vmem:[#allocation2 + $0x60] sm:$0xff]
      %v1217 = vld [vmem:[#allocation2 + $0x68] sm:$0xff]
      %v1218 = vld [vmem:[#allocation2 + $0x70] sm:$0xff]
      %v1219 = vld [vmem:[#allocation2 + $0x78] sm:$0xff]
      %v1220 = vld [vmem:[#allocation2 + $0x80] sm:$0xff]
      %v1221 = vld [vmem:[#allocation2 + $0x88] sm:$0xff]
      %v1222 = vld [vmem:[#allocation2 + $0x90] sm:$0xff]
      %v1223 = vld [vmem:[#allocation2 + $0x98] sm:$0xff]
      %v1224 = vld [vmem:[#allocation2 + $0xa0] sm:$0xff]
      %v1225 = vld [vmem:[#allocation2 + $0xa8] sm:$0xff]
      %v1226 = vld [vmem:[#allocation2 + $0xb0] sm:$0xff]
      %v1227 = vld [vmem:[#allocation2 + $0xb8] sm:$0xff]
      %v1228 = vld [vmem:[#allocation2 + $0xc0] sm:$0xff]
      %v1229 = vld [vmem:[#allocation2 + $0xc8] sm:$0xff]
      %v1230 = vld [vmem:[#allocation2 + $0xd0] sm:$0xff]
      %v1231 = vld [vmem:[#allocation2 + $0xd8] sm:$0xff]
      %v1232 = vld [vmem:[#allocation2 + $0xe0] sm:$0xff]
      %v1233 = vld [vmem:[#allocation2 + $0xe8] sm:$0xff]
      %v1234 = vld [vmem:[#allocation2 + $0xf0] sm:$0xff]
      %v1235 = vld [vmem:[#allocation2 + $0xf8] sm:$0xff]
      %v1236 = vld [vmem:[#allocation2 + $0x100] sm:$0xff]
      %v1237 = vpack.c.bf16 %v1214, %v1213
      %v1238 = vpack.c.bf16 %v1216, %v1215
      %v1239 = vpack.c.bf16 %v1218, %v1217
      %v1240 = vpack.c.bf16 %v1220, %v1219
      %v1241 = vpack.c.bf16 %v1222, %v1221
      %v1242 = vpack.c.bf16 %v1224, %v1223
      %v1243 = vpack.c.bf16 %v1226, %v1225
      %v1244 = vpack.c.bf16 %v1228, %v1227
      %v1245 = vpack.c.bf16 %v1230, %v1229
      %v1246 = vpack.c.bf16 %v1232, %v1231
      %v1247 = vpack.c.bf16 %v1234, %v1233
      %v1248 = vpack.c.bf16 %v1236, %v1235
      %s1249 = scalar_lea.vmem %s4, 4
      %v1250 = vld [vmem:[%s1249] sm:$0xf]
      %v1252 = vsel %vm335, %v1237, 0
      %v1255 = vsel %vm335, %v1238, 0
      %v1258 = vsel %vm335, %v1239, 0
      %v1261 = vsel %vm335, %v1240, 0
      %v1264 = vsel %vm335, %v1241, 0
      %v1267 = vsel %vm335, %v1242, 0
      %v1270 = vsel %vm335, %v1243, 0
      %v1273 = vsel %vm335, %v1244, 0
      %v1276 = vsel %vm335, %v1245, 0
      %v1279 = vsel %vm335, %v1246, 0
      %v1282 = vsel %vm335, %v1247, 0
      %v1285 = vsel %vm335, %v1248, 0
      %vm1287 = vcmask 1043456
      %v1289 = vsel %vm1287, %v1250, 0
      %1291 = vmatprep.subr.bf16.mxu0 0
      %1292 = vmatpush1.bf16.msra.mxu0 %v1289
      %1293 = vmatprep.subr.bf16.mxu0 0
      %1294 = vmatpush1.bf16.msra.mxu0 0
      %1295 = vmatprep.subr.bf16.mxu0 0
      %1296 = vmatpush1.bf16.msra.mxu0 0
      %1297 = vmatprep.subr.bf16.mxu0 0
      %1298 = vmatpush1.bf16.msra.mxu0 0
      %1299 = vmatprep.subr.bf16.mxu0 0
      %1300 = vmatpush1.bf16.msra.mxu0 0
      %1301 = vmatprep.subr.bf16.mxu0 0
      %1302 = vmatpush1.bf16.msra.mxu0 0
      %1303 = vmatprep.subr.bf16.mxu0 0
      %1304 = vmatpush1.bf16.msra.mxu0 0
      %1305 = vmatprep.subr.bf16.mxu0 0
      %1306 = vmatpush1.bf16.msra.mxu0 0
      %1307 = vmatprep.subr.bf16.mxu0 0
      %1308 = vmatpush1.bf16.msra.mxu0 0
      %1309 = vmatprep.subr.bf16.mxu0 0
      %1310 = vmatpush1.bf16.msra.mxu0 0
      %1311 = vmatprep.subr.bf16.mxu0 0
      %1312 = vmatpush1.bf16.msra.mxu0 0
      %1313 = vmatprep.subr.bf16.mxu0 0
      %1314 = vmatpush1.bf16.msra.mxu0 0
      %1315 = vmatprep.subr.bf16.mxu0 0
      %1316 = vmatpush1.bf16.msra.mxu0 0
      %1317 = vmatprep.subr.bf16.mxu0 0
      %1318 = vmatpush1.bf16.msra.mxu0 0
      %1319 = vmatprep.subr.bf16.mxu0 0
      %1320 = vmatpush1.bf16.msra.mxu0 0
      %1321 = vmatprep.subr.bf16.mxu0 0
      %1322 = vmatpush1.bf16.msra.mxu0 0
      %1323 = vmatprep.mubr.bf16.mxu0 0
      %1324 = vmatmul.mubr.bf16.gmra.mrb[0].mxu0 %v1252
      %v1325 = vpop.f32.mrb[0].mxu0
      %v1326 = vadd.f32 0.0, %v1325
      %v1327 = vpop.f32.mrb[0].mxu0
      %v1328 = vpop.f32.mrb[0].mxu0
      %v1329 = vadd.f32 0.0, %v1328
      %v1330 = vpop.f32.mrb[0].mxu0
      %1331 = vmatprep.mubr.bf16.mxu0 0
      %1332 = vmatmul.mubr.bf16.gmra.mrb[0].mxu0 %v1255
      %v1333 = vpop.f32.mrb[0].mxu0
      %v1334 = vadd.f32 0.0, %v1333
      %v1335 = vpop.f32.mrb[0].mxu0
      %v1336 = vpop.f32.mrb[0].mxu0
      %v1337 = vadd.f32 0.0, %v1336
      %v1338 = vpop.f32.mrb[0].mxu0
      %1339 = vmatprep.mubr.bf16.mxu0 0
      %1340 = vmatmul.mubr.bf16.gmra.mrb[0].mxu0 %v1258
      %v1341 = vpop.f32.mrb[0].mxu0
      %v1342 = vadd.f32 0.0, %v1341
      %v1343 = vpop.f32.mrb[0].mxu0
      %v1344 = vpop.f32.mrb[0].mxu0
      %v1345 = vadd.f32 0.0, %v1344
      %v1346 = vpop.f32.mrb[0].mxu0
      %1347 = vmatprep.mubr.bf16.mxu0 0
      %1348 = vmatmul.mubr.bf16.gmra.mrb[0].mxu0 %v1261
      %v1349 = vpop.f32.mrb[0].mxu0
      %v1350 = vadd.f32 0.0, %v1349
      %v1351 = vpop.f32.mrb[0].mxu0
      %v1352 = vpop.f32.mrb[0].mxu0
      %v1353 = vadd.f32 0.0, %v1352
      %v1354 = vpop.f32.mrb[0].mxu0
      %1355 = vmatprep.mubr.bf16.mxu0 0
      %1356 = vmatmul.mubr.bf16.gmra.mrb[0].mxu0 %v1264
      %v1357 = vpop.f32.mrb[0].mxu0
      %v1358 = vadd.f32 0.0, %v1357
      %v1359 = vpop.f32.mrb[0].mxu0
      %v1360 = vpop.f32.mrb[0].mxu0
      %v1361 = vadd.f32 0.0, %v1360
      %v1362 = vpop.f32.mrb[0].mxu0
      %1363 = vmatprep.mubr.bf16.mxu0 0
      %1364 = vmatmul.mubr.bf16.gmra.mrb[0].mxu0 %v1267
      %v1365 = vpop.f32.mrb[0].mxu0
      %v1366 = vadd.f32 0.0, %v1365
      %v1367 = vpop.f32.mrb[0].mxu0
      %v1368 = vpop.f32.mrb[0].mxu0
      %v1369 = vadd.f32 0.0, %v1368
      %v1370 = vpop.f32.mrb[0].mxu0
      %1371 = vmatprep.mubr.bf16.mxu0 0
      %1372 = vmatmul.mubr.bf16.gmra.mrb[0].mxu0 %v1270
      %v1373 = vpop.f32.mrb[0].mxu0
      %v1374 = vadd.f32 0.0, %v1373
      %v1375 = vpop.f32.mrb[0].mxu0
      %v1376 = vpop.f32.mrb[0].mxu0
      %v1377 = vadd.f32 0.0, %v1376
      %v1378 = vpop.f32.mrb[0].mxu0
      %1379 = vmatprep.mubr.bf16.mxu0 0
      %1380 = vmatmul.mubr.bf16.gmra.mrb[0].mxu0 %v1273
      %v1381 = vpop.f32.mrb[0].mxu0
      %v1382 = vadd.f32 0.0, %v1381
      %v1383 = vpop.f32.mrb[0].mxu0
      %v1384 = vpop.f32.mrb[0].mxu0
      %v1385 = vadd.f32 0.0, %v1384
      %v1386 = vpop.f32.mrb[0].mxu0
      %1387 = vmatprep.mubr.bf16.mxu0 0
      %1388 = vmatmul.mubr.bf16.gmra.mrb[0].mxu0 %v1276
      %v1389 = vpop.f32.mrb[0].mxu0
      %v1390 = vadd.f32 0.0, %v1389
      %v1391 = vpop.f32.mrb[0].mxu0
      %v1392 = vpop.f32.mrb[0].mxu0
      %v1393 = vadd.f32 0.0, %v1392
      %v1394 = vpop.f32.mrb[0].mxu0
      %1395 = vmatprep.mubr.bf16.mxu0 0
      %1396 = vmatmul.mubr.bf16.gmra.mrb[0].mxu0 %v1279
      %v1397 = vpop.f32.mrb[0].mxu0
      %v1398 = vadd.f32 0.0, %v1397
      %v1399 = vpop.f32.mrb[0].mxu0
      %v1400 = vpop.f32.mrb[0].mxu0
      %v1401 = vadd.f32 0.0, %v1400
      %v1402 = vpop.f32.mrb[0].mxu0
      %1403 = vmatprep.mubr.bf16.mxu0 0
      %1404 = vmatmul.mubr.bf16.gmra.mrb[0].mxu0 %v1282
      %v1405 = vpop.f32.mrb[0].mxu0
      %v1406 = vadd.f32 0.0, %v1405
      %v1407 = vpop.f32.mrb[0].mxu0
      %v1408 = vpop.f32.mrb[0].mxu0
      %v1409 = vadd.f32 0.0, %v1408
      %v1410 = vpop.f32.mrb[0].mxu0
      %1411 = vmatprep.mubr.bf16.mxu0 0
      %1412 = vmatmul.mubr.bf16.gmra.mrb[0].mxu0 %v1285
      %v1413 = vpop.f32.mrb[0].mxu0
      %v1414 = vadd.f32 0.0, %v1413
      %v1415 = vpop.f32.mrb[0].mxu0
      %v1416 = vpop.f32.mrb[0].mxu0
      %v1417 = vadd.f32 0.0, %v1416
      %v1418 = vpop.f32.mrb[0].mxu0
      %1419 = vdwg.mxu0
      %v1421 = vsel %vm335, %v1200, 0
      %v1424 = vsel %vm335, %v1201, 0
      %v1427 = vsel %vm335, %v1202, 0
      %v1430 = vsel %vm335, %v1203, 0
      %v1433 = vsel %vm335, %v1204, 0
      %v1436 = vsel %vm335, %v1205, 0
      %v1439 = vsel %vm335, %v1206, 0
      %v1442 = vsel %vm335, %v1207, 0
      %v1445 = vsel %vm335, %v1208, 0
      %v1448 = vsel %vm335, %v1209, 0
      %v1451 = vsel %vm335, %v1210, 0
      %v1454 = vsel %vm335, %v1211, 0
      %v1457 = vsel %vm1287, %v1212, 0
      %1459 = vmatprep.subr.bf16.mxu0 0
      %1460 = vmatpush1.bf16.msra.mxu0 %v1457
      %1461 = vmatprep.subr.bf16.mxu0 0
      %1462 = vmatpush1.bf16.msra.mxu0 0
      %1463 = vmatprep.subr.bf16.mxu0 0
      %1464 = vmatpush1.bf16.msra.mxu0 0
      %1465 = vmatprep.subr.bf16.mxu0 0
      %1466 = vmatpush1.bf16.msra.mxu0 0
      %1467 = vmatprep.subr.bf16.mxu0 0
      %1468 = vmatpush1.bf16.msra.mxu0 0
      %1469 = vmatprep.subr.bf16.mxu0 0
      %1470 = vmatpush1.bf16.msra.mxu0 0
      %1471 = vmatprep.subr.bf16.mxu0 0
      %1472 = vmatpush1.bf16.msra.mxu0 0
      %1473 = vmatprep.subr.bf16.mxu0 0
      %1474 = vmatpush1.bf16.msra.mxu0 0
      %1475 = vmatprep.subr.bf16.mxu0 0
      %1476 = vmatpush1.bf16.msra.mxu0 0
      %1477 = vmatprep.subr.bf16.mxu0 0
      %1478 = vmatpush1.bf16.msra.mxu0 0
      %1479 = vmatprep.subr.bf16.mxu0 0
      %1480 = vmatpush1.bf16.msra.mxu0 0
      %1481 = vmatprep.subr.bf16.mxu0 0
      %1482 = vmatpush1.bf16.msra.mxu0 0
      %1483 = vmatprep.subr.bf16.mxu0 0
      %1484 = vmatpush1.bf16.msra.mxu0 0
      %1485 = vmatprep.subr.bf16.mxu0 0
      %1486 = vmatpush1.bf16.msra.mxu0 0
      %1487 = vmatprep.subr.bf16.mxu0 0
      %1488 = vmatpush1.bf16.msra.mxu0 0
      %1489 = vmatprep.subr.bf16.mxu0 0
      %1490 = vmatpush1.bf16.msra.mxu0 0
      %1491 = vmatprep.mubr.bf16.mxu0 0
      %1492 = vmatmul.mubr.bf16.gmra.mrb[0].mxu0 %v1421
      %v1493 = vpop.f32.mrb[0].mxu0
      %v1494 = vadd.f32 %v1326, %v1493
      %v1495 = vpop.f32.mrb[0].mxu0
      %v1496 = vpop.f32.mrb[0].mxu0
      %v1497 = vadd.f32 %v1329, %v1496
      %v1498 = vpop.f32.mrb[0].mxu0
      %1499 = vmatprep.mubr.bf16.mxu0 0
      %1500 = vmatmul.mubr.bf16.gmra.mrb[0].mxu0 %v1424
      %v1501 = vpop.f32.mrb[0].mxu0
      %v1502 = vadd.f32 %v1334, %v1501
      %v1503 = vpop.f32.mrb[0].mxu0
      %v1504 = vpop.f32.mrb[0].mxu0
      %v1505 = vadd.f32 %v1337, %v1504
      %v1506 = vpop.f32.mrb[0].mxu0
      %1507 = vmatprep.mubr.bf16.mxu0 0
      %1508 = vmatmul.mubr.bf16.gmra.mrb[0].mxu0 %v1427
      %v1509 = vpop.f32.mrb[0].mxu0
      %v1510 = vadd.f32 %v1342, %v1509
      %v1511 = vpop.f32.mrb[0].mxu0
      %v1512 = vpop.f32.mrb[0].mxu0
      %v1513 = vadd.f32 %v1345, %v1512
      %v1514 = vpop.f32.mrb[0].mxu0
      %1515 = vmatprep.mubr.bf16.mxu0 0
      %1516 = vmatmul.mubr.bf16.gmra.mrb[0].mxu0 %v1430
      %v1517 = vpop.f32.mrb[0].mxu0
      %v1518 = vadd.f32 %v1350, %v1517
      %v1519 = vpop.f32.mrb[0].mxu0
      %v1520 = vpop.f32.mrb[0].mxu0
      %v1521 = vadd.f32 %v1353, %v1520
      %v1522 = vpop.f32.mrb[0].mxu0
      %1523 = vmatprep.mubr.bf16.mxu0 0
      %1524 = vmatmul.mubr.bf16.gmra.mrb[0].mxu0 %v1433
      %v1525 = vpop.f32.mrb[0].mxu0
      %v1526 = vadd.f32 %v1358, %v1525
      %v1527 = vpop.f32.mrb[0].mxu0
      %v1528 = vpop.f32.mrb[0].mxu0
      %v1529 = vadd.f32 %v1361, %v1528
      %v1530 = vpop.f32.mrb[0].mxu0
      %1531 = vmatprep.mubr.bf16.mxu0 0
      %1532 = vmatmul.mubr.bf16.gmra.mrb[0].mxu0 %v1436
      %v1533 = vpop.f32.mrb[0].mxu0
      %v1534 = vadd.f32 %v1366, %v1533
      %v1535 = vpop.f32.mrb[0].mxu0
      %v1536 = vpop.f32.mrb[0].mxu0
      %v1537 = vadd.f32 %v1369, %v1536
      %v1538 = vpop.f32.mrb[0].mxu0
      %1539 = vmatprep.mubr.bf16.mxu0 0
      %1540 = vmatmul.mubr.bf16.gmra.mrb[0].mxu0 %v1439
      %v1541 = vpop.f32.mrb[0].mxu0
      %v1542 = vadd.f32 %v1374, %v1541
      %v1543 = vpop.f32.mrb[0].mxu0
      %v1544 = vpop.f32.mrb[0].mxu0
      %v1545 = vadd.f32 %v1377, %v1544
      %v1546 = vpop.f32.mrb[0].mxu0
      %1547 = vmatprep.mubr.bf16.mxu0 0
      %1548 = vmatmul.mubr.bf16.gmra.mrb[0].mxu0 %v1442
      %v1549 = vpop.f32.mrb[0].mxu0
      %v1550 = vadd.f32 %v1382, %v1549
      %v1551 = vpop.f32.mrb[0].mxu0
      %v1552 = vpop.f32.mrb[0].mxu0
      %v1553 = vadd.f32 %v1385, %v1552
      %v1554 = vpop.f32.mrb[0].mxu0
      %1555 = vmatprep.mubr.bf16.mxu0 0
      %1556 = vmatmul.mubr.bf16.gmra.mrb[0].mxu0 %v1445
      %v1557 = vpop.f32.mrb[0].mxu0
      %v1558 = vadd.f32 %v1390, %v1557
      %v1559 = vpop.f32.mrb[0].mxu0
      %v1560 = vpop.f32.mrb[0].mxu0
      %v1561 = vadd.f32 %v1393, %v1560
      %v1562 = vpop.f32.mrb[0].mxu0
      %1563 = vmatprep.mubr.bf16.mxu0 0
      %1564 = vmatmul.mubr.bf16.gmra.mrb[0].mxu0 %v1448
      %v1565 = vpop.f32.mrb[0].mxu0
      %v1566 = vadd.f32 %v1398, %v1565
      %v1567 = vpop.f32.mrb[0].mxu0
      %v1568 = vpop.f32.mrb[0].mxu0
      %v1569 = vadd.f32 %v1401, %v1568
      %v1570 = vpop.f32.mrb[0].mxu0
      %1571 = vmatprep.mubr.bf16.mxu0 0
      %1572 = vmatmul.mubr.bf16.gmra.mrb[0].mxu0 %v1451
      %v1573 = vpop.f32.mrb[0].mxu0
      %v1574 = vadd.f32 %v1406, %v1573
      %v1575 = vpop.f32.mrb[0].mxu0
      %v1576 = vpop.f32.mrb[0].mxu0
      %v1577 = vadd.f32 %v1409, %v1576
      %v1578 = vpop.f32.mrb[0].mxu0
      %1579 = vmatprep.mubr.bf16.mxu0 0
      %1580 = vmatmul.mubr.bf16.gmra.mrb[0].mxu0 %v1454
      %v1581 = vpop.f32.mrb[0].mxu0
      %v1582 = vadd.f32 %v1414, %v1581
      %v1583 = vpop.f32.mrb[0].mxu0
      %v1584 = vpop.f32.mrb[0].mxu0
      %v1585 = vadd.f32 %v1417, %v1584
      %v1586 = vpop.f32.mrb[0].mxu0
      %1587 = vdwg.mxu0
      %v1588 = vld [vmem:[#allocation2 + $0x49] sm:$0xff]
      %v1589 = vld [vmem:[#allocation2 + $0x51] sm:$0xff]
      %v1590 = vld [vmem:[#allocation2 + $0x59] sm:$0xff]
      %v1591 = vld [vmem:[#allocation2 + $0x61] sm:$0xff]
      %v1592 = vld [vmem:[#allocation2 + $0x69] sm:$0xff]
      %v1593 = vld [vmem:[#allocation2 + $0x71] sm:$0xff]
      %v1594 = vld [vmem:[#allocation2 + $0x79] sm:$0xff]
      %v1595 = vld [vmem:[#allocation2 + $0x81] sm:$0xff]
      %v1596 = vld [vmem:[#allocation2 + $0x89] sm:$0xff]
      %v1597 = vld [vmem:[#allocation2 + $0x91] sm:$0xff]
      %v1598 = vld [vmem:[#allocation2 + $0x99] sm:$0xff]
      %v1599 = vld [vmem:[#allocation2 + $0xa1] sm:$0xff]
      %v1600 = vld [vmem:[#allocation2 + $0xa9] sm:$0xff]
      %v1601 = vld [vmem:[#allocation2 + $0xb1] sm:$0xff]
      %v1602 = vld [vmem:[#allocation2 + $0xb9] sm:$0xff]
      %v1603 = vld [vmem:[#allocation2 + $0xc1] sm:$0xff]
      %v1604 = vld [vmem:[#allocation2 + $0xc9] sm:$0xff]
      %v1605 = vld [vmem:[#allocation2 + $0xd1] sm:$0xff]
      %v1606 = vld [vmem:[#allocation2 + $0xd9] sm:$0xff]
      %v1607 = vld [vmem:[#allocation2 + $0xe1] sm:$0xff]
      %v1608 = vld [vmem:[#allocation2 + $0xe9] sm:$0xff]
      %v1609 = vld [vmem:[#allocation2 + $0xf1] sm:$0xff]
      %v1610 = vld [vmem:[#allocation2 + $0xf9] sm:$0xff]
      %v1611 = vld [vmem:[#allocation2 + $0x101] sm:$0xff]
      %v1612 = vpack.c.bf16 %v1589, %v1588
      %v1613 = vpack.c.bf16 %v1591, %v1590
      %v1614 = vpack.c.bf16 %v1593, %v1592
      %v1615 = vpack.c.bf16 %v1595, %v1594
      %v1616 = vpack.c.bf16 %v1597, %v1596
      %v1617 = vpack.c.bf16 %v1599, %v1598
      %v1618 = vpack.c.bf16 %v1601, %v1600
      %v1619 = vpack.c.bf16 %v1603, %v1602
      %v1620 = vpack.c.bf16 %v1605, %v1604
      %v1621 = vpack.c.bf16 %v1607, %v1606
      %v1622 = vpack.c.bf16 %v1609, %v1608
      %v1623 = vpack.c.bf16 %v1611, %v1610
      %s1624 = scalar_lea.vmem %s4, 8
      %v1625 = vld [vmem:[%s1624] sm:$0xf]
      %v1627 = vsel %vm335, %v1612, 0
      %v1630 = vsel %vm335, %v1613, 0
      %v1633 = vsel %vm335, %v1614, 0
      %v1636 = vsel %vm335, %v1615, 0
      %v1639 = vsel %vm335, %v1616, 0
      %v1642 = vsel %vm335, %v1617, 0
      %v1645 = vsel %vm335, %v1618, 0
      %v1648 = vsel %vm335, %v1619, 0
      %v1651 = vsel %vm335, %v1620, 0
      %v1654 = vsel %vm335, %v1621, 0
      %v1657 = vsel %vm335, %v1622, 0
      %v1660 = vsel %vm335, %v1623, 0
      %v1663 = vsel %vm1287, %v1625, 0
      %1665 = vmatprep.subr.bf16.mxu0 0
      %1666 = vmatpush1.bf16.msra.mxu0 %v1663
      %1667 = vmatprep.subr.bf16.mxu0 0
      %1668 = vmatpush1.bf16.msra.mxu0 0
      %1669 = vmatprep.subr.bf16.mxu0 0
      %1670 = vmatpush1.bf16.msra.mxu0 0
      %1671 = vmatprep.subr.bf16.mxu0 0
      %1672 = vmatpush1.bf16.msra.mxu0 0
      %1673 = vmatprep.subr.bf16.mxu0 0
      %1674 = vmatpush1.bf16.msra.mxu0 0
      %1675 = vmatprep.subr.bf16.mxu0 0
      %1676 = vmatpush1.bf16.msra.mxu0 0
      %1677 = vmatprep.subr.bf16.mxu0 0
      %1678 = vmatpush1.bf16.msra.mxu0 0
      %1679 = vmatprep.subr.bf16.mxu0 0
      %1680 = vmatpush1.bf16.msra.mxu0 0
      %1681 = vmatprep.subr.bf16.mxu0 0
      %1682 = vmatpush1.bf16.msra.mxu0 0
      %1683 = vmatprep.subr.bf16.mxu0 0
      %1684 = vmatpush1.bf16.msra.mxu0 0
      %1685 = vmatprep.subr.bf16.mxu0 0
      %1686 = vmatpush1.bf16.msra.mxu0 0
      %1687 = vmatprep.subr.bf16.mxu0 0
      %1688 = vmatpush1.bf16.msra.mxu0 0
      %1689 = vmatprep.subr.bf16.mxu0 0
      %1690 = vmatpush1.bf16.msra.mxu0 0
      %1691 = vmatprep.subr.bf16.mxu0 0
      %1692 = vmatpush1.bf16.msra.mxu0 0
      %1693 = vmatprep.subr.bf16.mxu0 0
      %1694 = vmatpush1.bf16.msra.mxu0 0
      %1695 = vmatprep.subr.bf16.mxu0 0
      %1696 = vmatpush1.bf16.msra.mxu0 0
      %1697 = vmatprep.mubr.bf16.mxu0 0
      %1698 = vmatmul.mubr.bf16.gmra.mrb[0].mxu0 %v1627
      %v1699 = vpop.f32.mrb[0].mxu0
      %v1700 = vadd.f32 0.0, %v1699
      %v1701 = vpop.f32.mrb[0].mxu0
      %v1702 = vpop.f32.mrb[0].mxu0
      %v1703 = vadd.f32 0.0, %v1702
      %v1704 = vpop.f32.mrb[0].mxu0
      %1705 = vmatprep.mubr.bf16.mxu0 0
      %1706 = vmatmul.mubr.bf16.gmra.mrb[0].mxu0 %v1630
      %v1707 = vpop.f32.mrb[0].mxu0
      %v1708 = vadd.f32 0.0, %v1707
      %v1709 = vpop.f32.mrb[0].mxu0
      %v1710 = vpop.f32.mrb[0].mxu0
      %v1711 = vadd.f32 0.0, %v1710
      %v1712 = vpop.f32.mrb[0].mxu0
      %1713 = vmatprep.mubr.bf16.mxu0 0
      %1714 = vmatmul.mubr.bf16.gmra.mrb[0].mxu0 %v1633
      %v1715 = vpop.f32.mrb[0].mxu0
      %v1716 = vadd.f32 0.0, %v1715
      %v1717 = vpop.f32.mrb[0].mxu0
      %v1718 = vpop.f32.mrb[0].mxu0
      %v1719 = vadd.f32 0.0, %v1718
      %v1720 = vpop.f32.mrb[0].mxu0
      %1721 = vmatprep.mubr.bf16.mxu0 0
      %1722 = vmatmul.mubr.bf16.gmra.mrb[0].mxu0 %v1636
      %v1723 = vpop.f32.mrb[0].mxu0
      %v1724 = vadd.f32 0.0, %v1723
      %v1725 = vpop.f32.mrb[0].mxu0
      %v1726 = vpop.f32.mrb[0].mxu0
      %v1727 = vadd.f32 0.0, %v1726
      %v1728 = vpop.f32.mrb[0].mxu0
      %1729 = vmatprep.mubr.bf16.mxu0 0
      %1730 = vmatmul.mubr.bf16.gmra.mrb[0].mxu0 %v1639
      %v1731 = vpop.f32.mrb[0].mxu0
      %v1732 = vadd.f32 0.0, %v1731
      %v1733 = vpop.f32.mrb[0].mxu0
      %v1734 = vpop.f32.mrb[0].mxu0
      %v1735 = vadd.f32 0.0, %v1734
      %v1736 = vpop.f32.mrb[0].mxu0
      %1737 = vmatprep.mubr.bf16.mxu0 0
      %1738 = vmatmul.mubr.bf16.gmra.mrb[0].mxu0 %v1642
      %v1739 = vpop.f32.mrb[0].mxu0
      %v1740 = vadd.f32 0.0, %v1739
      %v1741 = vpop.f32.mrb[0].mxu0
      %v1742 = vpop.f32.mrb[0].mxu0
      %v1743 = vadd.f32 0.0, %v1742
      %v1744 = vpop.f32.mrb[0].mxu0
      %1745 = vmatprep.mubr.bf16.mxu0 0
      %1746 = vmatmul.mubr.bf16.gmra.mrb[0].mxu0 %v1645
      %v1747 = vpop.f32.mrb[0].mxu0
      %v1748 = vadd.f32 0.0, %v1747
      %v1749 = vpop.f32.mrb[0].mxu0
      %v1750 = vpop.f32.mrb[0].mxu0
      %v1751 = vadd.f32 0.0, %v1750
      %v1752 = vpop.f32.mrb[0].mxu0
      %1753 = vmatprep.mubr.bf16.mxu0 0
      %1754 = vmatmul.mubr.bf16.gmra.mrb[0].mxu0 %v1648
      %v1755 = vpop.f32.mrb[0].mxu0
      %v1756 = vadd.f32 0.0, %v1755
      %v1757 = vpop.f32.mrb[0].mxu0
      %v1758 = vpop.f32.mrb[0].mxu0
      %v1759 = vadd.f32 0.0, %v1758
      %v1760 = vpop.f32.mrb[0].mxu0
      %1761 = vmatprep.mubr.bf16.mxu0 0
      %1762 = vmatmul.mubr.bf16.gmra.mrb[0].mxu0 %v1651
      %v1763 = vpop.f32.mrb[0].mxu0
      %v1764 = vadd.f32 0.0, %v1763
      %v1765 = vpop.f32.mrb[0].mxu0
      %v1766 = vpop.f32.mrb[0].mxu0
      %v1767 = vadd.f32 0.0, %v1766
      %v1768 = vpop.f32.mrb[0].mxu0
      %1769 = vmatprep.mubr.bf16.mxu0 0
      %1770 = vmatmul.mubr.bf16.gmra.mrb[0].mxu0 %v1654
      %v1771 = vpop.f32.mrb[0].mxu0
      %v1772 = vadd.f32 0.0, %v1771
      %v1773 = vpop.f32.mrb[0].mxu0
      %v1774 = vpop.f32.mrb[0].mxu0
      %v1775 = vadd.f32 0.0, %v1774
      %v1776 = vpop.f32.mrb[0].mxu0
      %1777 = vmatprep.mubr.bf16.mxu0 0
      %1778 = vmatmul.mubr.bf16.gmra.mrb[0].mxu0 %v1657
      %v1779 = vpop.f32.mrb[0].mxu0
      %v1780 = vadd.f32 0.0, %v1779
      %v1781 = vpop.f32.mrb[0].mxu0
      %v1782 = vpop.f32.mrb[0].mxu0
      %v1783 = vadd.f32 0.0, %v1782
      %v1784 = vpop.f32.mrb[0].mxu0
      %1785 = vmatprep.mubr.bf16.mxu0 0
      %1786 = vmatmul.mubr.bf16.gmra.mrb[0].mxu0 %v1660
      %v1787 = vpop.f32.mrb[0].mxu0
      %v1788 = vadd.f32 0.0, %v1787
      %v1789 = vpop.f32.mrb[0].mxu0
      %v1790 = vpop.f32.mrb[0].mxu0
      %v1791 = vadd.f32 0.0, %v1790
      %v1792 = vpop.f32.mrb[0].mxu0
      %1793 = vdwg.mxu0
      %v1794 = vadd.f32 %v1494, %v1700
      %v1795 = vadd.f32 %v1497, %v1703
      %v1796 = vadd.f32 %v1502, %v1708
      %v1797 = vadd.f32 %v1505, %v1711
      %v1798 = vadd.f32 %v1510, %v1716
      %v1799 = vadd.f32 %v1513, %v1719
      %v1800 = vadd.f32 %v1518, %v1724
      %v1801 = vadd.f32 %v1521, %v1727
      %v1802 = vadd.f32 %v1526, %v1732
      %v1803 = vadd.f32 %v1529, %v1735
      %v1804 = vadd.f32 %v1534, %v1740
      %v1805 = vadd.f32 %v1537, %v1743
      %v1806 = vadd.f32 %v1542, %v1748
      %v1807 = vadd.f32 %v1545, %v1751
      %v1808 = vadd.f32 %v1550, %v1756
      %v1809 = vadd.f32 %v1553, %v1759
      %v1810 = vadd.f32 %v1558, %v1764
      %v1811 = vadd.f32 %v1561, %v1767
      %v1812 = vadd.f32 %v1566, %v1772
      %v1813 = vadd.f32 %v1569, %v1775
      %v1814 = vadd.f32 %v1574, %v1780
      %v1815 = vadd.f32 %v1577, %v1783
      %v1816 = vadd.f32 %v1582, %v1788
      %v1817 = vadd.f32 %v1585, %v1791
      %v1818 = vld [vmem:[#allocation2 + $0x5f] sm:$0xff]
      %v1819 = vld [vmem:[#allocation2 + $0x67] sm:$0xff]
      %v1820 = vld [vmem:[#allocation2 + $0x6f] sm:$0xff]
      %v1821 = vld [vmem:[#allocation2 + $0x77] sm:$0xff]
      %v1822 = vld [vmem:[#allocation2 + $0x7f] sm:$0xff]
      %v1823 = vld [vmem:[#allocation2 + $0x87] sm:$0xff]
      %v1824 = vld [vmem:[#allocation2 + $0x8f] sm:$0xff]
      %v1825 = vld [vmem:[#allocation2 + $0x97] sm:$0xff]
      %v1826 = vld [vmem:[#allocation2 + $0x9f] sm:$0xff]
      %v1827 = vld [vmem:[#allocation2 + $0xa7] sm:$0xff]
      %v1828 = vld [vmem:[#allocation2 + $0xaf] sm:$0xff]
      %v1829 = vld [vmem:[#allocation2 + $0xb7] sm:$0xff]
      %v1830 = vld [vmem:[#allocation2 + $0xbf] sm:$0xff]
      %v1831 = vld [vmem:[#allocation2 + $0xc7] sm:$0xff]
      %v1832 = vld [vmem:[#allocation2 + $0xcf] sm:$0xff]
      %v1833 = vld [vmem:[#allocation2 + $0xd7] sm:$0xff]
      %v1834 = vld [vmem:[#allocation2 + $0xdf] sm:$0xff]
      %v1835 = vld [vmem:[#allocation2 + $0xe7] sm:$0xff]
      %v1836 = vld [vmem:[#allocation2 + $0xef] sm:$0xff]
      %v1837 = vld [vmem:[#allocation2 + $0xf7] sm:$0xff]
      %v1838 = vld [vmem:[#allocation2 + $0xff] sm:$0xff]
      %v1839 = vld [vmem:[#allocation2 + $0x107] sm:$0xff]
      %v1840 = vld [vmem:[#allocation2 + $0x10f] sm:$0xff]
      %v1841 = vld [vmem:[#allocation2 + $0x117] sm:$0xff]
      %v1842 = vpack.c.bf16 %v1819, %v1818
      %v1843 = vpack.c.bf16 %v1821, %v1820
      %v1844 = vpack.c.bf16 %v1823, %v1822
      %v1845 = vpack.c.bf16 %v1825, %v1824
      %v1846 = vpack.c.bf16 %v1827, %v1826
      %v1847 = vpack.c.bf16 %v1829, %v1828
      %v1848 = vpack.c.bf16 %v1831, %v1830
      %v1849 = vpack.c.bf16 %v1833, %v1832
      %v1850 = vpack.c.bf16 %v1835, %v1834
      %v1851 = vpack.c.bf16 %v1837, %v1836
      %v1852 = vpack.c.bf16 %v1839, %v1838
      %v1853 = vpack.c.bf16 %v1841, %v1840
      %s1854 = scalar_lea.vmem %s4, 12
      %v1855 = vld [vmem:[%s1854] sm:$0xf]
      %v1857 = vsel %vm335, %v1842, 0
      %v1860 = vsel %vm335, %v1843, 0
      %v1863 = vsel %vm335, %v1844, 0
      %v1866 = vsel %vm335, %v1845, 0
      %v1869 = vsel %vm335, %v1846, 0
      %v1872 = vsel %vm335, %v1847, 0
      %v1875 = vsel %vm335, %v1848, 0
      %v1878 = vsel %vm335, %v1849, 0
      %v1881 = vsel %vm335, %v1850, 0
      %v1884 = vsel %vm335, %v1851, 0
      %v1887 = vsel %vm335, %v1852, 0
      %v1890 = vsel %vm335, %v1853, 0
      %v1893 = vsel %vm1287, %v1855, 0
      %1895 = vmatprep.subr.bf16.mxu0 0
      %1896 = vmatpush1.bf16.msra.mxu0 %v1893
      %1897 = vmatprep.subr.bf16.mxu0 0
      %1898 = vmatpush1.bf16.msra.mxu0 0
      %1899 = vmatprep.subr.bf16.mxu0 0
      %1900 = vmatpush1.bf16.msra.mxu0 0
      %1901 = vmatprep.subr.bf16.mxu0 0
      %1902 = vmatpush1.bf16.msra.mxu0 0
      %1903 = vmatprep.subr.bf16.mxu0 0
      %1904 = vmatpush1.bf16.msra.mxu0 0
      %1905 = vmatprep.subr.bf16.mxu0 0
      %1906 = vmatpush1.bf16.msra.mxu0 0
      %1907 = vmatprep.subr.bf16.mxu0 0
      %1908 = vmatpush1.bf16.msra.mxu0 0
      %1909 = vmatprep.subr.bf16.mxu0 0
      %1910 = vmatpush1.bf16.msra.mxu0 0
      %1911 = vmatprep.subr.bf16.mxu0 0
      %1912 = vmatpush1.bf16.msra.mxu0 0
      %1913 = vmatprep.subr.bf16.mxu0 0
      %1914 = vmatpush1.bf16.msra.mxu0 0
      %1915 = vmatprep.subr.bf16.mxu0 0
      %1916 = vmatpush1.bf16.msra.mxu0 0
      %1917 = vmatprep.subr.bf16.mxu0 0
      %1918 = vmatpush1.bf16.msra.mxu0 0
      %1919 = vmatprep.subr.bf16.mxu0 0
      %1920 = vmatpush1.bf16.msra.mxu0 0
      %1921 = vmatprep.subr.bf16.mxu0 0
      %1922 = vmatpush1.bf16.msra.mxu0 0
      %1923 = vmatprep.subr.bf16.mxu0 0
      %1924 = vmatpush1.bf16.msra.mxu0 0
      %1925 = vmatprep.subr.bf16.mxu0 0
      %1926 = vmatpush1.bf16.msra.mxu0 0
      %1927 = vmatprep.mubr.bf16.mxu0 0
      %1928 = vmatmul.mubr.bf16.gmra.mrb[0].mxu0 %v1857
      %v1929 = vpop.f32.mrb[0].mxu0
      %v1930 = vadd.f32 0.0, %v1929
      %v1931 = vpop.f32.mrb[0].mxu0
      %v1932 = vpop.f32.mrb[0].mxu0
      %v1933 = vadd.f32 0.0, %v1932
      %v1934 = vpop.f32.mrb[0].mxu0
      %1935 = vmatprep.mubr.bf16.mxu0 0
      %1936 = vmatmul.mubr.bf16.gmra.mrb[0].mxu0 %v1860
      %v1937 = vpop.f32.mrb[0].mxu0
      %v1938 = vadd.f32 0.0, %v1937
      %v1939 = vpop.f32.mrb[0].mxu0
      %v1940 = vpop.f32.mrb[0].mxu0
      %v1941 = vadd.f32 0.0, %v1940
      %v1942 = vpop.f32.mrb[0].mxu0
      %1943 = vmatprep.mubr.bf16.mxu0 0
      %1944 = vmatmul.mubr.bf16.gmra.mrb[0].mxu0 %v1863
      %v1945 = vpop.f32.mrb[0].mxu0
      %v1946 = vadd.f32 0.0, %v1945
      %v1947 = vpop.f32.mrb[0].mxu0
      %v1948 = vpop.f32.mrb[0].mxu0
      %v1949 = vadd.f32 0.0, %v1948
      %v1950 = vpop.f32.mrb[0].mxu0
      %1951 = vmatprep.mubr.bf16.mxu0 0
      %1952 = vmatmul.mubr.bf16.gmra.mrb[0].mxu0 %v1866
      %v1953 = vpop.f32.mrb[0].mxu0
      %v1954 = vadd.f32 0.0, %v1953
      %v1955 = vpop.f32.mrb[0].mxu0
      %v1956 = vpop.f32.mrb[0].mxu0
      %v1957 = vadd.f32 0.0, %v1956
      %v1958 = vpop.f32.mrb[0].mxu0
      %1959 = vmatprep.mubr.bf16.mxu0 0
      %1960 = vmatmul.mubr.bf16.gmra.mrb[0].mxu0 %v1869
      %v1961 = vpop.f32.mrb[0].mxu0
      %v1962 = vadd.f32 0.0, %v1961
      %v1963 = vpop.f32.mrb[0].mxu0
      %v1964 = vpop.f32.mrb[0].mxu0
      %v1965 = vadd.f32 0.0, %v1964
      %v1966 = vpop.f32.mrb[0].mxu0
      %1967 = vmatprep.mubr.bf16.mxu0 0
      %1968 = vmatmul.mubr.bf16.gmra.mrb[0].mxu0 %v1872
      %v1969 = vpop.f32.mrb[0].mxu0
      %v1970 = vadd.f32 0.0, %v1969
      %v1971 = vpop.f32.mrb[0].mxu0
      %v1972 = vpop.f32.mrb[0].mxu0
      %v1973 = vadd.f32 0.0, %v1972
      %v1974 = vpop.f32.mrb[0].mxu0
      %1975 = vmatprep.mubr.bf16.mxu0 0
      %1976 = vmatmul.mubr.bf16.gmra.mrb[0].mxu0 %v1875
      %v1977 = vpop.f32.mrb[0].mxu0
      %v1978 = vadd.f32 0.0, %v1977
      %v1979 = vpop.f32.mrb[0].mxu0
      %v1980 = vpop.f32.mrb[0].mxu0
      %v1981 = vadd.f32 0.0, %v1980
      %v1982 = vpop.f32.mrb[0].mxu0
      %1983 = vmatprep.mubr.bf16.mxu0 0
      %1984 = vmatmul.mubr.bf16.gmra.mrb[0].mxu0 %v1878
      %v1985 = vpop.f32.mrb[0].mxu0
      %v1986 = vadd.f32 0.0, %v1985
      %v1987 = vpop.f32.mrb[0].mxu0
      %v1988 = vpop.f32.mrb[0].mxu0
      %v1989 = vadd.f32 0.0, %v1988
      %v1990 = vpop.f32.mrb[0].mxu0
      %1991 = vmatprep.mubr.bf16.mxu0 0
      %1992 = vmatmul.mubr.bf16.gmra.mrb[0].mxu0 %v1881
      %v1993 = vpop.f32.mrb[0].mxu0
      %v1994 = vadd.f32 0.0, %v1993
      %v1995 = vpop.f32.mrb[0].mxu0
      %v1996 = vpop.f32.mrb[0].mxu0
      %v1997 = vadd.f32 0.0, %v1996
      %v1998 = vpop.f32.mrb[0].mxu0
      %1999 = vmatprep.mubr.bf16.mxu0 0
      %2000 = vmatmul.mubr.bf16.gmra.mrb[0].mxu0 %v1884
      %v2001 = vpop.f32.mrb[0].mxu0
      %v2002 = vadd.f32 0.0, %v2001
      %v2003 = vpop.f32.mrb[0].mxu0
      %v2004 = vpop.f32.mrb[0].mxu0
      %v2005 = vadd.f32 0.0, %v2004
      %v2006 = vpop.f32.mrb[0].mxu0
      %2007 = vmatprep.mubr.bf16.mxu0 0
      %2008 = vmatmul.mubr.bf16.gmra.mrb[0].mxu0 %v1887
      %v2009 = vpop.f32.mrb[0].mxu0
      %v2010 = vadd.f32 0.0, %v2009
      %v2011 = vpop.f32.mrb[0].mxu0
      %v2012 = vpop.f32.mrb[0].mxu0
      %v2013 = vadd.f32 0.0, %v2012
      %v2014 = vpop.f32.mrb[0].mxu0
      %2015 = vmatprep.mubr.bf16.mxu0 0
      %2016 = vmatmul.mubr.bf16.gmra.mrb[0].mxu0 %v1890
      %v2017 = vpop.f32.mrb[0].mxu0
      %v2018 = vadd.f32 0.0, %v2017
      %v2019 = vpop.f32.mrb[0].mxu0
      %v2020 = vpop.f32.mrb[0].mxu0
      %v2021 = vadd.f32 0.0, %v2020
      %v2022 = vpop.f32.mrb[0].mxu0
      %2023 = vdwg.mxu0
      %v2024 = vadd.f32 %v1794, %v1930
      %v2025 = vadd.f32 %v1795, %v1933
      %v2026 = vadd.f32 %v1796, %v1938
      %v2027 = vadd.f32 %v1797, %v1941
      %v2028 = vadd.f32 %v1798, %v1946
      %v2029 = vadd.f32 %v1799, %v1949
      %v2030 = vadd.f32 %v1800, %v1954
      %v2031 = vadd.f32 %v1801, %v1957
      %v2032 = vadd.f32 %v1802, %v1962
      %v2033 = vadd.f32 %v1803, %v1965
      %v2034 = vadd.f32 %v1804, %v1970
      %v2035 = vadd.f32 %v1805, %v1973
      %v2036 = vadd.f32 %v1806, %v1978
      %v2037 = vadd.f32 %v1807, %v1981
      %v2038 = vadd.f32 %v1808, %v1986
      %v2039 = vadd.f32 %v1809, %v1989
      %v2040 = vadd.f32 %v1810, %v1994
      %v2041 = vadd.f32 %v1811, %v1997
      %v2042 = vadd.f32 %v1812, %v2002
      %v2043 = vadd.f32 %v1813, %v2005
      %v2044 = vadd.f32 %v1814, %v2010
      %v2045 = vadd.f32 %v1815, %v2013
      %v2046 = vadd.f32 %v1816, %v2018
      %v2047 = vadd.f32 %v1817, %v2021
      %v2048 = vld [vmem:[#allocation2 + $0x60] sm:$0xff]
      %v2049 = vld [vmem:[#allocation2 + $0x68] sm:$0xff]
      %v2050 = vld [vmem:[#allocation2 + $0x70] sm:$0xff]
      %v2051 = vld [vmem:[#allocation2 + $0x78] sm:$0xff]
      %v2052 = vld [vmem:[#allocation2 + $0x80] sm:$0xff]
      %v2053 = vld [vmem:[#allocation2 + $0x88] sm:$0xff]
      %v2054 = vld [vmem:[#allocation2 + $0x90] sm:$0xff]
      %v2055 = vld [vmem:[#allocation2 + $0x98] sm:$0xff]
      %v2056 = vld [vmem:[#allocation2 + $0xa0] sm:$0xff]
      %v2057 = vld [vmem:[#allocation2 + $0xa8] sm:$0xff]
      %v2058 = vld [vmem:[#allocation2 + $0xb0] sm:$0xff]
      %v2059 = vld [vmem:[#allocation2 + $0xb8] sm:$0xff]
      %v2060 = vld [vmem:[#allocation2 + $0xc0] sm:$0xff]
      %v2061 = vld [vmem:[#allocation2 + $0xc8] sm:$0xff]
      %v2062 = vld [vmem:[#allocation2 + $0xd0] sm:$0xff]
      %v2063 = vld [vmem:[#allocation2 + $0xd8] sm:$0xff]
      %v2064 = vld [vmem:[#allocation2 + $0xe0] sm:$0xff]
      %v2065 = vld [vmem:[#allocation2 + $0xe8] sm:$0xff]
      %v2066 = vld [vmem:[#allocation2 + $0xf0] sm:$0xff]
      %v2067 = vld [vmem:[#allocation2 + $0xf8] sm:$0xff]
      %v2068 = vld [vmem:[#allocation2 + $0x100] sm:$0xff]
      %v2069 = vld [vmem:[#allocation2 + $0x108] sm:$0xff]
      %v2070 = vld [vmem:[#allocation2 + $0x110] sm:$0xff]
      %v2071 = vld [vmem:[#allocation2 + $0x118] sm:$0xff]
      %v2072 = vpack.c.bf16 %v2049, %v2048
      %v2073 = vpack.c.bf16 %v2051, %v2050
      %v2074 = vpack.c.bf16 %v2053, %v2052
      %v2075 = vpack.c.bf16 %v2055, %v2054
      %v2076 = vpack.c.bf16 %v2057, %v2056
      %v2077 = vpack.c.bf16 %v2059, %v2058
      %v2078 = vpack.c.bf16 %v2061, %v2060
      %v2079 = vpack.c.bf16 %v2063, %v2062
      %v2080 = vpack.c.bf16 %v2065, %v2064
      %v2081 = vpack.c.bf16 %v2067, %v2066
      %v2082 = vpack.c.bf16 %v2069, %v2068
      %v2083 = vpack.c.bf16 %v2071, %v2070
      %s2084 = scalar_lea.vmem %s4, 16
      %v2085 = vld [vmem:[%s2084] sm:$0xf]
      %v2087 = vsel %vm335, %v2072, 0
      %v2090 = vsel %vm335, %v2073, 0
      %v2093 = vsel %vm335, %v2074, 0
      %v2096 = vsel %vm335, %v2075, 0
      %v2099 = vsel %vm335, %v2076, 0
      %v2102 = vsel %vm335, %v2077, 0
      %v2105 = vsel %vm335, %v2078, 0
      %v2108 = vsel %vm335, %v2079, 0
      %v2111 = vsel %vm335, %v2080, 0
      %v2114 = vsel %vm335, %v2081, 0
      %v2117 = vsel %vm335, %v2082, 0
      %v2120 = vsel %vm335, %v2083, 0
      %v2123 = vsel %vm1287, %v2085, 0
      %2125 = vmatprep.subr.bf16.mxu0 0
      %2126 = vmatpush1.bf16.msra.mxu0 %v2123
      %2127 = vmatprep.subr.bf16.mxu0 0
      %2128 = vmatpush1.bf16.msra.mxu0 0
      %2129 = vmatprep.subr.bf16.mxu0 0
      %2130 = vmatpush1.bf16.msra.mxu0 0
      %2131 = vmatprep.subr.bf16.mxu0 0
      %2132 = vmatpush1.bf16.msra.mxu0 0
      %2133 = vmatprep.subr.bf16.mxu0 0
      %2134 = vmatpush1.bf16.msra.mxu0 0
      %2135 = vmatprep.subr.bf16.mxu0 0
      %2136 = vmatpush1.bf16.msra.mxu0 0
      %2137 = vmatprep.subr.bf16.mxu0 0
      %2138 = vmatpush1.bf16.msra.mxu0 0
      %2139 = vmatprep.subr.bf16.mxu0 0
      %2140 = vmatpush1.bf16.msra.mxu0 0
      %2141 = vmatprep.subr.bf16.mxu0 0
      %2142 = vmatpush1.bf16.msra.mxu0 0
      %2143 = vmatprep.subr.bf16.mxu0 0
      %2144 = vmatpush1.bf16.msra.mxu0 0
      %2145 = vmatprep.subr.bf16.mxu0 0
      %2146 = vmatpush1.bf16.msra.mxu0 0
      %2147 = vmatprep.subr.bf16.mxu0 0
      %2148 = vmatpush1.bf16.msra.mxu0 0
      %2149 = vmatprep.subr.bf16.mxu0 0
      %2150 = vmatpush1.bf16.msra.mxu0 0
      %2151 = vmatprep.subr.bf16.mxu0 0
      %2152 = vmatpush1.bf16.msra.mxu0 0
      %2153 = vmatprep.subr.bf16.mxu0 0
      %2154 = vmatpush1.bf16.msra.mxu0 0
      %2155 = vmatprep.subr.bf16.mxu0 0
      %2156 = vmatpush1.bf16.msra.mxu0 0
      %2157 = vmatprep.mubr.bf16.mxu0 0
      %2158 = vmatmul.mubr.bf16.gmra.mrb[0].mxu0 %v2087
      %v2159 = vpop.f32.mrb[0].mxu0
      %v2160 = vadd.f32 0.0, %v2159
      %v2161 = vpop.f32.mrb[0].mxu0
      %v2162 = vpop.f32.mrb[0].mxu0
      %v2163 = vadd.f32 0.0, %v2162
      %v2164 = vpop.f32.mrb[0].mxu0
      %2165 = vmatprep.mubr.bf16.mxu0 0
      %2166 = vmatmul.mubr.bf16.gmra.mrb[0].mxu0 %v2090
      %v2167 = vpop.f32.mrb[0].mxu0
      %v2168 = vadd.f32 0.0, %v2167
      %v2169 = vpop.f32.mrb[0].mxu0
      %v2170 = vpop.f32.mrb[0].mxu0
      %v2171 = vadd.f32 0.0, %v2170
      %v2172 = vpop.f32.mrb[0].mxu0
      %2173 = vmatprep.mubr.bf16.mxu0 0
      %2174 = vmatmul.mubr.bf16.gmra.mrb[0].mxu0 %v2093
      %v2175 = vpop.f32.mrb[0].mxu0
      %v2176 = vadd.f32 0.0, %v2175
      %v2177 = vpop.f32.mrb[0].mxu0
      %v2178 = vpop.f32.mrb[0].mxu0
      %v2179 = vadd.f32 0.0, %v2178
      %v2180 = vpop.f32.mrb[0].mxu0
      %2181 = vmatprep.mubr.bf16.mxu0 0
      %2182 = vmatmul.mubr.bf16.gmra.mrb[0].mxu0 %v2096
      %v2183 = vpop.f32.mrb[0].mxu0
      %v2184 = vadd.f32 0.0, %v2183
      %v2185 = vpop.f32.mrb[0].mxu0
      %v2186 = vpop.f32.mrb[0].mxu0
      %v2187 = vadd.f32 0.0, %v2186
      %v2188 = vpop.f32.mrb[0].mxu0
      %2189 = vmatprep.mubr.bf16.mxu0 0
      %2190 = vmatmul.mubr.bf16.gmra.mrb[0].mxu0 %v2099
      %v2191 = vpop.f32.mrb[0].mxu0
      %v2192 = vadd.f32 0.0, %v2191
      %v2193 = vpop.f32.mrb[0].mxu0
      %v2194 = vpop.f32.mrb[0].mxu0
      %v2195 = vadd.f32 0.0, %v2194
      %v2196 = vpop.f32.mrb[0].mxu0
      %2197 = vmatprep.mubr.bf16.mxu0 0
      %2198 = vmatmul.mubr.bf16.gmra.mrb[0].mxu0 %v2102
      %v2199 = vpop.f32.mrb[0].mxu0
      %v2200 = vadd.f32 0.0, %v2199
      %v2201 = vpop.f32.mrb[0].mxu0
      %v2202 = vpop.f32.mrb[0].mxu0
      %v2203 = vadd.f32 0.0, %v2202
      %v2204 = vpop.f32.mrb[0].mxu0
      %2205 = vmatprep.mubr.bf16.mxu0 0
      %2206 = vmatmul.mubr.bf16.gmra.mrb[0].mxu0 %v2105
      %v2207 = vpop.f32.mrb[0].mxu0
      %v2208 = vadd.f32 0.0, %v2207
      %v2209 = vpop.f32.mrb[0].mxu0
      %v2210 = vpop.f32.mrb[0].mxu0
      %v2211 = vadd.f32 0.0, %v2210
      %v2212 = vpop.f32.mrb[0].mxu0
      %2213 = vmatprep.mubr.bf16.mxu0 0
      %2214 = vmatmul.mubr.bf16.gmra.mrb[0].mxu0 %v2108
      %v2215 = vpop.f32.mrb[0].mxu0
      %v2216 = vadd.f32 0.0, %v2215
      %v2217 = vpop.f32.mrb[0].mxu0
      %v2218 = vpop.f32.mrb[0].mxu0
      %v2219 = vadd.f32 0.0, %v2218
      %v2220 = vpop.f32.mrb[0].mxu0
      %2221 = vmatprep.mubr.bf16.mxu0 0
      %2222 = vmatmul.mubr.bf16.gmra.mrb[0].mxu0 %v2111
      %v2223 = vpop.f32.mrb[0].mxu0
      %v2224 = vadd.f32 0.0, %v2223
      %v2225 = vpop.f32.mrb[0].mxu0
      %v2226 = vpop.f32.mrb[0].mxu0
      %v2227 = vadd.f32 0.0, %v2226
      %v2228 = vpop.f32.mrb[0].mxu0
      %2229 = vmatprep.mubr.bf16.mxu0 0
      %2230 = vmatmul.mubr.bf16.gmra.mrb[0].mxu0 %v2114
      %v2231 = vpop.f32.mrb[0].mxu0
      %v2232 = vadd.f32 0.0, %v2231
      %v2233 = vpop.f32.mrb[0].mxu0
      %v2234 = vpop.f32.mrb[0].mxu0
      %v2235 = vadd.f32 0.0, %v2234
      %v2236 = vpop.f32.mrb[0].mxu0
      %2237 = vmatprep.mubr.bf16.mxu0 0
      %2238 = vmatmul.mubr.bf16.gmra.mrb[0].mxu0 %v2117
      %v2239 = vpop.f32.mrb[0].mxu0
      %v2240 = vadd.f32 0.0, %v2239
      %v2241 = vpop.f32.mrb[0].mxu0
      %v2242 = vpop.f32.mrb[0].mxu0
      %v2243 = vadd.f32 0.0, %v2242
      %v2244 = vpop.f32.mrb[0].mxu0
      %2245 = vmatprep.mubr.bf16.mxu0 0
      %2246 = vmatmul.mubr.bf16.gmra.mrb[0].mxu0 %v2120
      %v2247 = vpop.f32.mrb[0].mxu0
      %v2248 = vadd.f32 0.0, %v2247
      %v2249 = vpop.f32.mrb[0].mxu0
      %v2250 = vpop.f32.mrb[0].mxu0
      %v2251 = vadd.f32 0.0, %v2250
      %v2252 = vpop.f32.mrb[0].mxu0
      %2253 = vdwg.mxu0
      %v2254 = vadd.f32 %v2024, %v2160
      %v2255 = vadd.f32 %v2025, %v2163
      %v2256 = vadd.f32 %v2026, %v2168
      %v2257 = vadd.f32 %v2027, %v2171
      %v2258 = vadd.f32 %v2028, %v2176
      %v2259 = vadd.f32 %v2029, %v2179
      %v2260 = vadd.f32 %v2030, %v2184
      %v2261 = vadd.f32 %v2031, %v2187
      %v2262 = vadd.f32 %v2032, %v2192
      %v2263 = vadd.f32 %v2033, %v2195
      %v2264 = vadd.f32 %v2034, %v2200
      %v2265 = vadd.f32 %v2035, %v2203
      %v2266 = vadd.f32 %v2036, %v2208
      %v2267 = vadd.f32 %v2037, %v2211
      %v2268 = vadd.f32 %v2038, %v2216
      %v2269 = vadd.f32 %v2039, %v2219
      %v2270 = vadd.f32 %v2040, %v2224
      %v2271 = vadd.f32 %v2041, %v2227
      %v2272 = vadd.f32 %v2042, %v2232
      %v2273 = vadd.f32 %v2043, %v2235
      %v2274 = vadd.f32 %v2044, %v2240
      %v2275 = vadd.f32 %v2045, %v2243
      %v2276 = vadd.f32 %v2046, %v2248
      %v2277 = vadd.f32 %v2047, %v2251
      %v2278 = vld [vmem:[#allocation2 + $0x61] sm:$0xff]
      %v2279 = vld [vmem:[#allocation2 + $0x69] sm:$0xff]
      %v2280 = vld [vmem:[#allocation2 + $0x71] sm:$0xff]
      %v2281 = vld [vmem:[#allocation2 + $0x79] sm:$0xff]
      %v2282 = vld [vmem:[#allocation2 + $0x81] sm:$0xff]
      %v2283 = vld [vmem:[#allocation2 + $0x89] sm:$0xff]
      %v2284 = vld [vmem:[#allocation2 + $0x91] sm:$0xff]
      %v2285 = vld [vmem:[#allocation2 + $0x99] sm:$0xff]
      %v2286 = vld [vmem:[#allocation2 + $0xa1] sm:$0xff]
      %v2287 = vld [vmem:[#allocation2 + $0xa9] sm:$0xff]
      %v2288 = vld [vmem:[#allocation2 + $0xb1] sm:$0xff]
      %v2289 = vld [vmem:[#allocation2 + $0xb9] sm:$0xff]
      %v2290 = vld [vmem:[#allocation2 + $0xc1] sm:$0xff]
      %v2291 = vld [vmem:[#allocation2 + $0xc9] sm:$0xff]
      %v2292 = vld [vmem:[#allocation2 + $0xd1] sm:$0xff]
      %v2293 = vld [vmem:[#allocation2 + $0xd9] sm:$0xff]
      %v2294 = vld [vmem:[#allocation2 + $0xe1] sm:$0xff]
      %v2295 = vld [vmem:[#allocation2 + $0xe9] sm:$0xff]
      %v2296 = vld [vmem:[#allocation2 + $0xf1] sm:$0xff]
      %v2297 = vld [vmem:[#allocation2 + $0xf9] sm:$0xff]
      %v2298 = vld [vmem:[#allocation2 + $0x101] sm:$0xff]
      %v2299 = vld [vmem:[#allocation2 + $0x109] sm:$0xff]
      %v2300 = vld [vmem:[#allocation2 + $0x111] sm:$0xff]
      %v2301 = vld [vmem:[#allocation2 + $0x119] sm:$0xff]
      %v2302 = vpack.c.bf16 %v2279, %v2278
      %v2303 = vpack.c.bf16 %v2281, %v2280
      %v2304 = vpack.c.bf16 %v2283, %v2282
      %v2305 = vpack.c.bf16 %v2285, %v2284
      %v2306 = vpack.c.bf16 %v2287, %v2286
      %v2307 = vpack.c.bf16 %v2289, %v2288
      %v2308 = vpack.c.bf16 %v2291, %v2290
      %v2309 = vpack.c.bf16 %v2293, %v2292
      %v2310 = vpack.c.bf16 %v2295, %v2294
      %v2311 = vpack.c.bf16 %v2297, %v2296
      %v2312 = vpack.c.bf16 %v2299, %v2298
      %v2313 = vpack.c.bf16 %v2301, %v2300
      %s2314 = scalar_lea.vmem %s4, 20
      %v2315 = vld [vmem:[%s2314] sm:$0xf]
      %v2317 = vsel %vm335, %v2302, 0
      %v2320 = vsel %vm335, %v2303, 0
      %v2323 = vsel %vm335, %v2304, 0
      %v2326 = vsel %vm335, %v2305, 0
      %v2329 = vsel %vm335, %v2306, 0
      %v2332 = vsel %vm335, %v2307, 0
      %v2335 = vsel %vm335, %v2308, 0
      %v2338 = vsel %vm335, %v2309, 0
      %v2341 = vsel %vm335, %v2310, 0
      %v2344 = vsel %vm335, %v2311, 0
      %v2347 = vsel %vm335, %v2312, 0
      %v2350 = vsel %vm335, %v2313, 0
      %v2353 = vsel %vm1287, %v2315, 0
      %2355 = vmatprep.subr.bf16.mxu0 0
      %2356 = vmatpush1.bf16.msra.mxu0 %v2353
      %2357 = vmatprep.subr.bf16.mxu0 0
      %2358 = vmatpush1.bf16.msra.mxu0 0
      %2359 = vmatprep.subr.bf16.mxu0 0
      %2360 = vmatpush1.bf16.msra.mxu0 0
      %2361 = vmatprep.subr.bf16.mxu0 0
      %2362 = vmatpush1.bf16.msra.mxu0 0
      %2363 = vmatprep.subr.bf16.mxu0 0
      %2364 = vmatpush1.bf16.msra.mxu0 0
      %2365 = vmatprep.subr.bf16.mxu0 0
      %2366 = vmatpush1.bf16.msra.mxu0 0
      %2367 = vmatprep.subr.bf16.mxu0 0
      %2368 = vmatpush1.bf16.msra.mxu0 0
      %2369 = vmatprep.subr.bf16.mxu0 0
      %2370 = vmatpush1.bf16.msra.mxu0 0
      %2371 = vmatprep.subr.bf16.mxu0 0
      %2372 = vmatpush1.bf16.msra.mxu0 0
      %2373 = vmatprep.subr.bf16.mxu0 0
      %2374 = vmatpush1.bf16.msra.mxu0 0
      %2375 = vmatprep.subr.bf16.mxu0 0
      %2376 = vmatpush1.bf16.msra.mxu0 0
      %2377 = vmatprep.subr.bf16.mxu0 0
      %2378 = vmatpush1.bf16.msra.mxu0 0
      %2379 = vmatprep.subr.bf16.mxu0 0
      %2380 = vmatpush1.bf16.msra.mxu0 0
      %2381 = vmatprep.subr.bf16.mxu0 0
      %2382 = vmatpush1.bf16.msra.mxu0 0
      %2383 = vmatprep.subr.bf16.mxu0 0
      %2384 = vmatpush1.bf16.msra.mxu0 0
      %2385 = vmatprep.subr.bf16.mxu0 0
      %2386 = vmatpush1.bf16.msra.mxu0 0
      %2387 = vmatprep.mubr.bf16.mxu0 0
      %2388 = vmatmul.mubr.bf16.gmra.mrb[0].mxu0 %v2317
      %v2389 = vpop.f32.mrb[0].mxu0
      %v2390 = vadd.f32 0.0, %v2389
      %v2391 = vpop.f32.mrb[0].mxu0
      %v2392 = vpop.f32.mrb[0].mxu0
      %v2393 = vadd.f32 0.0, %v2392
      %v2394 = vpop.f32.mrb[0].mxu0
      %2395 = vmatprep.mubr.bf16.mxu0 0
      %2396 = vmatmul.mubr.bf16.gmra.mrb[0].mxu0 %v2320
      %v2397 = vpop.f32.mrb[0].mxu0
      %v2398 = vadd.f32 0.0, %v2397
      %v2399 = vpop.f32.mrb[0].mxu0
      %v2400 = vpop.f32.mrb[0].mxu0
      %v2401 = vadd.f32 0.0, %v2400
      %v2402 = vpop.f32.mrb[0].mxu0
      %2403 = vmatprep.mubr.bf16.mxu0 0
      %2404 = vmatmul.mubr.bf16.gmra.mrb[0].mxu0 %v2323
      %v2405 = vpop.f32.mrb[0].mxu0
      %v2406 = vadd.f32 0.0, %v2405
      %v2407 = vpop.f32.mrb[0].mxu0
      %v2408 = vpop.f32.mrb[0].mxu0
      %v2409 = vadd.f32 0.0, %v2408
      %v2410 = vpop.f32.mrb[0].mxu0
      %2411 = vmatprep.mubr.bf16.mxu0 0
      %2412 = vmatmul.mubr.bf16.gmra.mrb[0].mxu0 %v2326
      %v2413 = vpop.f32.mrb[0].mxu0
      %v2414 = vadd.f32 0.0, %v2413
      %v2415 = vpop.f32.mrb[0].mxu0
      %v2416 = vpop.f32.mrb[0].mxu0
      %v2417 = vadd.f32 0.0, %v2416
      %v2418 = vpop.f32.mrb[0].mxu0
      %2419 = vmatprep.mubr.bf16.mxu0 0
      %2420 = vmatmul.mubr.bf16.gmra.mrb[0].mxu0 %v2329
      %v2421 = vpop.f32.mrb[0].mxu0
      %v2422 = vadd.f32 0.0, %v2421
      %v2423 = vpop.f32.mrb[0].mxu0
      %v2424 = vpop.f32.mrb[0].mxu0
      %v2425 = vadd.f32 0.0, %v2424
      %v2426 = vpop.f32.mrb[0].mxu0
      %2427 = vmatprep.mubr.bf16.mxu0 0
      %2428 = vmatmul.mubr.bf16.gmra.mrb[0].mxu0 %v2332
      %v2429 = vpop.f32.mrb[0].mxu0
      %v2430 = vadd.f32 0.0, %v2429
      %v2431 = vpop.f32.mrb[0].mxu0
      %v2432 = vpop.f32.mrb[0].mxu0
      %v2433 = vadd.f32 0.0, %v2432
      %v2434 = vpop.f32.mrb[0].mxu0
      %2435 = vmatprep.mubr.bf16.mxu0 0
      %2436 = vmatmul.mubr.bf16.gmra.mrb[0].mxu0 %v2335
      %v2437 = vpop.f32.mrb[0].mxu0
      %v2438 = vadd.f32 0.0, %v2437
      %v2439 = vpop.f32.mrb[0].mxu0
      %v2440 = vpop.f32.mrb[0].mxu0
      %v2441 = vadd.f32 0.0, %v2440
      %v2442 = vpop.f32.mrb[0].mxu0
      %2443 = vmatprep.mubr.bf16.mxu0 0
      %2444 = vmatmul.mubr.bf16.gmra.mrb[0].mxu0 %v2338
      %v2445 = vpop.f32.mrb[0].mxu0
      %v2446 = vadd.f32 0.0, %v2445
      %v2447 = vpop.f32.mrb[0].mxu0
      %v2448 = vpop.f32.mrb[0].mxu0
      %v2449 = vadd.f32 0.0, %v2448
      %v2450 = vpop.f32.mrb[0].mxu0
      %2451 = vmatprep.mubr.bf16.mxu0 0
      %2452 = vmatmul.mubr.bf16.gmra.mrb[0].mxu0 %v2341
      %v2453 = vpop.f32.mrb[0].mxu0
      %v2454 = vadd.f32 0.0, %v2453
      %v2455 = vpop.f32.mrb[0].mxu0
      %v2456 = vpop.f32.mrb[0].mxu0
      %v2457 = vadd.f32 0.0, %v2456
      %v2458 = vpop.f32.mrb[0].mxu0
      %2459 = vmatprep.mubr.bf16.mxu0 0
      %2460 = vmatmul.mubr.bf16.gmra.mrb[0].mxu0 %v2344
      %v2461 = vpop.f32.mrb[0].mxu0
      %v2462 = vadd.f32 0.0, %v2461
      %v2463 = vpop.f32.mrb[0].mxu0
      %v2464 = vpop.f32.mrb[0].mxu0
      %v2465 = vadd.f32 0.0, %v2464
      %v2466 = vpop.f32.mrb[0].mxu0
      %2467 = vmatprep.mubr.bf16.mxu0 0
      %2468 = vmatmul.mubr.bf16.gmra.mrb[0].mxu0 %v2347
      %v2469 = vpop.f32.mrb[0].mxu0
      %v2470 = vadd.f32 0.0, %v2469
      %v2471 = vpop.f32.mrb[0].mxu0
      %v2472 = vpop.f32.mrb[0].mxu0
      %v2473 = vadd.f32 0.0, %v2472
      %v2474 = vpop.f32.mrb[0].mxu0
      %2475 = vmatprep.mubr.bf16.mxu0 0
      %2476 = vmatmul.mubr.bf16.gmra.mrb[0].mxu0 %v2350
      %v2477 = vpop.f32.mrb[0].mxu0
      %v2478 = vadd.f32 0.0, %v2477
      %v2479 = vpop.f32.mrb[0].mxu0
      %v2480 = vpop.f32.mrb[0].mxu0
      %v2481 = vadd.f32 0.0, %v2480
      %v2482 = vpop.f32.mrb[0].mxu0
      %2483 = vdwg.mxu0
      %v2484 = vadd.f32 %v2254, %v2390
      %v2485 = vadd.f32 %v2255, %v2393
      %v2486 = vadd.f32 %v2256, %v2398
      %v2487 = vadd.f32 %v2257, %v2401
      %v2488 = vadd.f32 %v2258, %v2406
      %v2489 = vadd.f32 %v2259, %v2409
      %v2490 = vadd.f32 %v2260, %v2414
      %v2491 = vadd.f32 %v2261, %v2417
      %v2492 = vadd.f32 %v2262, %v2422
      %v2493 = vadd.f32 %v2263, %v2425
      %v2494 = vadd.f32 %v2264, %v2430
      %v2495 = vadd.f32 %v2265, %v2433
      %v2496 = vadd.f32 %v2266, %v2438
      %v2497 = vadd.f32 %v2267, %v2441
      %v2498 = vadd.f32 %v2268, %v2446
      %v2499 = vadd.f32 %v2269, %v2449
      %v2500 = vadd.f32 %v2270, %v2454
      %v2501 = vadd.f32 %v2271, %v2457
      %v2502 = vadd.f32 %v2272, %v2462
      %v2503 = vadd.f32 %v2273, %v2465
      %v2504 = vadd.f32 %v2274, %v2470
      %v2505 = vadd.f32 %v2275, %v2473
      %v2506 = vadd.f32 %v2276, %v2478
      %v2507 = vadd.f32 %v2277, %v2481
      %v2508 = vld [vmem:[#allocation2 + $0x77] sm:$0xff]
      %v2509 = vld [vmem:[#allocation2 + $0x7f] sm:$0xff]
      %v2510 = vld [vmem:[#allocation2 + $0x87] sm:$0xff]
      %v2511 = vld [vmem:[#allocation2 + $0x8f] sm:$0xff]
      %v2512 = vld [vmem:[#allocation2 + $0x97] sm:$0xff]
      %v2513 = vld [vmem:[#allocation2 + $0x9f] sm:$0xff]
      %v2514 = vld [vmem:[#allocation2 + $0xa7] sm:$0xff]
      %v2515 = vld [vmem:[#allocation2 + $0xaf] sm:$0xff]
      %v2516 = vld [vmem:[#allocation2 + $0xb7] sm:$0xff]
      %v2517 = vld [vmem:[#allocation2 + $0xbf] sm:$0xff]
      %v2518 = vld [vmem:[#allocation2 + $0xc7] sm:$0xff]
      %v2519 = vld [vmem:[#allocation2 + $0xcf] sm:$0xff]
      %v2520 = vld [vmem:[#allocation2 + $0xd7] sm:$0xff]
      %v2521 = vld [vmem:[#allocation2 + $0xdf] sm:$0xff]
      %v2522 = vld [vmem:[#allocation2 + $0xe7] sm:$0xff]
      %v2523 = vld [vmem:[#allocation2 + $0xef] sm:$0xff]
      %v2524 = vld [vmem:[#allocation2 + $0xf7] sm:$0xff]
      %v2525 = vld [vmem:[#allocation2 + $0xff] sm:$0xff]
      %v2526 = vld [vmem:[#allocation2 + $0x107] sm:$0xff]
      %v2527 = vld [vmem:[#allocation2 + $0x10f] sm:$0xff]
      %v2528 = vld [vmem:[#allocation2 + $0x117] sm:$0xff]
      %v2529 = vld [vmem:[#allocation2 + $0x11f] sm:$0xff]
      %v2530 = vld [vmem:[#allocation2 + $0x127] sm:$0xff]
      %v2531 = vld [vmem:[#allocation2 + $0x12f] sm:$0xff]
      %v2532 = vpack.c.bf16 %v2509, %v2508
      %v2533 = vpack.c.bf16 %v2511, %v2510
      %v2534 = vpack.c.bf16 %v2513, %v2512
      %v2535 = vpack.c.bf16 %v2515, %v2514
      %v2536 = vpack.c.bf16 %v2517, %v2516
      %v2537 = vpack.c.bf16 %v2519, %v2518
      %v2538 = vpack.c.bf16 %v2521, %v2520
      %v2539 = vpack.c.bf16 %v2523, %v2522
      %v2540 = vpack.c.bf16 %v2525, %v2524
      %v2541 = vpack.c.bf16 %v2527, %v2526
      %v2542 = vpack.c.bf16 %v2529, %v2528
      %v2543 = vpack.c.bf16 %v2531, %v2530
      %s2544 = scalar_lea.vmem %s4, 24
      %v2545 = vld [vmem:[%s2544] sm:$0xf]
      %v2547 = vsel %vm335, %v2532, 0
      %v2550 = vsel %vm335, %v2533, 0
      %v2553 = vsel %vm335, %v2534, 0
      %v2556 = vsel %vm335, %v2535, 0
      %v2559 = vsel %vm335, %v2536, 0
      %v2562 = vsel %vm335, %v2537, 0
      %v2565 = vsel %vm335, %v2538, 0
      %v2568 = vsel %vm335, %v2539, 0
      %v2571 = vsel %vm335, %v2540, 0
      %v2574 = vsel %vm335, %v2541, 0
      %v2577 = vsel %vm335, %v2542, 0
      %v2580 = vsel %vm335, %v2543, 0
      %v2583 = vsel %vm1287, %v2545, 0
      %2585 = vmatprep.subr.bf16.mxu0 0
      %2586 = vmatpush1.bf16.msra.mxu0 %v2583
      %2587 = vmatprep.subr.bf16.mxu0 0
      %2588 = vmatpush1.bf16.msra.mxu0 0
      %2589 = vmatprep.subr.bf16.mxu0 0
      %2590 = vmatpush1.bf16.msra.mxu0 0
      %2591 = vmatprep.subr.bf16.mxu0 0
      %2592 = vmatpush1.bf16.msra.mxu0 0
      %2593 = vmatprep.subr.bf16.mxu0 0
      %2594 = vmatpush1.bf16.msra.mxu0 0
      %2595 = vmatprep.subr.bf16.mxu0 0
      %2596 = vmatpush1.bf16.msra.mxu0 0
      %2597 = vmatprep.subr.bf16.mxu0 0
      %2598 = vmatpush1.bf16.msra.mxu0 0
      %2599 = vmatprep.subr.bf16.mxu0 0
      %2600 = vmatpush1.bf16.msra.mxu0 0
      %2601 = vmatprep.subr.bf16.mxu0 0
      %2602 = vmatpush1.bf16.msra.mxu0 0
      %2603 = vmatprep.subr.bf16.mxu0 0
      %2604 = vmatpush1.bf16.msra.mxu0 0
      %2605 = vmatprep.subr.bf16.mxu0 0
      %2606 = vmatpush1.bf16.msra.mxu0 0
      %2607 = vmatprep.subr.bf16.mxu0 0
      %2608 = vmatpush1.bf16.msra.mxu0 0
      %2609 = vmatprep.subr.bf16.mxu0 0
      %2610 = vmatpush1.bf16.msra.mxu0 0
      %2611 = vmatprep.subr.bf16.mxu0 0
      %2612 = vmatpush1.bf16.msra.mxu0 0
      %2613 = vmatprep.subr.bf16.mxu0 0
      %2614 = vmatpush1.bf16.msra.mxu0 0
      %2615 = vmatprep.subr.bf16.mxu0 0
      %2616 = vmatpush1.bf16.msra.mxu0 0
      %2617 = vmatprep.mubr.bf16.mxu0 0
      %2618 = vmatmul.mubr.bf16.gmra.mrb[0].mxu0 %v2547
      %v2619 = vpop.f32.mrb[0].mxu0
      %v2620 = vadd.f32 0.0, %v2619
      %v2621 = vpop.f32.mrb[0].mxu0
      %v2622 = vpop.f32.mrb[0].mxu0
      %v2623 = vadd.f32 0.0, %v2622
      %v2624 = vpop.f32.mrb[0].mxu0
      %2625 = vmatprep.mubr.bf16.mxu0 0
      %2626 = vmatmul.mubr.bf16.gmra.mrb[0].mxu0 %v2550
      %v2627 = vpop.f32.mrb[0].mxu0
      %v2628 = vadd.f32 0.0, %v2627
      %v2629 = vpop.f32.mrb[0].mxu0
      %v2630 = vpop.f32.mrb[0].mxu0
      %v2631 = vadd.f32 0.0, %v2630
      %v2632 = vpop.f32.mrb[0].mxu0
      %2633 = vmatprep.mubr.bf16.mxu0 0
      %2634 = vmatmul.mubr.bf16.gmra.mrb[0].mxu0 %v2553
      %v2635 = vpop.f32.mrb[0].mxu0
      %v2636 = vadd.f32 0.0, %v2635
      %v2637 = vpop.f32.mrb[0].mxu0
      %v2638 = vpop.f32.mrb[0].mxu0
      %v2639 = vadd.f32 0.0, %v2638
      %v2640 = vpop.f32.mrb[0].mxu0
      %2641 = vmatprep.mubr.bf16.mxu0 0
      %2642 = vmatmul.mubr.bf16.gmra.mrb[0].mxu0 %v2556
      %v2643 = vpop.f32.mrb[0].mxu0
      %v2644 = vadd.f32 0.0, %v2643
      %v2645 = vpop.f32.mrb[0].mxu0
      %v2646 = vpop.f32.mrb[0].mxu0
      %v2647 = vadd.f32 0.0, %v2646
      %v2648 = vpop.f32.mrb[0].mxu0
      %2649 = vmatprep.mubr.bf16.mxu0 0
      %2650 = vmatmul.mubr.bf16.gmra.mrb[0].mxu0 %v2559
      %v2651 = vpop.f32.mrb[0].mxu0
      %v2652 = vadd.f32 0.0, %v2651
      %v2653 = vpop.f32.mrb[0].mxu0
      %v2654 = vpop.f32.mrb[0].mxu0
      %v2655 = vadd.f32 0.0, %v2654
      %v2656 = vpop.f32.mrb[0].mxu0
      %2657 = vmatprep.mubr.bf16.mxu0 0
      %2658 = vmatmul.mubr.bf16.gmra.mrb[0].mxu0 %v2562
      %v2659 = vpop.f32.mrb[0].mxu0
      %v2660 = vadd.f32 0.0, %v2659
      %v2661 = vpop.f32.mrb[0].mxu0
      %v2662 = vpop.f32.mrb[0].mxu0
      %v2663 = vadd.f32 0.0, %v2662
      %v2664 = vpop.f32.mrb[0].mxu0
      %2665 = vmatprep.mubr.bf16.mxu0 0
      %2666 = vmatmul.mubr.bf16.gmra.mrb[0].mxu0 %v2565
      %v2667 = vpop.f32.mrb[0].mxu0
      %v2668 = vadd.f32 0.0, %v2667
      %v2669 = vpop.f32.mrb[0].mxu0
      %v2670 = vpop.f32.mrb[0].mxu0
      %v2671 = vadd.f32 0.0, %v2670
      %v2672 = vpop.f32.mrb[0].mxu0
      %2673 = vmatprep.mubr.bf16.mxu0 0
      %2674 = vmatmul.mubr.bf16.gmra.mrb[0].mxu0 %v2568
      %v2675 = vpop.f32.mrb[0].mxu0
      %v2676 = vadd.f32 0.0, %v2675
      %v2677 = vpop.f32.mrb[0].mxu0
      %v2678 = vpop.f32.mrb[0].mxu0
      %v2679 = vadd.f32 0.0, %v2678
      %v2680 = vpop.f32.mrb[0].mxu0
      %2681 = vmatprep.mubr.bf16.mxu0 0
      %2682 = vmatmul.mubr.bf16.gmra.mrb[0].mxu0 %v2571
      %v2683 = vpop.f32.mrb[0].mxu0
      %v2684 = vadd.f32 0.0, %v2683
      %v2685 = vpop.f32.mrb[0].mxu0
      %v2686 = vpop.f32.mrb[0].mxu0
      %v2687 = vadd.f32 0.0, %v2686
      %v2688 = vpop.f32.mrb[0].mxu0
      %2689 = vmatprep.mubr.bf16.mxu0 0
      %2690 = vmatmul.mubr.bf16.gmra.mrb[0].mxu0 %v2574
      %v2691 = vpop.f32.mrb[0].mxu0
      %v2692 = vadd.f32 0.0, %v2691
      %v2693 = vpop.f32.mrb[0].mxu0
      %v2694 = vpop.f32.mrb[0].mxu0
      %v2695 = vadd.f32 0.0, %v2694
      %v2696 = vpop.f32.mrb[0].mxu0
      %2697 = vmatprep.mubr.bf16.mxu0 0
      %2698 = vmatmul.mubr.bf16.gmra.mrb[0].mxu0 %v2577
      %v2699 = vpop.f32.mrb[0].mxu0
      %v2700 = vadd.f32 0.0, %v2699
      %v2701 = vpop.f32.mrb[0].mxu0
      %v2702 = vpop.f32.mrb[0].mxu0
      %v2703 = vadd.f32 0.0, %v2702
      %v2704 = vpop.f32.mrb[0].mxu0
      %2705 = vmatprep.mubr.bf16.mxu0 0
      %2706 = vmatmul.mubr.bf16.gmra.mrb[0].mxu0 %v2580
      %v2707 = vpop.f32.mrb[0].mxu0
      %v2708 = vadd.f32 0.0, %v2707
      %v2709 = vpop.f32.mrb[0].mxu0
      %v2710 = vpop.f32.mrb[0].mxu0
      %v2711 = vadd.f32 0.0, %v2710
      %v2712 = vpop.f32.mrb[0].mxu0
      %2713 = vdwg.mxu0
      %v2714 = vadd.f32 %v2484, %v2620
      %v2715 = vadd.f32 %v2485, %v2623
      %v2716 = vadd.f32 %v2486, %v2628
      %v2717 = vadd.f32 %v2487, %v2631
      %v2718 = vadd.f32 %v2488, %v2636
      %v2719 = vadd.f32 %v2489, %v2639
      %v2720 = vadd.f32 %v2490, %v2644
      %v2721 = vadd.f32 %v2491, %v2647
      %v2722 = vadd.f32 %v2492, %v2652
      %v2723 = vadd.f32 %v2493, %v2655
      %v2724 = vadd.f32 %v2494, %v2660
      %v2725 = vadd.f32 %v2495, %v2663
      %v2726 = vadd.f32 %v2496, %v2668
      %v2727 = vadd.f32 %v2497, %v2671
      %v2728 = vadd.f32 %v2498, %v2676
      %v2729 = vadd.f32 %v2499, %v2679
      %v2730 = vadd.f32 %v2500, %v2684
      %v2731 = vadd.f32 %v2501, %v2687
      %v2732 = vadd.f32 %v2502, %v2692
      %v2733 = vadd.f32 %v2503, %v2695
      %v2734 = vadd.f32 %v2504, %v2700
      %v2735 = vadd.f32 %v2505, %v2703
      %v2736 = vadd.f32 %v2506, %v2708
      %v2737 = vadd.f32 %v2507, %v2711
      %v2738 = vld [vmem:[#allocation2 + $0x78] sm:$0xff]
      %v2739 = vld [vmem:[#allocation2 + $0x80] sm:$0xff]
      %v2740 = vld [vmem:[#allocation2 + $0x88] sm:$0xff]
      %v2741 = vld [vmem:[#allocation2 + $0x90] sm:$0xff]
      %v2742 = vld [vmem:[#allocation2 + $0x98] sm:$0xff]
      %v2743 = vld [vmem:[#allocation2 + $0xa0] sm:$0xff]
      %v2744 = vld [vmem:[#allocation2 + $0xa8] sm:$0xff]
      %v2745 = vld [vmem:[#allocation2 + $0xb0] sm:$0xff]
      %v2746 = vld [vmem:[#allocation2 + $0xb8] sm:$0xff]
      %v2747 = vld [vmem:[#allocation2 + $0xc0] sm:$0xff]
      %v2748 = vld [vmem:[#allocation2 + $0xc8] sm:$0xff]
      %v2749 = vld [vmem:[#allocation2 + $0xd0] sm:$0xff]
      %v2750 = vld [vmem:[#allocation2 + $0xd8] sm:$0xff]
      %v2751 = vld [vmem:[#allocation2 + $0xe0] sm:$0xff]
      %v2752 = vld [vmem:[#allocation2 + $0xe8] sm:$0xff]
      %v2753 = vld [vmem:[#allocation2 + $0xf0] sm:$0xff]
      %v2754 = vld [vmem:[#allocation2 + $0xf8] sm:$0xff]
      %v2755 = vld [vmem:[#allocation2 + $0x100] sm:$0xff]
      %v2756 = vld [vmem:[#allocation2 + $0x108] sm:$0xff]
      %v2757 = vld [vmem:[#allocation2 + $0x110] sm:$0xff]
      %v2758 = vld [vmem:[#allocation2 + $0x118] sm:$0xff]
      %v2759 = vld [vmem:[#allocation2 + $0x120] sm:$0xff]
      %v2760 = vld [vmem:[#allocation2 + $0x128] sm:$0xff]
      %v2761 = vld [vmem:[#allocation2 + $0x130] sm:$0xff]
      %v2762 = vpack.c.bf16 %v2739, %v2738
      %v2763 = vpack.c.bf16 %v2741, %v2740
      %v2764 = vpack.c.bf16 %v2743, %v2742
      %v2765 = vpack.c.bf16 %v2745, %v2744
      %v2766 = vpack.c.bf16 %v2747, %v2746
      %v2767 = vpack.c.bf16 %v2749, %v2748
      %v2768 = vpack.c.bf16 %v2751, %v2750
      %v2769 = vpack.c.bf16 %v2753, %v2752
      %v2770 = vpack.c.bf16 %v2755, %v2754
      %v2771 = vpack.c.bf16 %v2757, %v2756
      %v2772 = vpack.c.bf16 %v2759, %v2758
      %v2773 = vpack.c.bf16 %v2761, %v2760
      %s2774 = scalar_lea.vmem %s4, 28
      %v2775 = vld [vmem:[%s2774] sm:$0xf]
      %v2777 = vsel %vm335, %v2762, 0
      %v2780 = vsel %vm335, %v2763, 0
      %v2783 = vsel %vm335, %v2764, 0
      %v2786 = vsel %vm335, %v2765, 0
      %v2789 = vsel %vm335, %v2766, 0
      %v2792 = vsel %vm335, %v2767, 0
      %v2795 = vsel %vm335, %v2768, 0
      %v2798 = vsel %vm335, %v2769, 0
      %v2801 = vsel %vm335, %v2770, 0
      %v2804 = vsel %vm335, %v2771, 0
      %v2807 = vsel %vm335, %v2772, 0
      %v2810 = vsel %vm335, %v2773, 0
      %v2813 = vsel %vm1287, %v2775, 0
      %2815 = vmatprep.subr.bf16.mxu0 0
      %2816 = vmatpush1.bf16.msra.mxu0 %v2813
      %2817 = vmatprep.subr.bf16.mxu0 0
      %2818 = vmatpush1.bf16.msra.mxu0 0
      %2819 = vmatprep.subr.bf16.mxu0 0
      %2820 = vmatpush1.bf16.msra.mxu0 0
      %2821 = vmatprep.subr.bf16.mxu0 0
      %2822 = vmatpush1.bf16.msra.mxu0 0
      %2823 = vmatprep.subr.bf16.mxu0 0
      %2824 = vmatpush1.bf16.msra.mxu0 0
      %2825 = vmatprep.subr.bf16.mxu0 0
      %2826 = vmatpush1.bf16.msra.mxu0 0
      %2827 = vmatprep.subr.bf16.mxu0 0
      %2828 = vmatpush1.bf16.msra.mxu0 0
      %2829 = vmatprep.subr.bf16.mxu0 0
      %2830 = vmatpush1.bf16.msra.mxu0 0
      %2831 = vmatprep.subr.bf16.mxu0 0
      %2832 = vmatpush1.bf16.msra.mxu0 0
      %2833 = vmatprep.subr.bf16.mxu0 0
      %2834 = vmatpush1.bf16.msra.mxu0 0
      %2835 = vmatprep.subr.bf16.mxu0 0
      %2836 = vmatpush1.bf16.msra.mxu0 0
      %2837 = vmatprep.subr.bf16.mxu0 0
      %2838 = vmatpush1.bf16.msra.mxu0 0
      %2839 = vmatprep.subr.bf16.mxu0 0
      %2840 = vmatpush1.bf16.msra.mxu0 0
      %2841 = vmatprep.subr.bf16.mxu0 0
      %2842 = vmatpush1.bf16.msra.mxu0 0
      %2843 = vmatprep.subr.bf16.mxu0 0
      %2844 = vmatpush1.bf16.msra.mxu0 0
      %2845 = vmatprep.subr.bf16.mxu0 0
      %2846 = vmatpush1.bf16.msra.mxu0 0
      %2847 = vmatprep.mubr.bf16.mxu0 0
      %2848 = vmatmul.mubr.bf16.gmra.mrb[0].mxu0 %v2777
      %v2849 = vpop.f32.mrb[0].mxu0
      %v2850 = vadd.f32 0.0, %v2849
      %v2851 = vpop.f32.mrb[0].mxu0
      %v2852 = vpop.f32.mrb[0].mxu0
      %v2853 = vadd.f32 0.0, %v2852
      %v2854 = vpop.f32.mrb[0].mxu0
      %2855 = vmatprep.mubr.bf16.mxu0 0
      %2856 = vmatmul.mubr.bf16.gmra.mrb[0].mxu0 %v2780
      %v2857 = vpop.f32.mrb[0].mxu0
      %v2858 = vadd.f32 0.0, %v2857
      %v2859 = vpop.f32.mrb[0].mxu0
      %v2860 = vpop.f32.mrb[0].mxu0
      %v2861 = vadd.f32 0.0, %v2860
      %v2862 = vpop.f32.mrb[0].mxu0
      %2863 = vmatprep.mubr.bf16.mxu0 0
      %2864 = vmatmul.mubr.bf16.gmra.mrb[0].mxu0 %v2783
      %v2865 = vpop.f32.mrb[0].mxu0
      %v2866 = vadd.f32 0.0, %v2865
      %v2867 = vpop.f32.mrb[0].mxu0
      %v2868 = vpop.f32.mrb[0].mxu0
      %v2869 = vadd.f32 0.0, %v2868
      %v2870 = vpop.f32.mrb[0].mxu0
      %2871 = vmatprep.mubr.bf16.mxu0 0
      %2872 = vmatmul.mubr.bf16.gmra.mrb[0].mxu0 %v2786
      %v2873 = vpop.f32.mrb[0].mxu0
      %v2874 = vadd.f32 0.0, %v2873
      %v2875 = vpop.f32.mrb[0].mxu0
      %v2876 = vpop.f32.mrb[0].mxu0
      %v2877 = vadd.f32 0.0, %v2876
      %v2878 = vpop.f32.mrb[0].mxu0
      %2879 = vmatprep.mubr.bf16.mxu0 0
      %2880 = vmatmul.mubr.bf16.gmra.mrb[0].mxu0 %v2789
      %v2881 = vpop.f32.mrb[0].mxu0
      %v2882 = vadd.f32 0.0, %v2881
      %v2883 = vpop.f32.mrb[0].mxu0
      %v2884 = vpop.f32.mrb[0].mxu0
      %v2885 = vadd.f32 0.0, %v2884
      %v2886 = vpop.f32.mrb[0].mxu0
      %2887 = vmatprep.mubr.bf16.mxu0 0
      %2888 = vmatmul.mubr.bf16.gmra.mrb[0].mxu0 %v2792
      %v2889 = vpop.f32.mrb[0].mxu0
      %v2890 = vadd.f32 0.0, %v2889
      %v2891 = vpop.f32.mrb[0].mxu0
      %v2892 = vpop.f32.mrb[0].mxu0
      %v2893 = vadd.f32 0.0, %v2892
      %v2894 = vpop.f32.mrb[0].mxu0
      %2895 = vmatprep.mubr.bf16.mxu0 0
      %2896 = vmatmul.mubr.bf16.gmra.mrb[0].mxu0 %v2795
      %v2897 = vpop.f32.mrb[0].mxu0
      %v2898 = vadd.f32 0.0, %v2897
      %v2899 = vpop.f32.mrb[0].mxu0
      %v2900 = vpop.f32.mrb[0].mxu0
      %v2901 = vadd.f32 0.0, %v2900
      %v2902 = vpop.f32.mrb[0].mxu0
      %2903 = vmatprep.mubr.bf16.mxu0 0
      %2904 = vmatmul.mubr.bf16.gmra.mrb[0].mxu0 %v2798
      %v2905 = vpop.f32.mrb[0].mxu0
      %v2906 = vadd.f32 0.0, %v2905
      %v2907 = vpop.f32.mrb[0].mxu0
      %v2908 = vpop.f32.mrb[0].mxu0
      %v2909 = vadd.f32 0.0, %v2908
      %v2910 = vpop.f32.mrb[0].mxu0
      %2911 = vmatprep.mubr.bf16.mxu0 0
      %2912 = vmatmul.mubr.bf16.gmra.mrb[0].mxu0 %v2801
      %v2913 = vpop.f32.mrb[0].mxu0
      %v2914 = vadd.f32 0.0, %v2913
      %v2915 = vpop.f32.mrb[0].mxu0
      %v2916 = vpop.f32.mrb[0].mxu0
      %v2917 = vadd.f32 0.0, %v2916
      %v2918 = vpop.f32.mrb[0].mxu0
      %2919 = vmatprep.mubr.bf16.mxu0 0
      %2920 = vmatmul.mubr.bf16.gmra.mrb[0].mxu0 %v2804
      %v2921 = vpop.f32.mrb[0].mxu0
      %v2922 = vadd.f32 0.0, %v2921
      %v2923 = vpop.f32.mrb[0].mxu0
      %v2924 = vpop.f32.mrb[0].mxu0
      %v2925 = vadd.f32 0.0, %v2924
      %v2926 = vpop.f32.mrb[0].mxu0
      %2927 = vmatprep.mubr.bf16.mxu0 0
      %2928 = vmatmul.mubr.bf16.gmra.mrb[0].mxu0 %v2807
      %v2929 = vpop.f32.mrb[0].mxu0
      %v2930 = vadd.f32 0.0, %v2929
      %v2931 = vpop.f32.mrb[0].mxu0
      %v2932 = vpop.f32.mrb[0].mxu0
      %v2933 = vadd.f32 0.0, %v2932
      %v2934 = vpop.f32.mrb[0].mxu0
      %2935 = vmatprep.mubr.bf16.mxu0 0
      %2936 = vmatmul.mubr.bf16.gmra.mrb[0].mxu0 %v2810
      %v2937 = vpop.f32.mrb[0].mxu0
      %v2938 = vadd.f32 0.0, %v2937
      %v2939 = vpop.f32.mrb[0].mxu0
      %v2940 = vpop.f32.mrb[0].mxu0
      %v2941 = vadd.f32 0.0, %v2940
      %v2942 = vpop.f32.mrb[0].mxu0
      %2943 = vdwg.mxu0
      %v2944 = vadd.f32 %v2714, %v2850
      %v2945 = vadd.f32 %v2715, %v2853
      %v2946 = vadd.f32 %v2716, %v2858
      %v2947 = vadd.f32 %v2717, %v2861
      %v2948 = vadd.f32 %v2718, %v2866
      %v2949 = vadd.f32 %v2719, %v2869
      %v2950 = vadd.f32 %v2720, %v2874
      %v2951 = vadd.f32 %v2721, %v2877
      %v2952 = vadd.f32 %v2722, %v2882
      %v2953 = vadd.f32 %v2723, %v2885
      %v2954 = vadd.f32 %v2724, %v2890
      %v2955 = vadd.f32 %v2725, %v2893
      %v2956 = vadd.f32 %v2726, %v2898
      %v2957 = vadd.f32 %v2727, %v2901
      %v2958 = vadd.f32 %v2728, %v2906
      %v2959 = vadd.f32 %v2729, %v2909
      %v2960 = vadd.f32 %v2730, %v2914
      %v2961 = vadd.f32 %v2731, %v2917
      %v2962 = vadd.f32 %v2732, %v2922
      %v2963 = vadd.f32 %v2733, %v2925
      %v2964 = vadd.f32 %v2734, %v2930
      %v2965 = vadd.f32 %v2735, %v2933
      %v2966 = vadd.f32 %v2736, %v2938
      %v2967 = vadd.f32 %v2737, %v2941
      %v2968 = vld [vmem:[#allocation2 + $0x79] sm:$0xff]
      %v2969 = vld [vmem:[#allocation2 + $0x81] sm:$0xff]
      %v2970 = vld [vmem:[#allocation2 + $0x89] sm:$0xff]
      %v2971 = vld [vmem:[#allocation2 + $0x91] sm:$0xff]
      %v2972 = vld [vmem:[#allocation2 + $0x99] sm:$0xff]
      %v2973 = vld [vmem:[#allocation2 + $0xa1] sm:$0xff]
      %v2974 = vld [vmem:[#allocation2 + $0xa9] sm:$0xff]
      %v2975 = vld [vmem:[#allocation2 + $0xb1] sm:$0xff]
      %v2976 = vld [vmem:[#allocation2 + $0xb9] sm:$0xff]
      %v2977 = vld [vmem:[#allocation2 + $0xc1] sm:$0xff]
      %v2978 = vld [vmem:[#allocation2 + $0xc9] sm:$0xff]
      %v2979 = vld [vmem:[#allocation2 + $0xd1] sm:$0xff]
      %v2980 = vld [vmem:[#allocation2 + $0xd9] sm:$0xff]
      %v2981 = vld [vmem:[#allocation2 + $0xe1] sm:$0xff]
      %v2982 = vld [vmem:[#allocation2 + $0xe9] sm:$0xff]
      %v2983 = vld [vmem:[#allocation2 + $0xf1] sm:$0xff]
      %v2984 = vld [vmem:[#allocation2 + $0xf9] sm:$0xff]
      %v2985 = vld [vmem:[#allocation2 + $0x101] sm:$0xff]
      %v2986 = vld [vmem:[#allocation2 + $0x109] sm:$0xff]
      %v2987 = vld [vmem:[#allocation2 + $0x111] sm:$0xff]
      %v2988 = vld [vmem:[#allocation2 + $0x119] sm:$0xff]
      %v2989 = vld [vmem:[#allocation2 + $0x121] sm:$0xff]
      %v2990 = vld [vmem:[#allocation2 + $0x129] sm:$0xff]
      %v2991 = vld [vmem:[#allocation2 + $0x131] sm:$0xff]
      %v2992 = vpack.c.bf16 %v2969, %v2968
      %v2993 = vpack.c.bf16 %v2971, %v2970
      %v2994 = vpack.c.bf16 %v2973, %v2972
      %v2995 = vpack.c.bf16 %v2975, %v2974
      %v2996 = vpack.c.bf16 %v2977, %v2976
      %v2997 = vpack.c.bf16 %v2979, %v2978
      %v2998 = vpack.c.bf16 %v2981, %v2980
      %v2999 = vpack.c.bf16 %v2983, %v2982
      %v3000 = vpack.c.bf16 %v2985, %v2984
      %v3001 = vpack.c.bf16 %v2987, %v2986
      %v3002 = vpack.c.bf16 %v2989, %v2988
      %v3003 = vpack.c.bf16 %v2991, %v2990
      %s3004 = scalar_lea.vmem %s4, 32
      %v3005 = vld [vmem:[%s3004] sm:$0xf]
      %v3007 = vsel %vm335, %v2992, 0
      %v3010 = vsel %vm335, %v2993, 0
      %v3013 = vsel %vm335, %v2994, 0
      %v3016 = vsel %vm335, %v2995, 0
      %v3019 = vsel %vm335, %v2996, 0
      %v3022 = vsel %vm335, %v2997, 0
      %v3025 = vsel %vm335, %v2998, 0
      %v3028 = vsel %vm335, %v2999, 0
      %v3031 = vsel %vm335, %v3000, 0
      %v3034 = vsel %vm335, %v3001, 0
      %v3037 = vsel %vm335, %v3002, 0
      %v3040 = vsel %vm335, %v3003, 0
      %v3043 = vsel %vm1287, %v3005, 0
      %3045 = vmatprep.subr.bf16.mxu0 0
      %3046 = vmatpush1.bf16.msra.mxu0 %v3043
      %3047 = vmatprep.subr.bf16.mxu0 0
      %3048 = vmatpush1.bf16.msra.mxu0 0
      %3049 = vmatprep.subr.bf16.mxu0 0
      %3050 = vmatpush1.bf16.msra.mxu0 0
      %3051 = vmatprep.subr.bf16.mxu0 0
      %3052 = vmatpush1.bf16.msra.mxu0 0
      %3053 = vmatprep.subr.bf16.mxu0 0
      %3054 = vmatpush1.bf16.msra.mxu0 0
      %3055 = vmatprep.subr.bf16.mxu0 0
      %3056 = vmatpush1.bf16.msra.mxu0 0
      %3057 = vmatprep.subr.bf16.mxu0 0
      %3058 = vmatpush1.bf16.msra.mxu0 0
      %3059 = vmatprep.subr.bf16.mxu0 0
      %3060 = vmatpush1.bf16.msra.mxu0 0
      %3061 = vmatprep.subr.bf16.mxu0 0
      %3062 = vmatpush1.bf16.msra.mxu0 0
      %3063 = vmatprep.subr.bf16.mxu0 0
      %3064 = vmatpush1.bf16.msra.mxu0 0
      %3065 = vmatprep.subr.bf16.mxu0 0
      %3066 = vmatpush1.bf16.msra.mxu0 0
      %3067 = vmatprep.subr.bf16.mxu0 0
      %3068 = vmatpush1.bf16.msra.mxu0 0
      %3069 = vmatprep.subr.bf16.mxu0 0
      %3070 = vmatpush1.bf16.msra.mxu0 0
      %3071 = vmatprep.subr.bf16.mxu0 0
      %3072 = vmatpush1.bf16.msra.mxu0 0
      %3073 = vmatprep.subr.bf16.mxu0 0
      %3074 = vmatpush1.bf16.msra.mxu0 0
      %3075 = vmatprep.subr.bf16.mxu0 0
      %3076 = vmatpush1.bf16.msra.mxu0 0
      %3077 = vmatprep.mubr.bf16.mxu0 0
      %3078 = vmatmul.mubr.bf16.gmra.mrb[0].mxu0 %v3007
      %v3079 = vpop.f32.mrb[0].mxu0
      %v3080 = vadd.f32 0.0, %v3079
      %v3081 = vpop.f32.mrb[0].mxu0
      %v3082 = vpop.f32.mrb[0].mxu0
      %v3083 = vadd.f32 0.0, %v3082
      %v3084 = vpop.f32.mrb[0].mxu0
      %3085 = vmatprep.mubr.bf16.mxu0 0
      %3086 = vmatmul.mubr.bf16.gmra.mrb[0].mxu0 %v3010
      %v3087 = vpop.f32.mrb[0].mxu0
      %v3088 = vadd.f32 0.0, %v3087
      %v3089 = vpop.f32.mrb[0].mxu0
      %v3090 = vpop.f32.mrb[0].mxu0
      %v3091 = vadd.f32 0.0, %v3090
      %v3092 = vpop.f32.mrb[0].mxu0
      %3093 = vmatprep.mubr.bf16.mxu0 0
      %3094 = vmatmul.mubr.bf16.gmra.mrb[0].mxu0 %v3013
      %v3095 = vpop.f32.mrb[0].mxu0
      %v3096 = vadd.f32 0.0, %v3095
      %v3097 = vpop.f32.mrb[0].mxu0
      %v3098 = vpop.f32.mrb[0].mxu0
      %v3099 = vadd.f32 0.0, %v3098
      %v3100 = vpop.f32.mrb[0].mxu0
      %3101 = vmatprep.mubr.bf16.mxu0 0
      %3102 = vmatmul.mubr.bf16.gmra.mrb[0].mxu0 %v3016
      %v3103 = vpop.f32.mrb[0].mxu0
      %v3104 = vadd.f32 0.0, %v3103
      %v3105 = vpop.f32.mrb[0].mxu0
      %v3106 = vpop.f32.mrb[0].mxu0
      %v3107 = vadd.f32 0.0, %v3106
      %v3108 = vpop.f32.mrb[0].mxu0
      %3109 = vmatprep.mubr.bf16.mxu0 0
      %3110 = vmatmul.mubr.bf16.gmra.mrb[0].mxu0 %v3019
      %v3111 = vpop.f32.mrb[0].mxu0
      %v3112 = vadd.f32 0.0, %v3111
      %v3113 = vpop.f32.mrb[0].mxu0
      %v3114 = vpop.f32.mrb[0].mxu0
      %v3115 = vadd.f32 0.0, %v3114
      %v3116 = vpop.f32.mrb[0].mxu0
      %3117 = vmatprep.mubr.bf16.mxu0 0
      %3118 = vmatmul.mubr.bf16.gmra.mrb[0].mxu0 %v3022
      %v3119 = vpop.f32.mrb[0].mxu0
      %v3120 = vadd.f32 0.0, %v3119
      %v3121 = vpop.f32.mrb[0].mxu0
      %v3122 = vpop.f32.mrb[0].mxu0
      %v3123 = vadd.f32 0.0, %v3122
      %v3124 = vpop.f32.mrb[0].mxu0
      %3125 = vmatprep.mubr.bf16.mxu0 0
      %3126 = vmatmul.mubr.bf16.gmra.mrb[0].mxu0 %v3025
      %v3127 = vpop.f32.mrb[0].mxu0
      %v3128 = vadd.f32 0.0, %v3127
      %v3129 = vpop.f32.mrb[0].mxu0
      %v3130 = vpop.f32.mrb[0].mxu0
      %v3131 = vadd.f32 0.0, %v3130
      %v3132 = vpop.f32.mrb[0].mxu0
      %3133 = vmatprep.mubr.bf16.mxu0 0
      %3134 = vmatmul.mubr.bf16.gmra.mrb[0].mxu0 %v3028
      %v3135 = vpop.f32.mrb[0].mxu0
      %v3136 = vadd.f32 0.0, %v3135
      %v3137 = vpop.f32.mrb[0].mxu0
      %v3138 = vpop.f32.mrb[0].mxu0
      %v3139 = vadd.f32 0.0, %v3138
      %v3140 = vpop.f32.mrb[0].mxu0
      %3141 = vmatprep.mubr.bf16.mxu0 0
      %3142 = vmatmul.mubr.bf16.gmra.mrb[0].mxu0 %v3031
      %v3143 = vpop.f32.mrb[0].mxu0
      %v3144 = vadd.f32 0.0, %v3143
      %v3145 = vpop.f32.mrb[0].mxu0
      %v3146 = vpop.f32.mrb[0].mxu0
      %v3147 = vadd.f32 0.0, %v3146
      %v3148 = vpop.f32.mrb[0].mxu0
      %3149 = vmatprep.mubr.bf16.mxu0 0
      %3150 = vmatmul.mubr.bf16.gmra.mrb[0].mxu0 %v3034
      %v3151 = vpop.f32.mrb[0].mxu0
      %v3152 = vadd.f32 0.0, %v3151
      %v3153 = vpop.f32.mrb[0].mxu0
      %v3154 = vpop.f32.mrb[0].mxu0
      %v3155 = vadd.f32 0.0, %v3154
      %v3156 = vpop.f32.mrb[0].mxu0
      %3157 = vmatprep.mubr.bf16.mxu0 0
      %3158 = vmatmul.mubr.bf16.gmra.mrb[0].mxu0 %v3037
      %v3159 = vpop.f32.mrb[0].mxu0
      %v3160 = vadd.f32 0.0, %v3159
      %v3161 = vpop.f32.mrb[0].mxu0
      %v3162 = vpop.f32.mrb[0].mxu0
      %v3163 = vadd.f32 0.0, %v3162
      %v3164 = vpop.f32.mrb[0].mxu0
      %3165 = vmatprep.mubr.bf16.mxu0 0
      %3166 = vmatmul.mubr.bf16.gmra.mrb[0].mxu0 %v3040
      %v3167 = vpop.f32.mrb[0].mxu0
      %v3168 = vadd.f32 0.0, %v3167
      %v3169 = vpop.f32.mrb[0].mxu0
      %v3170 = vpop.f32.mrb[0].mxu0
      %v3171 = vadd.f32 0.0, %v3170
      %v3172 = vpop.f32.mrb[0].mxu0
      %3173 = vdwg.mxu0
      %v3174 = vadd.f32 %v2944, %v3080
      %v3175 = vadd.f32 %v2945, %v3083
      %v3176 = vadd.f32 %v2946, %v3088
      %v3177 = vadd.f32 %v2947, %v3091
      %v3178 = vadd.f32 %v2948, %v3096
      %v3179 = vadd.f32 %v2949, %v3099
      %v3180 = vadd.f32 %v2950, %v3104
      %v3181 = vadd.f32 %v2951, %v3107
      %v3182 = vadd.f32 %v2952, %v3112
      %v3183 = vadd.f32 %v2953, %v3115
      %v3184 = vadd.f32 %v2954, %v3120
      %v3185 = vadd.f32 %v2955, %v3123
      %v3186 = vadd.f32 %v2956, %v3128
      %v3187 = vadd.f32 %v2957, %v3131
      %v3188 = vadd.f32 %v2958, %v3136
      %v3189 = vadd.f32 %v2959, %v3139
      %v3190 = vadd.f32 %v2960, %v3144
      %v3191 = vadd.f32 %v2961, %v3147
      %v3192 = vadd.f32 %v2962, %v3152
      %v3193 = vadd.f32 %v2963, %v3155
      %v3194 = vadd.f32 %v2964, %v3160
      %v3195 = vadd.f32 %v2965, %v3163
      %v3196 = vadd.f32 %v2966, %v3168
      %v3197 = vadd.f32 %v2967, %v3171
      %v3199 = vlaneseq
      %v3200 = vshrl.u32 %v3199, 7
      %v3201 = vsub.s32 0, %v3200
      %v3202 = vrot.slane %v309, %v3201
      %v3204 = vadd.f32 %v3174, %v3202
      %v3205 = vadd.f32 %v3175, %v3202
      %v3206 = vadd.f32 %v3176, %v3202
      %v3207 = vadd.f32 %v3177, %v3202
      %v3208 = vadd.f32 %v3178, %v3202
      %v3209 = vadd.f32 %v3179, %v3202
      %v3210 = vadd.f32 %v3180, %v3202
      %v3211 = vadd.f32 %v3181, %v3202
      %v3212 = vadd.f32 %v3182, %v3202
      %v3213 = vadd.f32 %v3183, %v3202
      %v3214 = vadd.f32 %v3184, %v3202
      %v3215 = vadd.f32 %v3185, %v3202
      %v3216 = vadd.f32 %v3186, %v3202
      %v3217 = vadd.f32 %v3187, %v3202
      %v3218 = vadd.f32 %v3188, %v3202
      %v3219 = vadd.f32 %v3189, %v3202
      %v3220 = vadd.f32 %v3190, %v3202
      %v3221 = vadd.f32 %v3191, %v3202
      %v3222 = vadd.f32 %v3192, %v3202
      %v3223 = vadd.f32 %v3193, %v3202
      %v3224 = vadd.f32 %v3194, %v3202
      %v3225 = vadd.f32 %v3195, %v3202
      %v3226 = vadd.f32 %v3196, %v3202
      %v3227 = vadd.f32 %v3197, %v3202
      %v3228 = vmax.f32 %v3204, 0.0
      %v3229 = vmax.f32 %v3205, 0.0
      %v3230 = vmax.f32 %v3206, 0.0
      %v3231 = vmax.f32 %v3207, 0.0
      %v3232 = vmax.f32 %v3208, 0.0
      %v3233 = vmax.f32 %v3209, 0.0
      %v3234 = vmax.f32 %v3210, 0.0
      %v3235 = vmax.f32 %v3211, 0.0
      %v3236 = vmax.f32 %v3212, 0.0
      %v3237 = vmax.f32 %v3213, 0.0
      %v3238 = vmax.f32 %v3214, 0.0
      %v3239 = vmax.f32 %v3215, 0.0
      %v3240 = vmax.f32 %v3216, 0.0
      %v3241 = vmax.f32 %v3217, 0.0
      %v3242 = vmax.f32 %v3218, 0.0
      %v3243 = vmax.f32 %v3219, 0.0
      %v3244 = vmax.f32 %v3220, 0.0
      %v3245 = vmax.f32 %v3221, 0.0
      %v3246 = vmax.f32 %v3222, 0.0
      %v3247 = vmax.f32 %v3223, 0.0
      %v3248 = vmax.f32 %v3224, 0.0
      %v3249 = vmax.f32 %v3225, 0.0
      %v3250 = vmax.f32 %v3226, 0.0
      %v3251 = vmax.f32 %v3227, 0.0
      %v3252 = vsel %vm783, %v3228, 0.0
      %v3253 = vsel %vm784, %v3229, 0.0
      %v3254 = vsel %vm785, %v3230, 0.0
      %v3255 = vsel %vm786, %v3231, 0.0
      %v3256 = vsel %vm787, %v3232, 0.0
      %v3257 = vsel %vm788, %v3233, 0.0
      %v3258 = vsel %vm789, %v3234, 0.0
      %v3259 = vsel %vm790, %v3235, 0.0
      %v3260 = vsel %vm791, %v3236, 0.0
      %v3261 = vsel %vm792, %v3237, 0.0
      %v3262 = vsel %vm793, %v3238, 0.0
      %v3263 = vsel %vm794, %v3239, 0.0
      %v3264 = vsel %vm795, %v3240, 0.0
      %v3265 = vsel %vm796, %v3241, 0.0
      %v3266 = vsel %vm797, %v3242, 0.0
      %v3267 = vsel %vm798, %v3243, 0.0
      %v3268 = vsel %vm799, %v3244, 0.0
      %v3269 = vsel %vm800, %v3245, 0.0
      %v3270 = vsel %vm801, %v3246, 0.0
      %v3271 = vsel %vm802, %v3247, 0.0
      %v3272 = vsel %vm803, %v3248, 0.0
      %v3273 = vsel %vm804, %v3249, 0.0
      %v3274 = vsel %vm805, %v3250, 0.0
      %v3275 = vsel %vm806, %v3251, 0.0
      %v3276 = vpack.c.bf16 %v3253, %v3252
      %v3277 = vpack.c.bf16 %v3255, %v3254
      %v3278 = vpack.c.bf16 %v3257, %v3256
      %v3279 = vpack.c.bf16 %v3259, %v3258
      %v3280 = vpack.c.bf16 %v3261, %v3260
      %v3281 = vpack.c.bf16 %v3263, %v3262
      %v3282 = vpack.c.bf16 %v3265, %v3264
      %v3283 = vpack.c.bf16 %v3267, %v3266
      %v3284 = vpack.c.bf16 %v3269, %v3268
      %v3285 = vpack.c.bf16 %v3271, %v3270
      %v3286 = vpack.c.bf16 %v3273, %v3272
      %v3287 = vpack.c.bf16 %v3275, %v3274
      %v3300 = vunpack.c.l.b16 %v3276
      %v3301 = vunpack.c.h.b16 %v3276
      %v3302 = vunpack.c.l.b16 %v3277
      %v3303 = vunpack.c.h.b16 %v3277
      %v3304 = vunpack.c.l.b16 %v3278
      %v3305 = vunpack.c.h.b16 %v3278
      %v3306 = vunpack.c.l.b16 %v3279
      %v3307 = vunpack.c.h.b16 %v3279
      %v3308 = vunpack.c.l.b16 %v3280
      %v3309 = vunpack.c.h.b16 %v3280
      %v3310 = vunpack.c.l.b16 %v3281
      %v3311 = vunpack.c.h.b16 %v3281
      %v3312 = vunpack.c.l.b16 %v3282
      %v3313 = vunpack.c.h.b16 %v3282
      %v3314 = vunpack.c.l.b16 %v3283
      %v3315 = vunpack.c.h.b16 %v3283
      %v3316 = vunpack.c.l.b16 %v3284
      %v3317 = vunpack.c.h.b16 %v3284
      %v3318 = vunpack.c.l.b16 %v3285
      %v3319 = vunpack.c.h.b16 %v3285
      %v3320 = vunpack.c.l.b16 %v3286
      %v3321 = vunpack.c.h.b16 %v3286
      %v3322 = vunpack.c.l.b16 %v3287
      %v3323 = vunpack.c.h.b16 %v3287
      %v3324 = vpack.c.b16 %v3300, %v3300
      %v3325 = vpack.c.b16 %v3301, %v3301
      %v3326 = vpack.c.b16 %v3302, %v3302
      %v3327 = vpack.c.b16 %v3303, %v3303
      %v3328 = vpack.c.b16 %v3304, %v3304
      %v3329 = vpack.c.b16 %v3305, %v3305
      %v3330 = vpack.c.b16 %v3306, %v3306
      %v3331 = vpack.c.b16 %v3307, %v3307
      %v3332 = vpack.c.b16 %v3308, %v3308
      %v3333 = vpack.c.b16 %v3309, %v3309
      %v3334 = vpack.c.b16 %v3310, %v3310
      %v3335 = vpack.c.b16 %v3311, %v3311
      %v3336 = vpack.c.b16 %v3312, %v3312
      %v3337 = vpack.c.b16 %v3313, %v3313
      %v3338 = vpack.c.b16 %v3314, %v3314
      %v3339 = vpack.c.b16 %v3315, %v3315
      %v3340 = vpack.c.b16 %v3316, %v3316
      %v3341 = vpack.c.b16 %v3317, %v3317
      %v3342 = vpack.c.b16 %v3318, %v3318
      %v3343 = vpack.c.b16 %v3319, %v3319
      %v3344 = vpack.c.b16 %v3320, %v3320
      %v3345 = vpack.c.b16 %v3321, %v3321
      %v3346 = vpack.c.b16 %v3322, %v3322
      %v3347 = vpack.c.b16 %v3323, %v3323
      %3372 = vst.msk [vmem:[#allocation3 + $0x30] sm:$0xf] %vm348, %v3324
      %3373 = vst.msk [vmem:[#allocation3 + $0x34] sm:$0xf] %vm348, %v3325
      %3374 = vst.msk [vmem:[#allocation3 + $0x38] sm:$0xf] %vm348, %v3326
      %3375 = vst.msk [vmem:[#allocation3 + $0x3c] sm:$0xf] %vm348, %v3327
      %3376 = vst.msk [vmem:[#allocation3 + $0x40] sm:$0xf] %vm348, %v3328
      %3377 = vst.msk [vmem:[#allocation3 + $0x44] sm:$0xf] %vm348, %v3329
      %3378 = vst.msk [vmem:[#allocation3 + $0x48] sm:$0xf] %vm348, %v3330
      %3379 = vst.msk [vmem:[#allocation3 + $0x4c] sm:$0xf] %vm348, %v3331
      %3380 = vst.msk [vmem:[#allocation3 + $0x50] sm:$0xf] %vm348, %v3332
      %3381 = vst.msk [vmem:[#allocation3 + $0x54] sm:$0xf] %vm348, %v3333
      %3382 = vst.msk [vmem:[#allocation3 + $0x58] sm:$0xf] %vm348, %v3334
      %3383 = vst.msk [vmem:[#allocation3 + $0x5c] sm:$0xf] %vm348, %v3335
      %3384 = vst.msk [vmem:[#allocation3 + $0x60] sm:$0xf] %vm348, %v3336
      %3385 = vst.msk [vmem:[#allocation3 + $0x64] sm:$0xf] %vm348, %v3337
      %3386 = vst.msk [vmem:[#allocation3 + $0x68] sm:$0xf] %vm348, %v3338
      %3387 = vst.msk [vmem:[#allocation3 + $0x6c] sm:$0xf] %vm348, %v3339
      %3388 = vst.msk [vmem:[#allocation3 + $0x70] sm:$0xf] %vm348, %v3340
      %3389 = vst.msk [vmem:[#allocation3 + $0x74] sm:$0xf] %vm348, %v3341
      %3390 = vst.msk [vmem:[#allocation3 + $0x78] sm:$0xf] %vm348, %v3342
      %3391 = vst.msk [vmem:[#allocation3 + $0x7c] sm:$0xf] %vm348, %v3343
      %3392 = vst.msk [vmem:[#allocation3 + $0x80] sm:$0xf] %vm348, %v3344
      %3393 = vst.msk [vmem:[#allocation3 + $0x84] sm:$0xf] %vm348, %v3345
      %3394 = vst.msk [vmem:[#allocation3 + $0x88] sm:$0xf] %vm348, %v3346
      %3395 = vst.msk [vmem:[#allocation3 + $0x8c] sm:$0xf] %vm348, %v3347
      %v3396 = vld [vmem:[#allocation2 + $0x107] sm:$0xff]
      %v3397 = vld [vmem:[#allocation2 + $0x10f] sm:$0xff]
      %v3398 = vld [vmem:[#allocation2 + $0x117] sm:$0xff]
      %v3399 = vld [vmem:[#allocation2 + $0x11f] sm:$0xff]
      %v3400 = vld [vmem:[#allocation2 + $0x127] sm:$0xff]
      %v3401 = vld [vmem:[#allocation2 + $0x12f] sm:$0xff]
      %v3402 = vld [vmem:[#allocation2 + $0x137] sm:$0xff]
      %v3403 = vld [vmem:[#allocation2 + $0x13f] sm:$0xff]
      %v3404 = vld [vmem:[#allocation2 + $0x147] sm:$0xff]
      %v3405 = vld [vmem:[#allocation2 + $0x14f] sm:$0xff]
      %v3406 = vld [vmem:[#allocation2 + $0x157] sm:$0xff]
      %v3407 = vld [vmem:[#allocation2 + $0x15f] sm:$0xff]
      %v3408 = vld [vmem:[#allocation2 + $0x167] sm:$0xff]
      %v3409 = vld [vmem:[#allocation2 + $0x16f] sm:$0xff]
      %v3410 = vld [vmem:[#allocation2 + $0x177] sm:$0xff]
      %v3411 = vld [vmem:[#allocation2 + $0x17f] sm:$0xff]
      %v3412 = vld [vmem:[#allocation2 + $0x187] sm:$0xff]
      %v3413 = vld [vmem:[#allocation2 + $0x18f] sm:$0xff]
      %v3414 = vld [vmem:[#allocation2 + $0x197] sm:$0xff]
      %v3415 = vld [vmem:[#allocation2 + $0x19f] sm:$0xff]
      %v3416 = vld [vmem:[#allocation2 + $0x1a7] sm:$0xff]
      %v3417 = vld [vmem:[#allocation2 + $0x1af] sm:$0xff]
      %v3418 = vld [vmem:[#allocation2 + $0x1b7] sm:$0xff]
      %v3419 = vld [vmem:[#allocation2 + $0x1bf] sm:$0xff]
      %v3420 = vpack.c.bf16 %v3397, %v3396
      %v3421 = vpack.c.bf16 %v3399, %v3398
      %v3422 = vpack.c.bf16 %v3401, %v3400
      %v3423 = vpack.c.bf16 %v3403, %v3402
      %v3424 = vpack.c.bf16 %v3405, %v3404
      %v3425 = vpack.c.bf16 %v3407, %v3406
      %v3426 = vpack.c.bf16 %v3409, %v3408
      %v3427 = vpack.c.bf16 %v3411, %v3410
      %v3428 = vpack.c.bf16 %v3413, %v3412
      %v3429 = vpack.c.bf16 %v3415, %v3414
      %v3430 = vpack.c.bf16 %v3417, %v3416
      %v3431 = vpack.c.bf16 %v3419, %v3418
      %v3432 = vld [vmem:[%s4] sm:$0xf]
      %v3433 = vld [vmem:[#allocation2 + $0x108] sm:$0xff]
      %v3434 = vld [vmem:[#allocation2 + $0x110] sm:$0xff]
      %v3435 = vld [vmem:[#allocation2 + $0x118] sm:$0xff]
      %v3436 = vld [vmem:[#allocation2 + $0x120] sm:$0xff]
      %v3437 = vld [vmem:[#allocation2 + $0x128] sm:$0xff]
      %v3438 = vld [vmem:[#allocation2 + $0x130] sm:$0xff]
      %v3439 = vld [vmem:[#allocation2 + $0x138] sm:$0xff]
      %v3440 = vld [vmem:[#allocation2 + $0x140] sm:$0xff]
      %v3441 = vld [vmem:[#allocation2 + $0x148] sm:$0xff]
      %v3442 = vld [vmem:[#allocation2 + $0x150] sm:$0xff]
      %v3443 = vld [vmem:[#allocation2 + $0x158] sm:$0xff]
      %v3444 = vld [vmem:[#allocation2 + $0x160] sm:$0xff]
      %v3445 = vld [vmem:[#allocation2 + $0x168] sm:$0xff]
      %v3446 = vld [vmem:[#allocation2 + $0x170] sm:$0xff]
      %v3447 = vld [vmem:[#allocation2 + $0x178] sm:$0xff]
      %v3448 = vld [vmem:[#allocation2 + $0x180] sm:$0xff]
      %v3449 = vld [vmem:[#allocation2 + $0x188] sm:$0xff]
      %v3450 = vld [vmem:[#allocation2 + $0x190] sm:$0xff]
      %v3451 = vld [vmem:[#allocation2 + $0x198] sm:$0xff]
      %v3452 = vld [vmem:[#allocation2 + $0x1a0] sm:$0xff]
      %v3453 = vld [vmem:[#allocation2 + $0x1a8] sm:$0xff]
      %v3454 = vld [vmem:[#allocation2 + $0x1b0] sm:$0xff]
      %v3455 = vld [vmem:[#allocation2 + $0x1b8] sm:$0xff]
      %v3456 = vld [vmem:[#allocation2 + $0x1c0] sm:$0xff]
      %v3457 = vpack.c.bf16 %v3434, %v3433
      %v3458 = vpack.c.bf16 %v3436, %v3435
      %v3459 = vpack.c.bf16 %v3438, %v3437
      %v3460 = vpack.c.bf16 %v3440, %v3439
      %v3461 = vpack.c.bf16 %v3442, %v3441
      %v3462 = vpack.c.bf16 %v3444, %v3443
      %v3463 = vpack.c.bf16 %v3446, %v3445
      %v3464 = vpack.c.bf16 %v3448, %v3447
      %v3465 = vpack.c.bf16 %v3450, %v3449
      %v3466 = vpack.c.bf16 %v3452, %v3451
      %v3467 = vpack.c.bf16 %v3454, %v3453
      %v3468 = vpack.c.bf16 %v3456, %v3455
      %v3469 = vld [vmem:[%s1249] sm:$0xf]
      %v3471 = vsel %vm335, %v3457, 0
      %v3474 = vsel %vm335, %v3458, 0
      %v3477 = vsel %vm335, %v3459, 0
      %v3480 = vsel %vm335, %v3460, 0
      %v3483 = vsel %vm335, %v3461, 0
      %v3486 = vsel %vm335, %v3462, 0
      %v3489 = vsel %vm335, %v3463, 0
      %v3492 = vsel %vm335, %v3464, 0
      %v3495 = vsel %vm335, %v3465, 0
      %v3498 = vsel %vm335, %v3466, 0
      %v3501 = vsel %vm335, %v3467, 0
      %v3504 = vsel %vm335, %v3468, 0
      %v3507 = vsel %vm1287, %v3469, 0
      %3509 = vmatprep.subr.bf16.mxu0 0
      %3510 = vmatpush1.bf16.msra.mxu0 %v3507
      %3511 = vmatprep.subr.bf16.mxu0 0
      %3512 = vmatpush1.bf16.msra.mxu0 0
      %3513 = vmatprep.subr.bf16.mxu0 0
      %3514 = vmatpush1.bf16.msra.mxu0 0
      %3515 = vmatprep.subr.bf16.mxu0 0
      %3516 = vmatpush1.bf16.msra.mxu0 0
      %3517 = vmatprep.subr.bf16.mxu0 0
      %3518 = vmatpush1.bf16.msra.mxu0 0
      %3519 = vmatprep.subr.bf16.mxu0 0
      %3520 = vmatpush1.bf16.msra.mxu0 0
      %3521 = vmatprep.subr.bf16.mxu0 0
      %3522 = vmatpush1.bf16.msra.mxu0 0
      %3523 = vmatprep.subr.bf16.mxu0 0
      %3524 = vmatpush1.bf16.msra.mxu0 0
      %3525 = vmatprep.subr.bf16.mxu0 0
      %3526 = vmatpush1.bf16.msra.mxu0 0
      %3527 = vmatprep.subr.bf16.mxu0 0
      %3528 = vmatpush1.bf16.msra.mxu0 0
      %3529 = vmatprep.subr.bf16.mxu0 0
      %3530 = vmatpush1.bf16.msra.mxu0 0
      %3531 = vmatprep.subr.bf16.mxu0 0
      %3532 = vmatpush1.bf16.msra.mxu0 0
      %3533 = vmatprep.subr.bf16.mxu0 0
      %3534 = vmatpush1.bf16.msra.mxu0 0
      %3535 = vmatprep.subr.bf16.mxu0 0
      %3536 = vmatpush1.bf16.msra.mxu0 0
      %3537 = vmatprep.subr.bf16.mxu0 0
      %3538 = vmatpush1.bf16.msra.mxu0 0
      %3539 = vmatprep.subr.bf16.mxu0 0
      %3540 = vmatpush1.bf16.msra.mxu0 0
      %3541 = vmatprep.mubr.bf16.mxu0 0
      %3542 = vmatmul.mubr.bf16.gmra.mrb[0].mxu0 %v3471
      %v3543 = vpop.f32.mrb[0].mxu0
      %v3544 = vadd.f32 0.0, %v3543
      %v3545 = vpop.f32.mrb[0].mxu0
      %v3546 = vpop.f32.mrb[0].mxu0
      %v3547 = vadd.f32 0.0, %v3546
      %v3548 = vpop.f32.mrb[0].mxu0
      %3549 = vmatprep.mubr.bf16.mxu0 0
      %3550 = vmatmul.mubr.bf16.gmra.mrb[0].mxu0 %v3474
      %v3551 = vpop.f32.mrb[0].mxu0
      %v3552 = vadd.f32 0.0, %v3551
      %v3553 = vpop.f32.mrb[0].mxu0
      %v3554 = vpop.f32.mrb[0].mxu0
      %v3555 = vadd.f32 0.0, %v3554
      %v3556 = vpop.f32.mrb[0].mxu0
      %3557 = vmatprep.mubr.bf16.mxu0 0
      %3558 = vmatmul.mubr.bf16.gmra.mrb[0].mxu0 %v3477
      %v3559 = vpop.f32.mrb[0].mxu0
      %v3560 = vadd.f32 0.0, %v3559
      %v3561 = vpop.f32.mrb[0].mxu0
      %v3562 = vpop.f32.mrb[0].mxu0
      %v3563 = vadd.f32 0.0, %v3562
      %v3564 = vpop.f32.mrb[0].mxu0
      %3565 = vmatprep.mubr.bf16.mxu0 0
      %3566 = vmatmul.mubr.bf16.gmra.mrb[0].mxu0 %v3480
      %v3567 = vpop.f32.mrb[0].mxu0
      %v3568 = vadd.f32 0.0, %v3567
      %v3569 = vpop.f32.mrb[0].mxu0
      %v3570 = vpop.f32.mrb[0].mxu0
      %v3571 = vadd.f32 0.0, %v3570
      %v3572 = vpop.f32.mrb[0].mxu0
      %3573 = vmatprep.mubr.bf16.mxu0 0
      %3574 = vmatmul.mubr.bf16.gmra.mrb[0].mxu0 %v3483
      %v3575 = vpop.f32.mrb[0].mxu0
      %v3576 = vadd.f32 0.0, %v3575
      %v3577 = vpop.f32.mrb[0].mxu0
      %v3578 = vpop.f32.mrb[0].mxu0
      %v3579 = vadd.f32 0.0, %v3578
      %v3580 = vpop.f32.mrb[0].mxu0
      %3581 = vmatprep.mubr.bf16.mxu0 0
      %3582 = vmatmul.mubr.bf16.gmra.mrb[0].mxu0 %v3486
      %v3583 = vpop.f32.mrb[0].mxu0
      %v3584 = vadd.f32 0.0, %v3583
      %v3585 = vpop.f32.mrb[0].mxu0
      %v3586 = vpop.f32.mrb[0].mxu0
      %v3587 = vadd.f32 0.0, %v3586
      %v3588 = vpop.f32.mrb[0].mxu0
      %3589 = vmatprep.mubr.bf16.mxu0 0
      %3590 = vmatmul.mubr.bf16.gmra.mrb[0].mxu0 %v3489
      %v3591 = vpop.f32.mrb[0].mxu0
      %v3592 = vadd.f32 0.0, %v3591
      %v3593 = vpop.f32.mrb[0].mxu0
      %v3594 = vpop.f32.mrb[0].mxu0
      %v3595 = vadd.f32 0.0, %v3594
      %v3596 = vpop.f32.mrb[0].mxu0
      %3597 = vmatprep.mubr.bf16.mxu0 0
      %3598 = vmatmul.mubr.bf16.gmra.mrb[0].mxu0 %v3492
      %v3599 = vpop.f32.mrb[0].mxu0
      %v3600 = vadd.f32 0.0, %v3599
      %v3601 = vpop.f32.mrb[0].mxu0
      %v3602 = vpop.f32.mrb[0].mxu0
      %v3603 = vadd.f32 0.0, %v3602
      %v3604 = vpop.f32.mrb[0].mxu0
      %3605 = vmatprep.mubr.bf16.mxu0 0
      %3606 = vmatmul.mubr.bf16.gmra.mrb[0].mxu0 %v3495
      %v3607 = vpop.f32.mrb[0].mxu0
      %v3608 = vadd.f32 0.0, %v3607
      %v3609 = vpop.f32.mrb[0].mxu0
      %v3610 = vpop.f32.mrb[0].mxu0
      %v3611 = vadd.f32 0.0, %v3610
      %v3612 = vpop.f32.mrb[0].mxu0
      %3613 = vmatprep.mubr.bf16.mxu0 0
      %3614 = vmatmul.mubr.bf16.gmra.mrb[0].mxu0 %v3498
      %v3615 = vpop.f32.mrb[0].mxu0
      %v3616 = vadd.f32 0.0, %v3615
      %v3617 = vpop.f32.mrb[0].mxu0
      %v3618 = vpop.f32.mrb[0].mxu0
      %v3619 = vadd.f32 0.0, %v3618
      %v3620 = vpop.f32.mrb[0].mxu0
      %3621 = vmatprep.mubr.bf16.mxu0 0
      %3622 = vmatmul.mubr.bf16.gmra.mrb[0].mxu0 %v3501
      %v3623 = vpop.f32.mrb[0].mxu0
      %v3624 = vadd.f32 0.0, %v3623
      %v3625 = vpop.f32.mrb[0].mxu0
      %v3626 = vpop.f32.mrb[0].mxu0
      %v3627 = vadd.f32 0.0, %v3626
      %v3628 = vpop.f32.mrb[0].mxu0
      %3629 = vmatprep.mubr.bf16.mxu0 0
      %3630 = vmatmul.mubr.bf16.gmra.mrb[0].mxu0 %v3504
      %v3631 = vpop.f32.mrb[0].mxu0
      %v3632 = vadd.f32 0.0, %v3631
      %v3633 = vpop.f32.mrb[0].mxu0
      %v3634 = vpop.f32.mrb[0].mxu0
      %v3635 = vadd.f32 0.0, %v3634
      %v3636 = vpop.f32.mrb[0].mxu0
      %3637 = vdwg.mxu0
      %v3639 = vsel %vm335, %v3420, 0
      %v3642 = vsel %vm335, %v3421, 0
      %v3645 = vsel %vm335, %v3422, 0
      %v3648 = vsel %vm335, %v3423, 0
      %v3651 = vsel %vm335, %v3424, 0
      %v3654 = vsel %vm335, %v3425, 0
      %v3657 = vsel %vm335, %v3426, 0
      %v3660 = vsel %vm335, %v3427, 0
      %v3663 = vsel %vm335, %v3428, 0
      %v3666 = vsel %vm335, %v3429, 0
      %v3669 = vsel %vm335, %v3430, 0
      %v3672 = vsel %vm335, %v3431, 0
      %v3675 = vsel %vm1287, %v3432, 0
      %3677 = vmatprep.subr.bf16.mxu0 0
      %3678 = vmatpush1.bf16.msra.mxu0 %v3675
      %3679 = vmatprep.subr.bf16.mxu0 0
      %3680 = vmatpush1.bf16.msra.mxu0 0
      %3681 = vmatprep.subr.bf16.mxu0 0
      %3682 = vmatpush1.bf16.msra.mxu0 0
      %3683 = vmatprep.subr.bf16.mxu0 0
      %3684 = vmatpush1.bf16.msra.mxu0 0
      %3685 = vmatprep.subr.bf16.mxu0 0
      %3686 = vmatpush1.bf16.msra.mxu0 0
      %3687 = vmatprep.subr.bf16.mxu0 0
      %3688 = vmatpush1.bf16.msra.mxu0 0
      %3689 = vmatprep.subr.bf16.mxu0 0
      %3690 = vmatpush1.bf16.msra.mxu0 0
      %3691 = vmatprep.subr.bf16.mxu0 0
      %3692 = vmatpush1.bf16.msra.mxu0 0
      %3693 = vmatprep.subr.bf16.mxu0 0
      %3694 = vmatpush1.bf16.msra.mxu0 0
      %3695 = vmatprep.subr.bf16.mxu0 0
      %3696 = vmatpush1.bf16.msra.mxu0 0
      %3697 = vmatprep.subr.bf16.mxu0 0
      %3698 = vmatpush1.bf16.msra.mxu0 0
      %3699 = vmatprep.subr.bf16.mxu0 0
      %3700 = vmatpush1.bf16.msra.mxu0 0
      %3701 = vmatprep.subr.bf16.mxu0 0
      %3702 = vmatpush1.bf16.msra.mxu0 0
      %3703 = vmatprep.subr.bf16.mxu0 0
      %3704 = vmatpush1.bf16.msra.mxu0 0
      %3705 = vmatprep.subr.bf16.mxu0 0
      %3706 = vmatpush1.bf16.msra.mxu0 0
      %3707 = vmatprep.subr.bf16.mxu0 0
      %3708 = vmatpush1.bf16.msra.mxu0 0
      %3709 = vmatprep.mubr.bf16.mxu0 0
      %3710 = vmatmul.mubr.bf16.gmra.mrb[0].mxu0 %v3639
      %v3711 = vpop.f32.mrb[0].mxu0
      %v3712 = vadd.f32 %v3544, %v3711
      %v3713 = vpop.f32.mrb[0].mxu0
      %v3714 = vpop.f32.mrb[0].mxu0
      %v3715 = vadd.f32 %v3547, %v3714
      %v3716 = vpop.f32.mrb[0].mxu0
      %3717 = vmatprep.mubr.bf16.mxu0 0
      %3718 = vmatmul.mubr.bf16.gmra.mrb[0].mxu0 %v3642
      %v3719 = vpop.f32.mrb[0].mxu0
      %v3720 = vadd.f32 %v3552, %v3719
      %v3721 = vpop.f32.mrb[0].mxu0
      %v3722 = vpop.f32.mrb[0].mxu0
      %v3723 = vadd.f32 %v3555, %v3722
      %v3724 = vpop.f32.mrb[0].mxu0
      %3725 = vmatprep.mubr.bf16.mxu0 0
      %3726 = vmatmul.mubr.bf16.gmra.mrb[0].mxu0 %v3645
      %v3727 = vpop.f32.mrb[0].mxu0
      %v3728 = vadd.f32 %v3560, %v3727
      %v3729 = vpop.f32.mrb[0].mxu0
      %v3730 = vpop.f32.mrb[0].mxu0
      %v3731 = vadd.f32 %v3563, %v3730
      %v3732 = vpop.f32.mrb[0].mxu0
      %3733 = vmatprep.mubr.bf16.mxu0 0
      %3734 = vmatmul.mubr.bf16.gmra.mrb[0].mxu0 %v3648
      %v3735 = vpop.f32.mrb[0].mxu0
      %v3736 = vadd.f32 %v3568, %v3735
      %v3737 = vpop.f32.mrb[0].mxu0
      %v3738 = vpop.f32.mrb[0].mxu0
      %v3739 = vadd.f32 %v3571, %v3738
      %v3740 = vpop.f32.mrb[0].mxu0
      %3741 = vmatprep.mubr.bf16.mxu0 0
      %3742 = vmatmul.mubr.bf16.gmra.mrb[0].mxu0 %v3651
      %v3743 = vpop.f32.mrb[0].mxu0
      %v3744 = vadd.f32 %v3576, %v3743
      %v3745 = vpop.f32.mrb[0].mxu0
      %v3746 = vpop.f32.mrb[0].mxu0
      %v3747 = vadd.f32 %v3579, %v3746
      %v3748 = vpop.f32.mrb[0].mxu0
      %3749 = vmatprep.mubr.bf16.mxu0 0
      %3750 = vmatmul.mubr.bf16.gmra.mrb[0].mxu0 %v3654
      %v3751 = vpop.f32.mrb[0].mxu0
      %v3752 = vadd.f32 %v3584, %v3751
      %v3753 = vpop.f32.mrb[0].mxu0
      %v3754 = vpop.f32.mrb[0].mxu0
      %v3755 = vadd.f32 %v3587, %v3754
      %v3756 = vpop.f32.mrb[0].mxu0
      %3757 = vmatprep.mubr.bf16.mxu0 0
      %3758 = vmatmul.mubr.bf16.gmra.mrb[0].mxu0 %v3657
      %v3759 = vpop.f32.mrb[0].mxu0
      %v3760 = vadd.f32 %v3592, %v3759
      %v3761 = vpop.f32.mrb[0].mxu0
      %v3762 = vpop.f32.mrb[0].mxu0
      %v3763 = vadd.f32 %v3595, %v3762
      %v3764 = vpop.f32.mrb[0].mxu0
      %3765 = vmatprep.mubr.bf16.mxu0 0
      %3766 = vmatmul.mubr.bf16.gmra.mrb[0].mxu0 %v3660
      %v3767 = vpop.f32.mrb[0].mxu0
      %v3768 = vadd.f32 %v3600, %v3767
      %v3769 = vpop.f32.mrb[0].mxu0
      %v3770 = vpop.f32.mrb[0].mxu0
      %v3771 = vadd.f32 %v3603, %v3770
      %v3772 = vpop.f32.mrb[0].mxu0
      %3773 = vmatprep.mubr.bf16.mxu0 0
      %3774 = vmatmul.mubr.bf16.gmra.mrb[0].mxu0 %v3663
      %v3775 = vpop.f32.mrb[0].mxu0
      %v3776 = vadd.f32 %v3608, %v3775
      %v3777 = vpop.f32.mrb[0].mxu0
      %v3778 = vpop.f32.mrb[0].mxu0
      %v3779 = vadd.f32 %v3611, %v3778
      %v3780 = vpop.f32.mrb[0].mxu0
      %3781 = vmatprep.mubr.bf16.mxu0 0
      %3782 = vmatmul.mubr.bf16.gmra.mrb[0].mxu0 %v3666
      %v3783 = vpop.f32.mrb[0].mxu0
      %v3784 = vadd.f32 %v3616, %v3783
      %v3785 = vpop.f32.mrb[0].mxu0
      %v3786 = vpop.f32.mrb[0].mxu0
      %v3787 = vadd.f32 %v3619, %v3786
      %v3788 = vpop.f32.mrb[0].mxu0
      %3789 = vmatprep.mubr.bf16.mxu0 0
      %3790 = vmatmul.mubr.bf16.gmra.mrb[0].mxu0 %v3669
      %v3791 = vpop.f32.mrb[0].mxu0
      %v3792 = vadd.f32 %v3624, %v3791
      %v3793 = vpop.f32.mrb[0].mxu0
      %v3794 = vpop.f32.mrb[0].mxu0
      %v3795 = vadd.f32 %v3627, %v3794
      %v3796 = vpop.f32.mrb[0].mxu0
      %3797 = vmatprep.mubr.bf16.mxu0 0
      %3798 = vmatmul.mubr.bf16.gmra.mrb[0].mxu0 %v3672
      %v3799 = vpop.f32.mrb[0].mxu0
      %v3800 = vadd.f32 %v3632, %v3799
      %v3801 = vpop.f32.mrb[0].mxu0
      %v3802 = vpop.f32.mrb[0].mxu0
      %v3803 = vadd.f32 %v3635, %v3802
      %v3804 = vpop.f32.mrb[0].mxu0
      %3805 = vdwg.mxu0
      %v3806 = vld [vmem:[#allocation2 + $0x109] sm:$0xff]
      %v3807 = vld [vmem:[#allocation2 + $0x111] sm:$0xff]
      %v3808 = vld [vmem:[#allocation2 + $0x119] sm:$0xff]
      %v3809 = vld [vmem:[#allocation2 + $0x121] sm:$0xff]
      %v3810 = vld [vmem:[#allocation2 + $0x129] sm:$0xff]
      %v3811 = vld [vmem:[#allocation2 + $0x131] sm:$0xff]
      %v3812 = vld [vmem:[#allocation2 + $0x139] sm:$0xff]
      %v3813 = vld [vmem:[#allocation2 + $0x141] sm:$0xff]
      %v3814 = vld [vmem:[#allocation2 + $0x149] sm:$0xff]
      %v3815 = vld [vmem:[#allocation2 + $0x151] sm:$0xff]
      %v3816 = vld [vmem:[#allocation2 + $0x159] sm:$0xff]
      %v3817 = vld [vmem:[#allocation2 + $0x161] sm:$0xff]
      %v3818 = vld [vmem:[#allocation2 + $0x169] sm:$0xff]
      %v3819 = vld [vmem:[#allocation2 + $0x171] sm:$0xff]
      %v3820 = vld [vmem:[#allocation2 + $0x179] sm:$0xff]
      %v3821 = vld [vmem:[#allocation2 + $0x181] sm:$0xff]
      %v3822 = vld [vmem:[#allocation2 + $0x189] sm:$0xff]
      %v3823 = vld [vmem:[#allocation2 + $0x191] sm:$0xff]
      %v3824 = vld [vmem:[#allocation2 + $0x199] sm:$0xff]
      %v3825 = vld [vmem:[#allocation2 + $0x1a1] sm:$0xff]
      %v3826 = vld [vmem:[#allocation2 + $0x1a9] sm:$0xff]
      %v3827 = vld [vmem:[#allocation2 + $0x1b1] sm:$0xff]
      %v3828 = vld [vmem:[#allocation2 + $0x1b9] sm:$0xff]
      %v3829 = vld [vmem:[#allocation2 + $0x1c1] sm:$0xff]
      %v3830 = vpack.c.bf16 %v3807, %v3806
      %v3831 = vpack.c.bf16 %v3809, %v3808
      %v3832 = vpack.c.bf16 %v3811, %v3810
      %v3833 = vpack.c.bf16 %v3813, %v3812
      %v3834 = vpack.c.bf16 %v3815, %v3814
      %v3835 = vpack.c.bf16 %v3817, %v3816
      %v3836 = vpack.c.bf16 %v3819, %v3818
      %v3837 = vpack.c.bf16 %v3821, %v3820
      %v3838 = vpack.c.bf16 %v3823, %v3822
      %v3839 = vpack.c.bf16 %v3825, %v3824
      %v3840 = vpack.c.bf16 %v3827, %v3826
      %v3841 = vpack.c.bf16 %v3829, %v3828
      %v3842 = vld [vmem:[%s1624] sm:$0xf]
      %v3844 = vsel %vm335, %v3830, 0
      %v3847 = vsel %vm335, %v3831, 0
      %v3850 = vsel %vm335, %v3832, 0
      %v3853 = vsel %vm335, %v3833, 0
      %v3856 = vsel %vm335, %v3834, 0
      %v3859 = vsel %vm335, %v3835, 0
      %v3862 = vsel %vm335, %v3836, 0
      %v3865 = vsel %vm335, %v3837, 0
      %v3868 = vsel %vm335, %v3838, 0
      %v3871 = vsel %vm335, %v3839, 0
      %v3874 = vsel %vm335, %v3840, 0
      %v3877 = vsel %vm335, %v3841, 0
      %v3880 = vsel %vm1287, %v3842, 0
      %3882 = vmatprep.subr.bf16.mxu0 0
      %3883 = vmatpush1.bf16.msra.mxu0 %v3880
      %3884 = vmatprep.subr.bf16.mxu0 0
      %3885 = vmatpush1.bf16.msra.mxu0 0
      %3886 = vmatprep.subr.bf16.mxu0 0
      %3887 = vmatpush1.bf16.msra.mxu0 0
      %3888 = vmatprep.subr.bf16.mxu0 0
      %3889 = vmatpush1.bf16.msra.mxu0 0
      %3890 = vmatprep.subr.bf16.mxu0 0
      %3891 = vmatpush1.bf16.msra.mxu0 0
      %3892 = vmatprep.subr.bf16.mxu0 0
      %3893 = vmatpush1.bf16.msra.mxu0 0
      %3894 = vmatprep.subr.bf16.mxu0 0
      %3895 = vmatpush1.bf16.msra.mxu0 0
      %3896 = vmatprep.subr.bf16.mxu0 0
      %3897 = vmatpush1.bf16.msra.mxu0 0
      %3898 = vmatprep.subr.bf16.mxu0 0
      %3899 = vmatpush1.bf16.msra.mxu0 0
      %3900 = vmatprep.subr.bf16.mxu0 0
      %3901 = vmatpush1.bf16.msra.mxu0 0
      %3902 = vmatprep.subr.bf16.mxu0 0
      %3903 = vmatpush1.bf16.msra.mxu0 0
      %3904 = vmatprep.subr.bf16.mxu0 0
      %3905 = vmatpush1.bf16.msra.mxu0 0
      %3906 = vmatprep.subr.bf16.mxu0 0
      %3907 = vmatpush1.bf16.msra.mxu0 0
      %3908 = vmatprep.subr.bf16.mxu0 0
      %3909 = vmatpush1.bf16.msra.mxu0 0
      %3910 = vmatprep.subr.bf16.mxu0 0
      %3911 = vmatpush1.bf16.msra.mxu0 0
      %3912 = vmatprep.subr.bf16.mxu0 0
      %3913 = vmatpush1.bf16.msra.mxu0 0
      %3914 = vmatprep.mubr.bf16.mxu0 0
      %3915 = vmatmul.mubr.bf16.gmra.mrb[0].mxu0 %v3844
      %v3916 = vpop.f32.mrb[0].mxu0
      %v3917 = vadd.f32 0.0, %v3916
      %v3918 = vpop.f32.mrb[0].mxu0
      %v3919 = vpop.f32.mrb[0].mxu0
      %v3920 = vadd.f32 0.0, %v3919
      %v3921 = vpop.f32.mrb[0].mxu0
      %3922 = vmatprep.mubr.bf16.mxu0 0
      %3923 = vmatmul.mubr.bf16.gmra.mrb[0].mxu0 %v3847
      %v3924 = vpop.f32.mrb[0].mxu0
      %v3925 = vadd.f32 0.0, %v3924
      %v3926 = vpop.f32.mrb[0].mxu0
      %v3927 = vpop.f32.mrb[0].mxu0
      %v3928 = vadd.f32 0.0, %v3927
      %v3929 = vpop.f32.mrb[0].mxu0
      %3930 = vmatprep.mubr.bf16.mxu0 0
      %3931 = vmatmul.mubr.bf16.gmra.mrb[0].mxu0 %v3850
      %v3932 = vpop.f32.mrb[0].mxu0
      %v3933 = vadd.f32 0.0, %v3932
      %v3934 = vpop.f32.mrb[0].mxu0
      %v3935 = vpop.f32.mrb[0].mxu0
      %v3936 = vadd.f32 0.0, %v3935
      %v3937 = vpop.f32.mrb[0].mxu0
      %3938 = vmatprep.mubr.bf16.mxu0 0
      %3939 = vmatmul.mubr.bf16.gmra.mrb[0].mxu0 %v3853
      %v3940 = vpop.f32.mrb[0].mxu0
      %v3941 = vadd.f32 0.0, %v3940
      %v3942 = vpop.f32.mrb[0].mxu0
      %v3943 = vpop.f32.mrb[0].mxu0
      %v3944 = vadd.f32 0.0, %v3943
      %v3945 = vpop.f32.mrb[0].mxu0
      %3946 = vmatprep.mubr.bf16.mxu0 0
      %3947 = vmatmul.mubr.bf16.gmra.mrb[0].mxu0 %v3856
      %v3948 = vpop.f32.mrb[0].mxu0
      %v3949 = vadd.f32 0.0, %v3948
      %v3950 = vpop.f32.mrb[0].mxu0
      %v3951 = vpop.f32.mrb[0].mxu0
      %v3952 = vadd.f32 0.0, %v3951
      %v3953 = vpop.f32.mrb[0].mxu0
      %3954 = vmatprep.mubr.bf16.mxu0 0
      %3955 = vmatmul.mubr.bf16.gmra.mrb[0].mxu0 %v3859
      %v3956 = vpop.f32.mrb[0].mxu0
      %v3957 = vadd.f32 0.0, %v3956
      %v3958 = vpop.f32.mrb[0].mxu0
      %v3959 = vpop.f32.mrb[0].mxu0
      %v3960 = vadd.f32 0.0, %v3959
      %v3961 = vpop.f32.mrb[0].mxu0
      %3962 = vmatprep.mubr.bf16.mxu0 0
      %3963 = vmatmul.mubr.bf16.gmra.mrb[0].mxu0 %v3862
      %v3964 = vpop.f32.mrb[0].mxu0
      %v3965 = vadd.f32 0.0, %v3964
      %v3966 = vpop.f32.mrb[0].mxu0
      %v3967 = vpop.f32.mrb[0].mxu0
      %v3968 = vadd.f32 0.0, %v3967
      %v3969 = vpop.f32.mrb[0].mxu0
      %3970 = vmatprep.mubr.bf16.mxu0 0
      %3971 = vmatmul.mubr.bf16.gmra.mrb[0].mxu0 %v3865
      %v3972 = vpop.f32.mrb[0].mxu0
      %v3973 = vadd.f32 0.0, %v3972
      %v3974 = vpop.f32.mrb[0].mxu0
      %v3975 = vpop.f32.mrb[0].mxu0
      %v3976 = vadd.f32 0.0, %v3975
      %v3977 = vpop.f32.mrb[0].mxu0
      %3978 = vmatprep.mubr.bf16.mxu0 0
      %3979 = vmatmul.mubr.bf16.gmra.mrb[0].mxu0 %v3868
      %v3980 = vpop.f32.mrb[0].mxu0
      %v3981 = vadd.f32 0.0, %v3980
      %v3982 = vpop.f32.mrb[0].mxu0
      %v3983 = vpop.f32.mrb[0].mxu0
      %v3984 = vadd.f32 0.0, %v3983
      %v3985 = vpop.f32.mrb[0].mxu0
      %3986 = vmatprep.mubr.bf16.mxu0 0
      %3987 = vmatmul.mubr.bf16.gmra.mrb[0].mxu0 %v3871
      %v3988 = vpop.f32.mrb[0].mxu0
      %v3989 = vadd.f32 0.0, %v3988
      %v3990 = vpop.f32.mrb[0].mxu0
      %v3991 = vpop.f32.mrb[0].mxu0
      %v3992 = vadd.f32 0.0, %v3991
      %v3993 = vpop.f32.mrb[0].mxu0
      %3994 = vmatprep.mubr.bf16.mxu0 0
      %3995 = vmatmul.mubr.bf16.gmra.mrb[0].mxu0 %v3874
      %v3996 = vpop.f32.mrb[0].mxu0
      %v3997 = vadd.f32 0.0, %v3996
      %v3998 = vpop.f32.mrb[0].mxu0
      %v3999 = vpop.f32.mrb[0].mxu0
      %v4000 = vadd.f32 0.0, %v3999
      %v4001 = vpop.f32.mrb[0].mxu0
      %4002 = vmatprep.mubr.bf16.mxu0 0
      %4003 = vmatmul.mubr.bf16.gmra.mrb[0].mxu0 %v3877
      %v4004 = vpop.f32.mrb[0].mxu0
      %v4005 = vadd.f32 0.0, %v4004
      %v4006 = vpop.f32.mrb[0].mxu0
      %v4007 = vpop.f32.mrb[0].mxu0
      %v4008 = vadd.f32 0.0, %v4007
      %v4009 = vpop.f32.mrb[0].mxu0
      %4010 = vdwg.mxu0
      %v4011 = vadd.f32 %v3712, %v3917
      %v4012 = vadd.f32 %v3715, %v3920
      %v4013 = vadd.f32 %v3720, %v3925
      %v4014 = vadd.f32 %v3723, %v3928
      %v4015 = vadd.f32 %v3728, %v3933
      %v4016 = vadd.f32 %v3731, %v3936
      %v4017 = vadd.f32 %v3736, %v3941
      %v4018 = vadd.f32 %v3739, %v3944
      %v4019 = vadd.f32 %v3744, %v3949
      %v4020 = vadd.f32 %v3747, %v3952
      %v4021 = vadd.f32 %v3752, %v3957
      %v4022 = vadd.f32 %v3755, %v3960
      %v4023 = vadd.f32 %v3760, %v3965
      %v4024 = vadd.f32 %v3763, %v3968
      %v4025 = vadd.f32 %v3768, %v3973
      %v4026 = vadd.f32 %v3771, %v3976
      %v4027 = vadd.f32 %v3776, %v3981
      %v4028 = vadd.f32 %v3779, %v3984
      %v4029 = vadd.f32 %v3784, %v3989
      %v4030 = vadd.f32 %v3787, %v3992
      %v4031 = vadd.f32 %v3792, %v3997
      %v4032 = vadd.f32 %v3795, %v4000
      %v4033 = vadd.f32 %v3800, %v4005
      %v4034 = vadd.f32 %v3803, %v4008
      %v4035 = vld [vmem:[#allocation2 + $0x11f] sm:$0xff]
      %v4036 = vld [vmem:[#allocation2 + $0x127] sm:$0xff]
      %v4037 = vld [vmem:[#allocation2 + $0x12f] sm:$0xff]
      %v4038 = vld [vmem:[#allocation2 + $0x137] sm:$0xff]
      %v4039 = vld [vmem:[#allocation2 + $0x13f] sm:$0xff]
      %v4040 = vld [vmem:[#allocation2 + $0x147] sm:$0xff]
      %v4041 = vld [vmem:[#allocation2 + $0x14f] sm:$0xff]
      %v4042 = vld [vmem:[#allocation2 + $0x157] sm:$0xff]
      %v4043 = vld [vmem:[#allocation2 + $0x15f] sm:$0xff]
      %v4044 = vld [vmem:[#allocation2 + $0x167] sm:$0xff]
      %v4045 = vld [vmem:[#allocation2 + $0x16f] sm:$0xff]
      %v4046 = vld [vmem:[#allocation2 + $0x177] sm:$0xff]
      %v4047 = vld [vmem:[#allocation2 + $0x17f] sm:$0xff]
      %v4048 = vld [vmem:[#allocation2 + $0x187] sm:$0xff]
      %v4049 = vld [vmem:[#allocation2 + $0x18f] sm:$0xff]
      %v4050 = vld [vmem:[#allocation2 + $0x197] sm:$0xff]
      %v4051 = vld [vmem:[#allocation2 + $0x19f] sm:$0xff]
      %v4052 = vld [vmem:[#allocation2 + $0x1a7] sm:$0xff]
      %v4053 = vld [vmem:[#allocation2 + $0x1af] sm:$0xff]
      %v4054 = vld [vmem:[#allocation2 + $0x1b7] sm:$0xff]
      %v4055 = vld [vmem:[#allocation2 + $0x1bf] sm:$0xff]
      %v4056 = vld [vmem:[#allocation2 + $0x1c7] sm:$0xff]
      %v4057 = vld [vmem:[#allocation2 + $0x1cf] sm:$0xff]
      %v4058 = vld [vmem:[#allocation2 + $0x1d7] sm:$0xff]
      %v4059 = vpack.c.bf16 %v4036, %v4035
      %v4060 = vpack.c.bf16 %v4038, %v4037
      %v4061 = vpack.c.bf16 %v4040, %v4039
      %v4062 = vpack.c.bf16 %v4042, %v4041
      %v4063 = vpack.c.bf16 %v4044, %v4043
      %v4064 = vpack.c.bf16 %v4046, %v4045
      %v4065 = vpack.c.bf16 %v4048, %v4047
      %v4066 = vpack.c.bf16 %v4050, %v4049
      %v4067 = vpack.c.bf16 %v4052, %v4051
      %v4068 = vpack.c.bf16 %v4054, %v4053
      %v4069 = vpack.c.bf16 %v4056, %v4055
      %v4070 = vpack.c.bf16 %v4058, %v4057
      %v4071 = vld [vmem:[%s1854] sm:$0xf]
      %v4073 = vsel %vm335, %v4059, 0
      %v4076 = vsel %vm335, %v4060, 0
      %v4079 = vsel %vm335, %v4061, 0
      %v4082 = vsel %vm335, %v4062, 0
      %v4085 = vsel %vm335, %v4063, 0
      %v4088 = vsel %vm335, %v4064, 0
      %v4091 = vsel %vm335, %v4065, 0
      %v4094 = vsel %vm335, %v4066, 0
      %v4097 = vsel %vm335, %v4067, 0
      %v4100 = vsel %vm335, %v4068, 0
      %v4103 = vsel %vm335, %v4069, 0
      %v4106 = vsel %vm335, %v4070, 0
      %v4109 = vsel %vm1287, %v4071, 0
      %4111 = vmatprep.subr.bf16.mxu0 0
      %4112 = vmatpush1.bf16.msra.mxu0 %v4109
      %4113 = vmatprep.subr.bf16.mxu0 0
      %4114 = vmatpush1.bf16.msra.mxu0 0
      %4115 = vmatprep.subr.bf16.mxu0 0
      %4116 = vmatpush1.bf16.msra.mxu0 0
      %4117 = vmatprep.subr.bf16.mxu0 0
      %4118 = vmatpush1.bf16.msra.mxu0 0
      %4119 = vmatprep.subr.bf16.mxu0 0
      %4120 = vmatpush1.bf16.msra.mxu0 0
      %4121 = vmatprep.subr.bf16.mxu0 0
      %4122 = vmatpush1.bf16.msra.mxu0 0
      %4123 = vmatprep.subr.bf16.mxu0 0
      %4124 = vmatpush1.bf16.msra.mxu0 0
      %4125 = vmatprep.subr.bf16.mxu0 0
      %4126 = vmatpush1.bf16.msra.mxu0 0
      %4127 = vmatprep.subr.bf16.mxu0 0
      %4128 = vmatpush1.bf16.msra.mxu0 0
      %4129 = vmatprep.subr.bf16.mxu0 0
      %4130 = vmatpush1.bf16.msra.mxu0 0
      %4131 = vmatprep.subr.bf16.mxu0 0
      %4132 = vmatpush1.bf16.msra.mxu0 0
      %4133 = vmatprep.subr.bf16.mxu0 0
      %4134 = vmatpush1.bf16.msra.mxu0 0
      %4135 = vmatprep.subr.bf16.mxu0 0
      %4136 = vmatpush1.bf16.msra.mxu0 0
      %4137 = vmatprep.subr.bf16.mxu0 0
      %4138 = vmatpush1.bf16.msra.mxu0 0
      %4139 = vmatprep.subr.bf16.mxu0 0
      %4140 = vmatpush1.bf16.msra.mxu0 0
      %4141 = vmatprep.subr.bf16.mxu0 0
      %4142 = vmatpush1.bf16.msra.mxu0 0
      %4143 = vmatprep.mubr.bf16.mxu0 0
      %4144 = vmatmul.mubr.bf16.gmra.mrb[0].mxu0 %v4073
      %v4145 = vpop.f32.mrb[0].mxu0
      %v4146 = vadd.f32 0.0, %v4145
      %v4147 = vpop.f32.mrb[0].mxu0
      %v4148 = vpop.f32.mrb[0].mxu0
      %v4149 = vadd.f32 0.0, %v4148
      %v4150 = vpop.f32.mrb[0].mxu0
      %4151 = vmatprep.mubr.bf16.mxu0 0
      %4152 = vmatmul.mubr.bf16.gmra.mrb[0].mxu0 %v4076
      %v4153 = vpop.f32.mrb[0].mxu0
      %v4154 = vadd.f32 0.0, %v4153
      %v4155 = vpop.f32.mrb[0].mxu0
      %v4156 = vpop.f32.mrb[0].mxu0
      %v4157 = vadd.f32 0.0, %v4156
      %v4158 = vpop.f32.mrb[0].mxu0
      %4159 = vmatprep.mubr.bf16.mxu0 0
      %4160 = vmatmul.mubr.bf16.gmra.mrb[0].mxu0 %v4079
      %v4161 = vpop.f32.mrb[0].mxu0
      %v4162 = vadd.f32 0.0, %v4161
      %v4163 = vpop.f32.mrb[0].mxu0
      %v4164 = vpop.f32.mrb[0].mxu0
      %v4165 = vadd.f32 0.0, %v4164
      %v4166 = vpop.f32.mrb[0].mxu0
      %4167 = vmatprep.mubr.bf16.mxu0 0
      %4168 = vmatmul.mubr.bf16.gmra.mrb[0].mxu0 %v4082
      %v4169 = vpop.f32.mrb[0].mxu0
      %v4170 = vadd.f32 0.0, %v4169
      %v4171 = vpop.f32.mrb[0].mxu0
      %v4172 = vpop.f32.mrb[0].mxu0
      %v4173 = vadd.f32 0.0, %v4172
      %v4174 = vpop.f32.mrb[0].mxu0
      %4175 = vmatprep.mubr.bf16.mxu0 0
      %4176 = vmatmul.mubr.bf16.gmra.mrb[0].mxu0 %v4085
      %v4177 = vpop.f32.mrb[0].mxu0
      %v4178 = vadd.f32 0.0, %v4177
      %v4179 = vpop.f32.mrb[0].mxu0
      %v4180 = vpop.f32.mrb[0].mxu0
      %v4181 = vadd.f32 0.0, %v4180
      %v4182 = vpop.f32.mrb[0].mxu0
      %4183 = vmatprep.mubr.bf16.mxu0 0
      %4184 = vmatmul.mubr.bf16.gmra.mrb[0].mxu0 %v4088
      %v4185 = vpop.f32.mrb[0].mxu0
      %v4186 = vadd.f32 0.0, %v4185
      %v4187 = vpop.f32.mrb[0].mxu0
      %v4188 = vpop.f32.mrb[0].mxu0
      %v4189 = vadd.f32 0.0, %v4188
      %v4190 = vpop.f32.mrb[0].mxu0
      %4191 = vmatprep.mubr.bf16.mxu0 0
      %4192 = vmatmul.mubr.bf16.gmra.mrb[0].mxu0 %v4091
      %v4193 = vpop.f32.mrb[0].mxu0
      %v4194 = vadd.f32 0.0, %v4193
      %v4195 = vpop.f32.mrb[0].mxu0
      %v4196 = vpop.f32.mrb[0].mxu0
      %v4197 = vadd.f32 0.0, %v4196
      %v4198 = vpop.f32.mrb[0].mxu0
      %4199 = vmatprep.mubr.bf16.mxu0 0
      %4200 = vmatmul.mubr.bf16.gmra.mrb[0].mxu0 %v4094
      %v4201 = vpop.f32.mrb[0].mxu0
      %v4202 = vadd.f32 0.0, %v4201
      %v4203 = vpop.f32.mrb[0].mxu0
      %v4204 = vpop.f32.mrb[0].mxu0
      %v4205 = vadd.f32 0.0, %v4204
      %v4206 = vpop.f32.mrb[0].mxu0
      %4207 = vmatprep.mubr.bf16.mxu0 0
      %4208 = vmatmul.mubr.bf16.gmra.mrb[0].mxu0 %v4097
      %v4209 = vpop.f32.mrb[0].mxu0
      %v4210 = vadd.f32 0.0, %v4209
      %v4211 = vpop.f32.mrb[0].mxu0
      %v4212 = vpop.f32.mrb[0].mxu0
      %v4213 = vadd.f32 0.0, %v4212
      %v4214 = vpop.f32.mrb[0].mxu0
      %4215 = vmatprep.mubr.bf16.mxu0 0
      %4216 = vmatmul.mubr.bf16.gmra.mrb[0].mxu0 %v4100
      %v4217 = vpop.f32.mrb[0].mxu0
      %v4218 = vadd.f32 0.0, %v4217
      %v4219 = vpop.f32.mrb[0].mxu0
      %v4220 = vpop.f32.mrb[0].mxu0
      %v4221 = vadd.f32 0.0, %v4220
      %v4222 = vpop.f32.mrb[0].mxu0
      %4223 = vmatprep.mubr.bf16.mxu0 0
      %4224 = vmatmul.mubr.bf16.gmra.mrb[0].mxu0 %v4103
      %v4225 = vpop.f32.mrb[0].mxu0
      %v4226 = vadd.f32 0.0, %v4225
      %v4227 = vpop.f32.mrb[0].mxu0
      %v4228 = vpop.f32.mrb[0].mxu0
      %v4229 = vadd.f32 0.0, %v4228
      %v4230 = vpop.f32.mrb[0].mxu0
      %4231 = vmatprep.mubr.bf16.mxu0 0
      %4232 = vmatmul.mubr.bf16.gmra.mrb[0].mxu0 %v4106
      %v4233 = vpop.f32.mrb[0].mxu0
      %v4234 = vadd.f32 0.0, %v4233
      %v4235 = vpop.f32.mrb[0].mxu0
      %v4236 = vpop.f32.mrb[0].mxu0
      %v4237 = vadd.f32 0.0, %v4236
      %v4238 = vpop.f32.mrb[0].mxu0
      %4239 = vdwg.mxu0
      %v4240 = vadd.f32 %v4011, %v4146
      %v4241 = vadd.f32 %v4012, %v4149
      %v4242 = vadd.f32 %v4013, %v4154
      %v4243 = vadd.f32 %v4014, %v4157
      %v4244 = vadd.f32 %v4015, %v4162
      %v4245 = vadd.f32 %v4016, %v4165
      %v4246 = vadd.f32 %v4017, %v4170
      %v4247 = vadd.f32 %v4018, %v4173
      %v4248 = vadd.f32 %v4019, %v4178
      %v4249 = vadd.f32 %v4020, %v4181
      %v4250 = vadd.f32 %v4021, %v4186
      %v4251 = vadd.f32 %v4022, %v4189
      %v4252 = vadd.f32 %v4023, %v4194
      %v4253 = vadd.f32 %v4024, %v4197
      %v4254 = vadd.f32 %v4025, %v4202
      %v4255 = vadd.f32 %v4026, %v4205
      %v4256 = vadd.f32 %v4027, %v4210
      %v4257 = vadd.f32 %v4028, %v4213
      %v4258 = vadd.f32 %v4029, %v4218
      %v4259 = vadd.f32 %v4030, %v4221
      %v4260 = vadd.f32 %v4031, %v4226
      %v4261 = vadd.f32 %v4032, %v4229
      %v4262 = vadd.f32 %v4033, %v4234
      %v4263 = vadd.f32 %v4034, %v4237
      %v4264 = vld [vmem:[#allocation2 + $0x120] sm:$0xff]
      %v4265 = vld [vmem:[#allocation2 + $0x128] sm:$0xff]
      %v4266 = vld [vmem:[#allocation2 + $0x130] sm:$0xff]
      %v4267 = vld [vmem:[#allocation2 + $0x138] sm:$0xff]
      %v4268 = vld [vmem:[#allocation2 + $0x140] sm:$0xff]
      %v4269 = vld [vmem:[#allocation2 + $0x148] sm:$0xff]
      %v4270 = vld [vmem:[#allocation2 + $0x150] sm:$0xff]
      %v4271 = vld [vmem:[#allocation2 + $0x158] sm:$0xff]
      %v4272 = vld [vmem:[#allocation2 + $0x160] sm:$0xff]
      %v4273 = vld [vmem:[#allocation2 + $0x168] sm:$0xff]
      %v4274 = vld [vmem:[#allocation2 + $0x170] sm:$0xff]
      %v4275 = vld [vmem:[#allocation2 + $0x178] sm:$0xff]
      %v4276 = vld [vmem:[#allocation2 + $0x180] sm:$0xff]
      %v4277 = vld [vmem:[#allocation2 + $0x188] sm:$0xff]
      %v4278 = vld [vmem:[#allocation2 + $0x190] sm:$0xff]
      %v4279 = vld [vmem:[#allocation2 + $0x198] sm:$0xff]
      %v4280 = vld [vmem:[#allocation2 + $0x1a0] sm:$0xff]
      %v4281 = vld [vmem:[#allocation2 + $0x1a8] sm:$0xff]
      %v4282 = vld [vmem:[#allocation2 + $0x1b0] sm:$0xff]
      %v4283 = vld [vmem:[#allocation2 + $0x1b8] sm:$0xff]
      %v4284 = vld [vmem:[#allocation2 + $0x1c0] sm:$0xff]
      %v4285 = vld [vmem:[#allocation2 + $0x1c8] sm:$0xff]
      %v4286 = vld [vmem:[#allocation2 + $0x1d0] sm:$0xff]
      %v4287 = vld [vmem:[#allocation2 + $0x1d8] sm:$0xff]
      %v4288 = vpack.c.bf16 %v4265, %v4264
      %v4289 = vpack.c.bf16 %v4267, %v4266
      %v4290 = vpack.c.bf16 %v4269, %v4268
      %v4291 = vpack.c.bf16 %v4271, %v4270
      %v4292 = vpack.c.bf16 %v4273, %v4272
      %v4293 = vpack.c.bf16 %v4275, %v4274
      %v4294 = vpack.c.bf16 %v4277, %v4276
      %v4295 = vpack.c.bf16 %v4279, %v4278
      %v4296 = vpack.c.bf16 %v4281, %v4280
      %v4297 = vpack.c.bf16 %v4283, %v4282
      %v4298 = vpack.c.bf16 %v4285, %v4284
      %v4299 = vpack.c.bf16 %v4287, %v4286
      %v4300 = vld [vmem:[%s2084] sm:$0xf]
      %v4302 = vsel %vm335, %v4288, 0
      %v4305 = vsel %vm335, %v4289, 0
      %v4308 = vsel %vm335, %v4290, 0
      %v4311 = vsel %vm335, %v4291, 0
      %v4314 = vsel %vm335, %v4292, 0
      %v4317 = vsel %vm335, %v4293, 0
      %v4320 = vsel %vm335, %v4294, 0
      %v4323 = vsel %vm335, %v4295, 0
      %v4326 = vsel %vm335, %v4296, 0
      %v4329 = vsel %vm335, %v4297, 0
      %v4332 = vsel %vm335, %v4298, 0
      %v4335 = vsel %vm335, %v4299, 0
      %v4338 = vsel %vm1287, %v4300, 0
      %4340 = vmatprep.subr.bf16.mxu0 0
      %4341 = vmatpush1.bf16.msra.mxu0 %v4338
      %4342 = vmatprep.subr.bf16.mxu0 0
      %4343 = vmatpush1.bf16.msra.mxu0 0
      %4344 = vmatprep.subr.bf16.mxu0 0
      %4345 = vmatpush1.bf16.msra.mxu0 0
      %4346 = vmatprep.subr.bf16.mxu0 0
      %4347 = vmatpush1.bf16.msra.mxu0 0
      %4348 = vmatprep.subr.bf16.mxu0 0
      %4349 = vmatpush1.bf16.msra.mxu0 0
      %4350 = vmatprep.subr.bf16.mxu0 0
      %4351 = vmatpush1.bf16.msra.mxu0 0
      %4352 = vmatprep.subr.bf16.mxu0 0
      %4353 = vmatpush1.bf16.msra.mxu0 0
      %4354 = vmatprep.subr.bf16.mxu0 0
      %4355 = vmatpush1.bf16.msra.mxu0 0
      %4356 = vmatprep.subr.bf16.mxu0 0
      %4357 = vmatpush1.bf16.msra.mxu0 0
      %4358 = vmatprep.subr.bf16.mxu0 0
      %4359 = vmatpush1.bf16.msra.mxu0 0
      %4360 = vmatprep.subr.bf16.mxu0 0
      %4361 = vmatpush1.bf16.msra.mxu0 0
      %4362 = vmatprep.subr.bf16.mxu0 0
      %4363 = vmatpush1.bf16.msra.mxu0 0
      %4364 = vmatprep.subr.bf16.mxu0 0
      %4365 = vmatpush1.bf16.msra.mxu0 0
      %4366 = vmatprep.subr.bf16.mxu0 0
      %4367 = vmatpush1.bf16.msra.mxu0 0
      %4368 = vmatprep.subr.bf16.mxu0 0
      %4369 = vmatpush1.bf16.msra.mxu0 0
      %4370 = vmatprep.subr.bf16.mxu0 0
      %4371 = vmatpush1.bf16.msra.mxu0 0
      %4372 = vmatprep.mubr.bf16.mxu0 0
      %4373 = vmatmul.mubr.bf16.gmra.mrb[0].mxu0 %v4302
      %v4374 = vpop.f32.mrb[0].mxu0
      %v4375 = vadd.f32 0.0, %v4374
      %v4376 = vpop.f32.mrb[0].mxu0
      %v4377 = vpop.f32.mrb[0].mxu0
      %v4378 = vadd.f32 0.0, %v4377
      %v4379 = vpop.f32.mrb[0].mxu0
      %4380 = vmatprep.mubr.bf16.mxu0 0
      %4381 = vmatmul.mubr.bf16.gmra.mrb[0].mxu0 %v4305
      %v4382 = vpop.f32.mrb[0].mxu0
      %v4383 = vadd.f32 0.0, %v4382
      %v4384 = vpop.f32.mrb[0].mxu0
      %v4385 = vpop.f32.mrb[0].mxu0
      %v4386 = vadd.f32 0.0, %v4385
      %v4387 = vpop.f32.mrb[0].mxu0
      %4388 = vmatprep.mubr.bf16.mxu0 0
      %4389 = vmatmul.mubr.bf16.gmra.mrb[0].mxu0 %v4308
      %v4390 = vpop.f32.mrb[0].mxu0
      %v4391 = vadd.f32 0.0, %v4390
      %v4392 = vpop.f32.mrb[0].mxu0
      %v4393 = vpop.f32.mrb[0].mxu0
      %v4394 = vadd.f32 0.0, %v4393
      %v4395 = vpop.f32.mrb[0].mxu0
      %4396 = vmatprep.mubr.bf16.mxu0 0
      %4397 = vmatmul.mubr.bf16.gmra.mrb[0].mxu0 %v4311
      %v4398 = vpop.f32.mrb[0].mxu0
      %v4399 = vadd.f32 0.0, %v4398
      %v4400 = vpop.f32.mrb[0].mxu0
      %v4401 = vpop.f32.mrb[0].mxu0
      %v4402 = vadd.f32 0.0, %v4401
      %v4403 = vpop.f32.mrb[0].mxu0
      %4404 = vmatprep.mubr.bf16.mxu0 0
      %4405 = vmatmul.mubr.bf16.gmra.mrb[0].mxu0 %v4314
      %v4406 = vpop.f32.mrb[0].mxu0
      %v4407 = vadd.f32 0.0, %v4406
      %v4408 = vpop.f32.mrb[0].mxu0
      %v4409 = vpop.f32.mrb[0].mxu0
      %v4410 = vadd.f32 0.0, %v4409
      %v4411 = vpop.f32.mrb[0].mxu0
      %4412 = vmatprep.mubr.bf16.mxu0 0
      %4413 = vmatmul.mubr.bf16.gmra.mrb[0].mxu0 %v4317
      %v4414 = vpop.f32.mrb[0].mxu0
      %v4415 = vadd.f32 0.0, %v4414
      %v4416 = vpop.f32.mrb[0].mxu0
      %v4417 = vpop.f32.mrb[0].mxu0
      %v4418 = vadd.f32 0.0, %v4417
      %v4419 = vpop.f32.mrb[0].mxu0
      %4420 = vmatprep.mubr.bf16.mxu0 0
      %4421 = vmatmul.mubr.bf16.gmra.mrb[0].mxu0 %v4320
      %v4422 = vpop.f32.mrb[0].mxu0
      %v4423 = vadd.f32 0.0, %v4422
      %v4424 = vpop.f32.mrb[0].mxu0
      %v4425 = vpop.f32.mrb[0].mxu0
      %v4426 = vadd.f32 0.0, %v4425
      %v4427 = vpop.f32.mrb[0].mxu0
      %4428 = vmatprep.mubr.bf16.mxu0 0
      %4429 = vmatmul.mubr.bf16.gmra.mrb[0].mxu0 %v4323
      %v4430 = vpop.f32.mrb[0].mxu0
      %v4431 = vadd.f32 0.0, %v4430
      %v4432 = vpop.f32.mrb[0].mxu0
      %v4433 = vpop.f32.mrb[0].mxu0
      %v4434 = vadd.f32 0.0, %v4433
      %v4435 = vpop.f32.mrb[0].mxu0
      %4436 = vmatprep.mubr.bf16.mxu0 0
      %4437 = vmatmul.mubr.bf16.gmra.mrb[0].mxu0 %v4326
      %v4438 = vpop.f32.mrb[0].mxu0
      %v4439 = vadd.f32 0.0, %v4438
      %v4440 = vpop.f32.mrb[0].mxu0
      %v4441 = vpop.f32.mrb[0].mxu0
      %v4442 = vadd.f32 0.0, %v4441
      %v4443 = vpop.f32.mrb[0].mxu0
      %4444 = vmatprep.mubr.bf16.mxu0 0
      %4445 = vmatmul.mubr.bf16.gmra.mrb[0].mxu0 %v4329
      %v4446 = vpop.f32.mrb[0].mxu0
      %v4447 = vadd.f32 0.0, %v4446
      %v4448 = vpop.f32.mrb[0].mxu0
      %v4449 = vpop.f32.mrb[0].mxu0
      %v4450 = vadd.f32 0.0, %v4449
      %v4451 = vpop.f32.mrb[0].mxu0
      %4452 = vmatprep.mubr.bf16.mxu0 0
      %4453 = vmatmul.mubr.bf16.gmra.mrb[0].mxu0 %v4332
      %v4454 = vpop.f32.mrb[0].mxu0
      %v4455 = vadd.f32 0.0, %v4454
      %v4456 = vpop.f32.mrb[0].mxu0
      %v4457 = vpop.f32.mrb[0].mxu0
      %v4458 = vadd.f32 0.0, %v4457
      %v4459 = vpop.f32.mrb[0].mxu0
      %4460 = vmatprep.mubr.bf16.mxu0 0
      %4461 = vmatmul.mubr.bf16.gmra.mrb[0].mxu0 %v4335
      %v4462 = vpop.f32.mrb[0].mxu0
      %v4463 = vadd.f32 0.0, %v4462
      %v4464 = vpop.f32.mrb[0].mxu0
      %v4465 = vpop.f32.mrb[0].mxu0
      %v4466 = vadd.f32 0.0, %v4465
      %v4467 = vpop.f32.mrb[0].mxu0
      %4468 = vdwg.mxu0
      %v4469 = vadd.f32 %v4240, %v4375
      %v4470 = vadd.f32 %v4241, %v4378
      %v4471 = vadd.f32 %v4242, %v4383
      %v4472 = vadd.f32 %v4243, %v4386
      %v4473 = vadd.f32 %v4244, %v4391
      %v4474 = vadd.f32 %v4245, %v4394
      %v4475 = vadd.f32 %v4246, %v4399
      %v4476 = vadd.f32 %v4247, %v4402
      %v4477 = vadd.f32 %v4248, %v4407
      %v4478 = vadd.f32 %v4249, %v4410
      %v4479 = vadd.f32 %v4250, %v4415
      %v4480 = vadd.f32 %v4251, %v4418
      %v4481 = vadd.f32 %v4252, %v4423
      %v4482 = vadd.f32 %v4253, %v4426
      %v4483 = vadd.f32 %v4254, %v4431
      %v4484 = vadd.f32 %v4255, %v4434
      %v4485 = vadd.f32 %v4256, %v4439
      %v4486 = vadd.f32 %v4257, %v4442
      %v4487 = vadd.f32 %v4258, %v4447
      %v4488 = vadd.f32 %v4259, %v4450
      %v4489 = vadd.f32 %v4260, %v4455
      %v4490 = vadd.f32 %v4261, %v4458
      %v4491 = vadd.f32 %v4262, %v4463
      %v4492 = vadd.f32 %v4263, %v4466
      %v4493 = vld [vmem:[#allocation2 + $0x121] sm:$0xff]
      %v4494 = vld [vmem:[#allocation2 + $0x129] sm:$0xff]
      %v4495 = vld [vmem:[#allocation2 + $0x131] sm:$0xff]
      %v4496 = vld [vmem:[#allocation2 + $0x139] sm:$0xff]
      %v4497 = vld [vmem:[#allocation2 + $0x141] sm:$0xff]
      %v4498 = vld [vmem:[#allocation2 + $0x149] sm:$0xff]
      %v4499 = vld [vmem:[#allocation2 + $0x151] sm:$0xff]
      %v4500 = vld [vmem:[#allocation2 + $0x159] sm:$0xff]
      %v4501 = vld [vmem:[#allocation2 + $0x161] sm:$0xff]
      %v4502 = vld [vmem:[#allocation2 + $0x169] sm:$0xff]
      %v4503 = vld [vmem:[#allocation2 + $0x171] sm:$0xff]
      %v4504 = vld [vmem:[#allocation2 + $0x179] sm:$0xff]
      %v4505 = vld [vmem:[#allocation2 + $0x181] sm:$0xff]
      %v4506 = vld [vmem:[#allocation2 + $0x189] sm:$0xff]
      %v4507 = vld [vmem:[#allocation2 + $0x191] sm:$0xff]
      %v4508 = vld [vmem:[#allocation2 + $0x199] sm:$0xff]
      %v4509 = vld [vmem:[#allocation2 + $0x1a1] sm:$0xff]
      %v4510 = vld [vmem:[#allocation2 + $0x1a9] sm:$0xff]
      %v4511 = vld [vmem:[#allocation2 + $0x1b1] sm:$0xff]
      %v4512 = vld [vmem:[#allocation2 + $0x1b9] sm:$0xff]
      %v4513 = vld [vmem:[#allocation2 + $0x1c1] sm:$0xff]
      %v4514 = vld [vmem:[#allocation2 + $0x1c9] sm:$0xff]
      %v4515 = vld [vmem:[#allocation2 + $0x1d1] sm:$0xff]
      %v4516 = vld [vmem:[#allocation2 + $0x1d9] sm:$0xff]
      %v4517 = vpack.c.bf16 %v4494, %v4493
      %v4518 = vpack.c.bf16 %v4496, %v4495
      %v4519 = vpack.c.bf16 %v4498, %v4497
      %v4520 = vpack.c.bf16 %v4500, %v4499
      %v4521 = vpack.c.bf16 %v4502, %v4501
      %v4522 = vpack.c.bf16 %v4504, %v4503
      %v4523 = vpack.c.bf16 %v4506, %v4505
      %v4524 = vpack.c.bf16 %v4508, %v4507
      %v4525 = vpack.c.bf16 %v4510, %v4509
      %v4526 = vpack.c.bf16 %v4512, %v4511
      %v4527 = vpack.c.bf16 %v4514, %v4513
      %v4528 = vpack.c.bf16 %v4516, %v4515
      %v4529 = vld [vmem:[%s2314] sm:$0xf]
      %v4531 = vsel %vm335, %v4517, 0
      %v4534 = vsel %vm335, %v4518, 0
      %v4537 = vsel %vm335, %v4519, 0
      %v4540 = vsel %vm335, %v4520, 0
      %v4543 = vsel %vm335, %v4521, 0
      %v4546 = vsel %vm335, %v4522, 0
      %v4549 = vsel %vm335, %v4523, 0
      %v4552 = vsel %vm335, %v4524, 0
      %v4555 = vsel %vm335, %v4525, 0
      %v4558 = vsel %vm335, %v4526, 0
      %v4561 = vsel %vm335, %v4527, 0
      %v4564 = vsel %vm335, %v4528, 0
      %v4567 = vsel %vm1287, %v4529, 0
      %4569 = vmatprep.subr.bf16.mxu0 0
      %4570 = vmatpush1.bf16.msra.mxu0 %v4567
      %4571 = vmatprep.subr.bf16.mxu0 0
      %4572 = vmatpush1.bf16.msra.mxu0 0
      %4573 = vmatprep.subr.bf16.mxu0 0
      %4574 = vmatpush1.bf16.msra.mxu0 0
      %4575 = vmatprep.subr.bf16.mxu0 0
      %4576 = vmatpush1.bf16.msra.mxu0 0
      %4577 = vmatprep.subr.bf16.mxu0 0
      %4578 = vmatpush1.bf16.msra.mxu0 0
      %4579 = vmatprep.subr.bf16.mxu0 0
      %4580 = vmatpush1.bf16.msra.mxu0 0
      %4581 = vmatprep.subr.bf16.mxu0 0
      %4582 = vmatpush1.bf16.msra.mxu0 0
      %4583 = vmatprep.subr.bf16.mxu0 0
      %4584 = vmatpush1.bf16.msra.mxu0 0
      %4585 = vmatprep.subr.bf16.mxu0 0
      %4586 = vmatpush1.bf16.msra.mxu0 0
      %4587 = vmatprep.subr.bf16.mxu0 0
      %4588 = vmatpush1.bf16.msra.mxu0 0
      %4589 = vmatprep.subr.bf16.mxu0 0
      %4590 = vmatpush1.bf16.msra.mxu0 0
      %4591 = vmatprep.subr.bf16.mxu0 0
      %4592 = vmatpush1.bf16.msra.mxu0 0
      %4593 = vmatprep.subr.bf16.mxu0 0
      %4594 = vmatpush1.bf16.msra.mxu0 0
      %4595 = vmatprep.subr.bf16.mxu0 0
      %4596 = vmatpush1.bf16.msra.mxu0 0
      %4597 = vmatprep.subr.bf16.mxu0 0
      %4598 = vmatpush1.bf16.msra.mxu0 0
      %4599 = vmatprep.subr.bf16.mxu0 0
      %4600 = vmatpush1.bf16.msra.mxu0 0
      %4601 = vmatprep.mubr.bf16.mxu0 0
      %4602 = vmatmul.mubr.bf16.gmra.mrb[0].mxu0 %v4531
      %v4603 = vpop.f32.mrb[0].mxu0
      %v4604 = vadd.f32 0.0, %v4603
      %v4605 = vpop.f32.mrb[0].mxu0
      %v4606 = vpop.f32.mrb[0].mxu0
      %v4607 = vadd.f32 0.0, %v4606
      %v4608 = vpop.f32.mrb[0].mxu0
      %4609 = vmatprep.mubr.bf16.mxu0 0
      %4610 = vmatmul.mubr.bf16.gmra.mrb[0].mxu0 %v4534
      %v4611 = vpop.f32.mrb[0].mxu0
      %v4612 = vadd.f32 0.0, %v4611
      %v4613 = vpop.f32.mrb[0].mxu0
      %v4614 = vpop.f32.mrb[0].mxu0
      %v4615 = vadd.f32 0.0, %v4614
      %v4616 = vpop.f32.mrb[0].mxu0
      %4617 = vmatprep.mubr.bf16.mxu0 0
      %4618 = vmatmul.mubr.bf16.gmra.mrb[0].mxu0 %v4537
      %v4619 = vpop.f32.mrb[0].mxu0
      %v4620 = vadd.f32 0.0, %v4619
      %v4621 = vpop.f32.mrb[0].mxu0
      %v4622 = vpop.f32.mrb[0].mxu0
      %v4623 = vadd.f32 0.0, %v4622
      %v4624 = vpop.f32.mrb[0].mxu0
      %4625 = vmatprep.mubr.bf16.mxu0 0
      %4626 = vmatmul.mubr.bf16.gmra.mrb[0].mxu0 %v4540
      %v4627 = vpop.f32.mrb[0].mxu0
      %v4628 = vadd.f32 0.0, %v4627
      %v4629 = vpop.f32.mrb[0].mxu0
      %v4630 = vpop.f32.mrb[0].mxu0
      %v4631 = vadd.f32 0.0, %v4630
      %v4632 = vpop.f32.mrb[0].mxu0
      %4633 = vmatprep.mubr.bf16.mxu0 0
      %4634 = vmatmul.mubr.bf16.gmra.mrb[0].mxu0 %v4543
      %v4635 = vpop.f32.mrb[0].mxu0
      %v4636 = vadd.f32 0.0, %v4635
      %v4637 = vpop.f32.mrb[0].mxu0
      %v4638 = vpop.f32.mrb[0].mxu0
      %v4639 = vadd.f32 0.0, %v4638
      %v4640 = vpop.f32.mrb[0].mxu0
      %4641 = vmatprep.mubr.bf16.mxu0 0
      %4642 = vmatmul.mubr.bf16.gmra.mrb[0].mxu0 %v4546
      %v4643 = vpop.f32.mrb[0].mxu0
      %v4644 = vadd.f32 0.0, %v4643
      %v4645 = vpop.f32.mrb[0].mxu0
      %v4646 = vpop.f32.mrb[0].mxu0
      %v4647 = vadd.f32 0.0, %v4646
      %v4648 = vpop.f32.mrb[0].mxu0
      %4649 = vmatprep.mubr.bf16.mxu0 0
      %4650 = vmatmul.mubr.bf16.gmra.mrb[0].mxu0 %v4549
      %v4651 = vpop.f32.mrb[0].mxu0
      %v4652 = vadd.f32 0.0, %v4651
      %v4653 = vpop.f32.mrb[0].mxu0
      %v4654 = vpop.f32.mrb[0].mxu0
      %v4655 = vadd.f32 0.0, %v4654
      %v4656 = vpop.f32.mrb[0].mxu0
      %4657 = vmatprep.mubr.bf16.mxu0 0
      %4658 = vmatmul.mubr.bf16.gmra.mrb[0].mxu0 %v4552
      %v4659 = vpop.f32.mrb[0].mxu0
      %v4660 = vadd.f32 0.0, %v4659
      %v4661 = vpop.f32.mrb[0].mxu0
      %v4662 = vpop.f32.mrb[0].mxu0
      %v4663 = vadd.f32 0.0, %v4662
      %v4664 = vpop.f32.mrb[0].mxu0
      %4665 = vmatprep.mubr.bf16.mxu0 0
      %4666 = vmatmul.mubr.bf16.gmra.mrb[0].mxu0 %v4555
      %v4667 = vpop.f32.mrb[0].mxu0
      %v4668 = vadd.f32 0.0, %v4667
      %v4669 = vpop.f32.mrb[0].mxu0
      %v4670 = vpop.f32.mrb[0].mxu0
      %v4671 = vadd.f32 0.0, %v4670
      %v4672 = vpop.f32.mrb[0].mxu0
      %4673 = vmatprep.mubr.bf16.mxu0 0
      %4674 = vmatmul.mubr.bf16.gmra.mrb[0].mxu0 %v4558
      %v4675 = vpop.f32.mrb[0].mxu0
      %v4676 = vadd.f32 0.0, %v4675
      %v4677 = vpop.f32.mrb[0].mxu0
      %v4678 = vpop.f32.mrb[0].mxu0
      %v4679 = vadd.f32 0.0, %v4678
      %v4680 = vpop.f32.mrb[0].mxu0
      %4681 = vmatprep.mubr.bf16.mxu0 0
      %4682 = vmatmul.mubr.bf16.gmra.mrb[0].mxu0 %v4561
      %v4683 = vpop.f32.mrb[0].mxu0
      %v4684 = vadd.f32 0.0, %v4683
      %v4685 = vpop.f32.mrb[0].mxu0
      %v4686 = vpop.f32.mrb[0].mxu0
      %v4687 = vadd.f32 0.0, %v4686
      %v4688 = vpop.f32.mrb[0].mxu0
      %4689 = vmatprep.mubr.bf16.mxu0 0
      %4690 = vmatmul.mubr.bf16.gmra.mrb[0].mxu0 %v4564
      %v4691 = vpop.f32.mrb[0].mxu0
      %v4692 = vadd.f32 0.0, %v4691
      %v4693 = vpop.f32.mrb[0].mxu0
      %v4694 = vpop.f32.mrb[0].mxu0
      %v4695 = vadd.f32 0.0, %v4694
      %v4696 = vpop.f32.mrb[0].mxu0
      %4697 = vdwg.mxu0
      %v4698 = vadd.f32 %v4469, %v4604
      %v4699 = vadd.f32 %v4470, %v4607
      %v4700 = vadd.f32 %v4471, %v4612
      %v4701 = vadd.f32 %v4472, %v4615
      %v4702 = vadd.f32 %v4473, %v4620
      %v4703 = vadd.f32 %v4474, %v4623
      %v4704 = vadd.f32 %v4475, %v4628
      %v4705 = vadd.f32 %v4476, %v4631
      %v4706 = vadd.f32 %v4477, %v4636
      %v4707 = vadd.f32 %v4478, %v4639
      %v4708 = vadd.f32 %v4479, %v4644
      %v4709 = vadd.f32 %v4480, %v4647
      %v4710 = vadd.f32 %v4481, %v4652
      %v4711 = vadd.f32 %v4482, %v4655
      %v4712 = vadd.f32 %v4483, %v4660
      %v4713 = vadd.f32 %v4484, %v4663
      %v4714 = vadd.f32 %v4485, %v4668
      %v4715 = vadd.f32 %v4486, %v4671
      %v4716 = vadd.f32 %v4487, %v4676
      %v4717 = vadd.f32 %v4488, %v4679
      %v4718 = vadd.f32 %v4489, %v4684
      %v4719 = vadd.f32 %v4490, %v4687
      %v4720 = vadd.f32 %v4491, %v4692
      %v4721 = vadd.f32 %v4492, %v4695
      %v4722 = vld [vmem:[#allocation2 + $0x137] sm:$0xff]
      %v4723 = vld [vmem:[#allocation2 + $0x13f] sm:$0xff]
      %v4724 = vld [vmem:[#allocation2 + $0x147] sm:$0xff]
      %v4725 = vld [vmem:[#allocation2 + $0x14f] sm:$0xff]
      %v4726 = vld [vmem:[#allocation2 + $0x157] sm:$0xff]
      %v4727 = vld [vmem:[#allocation2 + $0x15f] sm:$0xff]
      %v4728 = vld [vmem:[#allocation2 + $0x167] sm:$0xff]
      %v4729 = vld [vmem:[#allocation2 + $0x16f] sm:$0xff]
      %v4730 = vld [vmem:[#allocation2 + $0x177] sm:$0xff]
      %v4731 = vld [vmem:[#allocation2 + $0x17f] sm:$0xff]
      %v4732 = vld [vmem:[#allocation2 + $0x187] sm:$0xff]
      %v4733 = vld [vmem:[#allocation2 + $0x18f] sm:$0xff]
      %v4734 = vld [vmem:[#allocation2 + $0x197] sm:$0xff]
      %v4735 = vld [vmem:[#allocation2 + $0x19f] sm:$0xff]
      %v4736 = vld [vmem:[#allocation2 + $0x1a7] sm:$0xff]
      %v4737 = vld [vmem:[#allocation2 + $0x1af] sm:$0xff]
      %v4738 = vld [vmem:[#allocation2 + $0x1b7] sm:$0xff]
      %v4739 = vld [vmem:[#allocation2 + $0x1bf] sm:$0xff]
      %v4740 = vld [vmem:[#allocation2 + $0x1c7] sm:$0xff]
      %v4741 = vld [vmem:[#allocation2 + $0x1cf] sm:$0xff]
      %v4742 = vld [vmem:[#allocation2 + $0x1d7] sm:$0xff]
      %v4743 = vld [vmem:[#allocation2 + $0x1df] sm:$0xff]
      %v4744 = vld [vmem:[#allocation2 + $0x1e7] sm:$0xff]
      %v4745 = vld [vmem:[#allocation2 + $0x1ef] sm:$0xff]
      %v4746 = vpack.c.bf16 %v4723, %v4722
      %v4747 = vpack.c.bf16 %v4725, %v4724
      %v4748 = vpack.c.bf16 %v4727, %v4726
      %v4749 = vpack.c.bf16 %v4729, %v4728
      %v4750 = vpack.c.bf16 %v4731, %v4730
      %v4751 = vpack.c.bf16 %v4733, %v4732
      %v4752 = vpack.c.bf16 %v4735, %v4734
      %v4753 = vpack.c.bf16 %v4737, %v4736
      %v4754 = vpack.c.bf16 %v4739, %v4738
      %v4755 = vpack.c.bf16 %v4741, %v4740
      %v4756 = vpack.c.bf16 %v4743, %v4742
      %v4757 = vpack.c.bf16 %v4745, %v4744
      %v4758 = vld [vmem:[%s2544] sm:$0xf]
      %v4760 = vsel %vm335, %v4746, 0
      %v4763 = vsel %vm335, %v4747, 0
      %v4766 = vsel %vm335, %v4748, 0
      %v4769 = vsel %vm335, %v4749, 0
      %v4772 = vsel %vm335, %v4750, 0
      %v4775 = vsel %vm335, %v4751, 0
      %v4778 = vsel %vm335, %v4752, 0
      %v4781 = vsel %vm335, %v4753, 0
      %v4784 = vsel %vm335, %v4754, 0
      %v4787 = vsel %vm335, %v4755, 0
      %v4790 = vsel %vm335, %v4756, 0
      %v4793 = vsel %vm335, %v4757, 0
      %v4796 = vsel %vm1287, %v4758, 0
      %4798 = vmatprep.subr.bf16.mxu0 0
      %4799 = vmatpush1.bf16.msra.mxu0 %v4796
      %4800 = vmatprep.subr.bf16.mxu0 0
      %4801 = vmatpush1.bf16.msra.mxu0 0
      %4802 = vmatprep.subr.bf16.mxu0 0
      %4803 = vmatpush1.bf16.msra.mxu0 0
      %4804 = vmatprep.subr.bf16.mxu0 0
      %4805 = vmatpush1.bf16.msra.mxu0 0
      %4806 = vmatprep.subr.bf16.mxu0 0
      %4807 = vmatpush1.bf16.msra.mxu0 0
      %4808 = vmatprep.subr.bf16.mxu0 0
      %4809 = vmatpush1.bf16.msra.mxu0 0
      %4810 = vmatprep.subr.bf16.mxu0 0
      %4811 = vmatpush1.bf16.msra.mxu0 0
      %4812 = vmatprep.subr.bf16.mxu0 0
      %4813 = vmatpush1.bf16.msra.mxu0 0
      %4814 = vmatprep.subr.bf16.mxu0 0
      %4815 = vmatpush1.bf16.msra.mxu0 0
      %4816 = vmatprep.subr.bf16.mxu0 0
      %4817 = vmatpush1.bf16.msra.mxu0 0
      %4818 = vmatprep.subr.bf16.mxu0 0
      %4819 = vmatpush1.bf16.msra.mxu0 0
      %4820 = vmatprep.subr.bf16.mxu0 0
      %4821 = vmatpush1.bf16.msra.mxu0 0
      %4822 = vmatprep.subr.bf16.mxu0 0
      %4823 = vmatpush1.bf16.msra.mxu0 0
      %4824 = vmatprep.subr.bf16.mxu0 0
      %4825 = vmatpush1.bf16.msra.mxu0 0
      %4826 = vmatprep.subr.bf16.mxu0 0
      %4827 = vmatpush1.bf16.msra.mxu0 0
      %4828 = vmatprep.subr.bf16.mxu0 0
      %4829 = vmatpush1.bf16.msra.mxu0 0
      %4830 = vmatprep.mubr.bf16.mxu0 0
      %4831 = vmatmul.mubr.bf16.gmra.mrb[0].mxu0 %v4760
      %v4832 = vpop.f32.mrb[0].mxu0
      %v4833 = vadd.f32 0.0, %v4832
      %v4834 = vpop.f32.mrb[0].mxu0
      %v4835 = vpop.f32.mrb[0].mxu0
      %v4836 = vadd.f32 0.0, %v4835
      %v4837 = vpop.f32.mrb[0].mxu0
      %4838 = vmatprep.mubr.bf16.mxu0 0
      %4839 = vmatmul.mubr.bf16.gmra.mrb[0].mxu0 %v4763
      %v4840 = vpop.f32.mrb[0].mxu0
      %v4841 = vadd.f32 0.0, %v4840
      %v4842 = vpop.f32.mrb[0].mxu0
      %v4843 = vpop.f32.mrb[0].mxu0
      %v4844 = vadd.f32 0.0, %v4843
      %v4845 = vpop.f32.mrb[0].mxu0
      %4846 = vmatprep.mubr.bf16.mxu0 0
      %4847 = vmatmul.mubr.bf16.gmra.mrb[0].mxu0 %v4766
      %v4848 = vpop.f32.mrb[0].mxu0
      %v4849 = vadd.f32 0.0, %v4848
      %v4850 = vpop.f32.mrb[0].mxu0
      %v4851 = vpop.f32.mrb[0].mxu0
      %v4852 = vadd.f32 0.0, %v4851
      %v4853 = vpop.f32.mrb[0].mxu0
      %4854 = vmatprep.mubr.bf16.mxu0 0
      %4855 = vmatmul.mubr.bf16.gmra.mrb[0].mxu0 %v4769
      %v4856 = vpop.f32.mrb[0].mxu0
      %v4857 = vadd.f32 0.0, %v4856
      %v4858 = vpop.f32.mrb[0].mxu0
      %v4859 = vpop.f32.mrb[0].mxu0
      %v4860 = vadd.f32 0.0, %v4859
      %v4861 = vpop.f32.mrb[0].mxu0
      %4862 = vmatprep.mubr.bf16.mxu0 0
      %4863 = vmatmul.mubr.bf16.gmra.mrb[0].mxu0 %v4772
      %v4864 = vpop.f32.mrb[0].mxu0
      %v4865 = vadd.f32 0.0, %v4864
      %v4866 = vpop.f32.mrb[0].mxu0
      %v4867 = vpop.f32.mrb[0].mxu0
      %v4868 = vadd.f32 0.0, %v4867
      %v4869 = vpop.f32.mrb[0].mxu0
      %4870 = vmatprep.mubr.bf16.mxu0 0
      %4871 = vmatmul.mubr.bf16.gmra.mrb[0].mxu0 %v4775
      %v4872 = vpop.f32.mrb[0].mxu0
      %v4873 = vadd.f32 0.0, %v4872
      %v4874 = vpop.f32.mrb[0].mxu0
      %v4875 = vpop.f32.mrb[0].mxu0
      %v4876 = vadd.f32 0.0, %v4875
      %v4877 = vpop.f32.mrb[0].mxu0
      %4878 = vmatprep.mubr.bf16.mxu0 0
      %4879 = vmatmul.mubr.bf16.gmra.mrb[0].mxu0 %v4778
      %v4880 = vpop.f32.mrb[0].mxu0
      %v4881 = vadd.f32 0.0, %v4880
      %v4882 = vpop.f32.mrb[0].mxu0
      %v4883 = vpop.f32.mrb[0].mxu0
      %v4884 = vadd.f32 0.0, %v4883
      %v4885 = vpop.f32.mrb[0].mxu0
      %4886 = vmatprep.mubr.bf16.mxu0 0
      %4887 = vmatmul.mubr.bf16.gmra.mrb[0].mxu0 %v4781
      %v4888 = vpop.f32.mrb[0].mxu0
      %v4889 = vadd.f32 0.0, %v4888
      %v4890 = vpop.f32.mrb[0].mxu0
      %v4891 = vpop.f32.mrb[0].mxu0
      %v4892 = vadd.f32 0.0, %v4891
      %v4893 = vpop.f32.mrb[0].mxu0
      %4894 = vmatprep.mubr.bf16.mxu0 0
      %4895 = vmatmul.mubr.bf16.gmra.mrb[0].mxu0 %v4784
      %v4896 = vpop.f32.mrb[0].mxu0
      %v4897 = vadd.f32 0.0, %v4896
      %v4898 = vpop.f32.mrb[0].mxu0
      %v4899 = vpop.f32.mrb[0].mxu0
      %v4900 = vadd.f32 0.0, %v4899
      %v4901 = vpop.f32.mrb[0].mxu0
      %4902 = vmatprep.mubr.bf16.mxu0 0
      %4903 = vmatmul.mubr.bf16.gmra.mrb[0].mxu0 %v4787
      %v4904 = vpop.f32.mrb[0].mxu0
      %v4905 = vadd.f32 0.0, %v4904
      %v4906 = vpop.f32.mrb[0].mxu0
      %v4907 = vpop.f32.mrb[0].mxu0
      %v4908 = vadd.f32 0.0, %v4907
      %v4909 = vpop.f32.mrb[0].mxu0
      %4910 = vmatprep.mubr.bf16.mxu0 0
      %4911 = vmatmul.mubr.bf16.gmra.mrb[0].mxu0 %v4790
      %v4912 = vpop.f32.mrb[0].mxu0
      %v4913 = vadd.f32 0.0, %v4912
      %v4914 = vpop.f32.mrb[0].mxu0
      %v4915 = vpop.f32.mrb[0].mxu0
      %v4916 = vadd.f32 0.0, %v4915
      %v4917 = vpop.f32.mrb[0].mxu0
      %4918 = vmatprep.mubr.bf16.mxu0 0
      %4919 = vmatmul.mubr.bf16.gmra.mrb[0].mxu0 %v4793
      %v4920 = vpop.f32.mrb[0].mxu0
      %v4921 = vadd.f32 0.0, %v4920
      %v4922 = vpop.f32.mrb[0].mxu0
      %v4923 = vpop.f32.mrb[0].mxu0
      %v4924 = vadd.f32 0.0, %v4923
      %v4925 = vpop.f32.mrb[0].mxu0
      %4926 = vdwg.mxu0
      %v4927 = vadd.f32 %v4698, %v4833
      %v4928 = vadd.f32 %v4699, %v4836
      %v4929 = vadd.f32 %v4700, %v4841
      %v4930 = vadd.f32 %v4701, %v4844
      %v4931 = vadd.f32 %v4702, %v4849
      %v4932 = vadd.f32 %v4703, %v4852
      %v4933 = vadd.f32 %v4704, %v4857
      %v4934 = vadd.f32 %v4705, %v4860
      %v4935 = vadd.f32 %v4706, %v4865
      %v4936 = vadd.f32 %v4707, %v4868
      %v4937 = vadd.f32 %v4708, %v4873
      %v4938 = vadd.f32 %v4709, %v4876
      %v4939 = vadd.f32 %v4710, %v4881
      %v4940 = vadd.f32 %v4711, %v4884
      %v4941 = vadd.f32 %v4712, %v4889
      %v4942 = vadd.f32 %v4713, %v4892
      %v4943 = vadd.f32 %v4714, %v4897
      %v4944 = vadd.f32 %v4715, %v4900
      %v4945 = vadd.f32 %v4716, %v4905
      %v4946 = vadd.f32 %v4717, %v4908
      %v4947 = vadd.f32 %v4718, %v4913
      %v4948 = vadd.f32 %v4719, %v4916
      %v4949 = vadd.f32 %v4720, %v4921
      %v4950 = vadd.f32 %v4721, %v4924
      %v4951 = vld [vmem:[#allocation2 + $0x138] sm:$0xff]
      %v4952 = vld [vmem:[#allocation2 + $0x140] sm:$0xff]
      %v4953 = vld [vmem:[#allocation2 + $0x148] sm:$0xff]
      %v4954 = vld [vmem:[#allocation2 + $0x150] sm:$0xff]
      %v4955 = vld [vmem:[#allocation2 + $0x158] sm:$0xff]
      %v4956 = vld [vmem:[#allocation2 + $0x160] sm:$0xff]
      %v4957 = vld [vmem:[#allocation2 + $0x168] sm:$0xff]
      %v4958 = vld [vmem:[#allocation2 + $0x170] sm:$0xff]
      %v4959 = vld [vmem:[#allocation2 + $0x178] sm:$0xff]
      %v4960 = vld [vmem:[#allocation2 + $0x180] sm:$0xff]
      %v4961 = vld [vmem:[#allocation2 + $0x188] sm:$0xff]
      %v4962 = vld [vmem:[#allocation2 + $0x190] sm:$0xff]
      %v4963 = vld [vmem:[#allocation2 + $0x198] sm:$0xff]
      %v4964 = vld [vmem:[#allocation2 + $0x1a0] sm:$0xff]
      %v4965 = vld [vmem:[#allocation2 + $0x1a8] sm:$0xff]
      %v4966 = vld [vmem:[#allocation2 + $0x1b0] sm:$0xff]
      %v4967 = vld [vmem:[#allocation2 + $0x1b8] sm:$0xff]
      %v4968 = vld [vmem:[#allocation2 + $0x1c0] sm:$0xff]
      %v4969 = vld [vmem:[#allocation2 + $0x1c8] sm:$0xff]
      %v4970 = vld [vmem:[#allocation2 + $0x1d0] sm:$0xff]
      %v4971 = vld [vmem:[#allocation2 + $0x1d8] sm:$0xff]
      %v4972 = vld [vmem:[#allocation2 + $0x1e0] sm:$0xff]
      %v4973 = vld [vmem:[#allocation2 + $0x1e8] sm:$0xff]
      %v4974 = vld [vmem:[#allocation2 + $0x1f0] sm:$0xff]
      %v4975 = vpack.c.bf16 %v4952, %v4951
      %v4976 = vpack.c.bf16 %v4954, %v4953
      %v4977 = vpack.c.bf16 %v4956, %v4955
      %v4978 = vpack.c.bf16 %v4958, %v4957
      %v4979 = vpack.c.bf16 %v4960, %v4959
      %v4980 = vpack.c.bf16 %v4962, %v4961
      %v4981 = vpack.c.bf16 %v4964, %v4963
      %v4982 = vpack.c.bf16 %v4966, %v4965
      %v4983 = vpack.c.bf16 %v4968, %v4967
      %v4984 = vpack.c.bf16 %v4970, %v4969
      %v4985 = vpack.c.bf16 %v4972, %v4971
      %v4986 = vpack.c.bf16 %v4974, %v4973
      %v4987 = vld [vmem:[%s2774] sm:$0xf]
      %v4989 = vsel %vm335, %v4975, 0
      %v4992 = vsel %vm335, %v4976, 0
      %v4995 = vsel %vm335, %v4977, 0
      %v4998 = vsel %vm335, %v4978, 0
      %v5001 = vsel %vm335, %v4979, 0
      %v5004 = vsel %vm335, %v4980, 0
      %v5007 = vsel %vm335, %v4981, 0
      %v5010 = vsel %vm335, %v4982, 0
      %v5013 = vsel %vm335, %v4983, 0
      %v5016 = vsel %vm335, %v4984, 0
      %v5019 = vsel %vm335, %v4985, 0
      %v5022 = vsel %vm335, %v4986, 0
      %v5025 = vsel %vm1287, %v4987, 0
      %5027 = vmatprep.subr.bf16.mxu0 0
      %5028 = vmatpush1.bf16.msra.mxu0 %v5025
      %5029 = vmatprep.subr.bf16.mxu0 0
      %5030 = vmatpush1.bf16.msra.mxu0 0
      %5031 = vmatprep.subr.bf16.mxu0 0
      %5032 = vmatpush1.bf16.msra.mxu0 0
      %5033 = vmatprep.subr.bf16.mxu0 0
      %5034 = vmatpush1.bf16.msra.mxu0 0
      %5035 = vmatprep.subr.bf16.mxu0 0
      %5036 = vmatpush1.bf16.msra.mxu0 0
      %5037 = vmatprep.subr.bf16.mxu0 0
      %5038 = vmatpush1.bf16.msra.mxu0 0
      %5039 = vmatprep.subr.bf16.mxu0 0
      %5040 = vmatpush1.bf16.msra.mxu0 0
      %5041 = vmatprep.subr.bf16.mxu0 0
      %5042 = vmatpush1.bf16.msra.mxu0 0
      %5043 = vmatprep.subr.bf16.mxu0 0
      %5044 = vmatpush1.bf16.msra.mxu0 0
      %5045 = vmatprep.subr.bf16.mxu0 0
      %5046 = vmatpush1.bf16.msra.mxu0 0
      %5047 = vmatprep.subr.bf16.mxu0 0
      %5048 = vmatpush1.bf16.msra.mxu0 0
      %5049 = vmatprep.subr.bf16.mxu0 0
      %5050 = vmatpush1.bf16.msra.mxu0 0
      %5051 = vmatprep.subr.bf16.mxu0 0
      %5052 = vmatpush1.bf16.msra.mxu0 0
      %5053 = vmatprep.subr.bf16.mxu0 0
      %5054 = vmatpush1.bf16.msra.mxu0 0
      %5055 = vmatprep.subr.bf16.mxu0 0
      %5056 = vmatpush1.bf16.msra.mxu0 0
      %5057 = vmatprep.subr.bf16.mxu0 0
      %5058 = vmatpush1.bf16.msra.mxu0 0
      %5059 = vmatprep.mubr.bf16.mxu0 0
      %5060 = vmatmul.mubr.bf16.gmra.mrb[0].mxu0 %v4989
      %v5061 = vpop.f32.mrb[0].mxu0
      %v5062 = vadd.f32 0.0, %v5061
      %v5063 = vpop.f32.mrb[0].mxu0
      %v5064 = vpop.f32.mrb[0].mxu0
      %v5065 = vadd.f32 0.0, %v5064
      %v5066 = vpop.f32.mrb[0].mxu0
      %5067 = vmatprep.mubr.bf16.mxu0 0
      %5068 = vmatmul.mubr.bf16.gmra.mrb[0].mxu0 %v4992
      %v5069 = vpop.f32.mrb[0].mxu0
      %v5070 = vadd.f32 0.0, %v5069
      %v5071 = vpop.f32.mrb[0].mxu0
      %v5072 = vpop.f32.mrb[0].mxu0
      %v5073 = vadd.f32 0.0, %v5072
      %v5074 = vpop.f32.mrb[0].mxu0
      %5075 = vmatprep.mubr.bf16.mxu0 0
      %5076 = vmatmul.mubr.bf16.gmra.mrb[0].mxu0 %v4995
      %v5077 = vpop.f32.mrb[0].mxu0
      %v5078 = vadd.f32 0.0, %v5077
      %v5079 = vpop.f32.mrb[0].mxu0
      %v5080 = vpop.f32.mrb[0].mxu0
      %v5081 = vadd.f32 0.0, %v5080
      %v5082 = vpop.f32.mrb[0].mxu0
      %5083 = vmatprep.mubr.bf16.mxu0 0
      %5084 = vmatmul.mubr.bf16.gmra.mrb[0].mxu0 %v4998
      %v5085 = vpop.f32.mrb[0].mxu0
      %v5086 = vadd.f32 0.0, %v5085
      %v5087 = vpop.f32.mrb[0].mxu0
      %v5088 = vpop.f32.mrb[0].mxu0
      %v5089 = vadd.f32 0.0, %v5088
      %v5090 = vpop.f32.mrb[0].mxu0
      %5091 = vmatprep.mubr.bf16.mxu0 0
      %5092 = vmatmul.mubr.bf16.gmra.mrb[0].mxu0 %v5001
      %v5093 = vpop.f32.mrb[0].mxu0
      %v5094 = vadd.f32 0.0, %v5093
      %v5095 = vpop.f32.mrb[0].mxu0
      %v5096 = vpop.f32.mrb[0].mxu0
      %v5097 = vadd.f32 0.0, %v5096
      %v5098 = vpop.f32.mrb[0].mxu0
      %5099 = vmatprep.mubr.bf16.mxu0 0
      %5100 = vmatmul.mubr.bf16.gmra.mrb[0].mxu0 %v5004
      %v5101 = vpop.f32.mrb[0].mxu0
      %v5102 = vadd.f32 0.0, %v5101
      %v5103 = vpop.f32.mrb[0].mxu0
      %v5104 = vpop.f32.mrb[0].mxu0
      %v5105 = vadd.f32 0.0, %v5104
      %v5106 = vpop.f32.mrb[0].mxu0
      %5107 = vmatprep.mubr.bf16.mxu0 0
      %5108 = vmatmul.mubr.bf16.gmra.mrb[0].mxu0 %v5007
      %v5109 = vpop.f32.mrb[0].mxu0
      %v5110 = vadd.f32 0.0, %v5109
      %v5111 = vpop.f32.mrb[0].mxu0
      %v5112 = vpop.f32.mrb[0].mxu0
      %v5113 = vadd.f32 0.0, %v5112
      %v5114 = vpop.f32.mrb[0].mxu0
      %5115 = vmatprep.mubr.bf16.mxu0 0
      %5116 = vmatmul.mubr.bf16.gmra.mrb[0].mxu0 %v5010
      %v5117 = vpop.f32.mrb[0].mxu0
      %v5118 = vadd.f32 0.0, %v5117
      %v5119 = vpop.f32.mrb[0].mxu0
      %v5120 = vpop.f32.mrb[0].mxu0
      %v5121 = vadd.f32 0.0, %v5120
      %v5122 = vpop.f32.mrb[0].mxu0
      %5123 = vmatprep.mubr.bf16.mxu0 0
      %5124 = vmatmul.mubr.bf16.gmra.mrb[0].mxu0 %v5013
      %v5125 = vpop.f32.mrb[0].mxu0
      %v5126 = vadd.f32 0.0, %v5125
      %v5127 = vpop.f32.mrb[0].mxu0
      %v5128 = vpop.f32.mrb[0].mxu0
      %v5129 = vadd.f32 0.0, %v5128
      %v5130 = vpop.f32.mrb[0].mxu0
      %5131 = vmatprep.mubr.bf16.mxu0 0
      %5132 = vmatmul.mubr.bf16.gmra.mrb[0].mxu0 %v5016
      %v5133 = vpop.f32.mrb[0].mxu0
      %v5134 = vadd.f32 0.0, %v5133
      %v5135 = vpop.f32.mrb[0].mxu0
      %v5136 = vpop.f32.mrb[0].mxu0
      %v5137 = vadd.f32 0.0, %v5136
      %v5138 = vpop.f32.mrb[0].mxu0
      %5139 = vmatprep.mubr.bf16.mxu0 0
      %5140 = vmatmul.mubr.bf16.gmra.mrb[0].mxu0 %v5019
      %v5141 = vpop.f32.mrb[0].mxu0
      %v5142 = vadd.f32 0.0, %v5141
      %v5143 = vpop.f32.mrb[0].mxu0
      %v5144 = vpop.f32.mrb[0].mxu0
      %v5145 = vadd.f32 0.0, %v5144
      %v5146 = vpop.f32.mrb[0].mxu0
      %5147 = vmatprep.mubr.bf16.mxu0 0
      %5148 = vmatmul.mubr.bf16.gmra.mrb[0].mxu0 %v5022
      %v5149 = vpop.f32.mrb[0].mxu0
      %v5150 = vadd.f32 0.0, %v5149
      %v5151 = vpop.f32.mrb[0].mxu0
      %v5152 = vpop.f32.mrb[0].mxu0
      %v5153 = vadd.f32 0.0, %v5152
      %v5154 = vpop.f32.mrb[0].mxu0
      %5155 = vdwg.mxu0
      %v5156 = vadd.f32 %v4927, %v5062
      %v5157 = vadd.f32 %v4928, %v5065
      %v5158 = vadd.f32 %v4929, %v5070
      %v5159 = vadd.f32 %v4930, %v5073
      %v5160 = vadd.f32 %v4931, %v5078
      %v5161 = vadd.f32 %v4932, %v5081
      %v5162 = vadd.f32 %v4933, %v5086
      %v5163 = vadd.f32 %v4934, %v5089
      %v5164 = vadd.f32 %v4935, %v5094
      %v5165 = vadd.f32 %v4936, %v5097
      %v5166 = vadd.f32 %v4937, %v5102
      %v5167 = vadd.f32 %v4938, %v5105
      %v5168 = vadd.f32 %v4939, %v5110
      %v5169 = vadd.f32 %v4940, %v5113
      %v5170 = vadd.f32 %v4941, %v5118
      %v5171 = vadd.f32 %v4942, %v5121
      %v5172 = vadd.f32 %v4943, %v5126
      %v5173 = vadd.f32 %v4944, %v5129
      %v5174 = vadd.f32 %v4945, %v5134
      %v5175 = vadd.f32 %v4946, %v5137
      %v5176 = vadd.f32 %v4947, %v5142
      %v5177 = vadd.f32 %v4948, %v5145
      %v5178 = vadd.f32 %v4949, %v5150
      %v5179 = vadd.f32 %v4950, %v5153
      %v5180 = vld [vmem:[#allocation2 + $0x139] sm:$0xff]
      %v5181 = vld [vmem:[#allocation2 + $0x141] sm:$0xff]
      %v5182 = vld [vmem:[#allocation2 + $0x149] sm:$0xff]
      %v5183 = vld [vmem:[#allocation2 + $0x151] sm:$0xff]
      %v5184 = vld [vmem:[#allocation2 + $0x159] sm:$0xff]
      %v5185 = vld [vmem:[#allocation2 + $0x161] sm:$0xff]
      %v5186 = vld [vmem:[#allocation2 + $0x169] sm:$0xff]
      %v5187 = vld [vmem:[#allocation2 + $0x171] sm:$0xff]
      %v5188 = vld [vmem:[#allocation2 + $0x179] sm:$0xff]
      %v5189 = vld [vmem:[#allocation2 + $0x181] sm:$0xff]
      %v5190 = vld [vmem:[#allocation2 + $0x189] sm:$0xff]
      %v5191 = vld [vmem:[#allocation2 + $0x191] sm:$0xff]
      %v5192 = vld [vmem:[#allocation2 + $0x199] sm:$0xff]
      %v5193 = vld [vmem:[#allocation2 + $0x1a1] sm:$0xff]
      %v5194 = vld [vmem:[#allocation2 + $0x1a9] sm:$0xff]
      %v5195 = vld [vmem:[#allocation2 + $0x1b1] sm:$0xff]
      %v5196 = vld [vmem:[#allocation2 + $0x1b9] sm:$0xff]
      %v5197 = vld [vmem:[#allocation2 + $0x1c1] sm:$0xff]
      %v5198 = vld [vmem:[#allocation2 + $0x1c9] sm:$0xff]
      %v5199 = vld [vmem:[#allocation2 + $0x1d1] sm:$0xff]
      %v5200 = vld [vmem:[#allocation2 + $0x1d9] sm:$0xff]
      %v5201 = vld [vmem:[#allocation2 + $0x1e1] sm:$0xff]
      %v5202 = vld [vmem:[#allocation2 + $0x1e9] sm:$0xff]
      %v5203 = vld [vmem:[#allocation2 + $0x1f1] sm:$0xff]
      %v5204 = vpack.c.bf16 %v5181, %v5180
      %v5205 = vpack.c.bf16 %v5183, %v5182
      %v5206 = vpack.c.bf16 %v5185, %v5184
      %v5207 = vpack.c.bf16 %v5187, %v5186
      %v5208 = vpack.c.bf16 %v5189, %v5188
      %v5209 = vpack.c.bf16 %v5191, %v5190
      %v5210 = vpack.c.bf16 %v5193, %v5192
      %v5211 = vpack.c.bf16 %v5195, %v5194
      %v5212 = vpack.c.bf16 %v5197, %v5196
      %v5213 = vpack.c.bf16 %v5199, %v5198
      %v5214 = vpack.c.bf16 %v5201, %v5200
      %v5215 = vpack.c.bf16 %v5203, %v5202
      %v5216 = vld [vmem:[%s3004] sm:$0xf]
      %v5218 = vsel %vm335, %v5204, 0
      %v5221 = vsel %vm335, %v5205, 0
      %v5224 = vsel %vm335, %v5206, 0
      %v5227 = vsel %vm335, %v5207, 0
      %v5230 = vsel %vm335, %v5208, 0
      %v5233 = vsel %vm335, %v5209, 0
      %v5236 = vsel %vm335, %v5210, 0
      %v5239 = vsel %vm335, %v5211, 0
      %v5242 = vsel %vm335, %v5212, 0
      %v5245 = vsel %vm335, %v5213, 0
      %v5248 = vsel %vm335, %v5214, 0
      %v5251 = vsel %vm335, %v5215, 0
      %v5254 = vsel %vm1287, %v5216, 0
      %5256 = vmatprep.subr.bf16.mxu0 0
      %5257 = vmatpush1.bf16.msra.mxu0 %v5254
      %5258 = vmatprep.subr.bf16.mxu0 0
      %5259 = vmatpush1.bf16.msra.mxu0 0
      %5260 = vmatprep.subr.bf16.mxu0 0
      %5261 = vmatpush1.bf16.msra.mxu0 0
      %5262 = vmatprep.subr.bf16.mxu0 0
      %5263 = vmatpush1.bf16.msra.mxu0 0
      %5264 = vmatprep.subr.bf16.mxu0 0
      %5265 = vmatpush1.bf16.msra.mxu0 0
      %5266 = vmatprep.subr.bf16.mxu0 0
      %5267 = vmatpush1.bf16.msra.mxu0 0
      %5268 = vmatprep.subr.bf16.mxu0 0
      %5269 = vmatpush1.bf16.msra.mxu0 0
      %5270 = vmatprep.subr.bf16.mxu0 0
      %5271 = vmatpush1.bf16.msra.mxu0 0
      %5272 = vmatprep.subr.bf16.mxu0 0
      %5273 = vmatpush1.bf16.msra.mxu0 0
      %5274 = vmatprep.subr.bf16.mxu0 0
      %5275 = vmatpush1.bf16.msra.mxu0 0
      %5276 = vmatprep.subr.bf16.mxu0 0
      %5277 = vmatpush1.bf16.msra.mxu0 0
      %5278 = vmatprep.subr.bf16.mxu0 0
      %5279 = vmatpush1.bf16.msra.mxu0 0
      %5280 = vmatprep.subr.bf16.mxu0 0
      %5281 = vmatpush1.bf16.msra.mxu0 0
      %5282 = vmatprep.subr.bf16.mxu0 0
      %5283 = vmatpush1.bf16.msra.mxu0 0
      %5284 = vmatprep.subr.bf16.mxu0 0
      %5285 = vmatpush1.bf16.msra.mxu0 0
      %5286 = vmatprep.subr.bf16.mxu0 0
      %5287 = vmatpush1.bf16.msra.mxu0 0
      %5288 = vmatprep.mubr.bf16.mxu0 0
      %5289 = vmatmul.mubr.bf16.gmra.mrb[0].mxu0 %v5218
      %v5290 = vpop.f32.mrb[0].mxu0
      %v5291 = vadd.f32 0.0, %v5290
      %v5292 = vpop.f32.mrb[0].mxu0
      %v5293 = vpop.f32.mrb[0].mxu0
      %v5294 = vadd.f32 0.0, %v5293
      %v5295 = vpop.f32.mrb[0].mxu0
      %5296 = vmatprep.mubr.bf16.mxu0 0
      %5297 = vmatmul.mubr.bf16.gmra.mrb[0].mxu0 %v5221
      %v5298 = vpop.f32.mrb[0].mxu0
      %v5299 = vadd.f32 0.0, %v5298
      %v5300 = vpop.f32.mrb[0].mxu0
      %v5301 = vpop.f32.mrb[0].mxu0
      %v5302 = vadd.f32 0.0, %v5301
      %v5303 = vpop.f32.mrb[0].mxu0
      %5304 = vmatprep.mubr.bf16.mxu0 0
      %5305 = vmatmul.mubr.bf16.gmra.mrb[0].mxu0 %v5224
      %v5306 = vpop.f32.mrb[0].mxu0
      %v5307 = vadd.f32 0.0, %v5306
      %v5308 = vpop.f32.mrb[0].mxu0
      %v5309 = vpop.f32.mrb[0].mxu0
      %v5310 = vadd.f32 0.0, %v5309
      %v5311 = vpop.f32.mrb[0].mxu0
      %5312 = vmatprep.mubr.bf16.mxu0 0
      %5313 = vmatmul.mubr.bf16.gmra.mrb[0].mxu0 %v5227
      %v5314 = vpop.f32.mrb[0].mxu0
      %v5315 = vadd.f32 0.0, %v5314
      %v5316 = vpop.f32.mrb[0].mxu0
      %v5317 = vpop.f32.mrb[0].mxu0
      %v5318 = vadd.f32 0.0, %v5317
      %v5319 = vpop.f32.mrb[0].mxu0
      %5320 = vmatprep.mubr.bf16.mxu0 0
      %5321 = vmatmul.mubr.bf16.gmra.mrb[0].mxu0 %v5230
      %v5322 = vpop.f32.mrb[0].mxu0
      %v5323 = vadd.f32 0.0, %v5322
      %v5324 = vpop.f32.mrb[0].mxu0
      %v5325 = vpop.f32.mrb[0].mxu0
      %v5326 = vadd.f32 0.0, %v5325
      %v5327 = vpop.f32.mrb[0].mxu0
      %5328 = vmatprep.mubr.bf16.mxu0 0
      %5329 = vmatmul.mubr.bf16.gmra.mrb[0].mxu0 %v5233
      %v5330 = vpop.f32.mrb[0].mxu0
      %v5331 = vadd.f32 0.0, %v5330
      %v5332 = vpop.f32.mrb[0].mxu0
      %v5333 = vpop.f32.mrb[0].mxu0
      %v5334 = vadd.f32 0.0, %v5333
      %v5335 = vpop.f32.mrb[0].mxu0
      %5336 = vmatprep.mubr.bf16.mxu0 0
      %5337 = vmatmul.mubr.bf16.gmra.mrb[0].mxu0 %v5236
      %v5338 = vpop.f32.mrb[0].mxu0
      %v5339 = vadd.f32 0.0, %v5338
      %v5340 = vpop.f32.mrb[0].mxu0
      %v5341 = vpop.f32.mrb[0].mxu0
      %v5342 = vadd.f32 0.0, %v5341
      %v5343 = vpop.f32.mrb[0].mxu0
      %5344 = vmatprep.mubr.bf16.mxu0 0
      %5345 = vmatmul.mubr.bf16.gmra.mrb[0].mxu0 %v5239
      %v5346 = vpop.f32.mrb[0].mxu0
      %v5347 = vadd.f32 0.0, %v5346
      %v5348 = vpop.f32.mrb[0].mxu0
      %v5349 = vpop.f32.mrb[0].mxu0
      %v5350 = vadd.f32 0.0, %v5349
      %v5351 = vpop.f32.mrb[0].mxu0
      %5352 = vmatprep.mubr.bf16.mxu0 0
      %5353 = vmatmul.mubr.bf16.gmra.mrb[0].mxu0 %v5242
      %v5354 = vpop.f32.mrb[0].mxu0
      %v5355 = vadd.f32 0.0, %v5354
      %v5356 = vpop.f32.mrb[0].mxu0
      %v5357 = vpop.f32.mrb[0].mxu0
      %v5358 = vadd.f32 0.0, %v5357
      %v5359 = vpop.f32.mrb[0].mxu0
      %5360 = vmatprep.mubr.bf16.mxu0 0
      %5361 = vmatmul.mubr.bf16.gmra.mrb[0].mxu0 %v5245
      %v5362 = vpop.f32.mrb[0].mxu0
      %v5363 = vadd.f32 0.0, %v5362
      %v5364 = vpop.f32.mrb[0].mxu0
      %v5365 = vpop.f32.mrb[0].mxu0
      %v5366 = vadd.f32 0.0, %v5365
      %v5367 = vpop.f32.mrb[0].mxu0
      %5368 = vmatprep.mubr.bf16.mxu0 0
      %5369 = vmatmul.mubr.bf16.gmra.mrb[0].mxu0 %v5248
      %v5370 = vpop.f32.mrb[0].mxu0
      %v5371 = vadd.f32 0.0, %v5370
      %v5372 = vpop.f32.mrb[0].mxu0
      %v5373 = vpop.f32.mrb[0].mxu0
      %v5374 = vadd.f32 0.0, %v5373
      %v5375 = vpop.f32.mrb[0].mxu0
      %5376 = vmatprep.mubr.bf16.mxu0 0
      %5377 = vmatmul.mubr.bf16.gmra.mrb[0].mxu0 %v5251
      %v5378 = vpop.f32.mrb[0].mxu0
      %v5379 = vadd.f32 0.0, %v5378
      %v5380 = vpop.f32.mrb[0].mxu0
      %v5381 = vpop.f32.mrb[0].mxu0
      %v5382 = vadd.f32 0.0, %v5381
      %v5383 = vpop.f32.mrb[0].mxu0
      %5384 = vdwg.mxu0
      %v5385 = vadd.f32 %v5156, %v5291
      %v5386 = vadd.f32 %v5157, %v5294
      %v5387 = vadd.f32 %v5158, %v5299
      %v5388 = vadd.f32 %v5159, %v5302
      %v5389 = vadd.f32 %v5160, %v5307
      %v5390 = vadd.f32 %v5161, %v5310
      %v5391 = vadd.f32 %v5162, %v5315
      %v5392 = vadd.f32 %v5163, %v5318
      %v5393 = vadd.f32 %v5164, %v5323
      %v5394 = vadd.f32 %v5165, %v5326
      %v5395 = vadd.f32 %v5166, %v5331
      %v5396 = vadd.f32 %v5167, %v5334
      %v5397 = vadd.f32 %v5168, %v5339
      %v5398 = vadd.f32 %v5169, %v5342
      %v5399 = vadd.f32 %v5170, %v5347
      %v5400 = vadd.f32 %v5171, %v5350
      %v5401 = vadd.f32 %v5172, %v5355
      %v5402 = vadd.f32 %v5173, %v5358
      %v5403 = vadd.f32 %v5174, %v5363
      %v5404 = vadd.f32 %v5175, %v5366
      %v5405 = vadd.f32 %v5176, %v5371
      %v5406 = vadd.f32 %v5177, %v5374
      %v5407 = vadd.f32 %v5178, %v5379
      %v5408 = vadd.f32 %v5179, %v5382
      %v5409 = vadd.f32 %v5385, %v3202
      %v5410 = vadd.f32 %v5386, %v3202
      %v5411 = vadd.f32 %v5387, %v3202
      %v5412 = vadd.f32 %v5388, %v3202
      %v5413 = vadd.f32 %v5389, %v3202
      %v5414 = vadd.f32 %v5390, %v3202
      %v5415 = vadd.f32 %v5391, %v3202
      %v5416 = vadd.f32 %v5392, %v3202
      %v5417 = vadd.f32 %v5393, %v3202
      %v5418 = vadd.f32 %v5394, %v3202
      %v5419 = vadd.f32 %v5395, %v3202
      %v5420 = vadd.f32 %v5396, %v3202
      %v5421 = vadd.f32 %v5397, %v3202
      %v5422 = vadd.f32 %v5398, %v3202
      %v5423 = vadd.f32 %v5399, %v3202
      %v5424 = vadd.f32 %v5400, %v3202
      %v5425 = vadd.f32 %v5401, %v3202
      %v5426 = vadd.f32 %v5402, %v3202
      %v5427 = vadd.f32 %v5403, %v3202
      %v5428 = vadd.f32 %v5404, %v3202
      %v5429 = vadd.f32 %v5405, %v3202
      %v5430 = vadd.f32 %v5406, %v3202
      %v5431 = vadd.f32 %v5407, %v3202
      %v5432 = vadd.f32 %v5408, %v3202
      %v5433 = vmax.f32 %v5409, 0.0
      %v5434 = vmax.f32 %v5410, 0.0
      %v5435 = vmax.f32 %v5411, 0.0
      %v5436 = vmax.f32 %v5412, 0.0
      %v5437 = vmax.f32 %v5413, 0.0
      %v5438 = vmax.f32 %v5414, 0.0
      %v5439 = vmax.f32 %v5415, 0.0
      %v5440 = vmax.f32 %v5416, 0.0
      %v5441 = vmax.f32 %v5417, 0.0
      %v5442 = vmax.f32 %v5418, 0.0
      %v5443 = vmax.f32 %v5419, 0.0
      %v5444 = vmax.f32 %v5420, 0.0
      %v5445 = vmax.f32 %v5421, 0.0
      %v5446 = vmax.f32 %v5422, 0.0
      %v5447 = vmax.f32 %v5423, 0.0
      %v5448 = vmax.f32 %v5424, 0.0
      %v5449 = vmax.f32 %v5425, 0.0
      %v5450 = vmax.f32 %v5426, 0.0
      %v5451 = vmax.f32 %v5427, 0.0
      %v5452 = vmax.f32 %v5428, 0.0
      %v5453 = vmax.f32 %v5429, 0.0
      %v5454 = vmax.f32 %v5430, 0.0
      %v5455 = vmax.f32 %v5431, 0.0
      %v5456 = vmax.f32 %v5432, 0.0
      %v5457 = vsel %vm783, %v5433, 0.0
      %v5458 = vsel %vm784, %v5434, 0.0
      %v5459 = vsel %vm785, %v5435, 0.0
      %v5460 = vsel %vm786, %v5436, 0.0
      %v5461 = vsel %vm787, %v5437, 0.0
      %v5462 = vsel %vm788, %v5438, 0.0
      %v5463 = vsel %vm789, %v5439, 0.0
      %v5464 = vsel %vm790, %v5440, 0.0
      %v5465 = vsel %vm791, %v5441, 0.0
      %v5466 = vsel %vm792, %v5442, 0.0
      %v5467 = vsel %vm793, %v5443, 0.0
      %v5468 = vsel %vm794, %v5444, 0.0
      %v5469 = vsel %vm795, %v5445, 0.0
      %v5470 = vsel %vm796, %v5446, 0.0
      %v5471 = vsel %vm797, %v5447, 0.0
      %v5472 = vsel %vm798, %v5448, 0.0
      %v5473 = vsel %vm799, %v5449, 0.0
      %v5474 = vsel %vm800, %v5450, 0.0
      %v5475 = vsel %vm801, %v5451, 0.0
      %v5476 = vsel %vm802, %v5452, 0.0
      %v5477 = vsel %vm803, %v5453, 0.0
      %v5478 = vsel %vm804, %v5454, 0.0
      %v5479 = vsel %vm805, %v5455, 0.0
      %v5480 = vsel %vm806, %v5456, 0.0
      %v5481 = vpack.c.bf16 %v5458, %v5457
      %v5482 = vpack.c.bf16 %v5460, %v5459
      %v5483 = vpack.c.bf16 %v5462, %v5461
      %v5484 = vpack.c.bf16 %v5464, %v5463
      %v5485 = vpack.c.bf16 %v5466, %v5465
      %v5486 = vpack.c.bf16 %v5468, %v5467
      %v5487 = vpack.c.bf16 %v5470, %v5469
      %v5488 = vpack.c.bf16 %v5472, %v5471
      %v5489 = vpack.c.bf16 %v5474, %v5473
      %v5490 = vpack.c.bf16 %v5476, %v5475
      %v5491 = vpack.c.bf16 %v5478, %v5477
      %v5492 = vpack.c.bf16 %v5480, %v5479
      %v5505 = vunpack.c.l.b16 %v5481
      %v5506 = vunpack.c.h.b16 %v5481
      %v5507 = vunpack.c.l.b16 %v5482
      %v5508 = vunpack.c.h.b16 %v5482
      %v5509 = vunpack.c.l.b16 %v5483
      %v5510 = vunpack.c.h.b16 %v5483
      %v5511 = vunpack.c.l.b16 %v5484
      %v5512 = vunpack.c.h.b16 %v5484
      %v5513 = vunpack.c.l.b16 %v5485
      %v5514 = vunpack.c.h.b16 %v5485
      %v5515 = vunpack.c.l.b16 %v5486
      %v5516 = vunpack.c.h.b16 %v5486
      %v5517 = vunpack.c.l.b16 %v5487
      %v5518 = vunpack.c.h.b16 %v5487
      %v5519 = vunpack.c.l.b16 %v5488
      %v5520 = vunpack.c.h.b16 %v5488
      %v5521 = vunpack.c.l.b16 %v5489
      %v5522 = vunpack.c.h.b16 %v5489
      %v5523 = vunpack.c.l.b16 %v5490
      %v5524 = vunpack.c.h.b16 %v5490
      %v5525 = vunpack.c.l.b16 %v5491
      %v5526 = vunpack.c.h.b16 %v5491
      %v5527 = vunpack.c.l.b16 %v5492
      %v5528 = vunpack.c.h.b16 %v5492
      %v5529 = vpack.c.b16 %v5505, %v5505
      %v5530 = vpack.c.b16 %v5506, %v5506
      %v5531 = vpack.c.b16 %v5507, %v5507
      %v5532 = vpack.c.b16 %v5508, %v5508
      %v5533 = vpack.c.b16 %v5509, %v5509
      %v5534 = vpack.c.b16 %v5510, %v5510
      %v5535 = vpack.c.b16 %v5511, %v5511
      %v5536 = vpack.c.b16 %v5512, %v5512
      %v5537 = vpack.c.b16 %v5513, %v5513
      %v5538 = vpack.c.b16 %v5514, %v5514
      %v5539 = vpack.c.b16 %v5515, %v5515
      %v5540 = vpack.c.b16 %v5516, %v5516
      %v5541 = vpack.c.b16 %v5517, %v5517
      %v5542 = vpack.c.b16 %v5518, %v5518
      %v5543 = vpack.c.b16 %v5519, %v5519
      %v5544 = vpack.c.b16 %v5520, %v5520
      %v5545 = vpack.c.b16 %v5521, %v5521
      %v5546 = vpack.c.b16 %v5522, %v5522
      %v5547 = vpack.c.b16 %v5523, %v5523
      %v5548 = vpack.c.b16 %v5524, %v5524
      %v5549 = vpack.c.b16 %v5525, %v5525
      %v5550 = vpack.c.b16 %v5526, %v5526
      %v5551 = vpack.c.b16 %v5527, %v5527
      %v5552 = vpack.c.b16 %v5528, %v5528
      %5577 = vst.msk [vmem:[#allocation3 + $0x90] sm:$0xf] %vm348, %v5529
      %5578 = vst.msk [vmem:[#allocation3 + $0x94] sm:$0xf] %vm348, %v5530
      %5579 = vst.msk [vmem:[#allocation3 + $0x98] sm:$0xf] %vm348, %v5531
      %5580 = vst.msk [vmem:[#allocation3 + $0x9c] sm:$0xf] %vm348, %v5532
      %5581 = vst.msk [vmem:[#allocation3 + $0xa0] sm:$0xf] %vm348, %v5533
      %5582 = vst.msk [vmem:[#allocation3 + $0xa4] sm:$0xf] %vm348, %v5534
      %5583 = vst.msk [vmem:[#allocation3 + $0xa8] sm:$0xf] %vm348, %v5535
      %5584 = vst.msk [vmem:[#allocation3 + $0xac] sm:$0xf] %vm348, %v5536
      %5585 = vst.msk [vmem:[#allocation3 + $0xb0] sm:$0xf] %vm348, %v5537
      %5586 = vst.msk [vmem:[#allocation3 + $0xb4] sm:$0xf] %vm348, %v5538
      %5587 = vst.msk [vmem:[#allocation3 + $0xb8] sm:$0xf] %vm348, %v5539
      %5588 = vst.msk [vmem:[#allocation3 + $0xbc] sm:$0xf] %vm348, %v5540
      %5589 = vst.msk [vmem:[#allocation3 + $0xc0] sm:$0xf] %vm348, %v5541
      %5590 = vst.msk [vmem:[#allocation3 + $0xc4] sm:$0xf] %vm348, %v5542
      %5591 = vst.msk [vmem:[#allocation3 + $0xc8] sm:$0xf] %vm348, %v5543
      %5592 = vst.msk [vmem:[#allocation3 + $0xcc] sm:$0xf] %vm348, %v5544
      %5593 = vst.msk [vmem:[#allocation3 + $0xd0] sm:$0xf] %vm348, %v5545
      %5594 = vst.msk [vmem:[#allocation3 + $0xd4] sm:$0xf] %vm348, %v5546
      %5595 = vst.msk [vmem:[#allocation3 + $0xd8] sm:$0xf] %vm348, %v5547
      %5596 = vst.msk [vmem:[#allocation3 + $0xdc] sm:$0xf] %vm348, %v5548
      %5597 = vst.msk [vmem:[#allocation3 + $0xe0] sm:$0xf] %vm348, %v5549
      %5598 = vst.msk [vmem:[#allocation3 + $0xe4] sm:$0xf] %vm348, %v5550
      %5599 = vst.msk [vmem:[#allocation3 + $0xe8] sm:$0xf] %vm348, %v5551
      %5600 = vst.msk [vmem:[#allocation3 + $0xec] sm:$0xf] %vm348, %v5552
      %v5601 = vld [vmem:[#allocation3 + $0x14] sm:$0x8]
      %v5602 = vld [vmem:[#allocation3 + $0x18] sm:$0xf]
      %v5603 = vld [vmem:[#allocation3 + $0x1c] sm:$0xf]
      %v5604 = vld [vmem:[#allocation3 + $0x20] sm:$0xf]
      %v5605 = vld [vmem:[#allocation3 + $0x24] sm:$0xf]
      %v5606 = vld [vmem:[#allocation3 + $0x28] sm:$0xf]
      %v5607 = vld [vmem:[#allocation3 + $0x2c] sm:$0xf]
      %v5608 = vld [vmem:[#allocation3 + $0x30] sm:$0xf]
      %v5609 = vld [vmem:[#allocation3 + $0x34] sm:$0xf]
      %v5610 = vld [vmem:[#allocation3 + $0x38] sm:$0xf]
      %v5611 = vld [vmem:[#allocation3 + $0x3c] sm:$0xf]
      %v5612 = vld [vmem:[#allocation3 + $0x40] sm:$0xf]
      %v5613 = vld [vmem:[#allocation3 + $0x44] sm:$0xf]
      %v5614 = vld [vmem:[#allocation3 + $0x48] sm:$0xf]
      %v5615 = vld [vmem:[#allocation3 + $0x4c] sm:$0xf]
      %v5616 = vld [vmem:[#allocation3 + $0x50] sm:$0xf]
      %v5617 = vld [vmem:[#allocation3 + $0x54] sm:$0xf]
      %v5618 = vld [vmem:[#allocation3 + $0x58] sm:$0xf]
      %v5619 = vld [vmem:[#allocation3 + $0x5c] sm:$0xf]
      %v5620 = vld [vmem:[#allocation3 + $0x60] sm:$0xf]
      %v5621 = vld [vmem:[#allocation3 + $0x64] sm:$0xf]
      %v5622 = vld [vmem:[#allocation3 + $0x68] sm:$0xf]
      %v5623 = vld [vmem:[#allocation3 + $0x6c] sm:$0xf]
      %v5624 = vld [vmem:[#allocation3 + $0x70] sm:$0xf]
      %v5625 = vld [vmem:[#allocation3 + $0x74] sm:$0x7]
      %v5626 = vld [vmem:[%s6] sm:$0xf]
      %v5627 = vld [vmem:[#allocation3 + $0x74] sm:$0xf]
      %s5628 = scalar_lea.vmem %s6, 4
      %v5629 = vld [vmem:[%s5628] sm:$0xf]
      %v5654 = vunpack.c.l.b16 %v5602
      %v5655 = vunpack.c.l.b16 %v5603
      %v5656 = vunpack.c.l.b16 %v5604
      %v5657 = vunpack.c.l.b16 %v5605
      %v5658 = vunpack.c.l.b16 %v5606
      %v5659 = vunpack.c.l.b16 %v5607
      %v5660 = vunpack.c.l.b16 %v5608
      %v5661 = vunpack.c.l.b16 %v5609
      %v5662 = vunpack.c.l.b16 %v5610
      %v5663 = vunpack.c.l.b16 %v5611
      %v5664 = vunpack.c.l.b16 %v5612
      %v5665 = vunpack.c.l.b16 %v5613
      %v5666 = vunpack.c.l.b16 %v5614
      %v5667 = vunpack.c.l.b16 %v5615
      %v5668 = vunpack.c.l.b16 %v5616
      %v5669 = vunpack.c.l.b16 %v5617
      %v5670 = vunpack.c.l.b16 %v5618
      %v5671 = vunpack.c.l.b16 %v5619
      %v5672 = vunpack.c.l.b16 %v5620
      %v5673 = vunpack.c.l.b16 %v5621
      %v5674 = vunpack.c.l.b16 %v5622
      %v5675 = vunpack.c.l.b16 %v5623
      %v5676 = vunpack.c.l.b16 %v5624
      %v5677 = vunpack.c.l.b16 %v5627
      %v5678 = vpack.c.b16 %v5655, %v5654
      %v5679 = vpack.c.b16 %v5657, %v5656
      %v5680 = vpack.c.b16 %v5659, %v5658
      %v5681 = vpack.c.b16 %v5661, %v5660
      %v5682 = vpack.c.b16 %v5663, %v5662
      %v5683 = vpack.c.b16 %v5665, %v5664
      %v5684 = vpack.c.b16 %v5667, %v5666
      %v5685 = vpack.c.b16 %v5669, %v5668
      %v5686 = vpack.c.b16 %v5671, %v5670
      %v5687 = vpack.c.b16 %v5673, %v5672
      %v5688 = vpack.c.b16 %v5675, %v5674
      %v5689 = vpack.c.b16 %v5677, %v5676
      %v5691 = vsel %vm335, %v5678, 0
      %v5694 = vsel %vm335, %v5679, 0
      %v5697 = vsel %vm335, %v5680, 0
      %v5700 = vsel %vm335, %v5681, 0
      %v5703 = vsel %vm335, %v5682, 0
      %v5706 = vsel %vm335, %v5683, 0
      %v5709 = vsel %vm335, %v5684, 0
      %v5712 = vsel %vm335, %v5685, 0
      %v5715 = vsel %vm335, %v5686, 0
      %v5718 = vsel %vm335, %v5687, 0
      %v5721 = vsel %vm335, %v5688, 0
      %v5724 = vsel %vm335, %v5689, 0
      %v5727 = vsel %vm1287, %v5629, 0
      %5729 = vmatprep.subr.bf16.mxu0 0
      %5730 = vmatpush1.bf16.msra.mxu0 %v5727
      %5731 = vmatprep.subr.bf16.mxu0 0
      %5732 = vmatpush1.bf16.msra.mxu0 0
      %5733 = vmatprep.subr.bf16.mxu0 0
      %5734 = vmatpush1.bf16.msra.mxu0 0
      %5735 = vmatprep.subr.bf16.mxu0 0
      %5736 = vmatpush1.bf16.msra.mxu0 0
      %5737 = vmatprep.subr.bf16.mxu0 0
      %5738 = vmatpush1.bf16.msra.mxu0 0
      %5739 = vmatprep.subr.bf16.mxu0 0
      %5740 = vmatpush1.bf16.msra.mxu0 0
      %5741 = vmatprep.subr.bf16.mxu0 0
      %5742 = vmatpush1.bf16.msra.mxu0 0
      %5743 = vmatprep.subr.bf16.mxu0 0
      %5744 = vmatpush1.bf16.msra.mxu0 0
      %5745 = vmatprep.subr.bf16.mxu0 0
      %5746 = vmatpush1.bf16.msra.mxu0 0
      %5747 = vmatprep.subr.bf16.mxu0 0
      %5748 = vmatpush1.bf16.msra.mxu0 0
      %5749 = vmatprep.subr.bf16.mxu0 0
      %5750 = vmatpush1.bf16.msra.mxu0 0
      %5751 = vmatprep.subr.bf16.mxu0 0
      %5752 = vmatpush1.bf16.msra.mxu0 0
      %5753 = vmatprep.subr.bf16.mxu0 0
      %5754 = vmatpush1.bf16.msra.mxu0 0
      %5755 = vmatprep.subr.bf16.mxu0 0
      %5756 = vmatpush1.bf16.msra.mxu0 0
      %5757 = vmatprep.subr.bf16.mxu0 0
      %5758 = vmatpush1.bf16.msra.mxu0 0
      %5759 = vmatprep.subr.bf16.mxu0 0
      %5760 = vmatpush1.bf16.msra.mxu0 0
      %5761 = vmatprep.mubr.bf16.mxu0 0
      %5762 = vmatmul.mubr.bf16.gmra.mrb[0].mxu0 %v5691
      %v5763 = vpop.f32.mrb[0].mxu0
      %v5764 = vadd.f32 0.0, %v5763
      %v5765 = vpop.f32.mrb[0].mxu0
      %v5766 = vpop.f32.mrb[0].mxu0
      %v5767 = vadd.f32 0.0, %v5766
      %v5768 = vpop.f32.mrb[0].mxu0
      %5769 = vmatprep.mubr.bf16.mxu0 0
      %5770 = vmatmul.mubr.bf16.gmra.mrb[0].mxu0 %v5694
      %v5771 = vpop.f32.mrb[0].mxu0
      %v5772 = vadd.f32 0.0, %v5771
      %v5773 = vpop.f32.mrb[0].mxu0
      %v5774 = vpop.f32.mrb[0].mxu0
      %v5775 = vadd.f32 0.0, %v5774
      %v5776 = vpop.f32.mrb[0].mxu0
      %5777 = vmatprep.mubr.bf16.mxu0 0
      %5778 = vmatmul.mubr.bf16.gmra.mrb[0].mxu0 %v5697
      %v5779 = vpop.f32.mrb[0].mxu0
      %v5780 = vadd.f32 0.0, %v5779
      %v5781 = vpop.f32.mrb[0].mxu0
      %v5782 = vpop.f32.mrb[0].mxu0
      %v5783 = vadd.f32 0.0, %v5782
      %v5784 = vpop.f32.mrb[0].mxu0
      %5785 = vmatprep.mubr.bf16.mxu0 0
      %5786 = vmatmul.mubr.bf16.gmra.mrb[0].mxu0 %v5700
      %v5787 = vpop.f32.mrb[0].mxu0
      %v5788 = vadd.f32 0.0, %v5787
      %v5789 = vpop.f32.mrb[0].mxu0
      %v5790 = vpop.f32.mrb[0].mxu0
      %v5791 = vadd.f32 0.0, %v5790
      %v5792 = vpop.f32.mrb[0].mxu0
      %5793 = vmatprep.mubr.bf16.mxu0 0
      %5794 = vmatmul.mubr.bf16.gmra.mrb[0].mxu0 %v5703
      %v5795 = vpop.f32.mrb[0].mxu0
      %v5796 = vadd.f32 0.0, %v5795
      %v5797 = vpop.f32.mrb[0].mxu0
      %v5798 = vpop.f32.mrb[0].mxu0
      %v5799 = vadd.f32 0.0, %v5798
      %v5800 = vpop.f32.mrb[0].mxu0
      %5801 = vmatprep.mubr.bf16.mxu0 0
      %5802 = vmatmul.mubr.bf16.gmra.mrb[0].mxu0 %v5706
      %v5803 = vpop.f32.mrb[0].mxu0
      %v5804 = vadd.f32 0.0, %v5803
      %v5805 = vpop.f32.mrb[0].mxu0
      %v5806 = vpop.f32.mrb[0].mxu0
      %v5807 = vadd.f32 0.0, %v5806
      %v5808 = vpop.f32.mrb[0].mxu0
      %5809 = vmatprep.mubr.bf16.mxu0 0
      %5810 = vmatmul.mubr.bf16.gmra.mrb[0].mxu0 %v5709
      %v5811 = vpop.f32.mrb[0].mxu0
      %v5812 = vadd.f32 0.0, %v5811
      %v5813 = vpop.f32.mrb[0].mxu0
      %v5814 = vpop.f32.mrb[0].mxu0
      %v5815 = vadd.f32 0.0, %v5814
      %v5816 = vpop.f32.mrb[0].mxu0
      %5817 = vmatprep.mubr.bf16.mxu0 0
      %5818 = vmatmul.mubr.bf16.gmra.mrb[0].mxu0 %v5712
      %v5819 = vpop.f32.mrb[0].mxu0
      %v5820 = vadd.f32 0.0, %v5819
      %v5821 = vpop.f32.mrb[0].mxu0
      %v5822 = vpop.f32.mrb[0].mxu0
      %v5823 = vadd.f32 0.0, %v5822
      %v5824 = vpop.f32.mrb[0].mxu0
      %5825 = vmatprep.mubr.bf16.mxu0 0
      %5826 = vmatmul.mubr.bf16.gmra.mrb[0].mxu0 %v5715
      %v5827 = vpop.f32.mrb[0].mxu0
      %v5828 = vadd.f32 0.0, %v5827
      %v5829 = vpop.f32.mrb[0].mxu0
      %v5830 = vpop.f32.mrb[0].mxu0
      %v5831 = vadd.f32 0.0, %v5830
      %v5832 = vpop.f32.mrb[0].mxu0
      %5833 = vmatprep.mubr.bf16.mxu0 0
      %5834 = vmatmul.mubr.bf16.gmra.mrb[0].mxu0 %v5718
      %v5835 = vpop.f32.mrb[0].mxu0
      %v5836 = vadd.f32 0.0, %v5835
      %v5837 = vpop.f32.mrb[0].mxu0
      %v5838 = vpop.f32.mrb[0].mxu0
      %v5839 = vadd.f32 0.0, %v5838
      %v5840 = vpop.f32.mrb[0].mxu0
      %5841 = vmatprep.mubr.bf16.mxu0 0
      %5842 = vmatmul.mubr.bf16.gmra.mrb[0].mxu0 %v5721
      %v5843 = vpop.f32.mrb[0].mxu0
      %v5844 = vadd.f32 0.0, %v5843
      %v5845 = vpop.f32.mrb[0].mxu0
      %v5846 = vpop.f32.mrb[0].mxu0
      %v5847 = vadd.f32 0.0, %v5846
      %v5848 = vpop.f32.mrb[0].mxu0
      %5849 = vmatprep.mubr.bf16.mxu0 0
      %5850 = vmatmul.mubr.bf16.gmra.mrb[0].mxu0 %v5724
      %v5851 = vpop.f32.mrb[0].mxu0
      %v5852 = vadd.f32 0.0, %v5851
      %v5853 = vpop.f32.mrb[0].mxu0
      %v5854 = vpop.f32.mrb[0].mxu0
      %v5855 = vadd.f32 0.0, %v5854
      %v5856 = vpop.f32.mrb[0].mxu0
      %5857 = vdwg.mxu0
      %v5860 = vunpack.c.l.b16 %v5601
      %v5861 = vunpack.c.l.b16 %v5625
      %v5862 = vpack.c.b16 %v5654, %v5860
      %v5863 = vpack.c.b16 %v5656, %v5655
      %v5864 = vpack.c.b16 %v5658, %v5657
      %v5865 = vpack.c.b16 %v5660, %v5659
      %v5866 = vpack.c.b16 %v5662, %v5661
      %v5867 = vpack.c.b16 %v5664, %v5663
      %v5868 = vpack.c.b16 %v5666, %v5665
      %v5869 = vpack.c.b16 %v5668, %v5667
      %v5870 = vpack.c.b16 %v5670, %v5669
      %v5871 = vpack.c.b16 %v5672, %v5671
      %v5872 = vpack.c.b16 %v5674, %v5673
      %v5873 = vpack.c.b16 %v5676, %v5675
      %v5874 = vpack.c.b16 %v5861, %v5861
      %vm5875 = vcmask 1044480
      %v5876 = vrot.slane %v5862, 3
      %v5877 = vrot.slane %v5863, 3
      %v5878 = vsel %vm5875, %v5876, %v5877
      %v5879 = vrot.slane %v5864, 3
      %v5880 = vsel %vm5875, %v5877, %v5879
      %v5881 = vrot.slane %v5865, 3
      %v5882 = vsel %vm5875, %v5879, %v5881
      %v5883 = vrot.slane %v5866, 3
      %v5884 = vsel %vm5875, %v5881, %v5883
      %v5885 = vrot.slane %v5867, 3
      %v5886 = vsel %vm5875, %v5883, %v5885
      %v5887 = vrot.slane %v5868, 3
      %v5888 = vsel %vm5875, %v5885, %v5887
      %v5889 = vrot.slane %v5869, 3
      %v5890 = vsel %vm5875, %v5887, %v5889
      %v5891 = vrot.slane %v5870, 3
      %v5892 = vsel %vm5875, %v5889, %v5891
      %v5893 = vrot.slane %v5871, 3
      %v5894 = vsel %vm5875, %v5891, %v5893
      %v5895 = vrot.slane %v5872, 3
      %v5896 = vsel %vm5875, %v5893, %v5895
      %v5897 = vrot.slane %v5873, 3
      %v5898 = vsel %vm5875, %v5895, %v5897
      %v5899 = vrot.slane %v5874, 3
      %v5900 = vsel %vm5875, %v5897, %v5899
      %v5902 = vsel %vm335, %v5878, 0
      %v5905 = vsel %vm335, %v5880, 0
      %v5908 = vsel %vm335, %v5882, 0
      %v5911 = vsel %vm335, %v5884, 0
      %v5914 = vsel %vm335, %v5886, 0
      %v5917 = vsel %vm335, %v5888, 0
      %v5920 = vsel %vm335, %v5890, 0
      %v5923 = vsel %vm335, %v5892, 0
      %v5926 = vsel %vm335, %v5894, 0
      %v5929 = vsel %vm335, %v5896, 0
      %v5932 = vsel %vm335, %v5898, 0
      %v5935 = vsel %vm335, %v5900, 0
      %v5938 = vsel %vm1287, %v5626, 0
      %5940 = vmatprep.subr.bf16.mxu0 0
      %5941 = vmatpush1.bf16.msra.mxu0 %v5938
      %5942 = vmatprep.subr.bf16.mxu0 0
      %5943 = vmatpush1.bf16.msra.mxu0 0
      %5944 = vmatprep.subr.bf16.mxu0 0
      %5945 = vmatpush1.bf16.msra.mxu0 0
      %5946 = vmatprep.subr.bf16.mxu0 0
      %5947 = vmatpush1.bf16.msra.mxu0 0
      %5948 = vmatprep.subr.bf16.mxu0 0
      %5949 = vmatpush1.bf16.msra.mxu0 0
      %5950 = vmatprep.subr.bf16.mxu0 0
      %5951 = vmatpush1.bf16.msra.mxu0 0
      %5952 = vmatprep.subr.bf16.mxu0 0
      %5953 = vmatpush1.bf16.msra.mxu0 0
      %5954 = vmatprep.subr.bf16.mxu0 0
      %5955 = vmatpush1.bf16.msra.mxu0 0
      %5956 = vmatprep.subr.bf16.mxu0 0
      %5957 = vmatpush1.bf16.msra.mxu0 0
      %5958 = vmatprep.subr.bf16.mxu0 0
      %5959 = vmatpush1.bf16.msra.mxu0 0
      %5960 = vmatprep.subr.bf16.mxu0 0
      %5961 = vmatpush1.bf16.msra.mxu0 0
      %5962 = vmatprep.subr.bf16.mxu0 0
      %5963 = vmatpush1.bf16.msra.mxu0 0
      %5964 = vmatprep.subr.bf16.mxu0 0
      %5965 = vmatpush1.bf16.msra.mxu0 0
      %5966 = vmatprep.subr.bf16.mxu0 0
      %5967 = vmatpush1.bf16.msra.mxu0 0
      %5968 = vmatprep.subr.bf16.mxu0 0
      %5969 = vmatpush1.bf16.msra.mxu0 0
      %5970 = vmatprep.subr.bf16.mxu0 0
      %5971 = vmatpush1.bf16.msra.mxu0 0
      %5972 = vmatprep.mubr.bf16.mxu0 0
      %5973 = vmatmul.mubr.bf16.gmra.mrb[0].mxu0 %v5902
      %v5974 = vpop.f32.mrb[0].mxu0
      %v5975 = vadd.f32 %v5764, %v5974
      %v5976 = vpop.f32.mrb[0].mxu0
      %v5977 = vpop.f32.mrb[0].mxu0
      %v5978 = vadd.f32 %v5767, %v5977
      %v5979 = vpop.f32.mrb[0].mxu0
      %5980 = vmatprep.mubr.bf16.mxu0 0
      %5981 = vmatmul.mubr.bf16.gmra.mrb[0].mxu0 %v5905
      %v5982 = vpop.f32.mrb[0].mxu0
      %v5983 = vadd.f32 %v5772, %v5982
      %v5984 = vpop.f32.mrb[0].mxu0
      %v5985 = vpop.f32.mrb[0].mxu0
      %v5986 = vadd.f32 %v5775, %v5985
      %v5987 = vpop.f32.mrb[0].mxu0
      %5988 = vmatprep.mubr.bf16.mxu0 0
      %5989 = vmatmul.mubr.bf16.gmra.mrb[0].mxu0 %v5908
      %v5990 = vpop.f32.mrb[0].mxu0
      %v5991 = vadd.f32 %v5780, %v5990
      %v5992 = vpop.f32.mrb[0].mxu0
      %v5993 = vpop.f32.mrb[0].mxu0
      %v5994 = vadd.f32 %v5783, %v5993
      %v5995 = vpop.f32.mrb[0].mxu0
      %5996 = vmatprep.mubr.bf16.mxu0 0
      %5997 = vmatmul.mubr.bf16.gmra.mrb[0].mxu0 %v5911
      %v5998 = vpop.f32.mrb[0].mxu0
      %v5999 = vadd.f32 %v5788, %v5998
      %v6000 = vpop.f32.mrb[0].mxu0
      %v6001 = vpop.f32.mrb[0].mxu0
      %v6002 = vadd.f32 %v5791, %v6001
      %v6003 = vpop.f32.mrb[0].mxu0
      %6004 = vmatprep.mubr.bf16.mxu0 0
      %6005 = vmatmul.mubr.bf16.gmra.mrb[0].mxu0 %v5914
      %v6006 = vpop.f32.mrb[0].mxu0
      %v6007 = vadd.f32 %v5796, %v6006
      %v6008 = vpop.f32.mrb[0].mxu0
      %v6009 = vpop.f32.mrb[0].mxu0
      %v6010 = vadd.f32 %v5799, %v6009
      %v6011 = vpop.f32.mrb[0].mxu0
      %6012 = vmatprep.mubr.bf16.mxu0 0
      %6013 = vmatmul.mubr.bf16.gmra.mrb[0].mxu0 %v5917
      %v6014 = vpop.f32.mrb[0].mxu0
      %v6015 = vadd.f32 %v5804, %v6014
      %v6016 = vpop.f32.mrb[0].mxu0
      %v6017 = vpop.f32.mrb[0].mxu0
      %v6018 = vadd.f32 %v5807, %v6017
      %v6019 = vpop.f32.mrb[0].mxu0
      %6020 = vmatprep.mubr.bf16.mxu0 0
      %6021 = vmatmul.mubr.bf16.gmra.mrb[0].mxu0 %v5920
      %v6022 = vpop.f32.mrb[0].mxu0
      %v6023 = vadd.f32 %v5812, %v6022
      %v6024 = vpop.f32.mrb[0].mxu0
      %v6025 = vpop.f32.mrb[0].mxu0
      %v6026 = vadd.f32 %v5815, %v6025
      %v6027 = vpop.f32.mrb[0].mxu0
      %6028 = vmatprep.mubr.bf16.mxu0 0
      %6029 = vmatmul.mubr.bf16.gmra.mrb[0].mxu0 %v5923
      %v6030 = vpop.f32.mrb[0].mxu0
      %v6031 = vadd.f32 %v5820, %v6030
      %v6032 = vpop.f32.mrb[0].mxu0
      %v6033 = vpop.f32.mrb[0].mxu0
      %v6034 = vadd.f32 %v5823, %v6033
      %v6035 = vpop.f32.mrb[0].mxu0
      %6036 = vmatprep.mubr.bf16.mxu0 0
      %6037 = vmatmul.mubr.bf16.gmra.mrb[0].mxu0 %v5926
      %v6038 = vpop.f32.mrb[0].mxu0
      %v6039 = vadd.f32 %v5828, %v6038
      %v6040 = vpop.f32.mrb[0].mxu0
      %v6041 = vpop.f32.mrb[0].mxu0
      %v6042 = vadd.f32 %v5831, %v6041
      %v6043 = vpop.f32.mrb[0].mxu0
      %6044 = vmatprep.mubr.bf16.mxu0 0
      %6045 = vmatmul.mubr.bf16.gmra.mrb[0].mxu0 %v5929
      %v6046 = vpop.f32.mrb[0].mxu0
      %v6047 = vadd.f32 %v5836, %v6046
      %v6048 = vpop.f32.mrb[0].mxu0
      %v6049 = vpop.f32.mrb[0].mxu0
      %v6050 = vadd.f32 %v5839, %v6049
      %v6051 = vpop.f32.mrb[0].mxu0
      %6052 = vmatprep.mubr.bf16.mxu0 0
      %6053 = vmatmul.mubr.bf16.gmra.mrb[0].mxu0 %v5932
      %v6054 = vpop.f32.mrb[0].mxu0
      %v6055 = vadd.f32 %v5844, %v6054
      %v6056 = vpop.f32.mrb[0].mxu0
      %v6057 = vpop.f32.mrb[0].mxu0
      %v6058 = vadd.f32 %v5847, %v6057
      %v6059 = vpop.f32.mrb[0].mxu0
      %6060 = vmatprep.mubr.bf16.mxu0 0
      %6061 = vmatmul.mubr.bf16.gmra.mrb[0].mxu0 %v5935
      %v6062 = vpop.f32.mrb[0].mxu0
      %v6063 = vadd.f32 %v5852, %v6062
      %v6064 = vpop.f32.mrb[0].mxu0
      %v6065 = vpop.f32.mrb[0].mxu0
      %v6066 = vadd.f32 %v5855, %v6065
      %v6067 = vpop.f32.mrb[0].mxu0
      %6068 = vdwg.mxu0
      %v6069 = vld [vmem:[#allocation3 + $0x18] sm:$0xe]
      %v6070 = vld [vmem:[#allocation3 + $0x1c] sm:$0xf]
      %v6071 = vld [vmem:[#allocation3 + $0x20] sm:$0xf]
      %v6072 = vld [vmem:[#allocation3 + $0x24] sm:$0xf]
      %v6073 = vld [vmem:[#allocation3 + $0x28] sm:$0xf]
      %v6074 = vld [vmem:[#allocation3 + $0x2c] sm:$0xf]
      %v6075 = vld [vmem:[#allocation3 + $0x30] sm:$0xf]
      %v6076 = vld [vmem:[#allocation3 + $0x34] sm:$0xf]
      %v6077 = vld [vmem:[#allocation3 + $0x38] sm:$0xf]
      %v6078 = vld [vmem:[#allocation3 + $0x3c] sm:$0xf]
      %v6079 = vld [vmem:[#allocation3 + $0x40] sm:$0xf]
      %v6080 = vld [vmem:[#allocation3 + $0x44] sm:$0xf]
      %v6081 = vld [vmem:[#allocation3 + $0x48] sm:$0xf]
      %v6082 = vld [vmem:[#allocation3 + $0x4c] sm:$0xf]
      %v6083 = vld [vmem:[#allocation3 + $0x50] sm:$0xf]
      %v6084 = vld [vmem:[#allocation3 + $0x54] sm:$0xf]
      %v6085 = vld [vmem:[#allocation3 + $0x58] sm:$0xf]
      %v6086 = vld [vmem:[#allocation3 + $0x5c] sm:$0xf]
      %v6087 = vld [vmem:[#allocation3 + $0x60] sm:$0xf]
      %v6088 = vld [vmem:[#allocation3 + $0x64] sm:$0xf]
      %v6089 = vld [vmem:[#allocation3 + $0x68] sm:$0xf]
      %v6090 = vld [vmem:[#allocation3 + $0x6c] sm:$0xf]
      %v6091 = vld [vmem:[#allocation3 + $0x70] sm:$0xf]
      %v6092 = vld [vmem:[#allocation3 + $0x74] sm:$0xf]
      %v6093 = vld [vmem:[#allocation3 + $0x78] sm:$0x1]
      %s6094 = scalar_lea.vmem %s6, 8
      %v6095 = vld [vmem:[%s6094] sm:$0xf]
      %v6121 = vunpack.c.l.b16 %v6069
      %v6122 = vunpack.c.l.b16 %v6070
      %v6123 = vunpack.c.l.b16 %v6071
      %v6124 = vunpack.c.l.b16 %v6072
      %v6125 = vunpack.c.l.b16 %v6073
      %v6126 = vunpack.c.l.b16 %v6074
      %v6127 = vunpack.c.l.b16 %v6075
      %v6128 = vunpack.c.l.b16 %v6076
      %v6129 = vunpack.c.l.b16 %v6077
      %v6130 = vunpack.c.l.b16 %v6078
      %v6131 = vunpack.c.l.b16 %v6079
      %v6132 = vunpack.c.l.b16 %v6080
      %v6133 = vunpack.c.l.b16 %v6081
      %v6134 = vunpack.c.l.b16 %v6082
      %v6135 = vunpack.c.l.b16 %v6083
      %v6136 = vunpack.c.l.b16 %v6084
      %v6137 = vunpack.c.l.b16 %v6085
      %v6138 = vunpack.c.l.b16 %v6086
      %v6139 = vunpack.c.l.b16 %v6087
      %v6140 = vunpack.c.l.b16 %v6088
      %v6141 = vunpack.c.l.b16 %v6089
      %v6142 = vunpack.c.l.b16 %v6090
      %v6143 = vunpack.c.l.b16 %v6091
      %v6144 = vunpack.c.l.b16 %v6092
      %v6145 = vunpack.c.l.b16 %v6093
      %v6146 = vpack.c.b16 %v6122, %v6121
      %v6147 = vpack.c.b16 %v6124, %v6123
      %v6148 = vpack.c.b16 %v6126, %v6125
      %v6149 = vpack.c.b16 %v6128, %v6127
      %v6150 = vpack.c.b16 %v6130, %v6129
      %v6151 = vpack.c.b16 %v6132, %v6131
      %v6152 = vpack.c.b16 %v6134, %v6133
      %v6153 = vpack.c.b16 %v6136, %v6135
      %v6154 = vpack.c.b16 %v6138, %v6137
      %v6155 = vpack.c.b16 %v6140, %v6139
      %v6156 = vpack.c.b16 %v6142, %v6141
      %v6157 = vpack.c.b16 %v6144, %v6143
      %v6158 = vpack.c.b16 %v6145, %v6145
      %vm6159 = vcmask 1046528
      %v6160 = vrot.slane %v6146, 1
      %v6161 = vrot.slane %v6147, 1
      %v6162 = vsel %vm6159, %v6160, %v6161
      %v6163 = vrot.slane %v6148, 1
      %v6164 = vsel %vm6159, %v6161, %v6163
      %v6165 = vrot.slane %v6149, 1
      %v6166 = vsel %vm6159, %v6163, %v6165
      %v6167 = vrot.slane %v6150, 1
      %v6168 = vsel %vm6159, %v6165, %v6167
      %v6169 = vrot.slane %v6151, 1
      %v6170 = vsel %vm6159, %v6167, %v6169
      %v6171 = vrot.slane %v6152, 1
      %v6172 = vsel %vm6159, %v6169, %v6171
      %v6173 = vrot.slane %v6153, 1
      %v6174 = vsel %vm6159, %v6171, %v6173
      %v6175 = vrot.slane %v6154, 1
      %v6176 = vsel %vm6159, %v6173, %v6175
      %v6177 = vrot.slane %v6155, 1
      %v6178 = vsel %vm6159, %v6175, %v6177
      %v6179 = vrot.slane %v6156, 1
      %v6180 = vsel %vm6159, %v6177, %v6179
      %v6181 = vrot.slane %v6157, 1
      %v6182 = vsel %vm6159, %v6179, %v6181
      %v6183 = vrot.slane %v6158, 1
      %v6184 = vsel %vm6159, %v6181, %v6183
      %v6186 = vsel %vm335, %v6162, 0
      %v6189 = vsel %vm335, %v6164, 0
      %v6192 = vsel %vm335, %v6166, 0
      %v6195 = vsel %vm335, %v6168, 0
      %v6198 = vsel %vm335, %v6170, 0
      %v6201 = vsel %vm335, %v6172, 0
      %v6204 = vsel %vm335, %v6174, 0
      %v6207 = vsel %vm335, %v6176, 0
      %v6210 = vsel %vm335, %v6178, 0
      %v6213 = vsel %vm335, %v6180, 0
      %v6216 = vsel %vm335, %v6182, 0
      %v6219 = vsel %vm335, %v6184, 0
      %v6222 = vsel %vm1287, %v6095, 0
      %6224 = vmatprep.subr.bf16.mxu0 0
      %6225 = vmatpush1.bf16.msra.mxu0 %v6222
      %6226 = vmatprep.subr.bf16.mxu0 0
      %6227 = vmatpush1.bf16.msra.mxu0 0
      %6228 = vmatprep.subr.bf16.mxu0 0
      %6229 = vmatpush1.bf16.msra.mxu0 0
      %6230 = vmatprep.subr.bf16.mxu0 0
      %6231 = vmatpush1.bf16.msra.mxu0 0
      %6232 = vmatprep.subr.bf16.mxu0 0
      %6233 = vmatpush1.bf16.msra.mxu0 0
      %6234 = vmatprep.subr.bf16.mxu0 0
      %6235 = vmatpush1.bf16.msra.mxu0 0
      %6236 = vmatprep.subr.bf16.mxu0 0
      %6237 = vmatpush1.bf16.msra.mxu0 0
      %6238 = vmatprep.subr.bf16.mxu0 0
      %6239 = vmatpush1.bf16.msra.mxu0 0
      %6240 = vmatprep.subr.bf16.mxu0 0
      %6241 = vmatpush1.bf16.msra.mxu0 0
      %6242 = vmatprep.subr.bf16.mxu0 0
      %6243 = vmatpush1.bf16.msra.mxu0 0
      %6244 = vmatprep.subr.bf16.mxu0 0
      %6245 = vmatpush1.bf16.msra.mxu0 0
      %6246 = vmatprep.subr.bf16.mxu0 0
      %6247 = vmatpush1.bf16.msra.mxu0 0
      %6248 = vmatprep.subr.bf16.mxu0 0
      %6249 = vmatpush1.bf16.msra.mxu0 0
      %6250 = vmatprep.subr.bf16.mxu0 0
      %6251 = vmatpush1.bf16.msra.mxu0 0
      %6252 = vmatprep.subr.bf16.mxu0 0
      %6253 = vmatpush1.bf16.msra.mxu0 0
      %6254 = vmatprep.subr.bf16.mxu0 0
      %6255 = vmatpush1.bf16.msra.mxu0 0
      %6256 = vmatprep.mubr.bf16.mxu0 0
      %6257 = vmatmul.mubr.bf16.gmra.mrb[0].mxu0 %v6186
      %v6258 = vpop.f32.mrb[0].mxu0
      %v6259 = vadd.f32 0.0, %v6258
      %v6260 = vpop.f32.mrb[0].mxu0
      %v6261 = vpop.f32.mrb[0].mxu0
      %v6262 = vadd.f32 0.0, %v6261
      %v6263 = vpop.f32.mrb[0].mxu0
      %6264 = vmatprep.mubr.bf16.mxu0 0
      %6265 = vmatmul.mubr.bf16.gmra.mrb[0].mxu0 %v6189
      %v6266 = vpop.f32.mrb[0].mxu0
      %v6267 = vadd.f32 0.0, %v6266
      %v6268 = vpop.f32.mrb[0].mxu0
      %v6269 = vpop.f32.mrb[0].mxu0
      %v6270 = vadd.f32 0.0, %v6269
      %v6271 = vpop.f32.mrb[0].mxu0
      %6272 = vmatprep.mubr.bf16.mxu0 0
      %6273 = vmatmul.mubr.bf16.gmra.mrb[0].mxu0 %v6192
      %v6274 = vpop.f32.mrb[0].mxu0
      %v6275 = vadd.f32 0.0, %v6274
      %v6276 = vpop.f32.mrb[0].mxu0
      %v6277 = vpop.f32.mrb[0].mxu0
      %v6278 = vadd.f32 0.0, %v6277
      %v6279 = vpop.f32.mrb[0].mxu0
      %6280 = vmatprep.mubr.bf16.mxu0 0
      %6281 = vmatmul.mubr.bf16.gmra.mrb[0].mxu0 %v6195
      %v6282 = vpop.f32.mrb[0].mxu0
      %v6283 = vadd.f32 0.0, %v6282
      %v6284 = vpop.f32.mrb[0].mxu0
      %v6285 = vpop.f32.mrb[0].mxu0
      %v6286 = vadd.f32 0.0, %v6285
      %v6287 = vpop.f32.mrb[0].mxu0
      %6288 = vmatprep.mubr.bf16.mxu0 0
      %6289 = vmatmul.mubr.bf16.gmra.mrb[0].mxu0 %v6198
      %v6290 = vpop.f32.mrb[0].mxu0
      %v6291 = vadd.f32 0.0, %v6290
      %v6292 = vpop.f32.mrb[0].mxu0
      %v6293 = vpop.f32.mrb[0].mxu0
      %v6294 = vadd.f32 0.0, %v6293
      %v6295 = vpop.f32.mrb[0].mxu0
      %6296 = vmatprep.mubr.bf16.mxu0 0
      %6297 = vmatmul.mubr.bf16.gmra.mrb[0].mxu0 %v6201
      %v6298 = vpop.f32.mrb[0].mxu0
      %v6299 = vadd.f32 0.0, %v6298
      %v6300 = vpop.f32.mrb[0].mxu0
      %v6301 = vpop.f32.mrb[0].mxu0
      %v6302 = vadd.f32 0.0, %v6301
      %v6303 = vpop.f32.mrb[0].mxu0
      %6304 = vmatprep.mubr.bf16.mxu0 0
      %6305 = vmatmul.mubr.bf16.gmra.mrb[0].mxu0 %v6204
      %v6306 = vpop.f32.mrb[0].mxu0
      %v6307 = vadd.f32 0.0, %v6306
      %v6308 = vpop.f32.mrb[0].mxu0
      %v6309 = vpop.f32.mrb[0].mxu0
      %v6310 = vadd.f32 0.0, %v6309
      %v6311 = vpop.f32.mrb[0].mxu0
      %6312 = vmatprep.mubr.bf16.mxu0 0
      %6313 = vmatmul.mubr.bf16.gmra.mrb[0].mxu0 %v6207
      %v6314 = vpop.f32.mrb[0].mxu0
      %v6315 = vadd.f32 0.0, %v6314
      %v6316 = vpop.f32.mrb[0].mxu0
      %v6317 = vpop.f32.mrb[0].mxu0
      %v6318 = vadd.f32 0.0, %v6317
      %v6319 = vpop.f32.mrb[0].mxu0
      %6320 = vmatprep.mubr.bf16.mxu0 0
      %6321 = vmatmul.mubr.bf16.gmra.mrb[0].mxu0 %v6210
      %v6322 = vpop.f32.mrb[0].mxu0
      %v6323 = vadd.f32 0.0, %v6322
      %v6324 = vpop.f32.mrb[0].mxu0
      %v6325 = vpop.f32.mrb[0].mxu0
      %v6326 = vadd.f32 0.0, %v6325
      %v6327 = vpop.f32.mrb[0].mxu0
      %6328 = vmatprep.mubr.bf16.mxu0 0
      %6329 = vmatmul.mubr.bf16.gmra.mrb[0].mxu0 %v6213
      %v6330 = vpop.f32.mrb[0].mxu0
      %v6331 = vadd.f32 0.0, %v6330
      %v6332 = vpop.f32.mrb[0].mxu0
      %v6333 = vpop.f32.mrb[0].mxu0
      %v6334 = vadd.f32 0.0, %v6333
      %v6335 = vpop.f32.mrb[0].mxu0
      %6336 = vmatprep.mubr.bf16.mxu0 0
      %6337 = vmatmul.mubr.bf16.gmra.mrb[0].mxu0 %v6216
      %v6338 = vpop.f32.mrb[0].mxu0
      %v6339 = vadd.f32 0.0, %v6338
      %v6340 = vpop.f32.mrb[0].mxu0
      %v6341 = vpop.f32.mrb[0].mxu0
      %v6342 = vadd.f32 0.0, %v6341
      %v6343 = vpop.f32.mrb[0].mxu0
      %6344 = vmatprep.mubr.bf16.mxu0 0
      %6345 = vmatmul.mubr.bf16.gmra.mrb[0].mxu0 %v6219
      %v6346 = vpop.f32.mrb[0].mxu0
      %v6347 = vadd.f32 0.0, %v6346
      %v6348 = vpop.f32.mrb[0].mxu0
      %v6349 = vpop.f32.mrb[0].mxu0
      %v6350 = vadd.f32 0.0, %v6349
      %v6351 = vpop.f32.mrb[0].mxu0
      %6352 = vdwg.mxu0
      %v6353 = vadd.f32 %v5975, %v6259
      %v6354 = vadd.f32 %v5978, %v6262
      %v6355 = vadd.f32 %v5983, %v6267
      %v6356 = vadd.f32 %v5986, %v6270
      %v6357 = vadd.f32 %v5991, %v6275
      %v6358 = vadd.f32 %v5994, %v6278
      %v6359 = vadd.f32 %v5999, %v6283
      %v6360 = vadd.f32 %v6002, %v6286
      %v6361 = vadd.f32 %v6007, %v6291
      %v6362 = vadd.f32 %v6010, %v6294
      %v6363 = vadd.f32 %v6015, %v6299
      %v6364 = vadd.f32 %v6018, %v6302
      %v6365 = vadd.f32 %v6023, %v6307
      %v6366 = vadd.f32 %v6026, %v6310
      %v6367 = vadd.f32 %v6031, %v6315
      %v6368 = vadd.f32 %v6034, %v6318
      %v6369 = vadd.f32 %v6039, %v6323
      %v6370 = vadd.f32 %v6042, %v6326
      %v6371 = vadd.f32 %v6047, %v6331
      %v6372 = vadd.f32 %v6050, %v6334
      %v6373 = vadd.f32 %v6055, %v6339
      %v6374 = vadd.f32 %v6058, %v6342
      %v6375 = vadd.f32 %v6063, %v6347
      %v6376 = vadd.f32 %v6066, %v6350
      %v6377 = vld [vmem:[#allocation3 + $0x2c] sm:$0x8]
      %v6378 = vld [vmem:[#allocation3 + $0x30] sm:$0xf]
      %v6379 = vld [vmem:[#allocation3 + $0x34] sm:$0xf]
      %v6380 = vld [vmem:[#allocation3 + $0x38] sm:$0xf]
      %v6381 = vld [vmem:[#allocation3 + $0x3c] sm:$0xf]
      %v6382 = vld [vmem:[#allocation3 + $0x40] sm:$0xf]
      %v6383 = vld [vmem:[#allocation3 + $0x44] sm:$0xf]
      %v6384 = vld [vmem:[#allocation3 + $0x48] sm:$0xf]
      %v6385 = vld [vmem:[#allocation3 + $0x4c] sm:$0xf]
      %v6386 = vld [vmem:[#allocation3 + $0x50] sm:$0xf]
      %v6387 = vld [vmem:[#allocation3 + $0x54] sm:$0xf]
      %v6388 = vld [vmem:[#allocation3 + $0x58] sm:$0xf]
      %v6389 = vld [vmem:[#allocation3 + $0x5c] sm:$0xf]
      %v6390 = vld [vmem:[#allocation3 + $0x60] sm:$0xf]
      %v6391 = vld [vmem:[#allocation3 + $0x64] sm:$0xf]
      %v6392 = vld [vmem:[#allocation3 + $0x68] sm:$0xf]
      %v6393 = vld [vmem:[#allocation3 + $0x6c] sm:$0xf]
      %v6394 = vld [vmem:[#allocation3 + $0x70] sm:$0xf]
      %v6395 = vld [vmem:[#allocation3 + $0x74] sm:$0xf]
      %v6396 = vld [vmem:[#allocation3 + $0x78] sm:$0xf]
      %v6397 = vld [vmem:[#allocation3 + $0x7c] sm:$0xf]
      %v6398 = vld [vmem:[#allocation3 + $0x80] sm:$0xf]
      %v6399 = vld [vmem:[#allocation3 + $0x84] sm:$0xf]
      %v6400 = vld [vmem:[#allocation3 + $0x88] sm:$0xf]
      %v6401 = vld [vmem:[#allocation3 + $0x8c] sm:$0x7]
      %s6402 = scalar_lea.vmem %s6, 12
      %v6403 = vld [vmem:[%s6402] sm:$0xf]
      %v6429 = vunpack.c.l.b16 %v6377
      %v6430 = vunpack.c.l.b16 %v6378
      %v6431 = vunpack.c.l.b16 %v6379
      %v6432 = vunpack.c.l.b16 %v6380
      %v6433 = vunpack.c.l.b16 %v6381
      %v6434 = vunpack.c.l.b16 %v6382
      %v6435 = vunpack.c.l.b16 %v6383
      %v6436 = vunpack.c.l.b16 %v6384
      %v6437 = vunpack.c.l.b16 %v6385
      %v6438 = vunpack.c.l.b16 %v6386
      %v6439 = vunpack.c.l.b16 %v6387
      %v6440 = vunpack.c.l.b16 %v6388
      %v6441 = vunpack.c.l.b16 %v6389
      %v6442 = vunpack.c.l.b16 %v6390
      %v6443 = vunpack.c.l.b16 %v6391
      %v6444 = vunpack.c.l.b16 %v6392
      %v6445 = vunpack.c.l.b16 %v6393
      %v6446 = vunpack.c.l.b16 %v6394
      %v6447 = vunpack.c.l.b16 %v6395
      %v6448 = vunpack.c.l.b16 %v6396
      %v6449 = vunpack.c.l.b16 %v6397
      %v6450 = vunpack.c.l.b16 %v6398
      %v6451 = vunpack.c.l.b16 %v6399
      %v6452 = vunpack.c.l.b16 %v6400
      %v6453 = vunpack.c.l.b16 %v6401
      %v6454 = vpack.c.b16 %v6430, %v6429
      %v6455 = vpack.c.b16 %v6432, %v6431
      %v6456 = vpack.c.b16 %v6434, %v6433
      %v6457 = vpack.c.b16 %v6436, %v6435
      %v6458 = vpack.c.b16 %v6438, %v6437
      %v6459 = vpack.c.b16 %v6440, %v6439
      %v6460 = vpack.c.b16 %v6442, %v6441
      %v6461 = vpack.c.b16 %v6444, %v6443
      %v6462 = vpack.c.b16 %v6446, %v6445
      %v6463 = vpack.c.b16 %v6448, %v6447
      %v6464 = vpack.c.b16 %v6450, %v6449
      %v6465 = vpack.c.b16 %v6452, %v6451
      %v6466 = vpack.c.b16 %v6453, %v6453
      %v6467 = vrot.slane %v6454, 3
      %v6468 = vrot.slane %v6455, 3
      %v6469 = vsel %vm5875, %v6467, %v6468
      %v6470 = vrot.slane %v6456, 3
      %v6471 = vsel %vm5875, %v6468, %v6470
      %v6472 = vrot.slane %v6457, 3
      %v6473 = vsel %vm5875, %v6470, %v6472
      %v6474 = vrot.slane %v6458, 3
      %v6475 = vsel %vm5875, %v6472, %v6474
      %v6476 = vrot.slane %v6459, 3
      %v6477 = vsel %vm5875, %v6474, %v6476
      %v6478 = vrot.slane %v6460, 3
      %v6479 = vsel %vm5875, %v6476, %v6478
      %v6480 = vrot.slane %v6461, 3
      %v6481 = vsel %vm5875, %v6478, %v6480
      %v6482 = vrot.slane %v6462, 3
      %v6483 = vsel %vm5875, %v6480, %v6482
      %v6484 = vrot.slane %v6463, 3
      %v6485 = vsel %vm5875, %v6482, %v6484
      %v6486 = vrot.slane %v6464, 3
      %v6487 = vsel %vm5875, %v6484, %v6486
      %v6488 = vrot.slane %v6465, 3
      %v6489 = vsel %vm5875, %v6486, %v6488
      %v6490 = vrot.slane %v6466, 3
      %v6491 = vsel %vm5875, %v6488, %v6490
      %v6493 = vsel %vm335, %v6469, 0
      %v6496 = vsel %vm335, %v6471, 0
      %v6499 = vsel %vm335, %v6473, 0
      %v6502 = vsel %vm335, %v6475, 0
      %v6505 = vsel %vm335, %v6477, 0
      %v6508 = vsel %vm335, %v6479, 0
      %v6511 = vsel %vm335, %v6481, 0
      %v6514 = vsel %vm335, %v6483, 0
      %v6517 = vsel %vm335, %v6485, 0
      %v6520 = vsel %vm335, %v6487, 0
      %v6523 = vsel %vm335, %v6489, 0
      %v6526 = vsel %vm335, %v6491, 0
      %v6529 = vsel %vm1287, %v6403, 0
      %6531 = vmatprep.subr.bf16.mxu0 0
      %6532 = vmatpush1.bf16.msra.mxu0 %v6529
      %6533 = vmatprep.subr.bf16.mxu0 0
      %6534 = vmatpush1.bf16.msra.mxu0 0
      %6535 = vmatprep.subr.bf16.mxu0 0
      %6536 = vmatpush1.bf16.msra.mxu0 0
      %6537 = vmatprep.subr.bf16.mxu0 0
      %6538 = vmatpush1.bf16.msra.mxu0 0
      %6539 = vmatprep.subr.bf16.mxu0 0
      %6540 = vmatpush1.bf16.msra.mxu0 0
      %6541 = vmatprep.subr.bf16.mxu0 0
      %6542 = vmatpush1.bf16.msra.mxu0 0
      %6543 = vmatprep.subr.bf16.mxu0 0
      %6544 = vmatpush1.bf16.msra.mxu0 0
      %6545 = vmatprep.subr.bf16.mxu0 0
      %6546 = vmatpush1.bf16.msra.mxu0 0
      %6547 = vmatprep.subr.bf16.mxu0 0
      %6548 = vmatpush1.bf16.msra.mxu0 0
      %6549 = vmatprep.subr.bf16.mxu0 0
      %6550 = vmatpush1.bf16.msra.mxu0 0
      %6551 = vmatprep.subr.bf16.mxu0 0
      %6552 = vmatpush1.bf16.msra.mxu0 0
      %6553 = vmatprep.subr.bf16.mxu0 0
      %6554 = vmatpush1.bf16.msra.mxu0 0
      %6555 = vmatprep.subr.bf16.mxu0 0
      %6556 = vmatpush1.bf16.msra.mxu0 0
      %6557 = vmatprep.subr.bf16.mxu0 0
      %6558 = vmatpush1.bf16.msra.mxu0 0
      %6559 = vmatprep.subr.bf16.mxu0 0
      %6560 = vmatpush1.bf16.msra.mxu0 0
      %6561 = vmatprep.subr.bf16.mxu0 0
      %6562 = vmatpush1.bf16.msra.mxu0 0
      %6563 = vmatprep.mubr.bf16.mxu0 0
      %6564 = vmatmul.mubr.bf16.gmra.mrb[0].mxu0 %v6493
      %v6565 = vpop.f32.mrb[0].mxu0
      %v6566 = vadd.f32 0.0, %v6565
      %v6567 = vpop.f32.mrb[0].mxu0
      %v6568 = vpop.f32.mrb[0].mxu0
      %v6569 = vadd.f32 0.0, %v6568
      %v6570 = vpop.f32.mrb[0].mxu0
      %6571 = vmatprep.mubr.bf16.mxu0 0
      %6572 = vmatmul.mubr.bf16.gmra.mrb[0].mxu0 %v6496
      %v6573 = vpop.f32.mrb[0].mxu0
      %v6574 = vadd.f32 0.0, %v6573
      %v6575 = vpop.f32.mrb[0].mxu0
      %v6576 = vpop.f32.mrb[0].mxu0
      %v6577 = vadd.f32 0.0, %v6576
      %v6578 = vpop.f32.mrb[0].mxu0
      %6579 = vmatprep.mubr.bf16.mxu0 0
      %6580 = vmatmul.mubr.bf16.gmra.mrb[0].mxu0 %v6499
      %v6581 = vpop.f32.mrb[0].mxu0
      %v6582 = vadd.f32 0.0, %v6581
      %v6583 = vpop.f32.mrb[0].mxu0
      %v6584 = vpop.f32.mrb[0].mxu0
      %v6585 = vadd.f32 0.0, %v6584
      %v6586 = vpop.f32.mrb[0].mxu0
      %6587 = vmatprep.mubr.bf16.mxu0 0
      %6588 = vmatmul.mubr.bf16.gmra.mrb[0].mxu0 %v6502
      %v6589 = vpop.f32.mrb[0].mxu0
      %v6590 = vadd.f32 0.0, %v6589
      %v6591 = vpop.f32.mrb[0].mxu0
      %v6592 = vpop.f32.mrb[0].mxu0
      %v6593 = vadd.f32 0.0, %v6592
      %v6594 = vpop.f32.mrb[0].mxu0
      %6595 = vmatprep.mubr.bf16.mxu0 0
      %6596 = vmatmul.mubr.bf16.gmra.mrb[0].mxu0 %v6505
      %v6597 = vpop.f32.mrb[0].mxu0
      %v6598 = vadd.f32 0.0, %v6597
      %v6599 = vpop.f32.mrb[0].mxu0
      %v6600 = vpop.f32.mrb[0].mxu0
      %v6601 = vadd.f32 0.0, %v6600
      %v6602 = vpop.f32.mrb[0].mxu0
      %6603 = vmatprep.mubr.bf16.mxu0 0
      %6604 = vmatmul.mubr.bf16.gmra.mrb[0].mxu0 %v6508
      %v6605 = vpop.f32.mrb[0].mxu0
      %v6606 = vadd.f32 0.0, %v6605
      %v6607 = vpop.f32.mrb[0].mxu0
      %v6608 = vpop.f32.mrb[0].mxu0
      %v6609 = vadd.f32 0.0, %v6608
      %v6610 = vpop.f32.mrb[0].mxu0
      %6611 = vmatprep.mubr.bf16.mxu0 0
      %6612 = vmatmul.mubr.bf16.gmra.mrb[0].mxu0 %v6511
      %v6613 = vpop.f32.mrb[0].mxu0
      %v6614 = vadd.f32 0.0, %v6613
      %v6615 = vpop.f32.mrb[0].mxu0
      %v6616 = vpop.f32.mrb[0].mxu0
      %v6617 = vadd.f32 0.0, %v6616
      %v6618 = vpop.f32.mrb[0].mxu0
      %6619 = vmatprep.mubr.bf16.mxu0 0
      %6620 = vmatmul.mubr.bf16.gmra.mrb[0].mxu0 %v6514
      %v6621 = vpop.f32.mrb[0].mxu0
      %v6622 = vadd.f32 0.0, %v6621
      %v6623 = vpop.f32.mrb[0].mxu0
      %v6624 = vpop.f32.mrb[0].mxu0
      %v6625 = vadd.f32 0.0, %v6624
      %v6626 = vpop.f32.mrb[0].mxu0
      %6627 = vmatprep.mubr.bf16.mxu0 0
      %6628 = vmatmul.mubr.bf16.gmra.mrb[0].mxu0 %v6517
      %v6629 = vpop.f32.mrb[0].mxu0
      %v6630 = vadd.f32 0.0, %v6629
      %v6631 = vpop.f32.mrb[0].mxu0
      %v6632 = vpop.f32.mrb[0].mxu0
      %v6633 = vadd.f32 0.0, %v6632
      %v6634 = vpop.f32.mrb[0].mxu0
      %6635 = vmatprep.mubr.bf16.mxu0 0
      %6636 = vmatmul.mubr.bf16.gmra.mrb[0].mxu0 %v6520
      %v6637 = vpop.f32.mrb[0].mxu0
      %v6638 = vadd.f32 0.0, %v6637
      %v6639 = vpop.f32.mrb[0].mxu0
      %v6640 = vpop.f32.mrb[0].mxu0
      %v6641 = vadd.f32 0.0, %v6640
      %v6642 = vpop.f32.mrb[0].mxu0
      %6643 = vmatprep.mubr.bf16.mxu0 0
      %6644 = vmatmul.mubr.bf16.gmra.mrb[0].mxu0 %v6523
      %v6645 = vpop.f32.mrb[0].mxu0
      %v6646 = vadd.f32 0.0, %v6645
      %v6647 = vpop.f32.mrb[0].mxu0
      %v6648 = vpop.f32.mrb[0].mxu0
      %v6649 = vadd.f32 0.0, %v6648
      %v6650 = vpop.f32.mrb[0].mxu0
      %6651 = vmatprep.mubr.bf16.mxu0 0
      %6652 = vmatmul.mubr.bf16.gmra.mrb[0].mxu0 %v6526
      %v6653 = vpop.f32.mrb[0].mxu0
      %v6654 = vadd.f32 0.0, %v6653
      %v6655 = vpop.f32.mrb[0].mxu0
      %v6656 = vpop.f32.mrb[0].mxu0
      %v6657 = vadd.f32 0.0, %v6656
      %v6658 = vpop.f32.mrb[0].mxu0
      %6659 = vdwg.mxu0
      %v6660 = vadd.f32 %v6353, %v6566
      %v6661 = vadd.f32 %v6354, %v6569
      %v6662 = vadd.f32 %v6355, %v6574
      %v6663 = vadd.f32 %v6356, %v6577
      %v6664 = vadd.f32 %v6357, %v6582
      %v6665 = vadd.f32 %v6358, %v6585
      %v6666 = vadd.f32 %v6359, %v6590
      %v6667 = vadd.f32 %v6360, %v6593
      %v6668 = vadd.f32 %v6361, %v6598
      %v6669 = vadd.f32 %v6362, %v6601
      %v6670 = vadd.f32 %v6363, %v6606
      %v6671 = vadd.f32 %v6364, %v6609
      %v6672 = vadd.f32 %v6365, %v6614
      %v6673 = vadd.f32 %v6366, %v6617
      %v6674 = vadd.f32 %v6367, %v6622
      %v6675 = vadd.f32 %v6368, %v6625
      %v6676 = vadd.f32 %v6369, %v6630
      %v6677 = vadd.f32 %v6370, %v6633
      %v6678 = vadd.f32 %v6371, %v6638
      %v6679 = vadd.f32 %v6372, %v6641
      %v6680 = vadd.f32 %v6373, %v6646
      %v6681 = vadd.f32 %v6374, %v6649
      %v6682 = vadd.f32 %v6375, %v6654
      %v6683 = vadd.f32 %v6376, %v6657
      %v6684 = vld [vmem:[#allocation3 + $0x8c] sm:$0xf]
      %s6685 = scalar_lea.vmem %s6, 16
      %v6686 = vld [vmem:[%s6685] sm:$0xf]
      %v6688 = vunpack.c.l.b16 %v6684
      %v6689 = vpack.c.b16 %v6431, %v6430
      %v6690 = vpack.c.b16 %v6433, %v6432
      %v6691 = vpack.c.b16 %v6435, %v6434
      %v6692 = vpack.c.b16 %v6437, %v6436
      %v6693 = vpack.c.b16 %v6439, %v6438
      %v6694 = vpack.c.b16 %v6441, %v6440
      %v6695 = vpack.c.b16 %v6443, %v6442
      %v6696 = vpack.c.b16 %v6445, %v6444
      %v6697 = vpack.c.b16 %v6447, %v6446
      %v6698 = vpack.c.b16 %v6449, %v6448
      %v6699 = vpack.c.b16 %v6451, %v6450
      %v6700 = vpack.c.b16 %v6688, %v6452
      %v6702 = vsel %vm335, %v6689, 0
      %v6705 = vsel %vm335, %v6690, 0
      %v6708 = vsel %vm335, %v6691, 0
      %v6711 = vsel %vm335, %v6692, 0
      %v6714 = vsel %vm335, %v6693, 0
      %v6717 = vsel %vm335, %v6694, 0
      %v6720 = vsel %vm335, %v6695, 0
      %v6723 = vsel %vm335, %v6696, 0
      %v6726 = vsel %vm335, %v6697, 0
      %v6729 = vsel %vm335, %v6698, 0
      %v6732 = vsel %vm335, %v6699, 0
      %v6735 = vsel %vm335, %v6700, 0
      %v6738 = vsel %vm1287, %v6686, 0
      %6740 = vmatprep.subr.bf16.mxu0 0
      %6741 = vmatpush1.bf16.msra.mxu0 %v6738
      %6742 = vmatprep.subr.bf16.mxu0 0
      %6743 = vmatpush1.bf16.msra.mxu0 0
      %6744 = vmatprep.subr.bf16.mxu0 0
      %6745 = vmatpush1.bf16.msra.mxu0 0
      %6746 = vmatprep.subr.bf16.mxu0 0
      %6747 = vmatpush1.bf16.msra.mxu0 0
      %6748 = vmatprep.subr.bf16.mxu0 0
      %6749 = vmatpush1.bf16.msra.mxu0 0
      %6750 = vmatprep.subr.bf16.mxu0 0
      %6751 = vmatpush1.bf16.msra.mxu0 0
      %6752 = vmatprep.subr.bf16.mxu0 0
      %6753 = vmatpush1.bf16.msra.mxu0 0
      %6754 = vmatprep.subr.bf16.mxu0 0
      %6755 = vmatpush1.bf16.msra.mxu0 0
      %6756 = vmatprep.subr.bf16.mxu0 0
      %6757 = vmatpush1.bf16.msra.mxu0 0
      %6758 = vmatprep.subr.bf16.mxu0 0
      %6759 = vmatpush1.bf16.msra.mxu0 0
      %6760 = vmatprep.subr.bf16.mxu0 0
      %6761 = vmatpush1.bf16.msra.mxu0 0
      %6762 = vmatprep.subr.bf16.mxu0 0
      %6763 = vmatpush1.bf16.msra.mxu0 0
      %6764 = vmatprep.subr.bf16.mxu0 0
      %6765 = vmatpush1.bf16.msra.mxu0 0
      %6766 = vmatprep.subr.bf16.mxu0 0
      %6767 = vmatpush1.bf16.msra.mxu0 0
      %6768 = vmatprep.subr.bf16.mxu0 0
      %6769 = vmatpush1.bf16.msra.mxu0 0
      %6770 = vmatprep.subr.bf16.mxu0 0
      %6771 = vmatpush1.bf16.msra.mxu0 0
      %6772 = vmatprep.mubr.bf16.mxu0 0
      %6773 = vmatmul.mubr.bf16.gmra.mrb[0].mxu0 %v6702
      %v6774 = vpop.f32.mrb[0].mxu0
      %v6775 = vadd.f32 0.0, %v6774
      %v6776 = vpop.f32.mrb[0].mxu0
      %v6777 = vpop.f32.mrb[0].mxu0
      %v6778 = vadd.f32 0.0, %v6777
      %v6779 = vpop.f32.mrb[0].mxu0
      %6780 = vmatprep.mubr.bf16.mxu0 0
      %6781 = vmatmul.mubr.bf16.gmra.mrb[0].mxu0 %v6705
      %v6782 = vpop.f32.mrb[0].mxu0
      %v6783 = vadd.f32 0.0, %v6782
      %v6784 = vpop.f32.mrb[0].mxu0
      %v6785 = vpop.f32.mrb[0].mxu0
      %v6786 = vadd.f32 0.0, %v6785
      %v6787 = vpop.f32.mrb[0].mxu0
      %6788 = vmatprep.mubr.bf16.mxu0 0
      %6789 = vmatmul.mubr.bf16.gmra.mrb[0].mxu0 %v6708
      %v6790 = vpop.f32.mrb[0].mxu0
      %v6791 = vadd.f32 0.0, %v6790
      %v6792 = vpop.f32.mrb[0].mxu0
      %v6793 = vpop.f32.mrb[0].mxu0
      %v6794 = vadd.f32 0.0, %v6793
      %v6795 = vpop.f32.mrb[0].mxu0
      %6796 = vmatprep.mubr.bf16.mxu0 0
      %6797 = vmatmul.mubr.bf16.gmra.mrb[0].mxu0 %v6711
      %v6798 = vpop.f32.mrb[0].mxu0
      %v6799 = vadd.f32 0.0, %v6798
      %v6800 = vpop.f32.mrb[0].mxu0
      %v6801 = vpop.f32.mrb[0].mxu0
      %v6802 = vadd.f32 0.0, %v6801
      %v6803 = vpop.f32.mrb[0].mxu0
      %6804 = vmatprep.mubr.bf16.mxu0 0
      %6805 = vmatmul.mubr.bf16.gmra.mrb[0].mxu0 %v6714
      %v6806 = vpop.f32.mrb[0].mxu0
      %v6807 = vadd.f32 0.0, %v6806
      %v6808 = vpop.f32.mrb[0].mxu0
      %v6809 = vpop.f32.mrb[0].mxu0
      %v6810 = vadd.f32 0.0, %v6809
      %v6811 = vpop.f32.mrb[0].mxu0
      %6812 = vmatprep.mubr.bf16.mxu0 0
      %6813 = vmatmul.mubr.bf16.gmra.mrb[0].mxu0 %v6717
      %v6814 = vpop.f32.mrb[0].mxu0
      %v6815 = vadd.f32 0.0, %v6814
      %v6816 = vpop.f32.mrb[0].mxu0
      %v6817 = vpop.f32.mrb[0].mxu0
      %v6818 = vadd.f32 0.0, %v6817
      %v6819 = vpop.f32.mrb[0].mxu0
      %6820 = vmatprep.mubr.bf16.mxu0 0
      %6821 = vmatmul.mubr.bf16.gmra.mrb[0].mxu0 %v6720
      %v6822 = vpop.f32.mrb[0].mxu0
      %v6823 = vadd.f32 0.0, %v6822
      %v6824 = vpop.f32.mrb[0].mxu0
      %v6825 = vpop.f32.mrb[0].mxu0
      %v6826 = vadd.f32 0.0, %v6825
      %v6827 = vpop.f32.mrb[0].mxu0
      %6828 = vmatprep.mubr.bf16.mxu0 0
      %6829 = vmatmul.mubr.bf16.gmra.mrb[0].mxu0 %v6723
      %v6830 = vpop.f32.mrb[0].mxu0
      %v6831 = vadd.f32 0.0, %v6830
      %v6832 = vpop.f32.mrb[0].mxu0
      %v6833 = vpop.f32.mrb[0].mxu0
      %v6834 = vadd.f32 0.0, %v6833
      %v6835 = vpop.f32.mrb[0].mxu0
      %6836 = vmatprep.mubr.bf16.mxu0 0
      %6837 = vmatmul.mubr.bf16.gmra.mrb[0].mxu0 %v6726
      %v6838 = vpop.f32.mrb[0].mxu0
      %v6839 = vadd.f32 0.0, %v6838
      %v6840 = vpop.f32.mrb[0].mxu0
      %v6841 = vpop.f32.mrb[0].mxu0
      %v6842 = vadd.f32 0.0, %v6841
      %v6843 = vpop.f32.mrb[0].mxu0
      %6844 = vmatprep.mubr.bf16.mxu0 0
      %6845 = vmatmul.mubr.bf16.gmra.mrb[0].mxu0 %v6729
      %v6846 = vpop.f32.mrb[0].mxu0
      %v6847 = vadd.f32 0.0, %v6846
      %v6848 = vpop.f32.mrb[0].mxu0
      %v6849 = vpop.f32.mrb[0].mxu0
      %v6850 = vadd.f32 0.0, %v6849
      %v6851 = vpop.f32.mrb[0].mxu0
      %6852 = vmatprep.mubr.bf16.mxu0 0
      %6853 = vmatmul.mubr.bf16.gmra.mrb[0].mxu0 %v6732
      %v6854 = vpop.f32.mrb[0].mxu0
      %v6855 = vadd.f32 0.0, %v6854
      %v6856 = vpop.f32.mrb[0].mxu0
      %v6857 = vpop.f32.mrb[0].mxu0
      %v6858 = vadd.f32 0.0, %v6857
      %v6859 = vpop.f32.mrb[0].mxu0
      %6860 = vmatprep.mubr.bf16.mxu0 0
      %6861 = vmatmul.mubr.bf16.gmra.mrb[0].mxu0 %v6735
      %v6862 = vpop.f32.mrb[0].mxu0
      %v6863 = vadd.f32 0.0, %v6862
      %v6864 = vpop.f32.mrb[0].mxu0
      %v6865 = vpop.f32.mrb[0].mxu0
      %v6866 = vadd.f32 0.0, %v6865
      %v6867 = vpop.f32.mrb[0].mxu0
      %6868 = vdwg.mxu0
      %v6869 = vadd.f32 %v6660, %v6775
      %v6870 = vadd.f32 %v6661, %v6778
      %v6871 = vadd.f32 %v6662, %v6783
      %v6872 = vadd.f32 %v6663, %v6786
      %v6873 = vadd.f32 %v6664, %v6791
      %v6874 = vadd.f32 %v6665, %v6794
      %v6875 = vadd.f32 %v6666, %v6799
      %v6876 = vadd.f32 %v6667, %v6802
      %v6877 = vadd.f32 %v6668, %v6807
      %v6878 = vadd.f32 %v6669, %v6810
      %v6879 = vadd.f32 %v6670, %v6815
      %v6880 = vadd.f32 %v6671, %v6818
      %v6881 = vadd.f32 %v6672, %v6823
      %v6882 = vadd.f32 %v6673, %v6826
      %v6883 = vadd.f32 %v6674, %v6831
      %v6884 = vadd.f32 %v6675, %v6834
      %v6885 = vadd.f32 %v6676, %v6839
      %v6886 = vadd.f32 %v6677, %v6842
      %v6887 = vadd.f32 %v6678, %v6847
      %v6888 = vadd.f32 %v6679, %v6850
      %v6889 = vadd.f32 %v6680, %v6855
      %v6890 = vadd.f32 %v6681, %v6858
      %v6891 = vadd.f32 %v6682, %v6863
      %v6892 = vadd.f32 %v6683, %v6866
      %v6893 = vld [vmem:[#allocation3 + $0x30] sm:$0xe]
      %v6894 = vld [vmem:[#allocation3 + $0x34] sm:$0xf]
      %v6895 = vld [vmem:[#allocation3 + $0x38] sm:$0xf]
      %v6896 = vld [vmem:[#allocation3 + $0x3c] sm:$0xf]
      %v6897 = vld [vmem:[#allocation3 + $0x40] sm:$0xf]
      %v6898 = vld [vmem:[#allocation3 + $0x44] sm:$0xf]
      %v6899 = vld [vmem:[#allocation3 + $0x48] sm:$0xf]
      %v6900 = vld [vmem:[#allocation3 + $0x4c] sm:$0xf]
      %v6901 = vld [vmem:[#allocation3 + $0x50] sm:$0xf]
      %v6902 = vld [vmem:[#allocation3 + $0x54] sm:$0xf]
      %v6903 = vld [vmem:[#allocation3 + $0x58] sm:$0xf]
      %v6904 = vld [vmem:[#allocation3 + $0x5c] sm:$0xf]
      %v6905 = vld [vmem:[#allocation3 + $0x60] sm:$0xf]
      %v6906 = vld [vmem:[#allocation3 + $0x64] sm:$0xf]
      %v6907 = vld [vmem:[#allocation3 + $0x68] sm:$0xf]
      %v6908 = vld [vmem:[#allocation3 + $0x6c] sm:$0xf]
      %v6909 = vld [vmem:[#allocation3 + $0x70] sm:$0xf]
      %v6910 = vld [vmem:[#allocation3 + $0x74] sm:$0xf]
      %v6911 = vld [vmem:[#allocation3 + $0x78] sm:$0xf]
      %v6912 = vld [vmem:[#allocation3 + $0x7c] sm:$0xf]
      %v6913 = vld [vmem:[#allocation3 + $0x80] sm:$0xf]
      %v6914 = vld [vmem:[#allocation3 + $0x84] sm:$0xf]
      %v6915 = vld [vmem:[#allocation3 + $0x88] sm:$0xf]
      %v6916 = vld [vmem:[#allocation3 + $0x8c] sm:$0xf]
      %v6917 = vld [vmem:[#allocation3 + $0x90] sm:$0x1]
      %s6918 = scalar_lea.vmem %s6, 20
      %v6919 = vld [vmem:[%s6918] sm:$0xf]
      %v6945 = vunpack.c.l.b16 %v6893
      %v6946 = vunpack.c.l.b16 %v6894
      %v6947 = vunpack.c.l.b16 %v6895
      %v6948 = vunpack.c.l.b16 %v6896
      %v6949 = vunpack.c.l.b16 %v6897
      %v6950 = vunpack.c.l.b16 %v6898
      %v6951 = vunpack.c.l.b16 %v6899
      %v6952 = vunpack.c.l.b16 %v6900
      %v6953 = vunpack.c.l.b16 %v6901
      %v6954 = vunpack.c.l.b16 %v6902
      %v6955 = vunpack.c.l.b16 %v6903
      %v6956 = vunpack.c.l.b16 %v6904
      %v6957 = vunpack.c.l.b16 %v6905
      %v6958 = vunpack.c.l.b16 %v6906
      %v6959 = vunpack.c.l.b16 %v6907
      %v6960 = vunpack.c.l.b16 %v6908
      %v6961 = vunpack.c.l.b16 %v6909
      %v6962 = vunpack.c.l.b16 %v6910
      %v6963 = vunpack.c.l.b16 %v6911
      %v6964 = vunpack.c.l.b16 %v6912
      %v6965 = vunpack.c.l.b16 %v6913
      %v6966 = vunpack.c.l.b16 %v6914
      %v6967 = vunpack.c.l.b16 %v6915
      %v6968 = vunpack.c.l.b16 %v6916
      %v6969 = vunpack.c.l.b16 %v6917
      %v6970 = vpack.c.b16 %v6946, %v6945
      %v6971 = vpack.c.b16 %v6948, %v6947
      %v6972 = vpack.c.b16 %v6950, %v6949
      %v6973 = vpack.c.b16 %v6952, %v6951
      %v6974 = vpack.c.b16 %v6954, %v6953
      %v6975 = vpack.c.b16 %v6956, %v6955
      %v6976 = vpack.c.b16 %v6958, %v6957
      %v6977 = vpack.c.b16 %v6960, %v6959
      %v6978 = vpack.c.b16 %v6962, %v6961
      %v6979 = vpack.c.b16 %v6964, %v6963
      %v6980 = vpack.c.b16 %v6966, %v6965
      %v6981 = vpack.c.b16 %v6968, %v6967
      %v6982 = vpack.c.b16 %v6969, %v6969
      %v6983 = vrot.slane %v6970, 1
      %v6984 = vrot.slane %v6971, 1
      %v6985 = vsel %vm6159, %v6983, %v6984
      %v6986 = vrot.slane %v6972, 1
      %v6987 = vsel %vm6159, %v6984, %v6986
      %v6988 = vrot.slane %v6973, 1
      %v6989 = vsel %vm6159, %v6986, %v6988
      %v6990 = vrot.slane %v6974, 1
      %v6991 = vsel %vm6159, %v6988, %v6990
      %v6992 = vrot.slane %v6975, 1
      %v6993 = vsel %vm6159, %v6990, %v6992
      %v6994 = vrot.slane %v6976, 1
      %v6995 = vsel %vm6159, %v6992, %v6994
      %v6996 = vrot.slane %v6977, 1
      %v6997 = vsel %vm6159, %v6994, %v6996
      %v6998 = vrot.slane %v6978, 1
      %v6999 = vsel %vm6159, %v6996, %v6998
      %v7000 = vrot.slane %v6979, 1
      %v7001 = vsel %vm6159, %v6998, %v7000
      %v7002 = vrot.slane %v6980, 1
      %v7003 = vsel %vm6159, %v7000, %v7002
      %v7004 = vrot.slane %v6981, 1
      %v7005 = vsel %vm6159, %v7002, %v7004
      %v7006 = vrot.slane %v6982, 1
      %v7007 = vsel %vm6159, %v7004, %v7006
      %v7009 = vsel %vm335, %v6985, 0
      %v7012 = vsel %vm335, %v6987, 0
      %v7015 = vsel %vm335, %v6989, 0
      %v7018 = vsel %vm335, %v6991, 0
      %v7021 = vsel %vm335, %v6993, 0
      %v7024 = vsel %vm335, %v6995, 0
      %v7027 = vsel %vm335, %v6997, 0
      %v7030 = vsel %vm335, %v6999, 0
      %v7033 = vsel %vm335, %v7001, 0
      %v7036 = vsel %vm335, %v7003, 0
      %v7039 = vsel %vm335, %v7005, 0
      %v7042 = vsel %vm335, %v7007, 0
      %v7045 = vsel %vm1287, %v6919, 0
      %7047 = vmatprep.subr.bf16.mxu0 0
      %7048 = vmatpush1.bf16.msra.mxu0 %v7045
      %7049 = vmatprep.subr.bf16.mxu0 0
      %7050 = vmatpush1.bf16.msra.mxu0 0
      %7051 = vmatprep.subr.bf16.mxu0 0
      %7052 = vmatpush1.bf16.msra.mxu0 0
      %7053 = vmatprep.subr.bf16.mxu0 0
      %7054 = vmatpush1.bf16.msra.mxu0 0
      %7055 = vmatprep.subr.bf16.mxu0 0
      %7056 = vmatpush1.bf16.msra.mxu0 0
      %7057 = vmatprep.subr.bf16.mxu0 0
      %7058 = vmatpush1.bf16.msra.mxu0 0
      %7059 = vmatprep.subr.bf16.mxu0 0
      %7060 = vmatpush1.bf16.msra.mxu0 0
      %7061 = vmatprep.subr.bf16.mxu0 0
      %7062 = vmatpush1.bf16.msra.mxu0 0
      %7063 = vmatprep.subr.bf16.mxu0 0
      %7064 = vmatpush1.bf16.msra.mxu0 0
      %7065 = vmatprep.subr.bf16.mxu0 0
      %7066 = vmatpush1.bf16.msra.mxu0 0
      %7067 = vmatprep.subr.bf16.mxu0 0
      %7068 = vmatpush1.bf16.msra.mxu0 0
      %7069 = vmatprep.subr.bf16.mxu0 0
      %7070 = vmatpush1.bf16.msra.mxu0 0
      %7071 = vmatprep.subr.bf16.mxu0 0
      %7072 = vmatpush1.bf16.msra.mxu0 0
      %7073 = vmatprep.subr.bf16.mxu0 0
      %7074 = vmatpush1.bf16.msra.mxu0 0
      %7075 = vmatprep.subr.bf16.mxu0 0
      %7076 = vmatpush1.bf16.msra.mxu0 0
      %7077 = vmatprep.subr.bf16.mxu0 0
      %7078 = vmatpush1.bf16.msra.mxu0 0
      %7079 = vmatprep.mubr.bf16.mxu0 0
      %7080 = vmatmul.mubr.bf16.gmra.mrb[0].mxu0 %v7009
      %v7081 = vpop.f32.mrb[0].mxu0
      %v7082 = vadd.f32 0.0, %v7081
      %v7083 = vpop.f32.mrb[0].mxu0
      %v7084 = vpop.f32.mrb[0].mxu0
      %v7085 = vadd.f32 0.0, %v7084
      %v7086 = vpop.f32.mrb[0].mxu0
      %7087 = vmatprep.mubr.bf16.mxu0 0
      %7088 = vmatmul.mubr.bf16.gmra.mrb[0].mxu0 %v7012
      %v7089 = vpop.f32.mrb[0].mxu0
      %v7090 = vadd.f32 0.0, %v7089
      %v7091 = vpop.f32.mrb[0].mxu0
      %v7092 = vpop.f32.mrb[0].mxu0
      %v7093 = vadd.f32 0.0, %v7092
      %v7094 = vpop.f32.mrb[0].mxu0
      %7095 = vmatprep.mubr.bf16.mxu0 0
      %7096 = vmatmul.mubr.bf16.gmra.mrb[0].mxu0 %v7015
      %v7097 = vpop.f32.mrb[0].mxu0
      %v7098 = vadd.f32 0.0, %v7097
      %v7099 = vpop.f32.mrb[0].mxu0
      %v7100 = vpop.f32.mrb[0].mxu0
      %v7101 = vadd.f32 0.0, %v7100
      %v7102 = vpop.f32.mrb[0].mxu0
      %7103 = vmatprep.mubr.bf16.mxu0 0
      %7104 = vmatmul.mubr.bf16.gmra.mrb[0].mxu0 %v7018
      %v7105 = vpop.f32.mrb[0].mxu0
      %v7106 = vadd.f32 0.0, %v7105
      %v7107 = vpop.f32.mrb[0].mxu0
      %v7108 = vpop.f32.mrb[0].mxu0
      %v7109 = vadd.f32 0.0, %v7108
      %v7110 = vpop.f32.mrb[0].mxu0
      %7111 = vmatprep.mubr.bf16.mxu0 0
      %7112 = vmatmul.mubr.bf16.gmra.mrb[0].mxu0 %v7021
      %v7113 = vpop.f32.mrb[0].mxu0
      %v7114 = vadd.f32 0.0, %v7113
      %v7115 = vpop.f32.mrb[0].mxu0
      %v7116 = vpop.f32.mrb[0].mxu0
      %v7117 = vadd.f32 0.0, %v7116
      %v7118 = vpop.f32.mrb[0].mxu0
      %7119 = vmatprep.mubr.bf16.mxu0 0
      %7120 = vmatmul.mubr.bf16.gmra.mrb[0].mxu0 %v7024
      %v7121 = vpop.f32.mrb[0].mxu0
      %v7122 = vadd.f32 0.0, %v7121
      %v7123 = vpop.f32.mrb[0].mxu0
      %v7124 = vpop.f32.mrb[0].mxu0
      %v7125 = vadd.f32 0.0, %v7124
      %v7126 = vpop.f32.mrb[0].mxu0
      %7127 = vmatprep.mubr.bf16.mxu0 0
      %7128 = vmatmul.mubr.bf16.gmra.mrb[0].mxu0 %v7027
      %v7129 = vpop.f32.mrb[0].mxu0
      %v7130 = vadd.f32 0.0, %v7129
      %v7131 = vpop.f32.mrb[0].mxu0
      %v7132 = vpop.f32.mrb[0].mxu0
      %v7133 = vadd.f32 0.0, %v7132
      %v7134 = vpop.f32.mrb[0].mxu0
      %7135 = vmatprep.mubr.bf16.mxu0 0
      %7136 = vmatmul.mubr.bf16.gmra.mrb[0].mxu0 %v7030
      %v7137 = vpop.f32.mrb[0].mxu0
      %v7138 = vadd.f32 0.0, %v7137
      %v7139 = vpop.f32.mrb[0].mxu0
      %v7140 = vpop.f32.mrb[0].mxu0
      %v7141 = vadd.f32 0.0, %v7140
      %v7142 = vpop.f32.mrb[0].mxu0
      %7143 = vmatprep.mubr.bf16.mxu0 0
      %7144 = vmatmul.mubr.bf16.gmra.mrb[0].mxu0 %v7033
      %v7145 = vpop.f32.mrb[0].mxu0
      %v7146 = vadd.f32 0.0, %v7145
      %v7147 = vpop.f32.mrb[0].mxu0
      %v7148 = vpop.f32.mrb[0].mxu0
      %v7149 = vadd.f32 0.0, %v7148
      %v7150 = vpop.f32.mrb[0].mxu0
      %7151 = vmatprep.mubr.bf16.mxu0 0
      %7152 = vmatmul.mubr.bf16.gmra.mrb[0].mxu0 %v7036
      %v7153 = vpop.f32.mrb[0].mxu0
      %v7154 = vadd.f32 0.0, %v7153
      %v7155 = vpop.f32.mrb[0].mxu0
      %v7156 = vpop.f32.mrb[0].mxu0
      %v7157 = vadd.f32 0.0, %v7156
      %v7158 = vpop.f32.mrb[0].mxu0
      %7159 = vmatprep.mubr.bf16.mxu0 0
      %7160 = vmatmul.mubr.bf16.gmra.mrb[0].mxu0 %v7039
      %v7161 = vpop.f32.mrb[0].mxu0
      %v7162 = vadd.f32 0.0, %v7161
      %v7163 = vpop.f32.mrb[0].mxu0
      %v7164 = vpop.f32.mrb[0].mxu0
      %v7165 = vadd.f32 0.0, %v7164
      %v7166 = vpop.f32.mrb[0].mxu0
      %7167 = vmatprep.mubr.bf16.mxu0 0
      %7168 = vmatmul.mubr.bf16.gmra.mrb[0].mxu0 %v7042
      %v7169 = vpop.f32.mrb[0].mxu0
      %v7170 = vadd.f32 0.0, %v7169
      %v7171 = vpop.f32.mrb[0].mxu0
      %v7172 = vpop.f32.mrb[0].mxu0
      %v7173 = vadd.f32 0.0, %v7172
      %v7174 = vpop.f32.mrb[0].mxu0
      %7175 = vdwg.mxu0
      %v7176 = vadd.f32 %v6869, %v7082
      %v7177 = vadd.f32 %v6870, %v7085
      %v7178 = vadd.f32 %v6871, %v7090
      %v7179 = vadd.f32 %v6872, %v7093
      %v7180 = vadd.f32 %v6873, %v7098
      %v7181 = vadd.f32 %v6874, %v7101
      %v7182 = vadd.f32 %v6875, %v7106
      %v7183 = vadd.f32 %v6876, %v7109
      %v7184 = vadd.f32 %v6877, %v7114
      %v7185 = vadd.f32 %v6878, %v7117
      %v7186 = vadd.f32 %v6879, %v7122
      %v7187 = vadd.f32 %v6880, %v7125
      %v7188 = vadd.f32 %v6881, %v7130
      %v7189 = vadd.f32 %v6882, %v7133
      %v7190 = vadd.f32 %v6883, %v7138
      %v7191 = vadd.f32 %v6884, %v7141
      %v7192 = vadd.f32 %v6885, %v7146
      %v7193 = vadd.f32 %v6886, %v7149
      %v7194 = vadd.f32 %v6887, %v7154
      %v7195 = vadd.f32 %v6888, %v7157
      %v7196 = vadd.f32 %v6889, %v7162
      %v7197 = vadd.f32 %v6890, %v7165
      %v7198 = vadd.f32 %v6891, %v7170
      %v7199 = vadd.f32 %v6892, %v7173
      %v7200 = vld [vmem:[#allocation3 + $0x44] sm:$0x8]
      %v7201 = vld [vmem:[#allocation3 + $0x48] sm:$0xf]
      %v7202 = vld [vmem:[#allocation3 + $0x4c] sm:$0xf]
      %v7203 = vld [vmem:[#allocation3 + $0x50] sm:$0xf]
      %v7204 = vld [vmem:[#allocation3 + $0x54] sm:$0xf]
      %v7205 = vld [vmem:[#allocation3 + $0x58] sm:$0xf]
      %v7206 = vld [vmem:[#allocation3 + $0x5c] sm:$0xf]
      %v7207 = vld [vmem:[#allocation3 + $0x60] sm:$0xf]
      %v7208 = vld [vmem:[#allocation3 + $0x64] sm:$0xf]
      %v7209 = vld [vmem:[#allocation3 + $0x68] sm:$0xf]
      %v7210 = vld [vmem:[#allocation3 + $0x6c] sm:$0xf]
      %v7211 = vld [vmem:[#allocation3 + $0x70] sm:$0xf]
      %v7212 = vld [vmem:[#allocation3 + $0x74] sm:$0xf]
      %v7213 = vld [vmem:[#allocation3 + $0x78] sm:$0xf]
      %v7214 = vld [vmem:[#allocation3 + $0x7c] sm:$0xf]
      %v7215 = vld [vmem:[#allocation3 + $0x80] sm:$0xf]
      %v7216 = vld [vmem:[#allocation3 + $0x84] sm:$0xf]
      %v7217 = vld [vmem:[#allocation3 + $0x88] sm:$0xf]
      %v7218 = vld [vmem:[#allocation3 + $0x8c] sm:$0xf]
      %v7219 = vld [vmem:[#allocation3 + $0x90] sm:$0xf]
      %v7220 = vld [vmem:[#allocation3 + $0x94] sm:$0xf]
      %v7221 = vld [vmem:[#allocation3 + $0x98] sm:$0xf]
      %v7222 = vld [vmem:[#allocation3 + $0x9c] sm:$0xf]
      %v7223 = vld [vmem:[#allocation3 + $0xa0] sm:$0xf]
      %v7224 = vld [vmem:[#allocation3 + $0xa4] sm:$0x7]
      %s7225 = scalar_lea.vmem %s6, 24
      %v7226 = vld [vmem:[%s7225] sm:$0xf]
      %v7252 = vunpack.c.l.b16 %v7200
      %v7253 = vunpack.c.l.b16 %v7201
      %v7254 = vunpack.c.l.b16 %v7202
      %v7255 = vunpack.c.l.b16 %v7203
      %v7256 = vunpack.c.l.b16 %v7204
      %v7257 = vunpack.c.l.b16 %v7205
      %v7258 = vunpack.c.l.b16 %v7206
      %v7259 = vunpack.c.l.b16 %v7207
      %v7260 = vunpack.c.l.b16 %v7208
      %v7261 = vunpack.c.l.b16 %v7209
      %v7262 = vunpack.c.l.b16 %v7210
      %v7263 = vunpack.c.l.b16 %v7211
      %v7264 = vunpack.c.l.b16 %v7212
      %v7265 = vunpack.c.l.b16 %v7213
      %v7266 = vunpack.c.l.b16 %v7214
      %v7267 = vunpack.c.l.b16 %v7215
      %v7268 = vunpack.c.l.b16 %v7216
      %v7269 = vunpack.c.l.b16 %v7217
      %v7270 = vunpack.c.l.b16 %v7218
      %v7271 = vunpack.c.l.b16 %v7219
      %v7272 = vunpack.c.l.b16 %v7220
      %v7273 = vunpack.c.l.b16 %v7221
      %v7274 = vunpack.c.l.b16 %v7222
      %v7275 = vunpack.c.l.b16 %v7223
      %v7276 = vunpack.c.l.b16 %v7224
      %v7277 = vpack.c.b16 %v7253, %v7252
      %v7278 = vpack.c.b16 %v7255, %v7254
      %v7279 = vpack.c.b16 %v7257, %v7256
      %v7280 = vpack.c.b16 %v7259, %v7258
      %v7281 = vpack.c.b16 %v7261, %v7260
      %v7282 = vpack.c.b16 %v7263, %v7262
      %v7283 = vpack.c.b16 %v7265, %v7264
      %v7284 = vpack.c.b16 %v7267, %v7266
      %v7285 = vpack.c.b16 %v7269, %v7268
      %v7286 = vpack.c.b16 %v7271, %v7270
      %v7287 = vpack.c.b16 %v7273, %v7272
      %v7288 = vpack.c.b16 %v7275, %v7274
      %v7289 = vpack.c.b16 %v7276, %v7276
      %v7290 = vrot.slane %v7277, 3
      %v7291 = vrot.slane %v7278, 3
      %v7292 = vsel %vm5875, %v7290, %v7291
      %v7293 = vrot.slane %v7279, 3
      %v7294 = vsel %vm5875, %v7291, %v7293
      %v7295 = vrot.slane %v7280, 3
      %v7296 = vsel %vm5875, %v7293, %v7295
      %v7297 = vrot.slane %v7281, 3
      %v7298 = vsel %vm5875, %v7295, %v7297
      %v7299 = vrot.slane %v7282, 3
      %v7300 = vsel %vm5875, %v7297, %v7299
      %v7301 = vrot.slane %v7283, 3
      %v7302 = vsel %vm5875, %v7299, %v7301
      %v7303 = vrot.slane %v7284, 3
      %v7304 = vsel %vm5875, %v7301, %v7303
      %v7305 = vrot.slane %v7285, 3
      %v7306 = vsel %vm5875, %v7303, %v7305
      %v7307 = vrot.slane %v7286, 3
      %v7308 = vsel %vm5875, %v7305, %v7307
      %v7309 = vrot.slane %v7287, 3
      %v7310 = vsel %vm5875, %v7307, %v7309
      %v7311 = vrot.slane %v7288, 3
      %v7312 = vsel %vm5875, %v7309, %v7311
      %v7313 = vrot.slane %v7289, 3
      %v7314 = vsel %vm5875, %v7311, %v7313
      %v7316 = vsel %vm335, %v7292, 0
      %v7319 = vsel %vm335, %v7294, 0
      %v7322 = vsel %vm335, %v7296, 0
      %v7325 = vsel %vm335, %v7298, 0
      %v7328 = vsel %vm335, %v7300, 0
      %v7331 = vsel %vm335, %v7302, 0
      %v7334 = vsel %vm335, %v7304, 0
      %v7337 = vsel %vm335, %v7306, 0
      %v7340 = vsel %vm335, %v7308, 0
      %v7343 = vsel %vm335, %v7310, 0
      %v7346 = vsel %vm335, %v7312, 0
      %v7349 = vsel %vm335, %v7314, 0
      %v7352 = vsel %vm1287, %v7226, 0
      %7354 = vmatprep.subr.bf16.mxu0 0
      %7355 = vmatpush1.bf16.msra.mxu0 %v7352
      %7356 = vmatprep.subr.bf16.mxu0 0
      %7357 = vmatpush1.bf16.msra.mxu0 0
      %7358 = vmatprep.subr.bf16.mxu0 0
      %7359 = vmatpush1.bf16.msra.mxu0 0
      %7360 = vmatprep.subr.bf16.mxu0 0
      %7361 = vmatpush1.bf16.msra.mxu0 0
      %7362 = vmatprep.subr.bf16.mxu0 0
      %7363 = vmatpush1.bf16.msra.mxu0 0
      %7364 = vmatprep.subr.bf16.mxu0 0
      %7365 = vmatpush1.bf16.msra.mxu0 0
      %7366 = vmatprep.subr.bf16.mxu0 0
      %7367 = vmatpush1.bf16.msra.mxu0 0
      %7368 = vmatprep.subr.bf16.mxu0 0
      %7369 = vmatpush1.bf16.msra.mxu0 0
      %7370 = vmatprep.subr.bf16.mxu0 0
      %7371 = vmatpush1.bf16.msra.mxu0 0
      %7372 = vmatprep.subr.bf16.mxu0 0
      %7373 = vmatpush1.bf16.msra.mxu0 0
      %7374 = vmatprep.subr.bf16.mxu0 0
      %7375 = vmatpush1.bf16.msra.mxu0 0
      %7376 = vmatprep.subr.bf16.mxu0 0
      %7377 = vmatpush1.bf16.msra.mxu0 0
      %7378 = vmatprep.subr.bf16.mxu0 0
      %7379 = vmatpush1.bf16.msra.mxu0 0
      %7380 = vmatprep.subr.bf16.mxu0 0
      %7381 = vmatpush1.bf16.msra.mxu0 0
      %7382 = vmatprep.subr.bf16.mxu0 0
      %7383 = vmatpush1.bf16.msra.mxu0 0
      %7384 = vmatprep.subr.bf16.mxu0 0
      %7385 = vmatpush1.bf16.msra.mxu0 0
      %7386 = vmatprep.mubr.bf16.mxu0 0
      %7387 = vmatmul.mubr.bf16.gmra.mrb[0].mxu0 %v7316
      %v7388 = vpop.f32.mrb[0].mxu0
      %v7389 = vadd.f32 0.0, %v7388
      %v7390 = vpop.f32.mrb[0].mxu0
      %v7391 = vpop.f32.mrb[0].mxu0
      %v7392 = vadd.f32 0.0, %v7391
      %v7393 = vpop.f32.mrb[0].mxu0
      %7394 = vmatprep.mubr.bf16.mxu0 0
      %7395 = vmatmul.mubr.bf16.gmra.mrb[0].mxu0 %v7319
      %v7396 = vpop.f32.mrb[0].mxu0
      %v7397 = vadd.f32 0.0, %v7396
      %v7398 = vpop.f32.mrb[0].mxu0
      %v7399 = vpop.f32.mrb[0].mxu0
      %v7400 = vadd.f32 0.0, %v7399
      %v7401 = vpop.f32.mrb[0].mxu0
      %7402 = vmatprep.mubr.bf16.mxu0 0
      %7403 = vmatmul.mubr.bf16.gmra.mrb[0].mxu0 %v7322
      %v7404 = vpop.f32.mrb[0].mxu0
      %v7405 = vadd.f32 0.0, %v7404
      %v7406 = vpop.f32.mrb[0].mxu0
      %v7407 = vpop.f32.mrb[0].mxu0
      %v7408 = vadd.f32 0.0, %v7407
      %v7409 = vpop.f32.mrb[0].mxu0
      %7410 = vmatprep.mubr.bf16.mxu0 0
      %7411 = vmatmul.mubr.bf16.gmra.mrb[0].mxu0 %v7325
      %v7412 = vpop.f32.mrb[0].mxu0
      %v7413 = vadd.f32 0.0, %v7412
      %v7414 = vpop.f32.mrb[0].mxu0
      %v7415 = vpop.f32.mrb[0].mxu0
      %v7416 = vadd.f32 0.0, %v7415
      %v7417 = vpop.f32.mrb[0].mxu0
      %7418 = vmatprep.mubr.bf16.mxu0 0
      %7419 = vmatmul.mubr.bf16.gmra.mrb[0].mxu0 %v7328
      %v7420 = vpop.f32.mrb[0].mxu0
      %v7421 = vadd.f32 0.0, %v7420
      %v7422 = vpop.f32.mrb[0].mxu0
      %v7423 = vpop.f32.mrb[0].mxu0
      %v7424 = vadd.f32 0.0, %v7423
      %v7425 = vpop.f32.mrb[0].mxu0
      %7426 = vmatprep.mubr.bf16.mxu0 0
      %7427 = vmatmul.mubr.bf16.gmra.mrb[0].mxu0 %v7331
      %v7428 = vpop.f32.mrb[0].mxu0
      %v7429 = vadd.f32 0.0, %v7428
      %v7430 = vpop.f32.mrb[0].mxu0
      %v7431 = vpop.f32.mrb[0].mxu0
      %v7432 = vadd.f32 0.0, %v7431
      %v7433 = vpop.f32.mrb[0].mxu0
      %7434 = vmatprep.mubr.bf16.mxu0 0
      %7435 = vmatmul.mubr.bf16.gmra.mrb[0].mxu0 %v7334
      %v7436 = vpop.f32.mrb[0].mxu0
      %v7437 = vadd.f32 0.0, %v7436
      %v7438 = vpop.f32.mrb[0].mxu0
      %v7439 = vpop.f32.mrb[0].mxu0
      %v7440 = vadd.f32 0.0, %v7439
      %v7441 = vpop.f32.mrb[0].mxu0
      %7442 = vmatprep.mubr.bf16.mxu0 0
      %7443 = vmatmul.mubr.bf16.gmra.mrb[0].mxu0 %v7337
      %v7444 = vpop.f32.mrb[0].mxu0
      %v7445 = vadd.f32 0.0, %v7444
      %v7446 = vpop.f32.mrb[0].mxu0
      %v7447 = vpop.f32.mrb[0].mxu0
      %v7448 = vadd.f32 0.0, %v7447
      %v7449 = vpop.f32.mrb[0].mxu0
      %7450 = vmatprep.mubr.bf16.mxu0 0
      %7451 = vmatmul.mubr.bf16.gmra.mrb[0].mxu0 %v7340
      %v7452 = vpop.f32.mrb[0].mxu0
      %v7453 = vadd.f32 0.0, %v7452
      %v7454 = vpop.f32.mrb[0].mxu0
      %v7455 = vpop.f32.mrb[0].mxu0
      %v7456 = vadd.f32 0.0, %v7455
      %v7457 = vpop.f32.mrb[0].mxu0
      %7458 = vmatprep.mubr.bf16.mxu0 0
      %7459 = vmatmul.mubr.bf16.gmra.mrb[0].mxu0 %v7343
      %v7460 = vpop.f32.mrb[0].mxu0
      %v7461 = vadd.f32 0.0, %v7460
      %v7462 = vpop.f32.mrb[0].mxu0
      %v7463 = vpop.f32.mrb[0].mxu0
      %v7464 = vadd.f32 0.0, %v7463
      %v7465 = vpop.f32.mrb[0].mxu0
      %7466 = vmatprep.mubr.bf16.mxu0 0
      %7467 = vmatmul.mubr.bf16.gmra.mrb[0].mxu0 %v7346
      %v7468 = vpop.f32.mrb[0].mxu0
      %v7469 = vadd.f32 0.0, %v7468
      %v7470 = vpop.f32.mrb[0].mxu0
      %v7471 = vpop.f32.mrb[0].mxu0
      %v7472 = vadd.f32 0.0, %v7471
      %v7473 = vpop.f32.mrb[0].mxu0
      %7474 = vmatprep.mubr.bf16.mxu0 0
      %7475 = vmatmul.mubr.bf16.gmra.mrb[0].mxu0 %v7349
      %v7476 = vpop.f32.mrb[0].mxu0
      %v7477 = vadd.f32 0.0, %v7476
      %v7478 = vpop.f32.mrb[0].mxu0
      %v7479 = vpop.f32.mrb[0].mxu0
      %v7480 = vadd.f32 0.0, %v7479
      %v7481 = vpop.f32.mrb[0].mxu0
      %7482 = vdwg.mxu0
      %v7483 = vadd.f32 %v7176, %v7389
      %v7484 = vadd.f32 %v7177, %v7392
      %v7485 = vadd.f32 %v7178, %v7397
      %v7486 = vadd.f32 %v7179, %v7400
      %v7487 = vadd.f32 %v7180, %v7405
      %v7488 = vadd.f32 %v7181, %v7408
      %v7489 = vadd.f32 %v7182, %v7413
      %v7490 = vadd.f32 %v7183, %v7416
      %v7491 = vadd.f32 %v7184, %v7421
      %v7492 = vadd.f32 %v7185, %v7424
      %v7493 = vadd.f32 %v7186, %v7429
      %v7494 = vadd.f32 %v7187, %v7432
      %v7495 = vadd.f32 %v7188, %v7437
      %v7496 = vadd.f32 %v7189, %v7440
      %v7497 = vadd.f32 %v7190, %v7445
      %v7498 = vadd.f32 %v7191, %v7448
      %v7499 = vadd.f32 %v7192, %v7453
      %v7500 = vadd.f32 %v7193, %v7456
      %v7501 = vadd.f32 %v7194, %v7461
      %v7502 = vadd.f32 %v7195, %v7464
      %v7503 = vadd.f32 %v7196, %v7469
      %v7504 = vadd.f32 %v7197, %v7472
      %v7505 = vadd.f32 %v7198, %v7477
      %v7506 = vadd.f32 %v7199, %v7480
      %v7507 = vld [vmem:[#allocation3 + $0xa4] sm:$0xf]
      %s7508 = scalar_lea.vmem %s6, 28
      %v7509 = vld [vmem:[%s7508] sm:$0xf]
      %v7511 = vunpack.c.l.b16 %v7507
      %v7512 = vpack.c.b16 %v7254, %v7253
      %v7513 = vpack.c.b16 %v7256, %v7255
      %v7514 = vpack.c.b16 %v7258, %v7257
      %v7515 = vpack.c.b16 %v7260, %v7259
      %v7516 = vpack.c.b16 %v7262, %v7261
      %v7517 = vpack.c.b16 %v7264, %v7263
      %v7518 = vpack.c.b16 %v7266, %v7265
      %v7519 = vpack.c.b16 %v7268, %v7267
      %v7520 = vpack.c.b16 %v7270, %v7269
      %v7521 = vpack.c.b16 %v7272, %v7271
      %v7522 = vpack.c.b16 %v7274, %v7273
      %v7523 = vpack.c.b16 %v7511, %v7275
      %v7525 = vsel %vm335, %v7512, 0
      %v7528 = vsel %vm335, %v7513, 0
      %v7531 = vsel %vm335, %v7514, 0
      %v7534 = vsel %vm335, %v7515, 0
      %v7537 = vsel %vm335, %v7516, 0
      %v7540 = vsel %vm335, %v7517, 0
      %v7543 = vsel %vm335, %v7518, 0
      %v7546 = vsel %vm335, %v7519, 0
      %v7549 = vsel %vm335, %v7520, 0
      %v7552 = vsel %vm335, %v7521, 0
      %v7555 = vsel %vm335, %v7522, 0
      %v7558 = vsel %vm335, %v7523, 0
      %v7561 = vsel %vm1287, %v7509, 0
      %7563 = vmatprep.subr.bf16.mxu0 0
      %7564 = vmatpush1.bf16.msra.mxu0 %v7561
      %7565 = vmatprep.subr.bf16.mxu0 0
      %7566 = vmatpush1.bf16.msra.mxu0 0
      %7567 = vmatprep.subr.bf16.mxu0 0
      %7568 = vmatpush1.bf16.msra.mxu0 0
      %7569 = vmatprep.subr.bf16.mxu0 0
      %7570 = vmatpush1.bf16.msra.mxu0 0
      %7571 = vmatprep.subr.bf16.mxu0 0
      %7572 = vmatpush1.bf16.msra.mxu0 0
      %7573 = vmatprep.subr.bf16.mxu0 0
      %7574 = vmatpush1.bf16.msra.mxu0 0
      %7575 = vmatprep.subr.bf16.mxu0 0
      %7576 = vmatpush1.bf16.msra.mxu0 0
      %7577 = vmatprep.subr.bf16.mxu0 0
      %7578 = vmatpush1.bf16.msra.mxu0 0
      %7579 = vmatprep.subr.bf16.mxu0 0
      %7580 = vmatpush1.bf16.msra.mxu0 0
      %7581 = vmatprep.subr.bf16.mxu0 0
      %7582 = vmatpush1.bf16.msra.mxu0 0
      %7583 = vmatprep.subr.bf16.mxu0 0
      %7584 = vmatpush1.bf16.msra.mxu0 0
      %7585 = vmatprep.subr.bf16.mxu0 0
      %7586 = vmatpush1.bf16.msra.mxu0 0
      %7587 = vmatprep.subr.bf16.mxu0 0
      %7588 = vmatpush1.bf16.msra.mxu0 0
      %7589 = vmatprep.subr.bf16.mxu0 0
      %7590 = vmatpush1.bf16.msra.mxu0 0
      %7591 = vmatprep.subr.bf16.mxu0 0
      %7592 = vmatpush1.bf16.msra.mxu0 0
      %7593 = vmatprep.subr.bf16.mxu0 0
      %7594 = vmatpush1.bf16.msra.mxu0 0
      %7595 = vmatprep.mubr.bf16.mxu0 0
      %7596 = vmatmul.mubr.bf16.gmra.mrb[0].mxu0 %v7525
      %v7597 = vpop.f32.mrb[0].mxu0
      %v7598 = vadd.f32 0.0, %v7597
      %v7599 = vpop.f32.mrb[0].mxu0
      %v7600 = vpop.f32.mrb[0].mxu0
      %v7601 = vadd.f32 0.0, %v7600
      %v7602 = vpop.f32.mrb[0].mxu0
      %7603 = vmatprep.mubr.bf16.mxu0 0
      %7604 = vmatmul.mubr.bf16.gmra.mrb[0].mxu0 %v7528
      %v7605 = vpop.f32.mrb[0].mxu0
      %v7606 = vadd.f32 0.0, %v7605
      %v7607 = vpop.f32.mrb[0].mxu0
      %v7608 = vpop.f32.mrb[0].mxu0
      %v7609 = vadd.f32 0.0, %v7608
      %v7610 = vpop.f32.mrb[0].mxu0
      %7611 = vmatprep.mubr.bf16.mxu0 0
      %7612 = vmatmul.mubr.bf16.gmra.mrb[0].mxu0 %v7531
      %v7613 = vpop.f32.mrb[0].mxu0
      %v7614 = vadd.f32 0.0, %v7613
      %v7615 = vpop.f32.mrb[0].mxu0
      %v7616 = vpop.f32.mrb[0].mxu0
      %v7617 = vadd.f32 0.0, %v7616
      %v7618 = vpop.f32.mrb[0].mxu0
      %7619 = vmatprep.mubr.bf16.mxu0 0
      %7620 = vmatmul.mubr.bf16.gmra.mrb[0].mxu0 %v7534
      %v7621 = vpop.f32.mrb[0].mxu0
      %v7622 = vadd.f32 0.0, %v7621
      %v7623 = vpop.f32.mrb[0].mxu0
      %v7624 = vpop.f32.mrb[0].mxu0
      %v7625 = vadd.f32 0.0, %v7624
      %v7626 = vpop.f32.mrb[0].mxu0
      %7627 = vmatprep.mubr.bf16.mxu0 0
      %7628 = vmatmul.mubr.bf16.gmra.mrb[0].mxu0 %v7537
      %v7629 = vpop.f32.mrb[0].mxu0
      %v7630 = vadd.f32 0.0, %v7629
      %v7631 = vpop.f32.mrb[0].mxu0
      %v7632 = vpop.f32.mrb[0].mxu0
      %v7633 = vadd.f32 0.0, %v7632
      %v7634 = vpop.f32.mrb[0].mxu0
      %7635 = vmatprep.mubr.bf16.mxu0 0
      %7636 = vmatmul.mubr.bf16.gmra.mrb[0].mxu0 %v7540
      %v7637 = vpop.f32.mrb[0].mxu0
      %v7638 = vadd.f32 0.0, %v7637
      %v7639 = vpop.f32.mrb[0].mxu0
      %v7640 = vpop.f32.mrb[0].mxu0
      %v7641 = vadd.f32 0.0, %v7640
      %v7642 = vpop.f32.mrb[0].mxu0
      %7643 = vmatprep.mubr.bf16.mxu0 0
      %7644 = vmatmul.mubr.bf16.gmra.mrb[0].mxu0 %v7543
      %v7645 = vpop.f32.mrb[0].mxu0
      %v7646 = vadd.f32 0.0, %v7645
      %v7647 = vpop.f32.mrb[0].mxu0
      %v7648 = vpop.f32.mrb[0].mxu0
      %v7649 = vadd.f32 0.0, %v7648
      %v7650 = vpop.f32.mrb[0].mxu0
      %7651 = vmatprep.mubr.bf16.mxu0 0
      %7652 = vmatmul.mubr.bf16.gmra.mrb[0].mxu0 %v7546
      %v7653 = vpop.f32.mrb[0].mxu0
      %v7654 = vadd.f32 0.0, %v7653
      %v7655 = vpop.f32.mrb[0].mxu0
      %v7656 = vpop.f32.mrb[0].mxu0
      %v7657 = vadd.f32 0.0, %v7656
      %v7658 = vpop.f32.mrb[0].mxu0
      %7659 = vmatprep.mubr.bf16.mxu0 0
      %7660 = vmatmul.mubr.bf16.gmra.mrb[0].mxu0 %v7549
      %v7661 = vpop.f32.mrb[0].mxu0
      %v7662 = vadd.f32 0.0, %v7661
      %v7663 = vpop.f32.mrb[0].mxu0
      %v7664 = vpop.f32.mrb[0].mxu0
      %v7665 = vadd.f32 0.0, %v7664
      %v7666 = vpop.f32.mrb[0].mxu0
      %7667 = vmatprep.mubr.bf16.mxu0 0
      %7668 = vmatmul.mubr.bf16.gmra.mrb[0].mxu0 %v7552
      %v7669 = vpop.f32.mrb[0].mxu0
      %v7670 = vadd.f32 0.0, %v7669
      %v7671 = vpop.f32.mrb[0].mxu0
      %v7672 = vpop.f32.mrb[0].mxu0
      %v7673 = vadd.f32 0.0, %v7672
      %v7674 = vpop.f32.mrb[0].mxu0
      %7675 = vmatprep.mubr.bf16.mxu0 0
      %7676 = vmatmul.mubr.bf16.gmra.mrb[0].mxu0 %v7555
      %v7677 = vpop.f32.mrb[0].mxu0
      %v7678 = vadd.f32 0.0, %v7677
      %v7679 = vpop.f32.mrb[0].mxu0
      %v7680 = vpop.f32.mrb[0].mxu0
      %v7681 = vadd.f32 0.0, %v7680
      %v7682 = vpop.f32.mrb[0].mxu0
      %7683 = vmatprep.mubr.bf16.mxu0 0
      %7684 = vmatmul.mubr.bf16.gmra.mrb[0].mxu0 %v7558
      %v7685 = vpop.f32.mrb[0].mxu0
      %v7686 = vadd.f32 0.0, %v7685
      %v7687 = vpop.f32.mrb[0].mxu0
      %v7688 = vpop.f32.mrb[0].mxu0
      %v7689 = vadd.f32 0.0, %v7688
      %v7690 = vpop.f32.mrb[0].mxu0
      %7691 = vdwg.mxu0
      %v7692 = vadd.f32 %v7483, %v7598
      %v7693 = vadd.f32 %v7484, %v7601
      %v7694 = vadd.f32 %v7485, %v7606
      %v7695 = vadd.f32 %v7486, %v7609
      %v7696 = vadd.f32 %v7487, %v7614
      %v7697 = vadd.f32 %v7488, %v7617
      %v7698 = vadd.f32 %v7489, %v7622
      %v7699 = vadd.f32 %v7490, %v7625
      %v7700 = vadd.f32 %v7491, %v7630
      %v7701 = vadd.f32 %v7492, %v7633
      %v7702 = vadd.f32 %v7493, %v7638
      %v7703 = vadd.f32 %v7494, %v7641
      %v7704 = vadd.f32 %v7495, %v7646
      %v7705 = vadd.f32 %v7496, %v7649
      %v7706 = vadd.f32 %v7497, %v7654
      %v7707 = vadd.f32 %v7498, %v7657
      %v7708 = vadd.f32 %v7499, %v7662
      %v7709 = vadd.f32 %v7500, %v7665
      %v7710 = vadd.f32 %v7501, %v7670
      %v7711 = vadd.f32 %v7502, %v7673
      %v7712 = vadd.f32 %v7503, %v7678
      %v7713 = vadd.f32 %v7504, %v7681
      %v7714 = vadd.f32 %v7505, %v7686
      %v7715 = vadd.f32 %v7506, %v7689
      %v7716 = vld [vmem:[#allocation3 + $0x48] sm:$0xe]
      %v7717 = vld [vmem:[#allocation3 + $0x4c] sm:$0xf]
      %v7718 = vld [vmem:[#allocation3 + $0x50] sm:$0xf]
      %v7719 = vld [vmem:[#allocation3 + $0x54] sm:$0xf]
      %v7720 = vld [vmem:[#allocation3 + $0x58] sm:$0xf]
      %v7721 = vld [vmem:[#allocation3 + $0x5c] sm:$0xf]
      %v7722 = vld [vmem:[#allocation3 + $0x60] sm:$0xf]
      %v7723 = vld [vmem:[#allocation3 + $0x64] sm:$0xf]
      %v7724 = vld [vmem:[#allocation3 + $0x68] sm:$0xf]
      %v7725 = vld [vmem:[#allocation3 + $0x6c] sm:$0xf]
      %v7726 = vld [vmem:[#allocation3 + $0x70] sm:$0xf]
      %v7727 = vld [vmem:[#allocation3 + $0x74] sm:$0xf]
      %v7728 = vld [vmem:[#allocation3 + $0x78] sm:$0xf]
      %v7729 = vld [vmem:[#allocation3 + $0x7c] sm:$0xf]
      %v7730 = vld [vmem:[#allocation3 + $0x80] sm:$0xf]
      %v7731 = vld [vmem:[#allocation3 + $0x84] sm:$0xf]
      %v7732 = vld [vmem:[#allocation3 + $0x88] sm:$0xf]
      %v7733 = vld [vmem:[#allocation3 + $0x8c] sm:$0xf]
      %v7734 = vld [vmem:[#allocation3 + $0x90] sm:$0xf]
      %v7735 = vld [vmem:[#allocation3 + $0x94] sm:$0xf]
      %v7736 = vld [vmem:[#allocation3 + $0x98] sm:$0xf]
      %v7737 = vld [vmem:[#allocation3 + $0x9c] sm:$0xf]
      %v7738 = vld [vmem:[#allocation3 + $0xa0] sm:$0xf]
      %v7739 = vld [vmem:[#allocation3 + $0xa4] sm:$0xf]
      %v7740 = vld [vmem:[#allocation3 + $0xa8] sm:$0x1]
      %s7741 = scalar_lea.vmem %s6, 32
      %v7742 = vld [vmem:[%s7741] sm:$0xf]
      %v7768 = vunpack.c.l.b16 %v7716
      %v7769 = vunpack.c.l.b16 %v7717
      %v7770 = vunpack.c.l.b16 %v7718
      %v7771 = vunpack.c.l.b16 %v7719
      %v7772 = vunpack.c.l.b16 %v7720
      %v7773 = vunpack.c.l.b16 %v7721
      %v7774 = vunpack.c.l.b16 %v7722
      %v7775 = vunpack.c.l.b16 %v7723
      %v7776 = vunpack.c.l.b16 %v7724
      %v7777 = vunpack.c.l.b16 %v7725
      %v7778 = vunpack.c.l.b16 %v7726
      %v7779 = vunpack.c.l.b16 %v7727
      %v7780 = vunpack.c.l.b16 %v7728
      %v7781 = vunpack.c.l.b16 %v7729
      %v7782 = vunpack.c.l.b16 %v7730
      %v7783 = vunpack.c.l.b16 %v7731
      %v7784 = vunpack.c.l.b16 %v7732
      %v7785 = vunpack.c.l.b16 %v7733
      %v7786 = vunpack.c.l.b16 %v7734
      %v7787 = vunpack.c.l.b16 %v7735
      %v7788 = vunpack.c.l.b16 %v7736
      %v7789 = vunpack.c.l.b16 %v7737
      %v7790 = vunpack.c.l.b16 %v7738
      %v7791 = vunpack.c.l.b16 %v7739
      %v7792 = vunpack.c.l.b16 %v7740
      %v7793 = vpack.c.b16 %v7769, %v7768
      %v7794 = vpack.c.b16 %v7771, %v7770
      %v7795 = vpack.c.b16 %v7773, %v7772
      %v7796 = vpack.c.b16 %v7775, %v7774
      %v7797 = vpack.c.b16 %v7777, %v7776
      %v7798 = vpack.c.b16 %v7779, %v7778
      %v7799 = vpack.c.b16 %v7781, %v7780
      %v7800 = vpack.c.b16 %v7783, %v7782
      %v7801 = vpack.c.b16 %v7785, %v7784
      %v7802 = vpack.c.b16 %v7787, %v7786
      %v7803 = vpack.c.b16 %v7789, %v7788
      %v7804 = vpack.c.b16 %v7791, %v7790
      %v7805 = vpack.c.b16 %v7792, %v7792
      %v7806 = vrot.slane %v7793, 1
      %v7807 = vrot.slane %v7794, 1
      %v7808 = vsel %vm6159, %v7806, %v7807
      %v7809 = vrot.slane %v7795, 1
      %v7810 = vsel %vm6159, %v7807, %v7809
      %v7811 = vrot.slane %v7796, 1
      %v7812 = vsel %vm6159, %v7809, %v7811
      %v7813 = vrot.slane %v7797, 1
      %v7814 = vsel %vm6159, %v7811, %v7813
      %v7815 = vrot.slane %v7798, 1
      %v7816 = vsel %vm6159, %v7813, %v7815
      %v7817 = vrot.slane %v7799, 1
      %v7818 = vsel %vm6159, %v7815, %v7817
      %v7819 = vrot.slane %v7800, 1
      %v7820 = vsel %vm6159, %v7817, %v7819
      %v7821 = vrot.slane %v7801, 1
      %v7822 = vsel %vm6159, %v7819, %v7821
      %v7823 = vrot.slane %v7802, 1
      %v7824 = vsel %vm6159, %v7821, %v7823
      %v7825 = vrot.slane %v7803, 1
      %v7826 = vsel %vm6159, %v7823, %v7825
      %v7827 = vrot.slane %v7804, 1
      %v7828 = vsel %vm6159, %v7825, %v7827
      %v7829 = vrot.slane %v7805, 1
      %v7830 = vsel %vm6159, %v7827, %v7829
      %v7832 = vsel %vm335, %v7808, 0
      %v7835 = vsel %vm335, %v7810, 0
      %v7838 = vsel %vm335, %v7812, 0
      %v7841 = vsel %vm335, %v7814, 0
      %v7844 = vsel %vm335, %v7816, 0
      %v7847 = vsel %vm335, %v7818, 0
      %v7850 = vsel %vm335, %v7820, 0
      %v7853 = vsel %vm335, %v7822, 0
      %v7856 = vsel %vm335, %v7824, 0
      %v7859 = vsel %vm335, %v7826, 0
      %v7862 = vsel %vm335, %v7828, 0
      %v7865 = vsel %vm335, %v7830, 0
      %v7868 = vsel %vm1287, %v7742, 0
      %7870 = vmatprep.subr.bf16.mxu0 0
      %7871 = vmatpush1.bf16.msra.mxu0 %v7868
      %7872 = vmatprep.subr.bf16.mxu0 0
      %7873 = vmatpush1.bf16.msra.mxu0 0
      %7874 = vmatprep.subr.bf16.mxu0 0
      %7875 = vmatpush1.bf16.msra.mxu0 0
      %7876 = vmatprep.subr.bf16.mxu0 0
      %7877 = vmatpush1.bf16.msra.mxu0 0
      %7878 = vmatprep.subr.bf16.mxu0 0
      %7879 = vmatpush1.bf16.msra.mxu0 0
      %7880 = vmatprep.subr.bf16.mxu0 0
      %7881 = vmatpush1.bf16.msra.mxu0 0
      %7882 = vmatprep.subr.bf16.mxu0 0
      %7883 = vmatpush1.bf16.msra.mxu0 0
      %7884 = vmatprep.subr.bf16.mxu0 0
      %7885 = vmatpush1.bf16.msra.mxu0 0
      %7886 = vmatprep.subr.bf16.mxu0 0
      %7887 = vmatpush1.bf16.msra.mxu0 0
      %7888 = vmatprep.subr.bf16.mxu0 0
      %7889 = vmatpush1.bf16.msra.mxu0 0
      %7890 = vmatprep.subr.bf16.mxu0 0
      %7891 = vmatpush1.bf16.msra.mxu0 0
      %7892 = vmatprep.subr.bf16.mxu0 0
      %7893 = vmatpush1.bf16.msra.mxu0 0
      %7894 = vmatprep.subr.bf16.mxu0 0
      %7895 = vmatpush1.bf16.msra.mxu0 0
      %7896 = vmatprep.subr.bf16.mxu0 0
      %7897 = vmatpush1.bf16.msra.mxu0 0
      %7898 = vmatprep.subr.bf16.mxu0 0
      %7899 = vmatpush1.bf16.msra.mxu0 0
      %7900 = vmatprep.subr.bf16.mxu0 0
      %7901 = vmatpush1.bf16.msra.mxu0 0
      %7902 = vmatprep.mubr.bf16.mxu0 0
      %7903 = vmatmul.mubr.bf16.gmra.mrb[0].mxu0 %v7832
      %v7904 = vpop.f32.mrb[0].mxu0
      %v7905 = vadd.f32 0.0, %v7904
      %v7906 = vpop.f32.mrb[0].mxu0
      %v7907 = vpop.f32.mrb[0].mxu0
      %v7908 = vadd.f32 0.0, %v7907
      %v7909 = vpop.f32.mrb[0].mxu0
      %7910 = vmatprep.mubr.bf16.mxu0 0
      %7911 = vmatmul.mubr.bf16.gmra.mrb[0].mxu0 %v7835
      %v7912 = vpop.f32.mrb[0].mxu0
      %v7913 = vadd.f32 0.0, %v7912
      %v7914 = vpop.f32.mrb[0].mxu0
      %v7915 = vpop.f32.mrb[0].mxu0
      %v7916 = vadd.f32 0.0, %v7915
      %v7917 = vpop.f32.mrb[0].mxu0
      %7918 = vmatprep.mubr.bf16.mxu0 0
      %7919 = vmatmul.mubr.bf16.gmra.mrb[0].mxu0 %v7838
      %v7920 = vpop.f32.mrb[0].mxu0
      %v7921 = vadd.f32 0.0, %v7920
      %v7922 = vpop.f32.mrb[0].mxu0
      %v7923 = vpop.f32.mrb[0].mxu0
      %v7924 = vadd.f32 0.0, %v7923
      %v7925 = vpop.f32.mrb[0].mxu0
      %7926 = vmatprep.mubr.bf16.mxu0 0
      %7927 = vmatmul.mubr.bf16.gmra.mrb[0].mxu0 %v7841
      %v7928 = vpop.f32.mrb[0].mxu0
      %v7929 = vadd.f32 0.0, %v7928
      %v7930 = vpop.f32.mrb[0].mxu0
      %v7931 = vpop.f32.mrb[0].mxu0
      %v7932 = vadd.f32 0.0, %v7931
      %v7933 = vpop.f32.mrb[0].mxu0
      %7934 = vmatprep.mubr.bf16.mxu0 0
      %7935 = vmatmul.mubr.bf16.gmra.mrb[0].mxu0 %v7844
      %v7936 = vpop.f32.mrb[0].mxu0
      %v7937 = vadd.f32 0.0, %v7936
      %v7938 = vpop.f32.mrb[0].mxu0
      %v7939 = vpop.f32.mrb[0].mxu0
      %v7940 = vadd.f32 0.0, %v7939
      %v7941 = vpop.f32.mrb[0].mxu0
      %7942 = vmatprep.mubr.bf16.mxu0 0
      %7943 = vmatmul.mubr.bf16.gmra.mrb[0].mxu0 %v7847
      %v7944 = vpop.f32.mrb[0].mxu0
      %v7945 = vadd.f32 0.0, %v7944
      %v7946 = vpop.f32.mrb[0].mxu0
      %v7947 = vpop.f32.mrb[0].mxu0
      %v7948 = vadd.f32 0.0, %v7947
      %v7949 = vpop.f32.mrb[0].mxu0
      %7950 = vmatprep.mubr.bf16.mxu0 0
      %7951 = vmatmul.mubr.bf16.gmra.mrb[0].mxu0 %v7850
      %v7952 = vpop.f32.mrb[0].mxu0
      %v7953 = vadd.f32 0.0, %v7952
      %v7954 = vpop.f32.mrb[0].mxu0
      %v7955 = vpop.f32.mrb[0].mxu0
      %v7956 = vadd.f32 0.0, %v7955
      %v7957 = vpop.f32.mrb[0].mxu0
      %7958 = vmatprep.mubr.bf16.mxu0 0
      %7959 = vmatmul.mubr.bf16.gmra.mrb[0].mxu0 %v7853
      %v7960 = vpop.f32.mrb[0].mxu0
      %v7961 = vadd.f32 0.0, %v7960
      %v7962 = vpop.f32.mrb[0].mxu0
      %v7963 = vpop.f32.mrb[0].mxu0
      %v7964 = vadd.f32 0.0, %v7963
      %v7965 = vpop.f32.mrb[0].mxu0
      %7966 = vmatprep.mubr.bf16.mxu0 0
      %7967 = vmatmul.mubr.bf16.gmra.mrb[0].mxu0 %v7856
      %v7968 = vpop.f32.mrb[0].mxu0
      %v7969 = vadd.f32 0.0, %v7968
      %v7970 = vpop.f32.mrb[0].mxu0
      %v7971 = vpop.f32.mrb[0].mxu0
      %v7972 = vadd.f32 0.0, %v7971
      %v7973 = vpop.f32.mrb[0].mxu0
      %7974 = vmatprep.mubr.bf16.mxu0 0
      %7975 = vmatmul.mubr.bf16.gmra.mrb[0].mxu0 %v7859
      %v7976 = vpop.f32.mrb[0].mxu0
      %v7977 = vadd.f32 0.0, %v7976
      %v7978 = vpop.f32.mrb[0].mxu0
      %v7979 = vpop.f32.mrb[0].mxu0
      %v7980 = vadd.f32 0.0, %v7979
      %v7981 = vpop.f32.mrb[0].mxu0
      %7982 = vmatprep.mubr.bf16.mxu0 0
      %7983 = vmatmul.mubr.bf16.gmra.mrb[0].mxu0 %v7862
      %v7984 = vpop.f32.mrb[0].mxu0
      %v7985 = vadd.f32 0.0, %v7984
      %v7986 = vpop.f32.mrb[0].mxu0
      %v7987 = vpop.f32.mrb[0].mxu0
      %v7988 = vadd.f32 0.0, %v7987
      %v7989 = vpop.f32.mrb[0].mxu0
      %7990 = vmatprep.mubr.bf16.mxu0 0
      %7991 = vmatmul.mubr.bf16.gmra.mrb[0].mxu0 %v7865
      %v7992 = vpop.f32.mrb[0].mxu0
      %v7993 = vadd.f32 0.0, %v7992
      %v7994 = vpop.f32.mrb[0].mxu0
      %v7995 = vpop.f32.mrb[0].mxu0
      %v7996 = vadd.f32 0.0, %v7995
      %v7997 = vpop.f32.mrb[0].mxu0
      %7998 = vdwg.mxu0
      %v7999 = vadd.f32 %v7692, %v7905
      %v8000 = vadd.f32 %v7693, %v7908
      %v8001 = vadd.f32 %v7694, %v7913
      %v8002 = vadd.f32 %v7695, %v7916
      %v8003 = vadd.f32 %v7696, %v7921
      %v8004 = vadd.f32 %v7697, %v7924
      %v8005 = vadd.f32 %v7698, %v7929
      %v8006 = vadd.f32 %v7699, %v7932
      %v8007 = vadd.f32 %v7700, %v7937
      %v8008 = vadd.f32 %v7701, %v7940
      %v8009 = vadd.f32 %v7702, %v7945
      %v8010 = vadd.f32 %v7703, %v7948
      %v8011 = vadd.f32 %v7704, %v7953
      %v8012 = vadd.f32 %v7705, %v7956
      %v8013 = vadd.f32 %v7706, %v7961
      %v8014 = vadd.f32 %v7707, %v7964
      %v8015 = vadd.f32 %v7708, %v7969
      %v8016 = vadd.f32 %v7709, %v7972
      %v8017 = vadd.f32 %v7710, %v7977
      %v8018 = vadd.f32 %v7711, %v7980
      %v8019 = vadd.f32 %v7712, %v7985
      %v8020 = vadd.f32 %v7713, %v7988
      %v8021 = vadd.f32 %v7714, %v7993
      %v8022 = vadd.f32 %v7715, %v7996
      %v8024 = vlaneseq
      %v8025 = vshrl.u32 %v8024, 7
      %v8026 = vsub.s32 0, %v8025
      %v8027 = vrot.slane %v310, %v8026
      %v8029 = vadd.f32 %v7999, %v8027
      %v8030 = vadd.f32 %v8000, %v8027
      %v8031 = vadd.f32 %v8001, %v8027
      %v8032 = vadd.f32 %v8002, %v8027
      %v8033 = vadd.f32 %v8003, %v8027
      %v8034 = vadd.f32 %v8004, %v8027
      %v8035 = vadd.f32 %v8005, %v8027
      %v8036 = vadd.f32 %v8006, %v8027
      %v8037 = vadd.f32 %v8007, %v8027
      %v8038 = vadd.f32 %v8008, %v8027
      %v8039 = vadd.f32 %v8009, %v8027
      %v8040 = vadd.f32 %v8010, %v8027
      %v8041 = vadd.f32 %v8011, %v8027
      %v8042 = vadd.f32 %v8012, %v8027
      %v8043 = vadd.f32 %v8013, %v8027
      %v8044 = vadd.f32 %v8014, %v8027
      %v8045 = vadd.f32 %v8015, %v8027
      %v8046 = vadd.f32 %v8016, %v8027
      %v8047 = vadd.f32 %v8017, %v8027
      %v8048 = vadd.f32 %v8018, %v8027
      %v8049 = vadd.f32 %v8019, %v8027
      %v8050 = vadd.f32 %v8020, %v8027
      %v8051 = vadd.f32 %v8021, %v8027
      %v8052 = vadd.f32 %v8022, %v8027
      %v8053 = vmax.f32 %v8029, 0.0
      %v8054 = vmax.f32 %v8030, 0.0
      %v8055 = vmax.f32 %v8031, 0.0
      %v8056 = vmax.f32 %v8032, 0.0
      %v8057 = vmax.f32 %v8033, 0.0
      %v8058 = vmax.f32 %v8034, 0.0
      %v8059 = vmax.f32 %v8035, 0.0
      %v8060 = vmax.f32 %v8036, 0.0
      %v8061 = vmax.f32 %v8037, 0.0
      %v8062 = vmax.f32 %v8038, 0.0
      %v8063 = vmax.f32 %v8039, 0.0
      %v8064 = vmax.f32 %v8040, 0.0
      %v8065 = vmax.f32 %v8041, 0.0
      %v8066 = vmax.f32 %v8042, 0.0
      %v8067 = vmax.f32 %v8043, 0.0
      %v8068 = vmax.f32 %v8044, 0.0
      %v8069 = vmax.f32 %v8045, 0.0
      %v8070 = vmax.f32 %v8046, 0.0
      %v8071 = vmax.f32 %v8047, 0.0
      %v8072 = vmax.f32 %v8048, 0.0
      %v8073 = vmax.f32 %v8049, 0.0
      %v8074 = vmax.f32 %v8050, 0.0
      %v8075 = vmax.f32 %v8051, 0.0
      %v8076 = vmax.f32 %v8052, 0.0
      %v8077 = vld [vmem:[#allocation2 + $0x60] sm:$0xff]
      %v8078 = vld [vmem:[#allocation2 + $0x68] sm:$0xff]
      %v8079 = vld [vmem:[#allocation2 + $0x70] sm:$0xff]
      %v8080 = vld [vmem:[#allocation2 + $0x78] sm:$0xff]
      %v8081 = vld [vmem:[#allocation2 + $0x80] sm:$0xff]
      %v8082 = vld [vmem:[#allocation2 + $0x88] sm:$0xff]
      %v8083 = vld [vmem:[#allocation2 + $0x90] sm:$0xff]
      %v8084 = vld [vmem:[#allocation2 + $0x98] sm:$0xff]
      %v8085 = vld [vmem:[#allocation2 + $0xa0] sm:$0xff]
      %v8086 = vld [vmem:[#allocation2 + $0xa8] sm:$0xff]
      %v8087 = vld [vmem:[#allocation2 + $0xb0] sm:$0xff]
      %v8088 = vld [vmem:[#allocation2 + $0xb8] sm:$0xff]
      %v8089 = vld [vmem:[#allocation2 + $0xc0] sm:$0xff]
      %v8090 = vld [vmem:[#allocation2 + $0xc8] sm:$0xff]
      %v8091 = vld [vmem:[#allocation2 + $0xd0] sm:$0xff]
      %v8092 = vld [vmem:[#allocation2 + $0xd8] sm:$0xff]
      %v8093 = vld [vmem:[#allocation2 + $0xe0] sm:$0xff]
      %v8094 = vld [vmem:[#allocation2 + $0xe8] sm:$0xff]
      %v8095 = vld [vmem:[#allocation2 + $0xf0] sm:$0xff]
      %v8096 = vld [vmem:[#allocation2 + $0xf8] sm:$0xff]
      %v8097 = vld [vmem:[#allocation2 + $0x100] sm:$0xff]
      %v8098 = vld [vmem:[#allocation2 + $0x108] sm:$0xff]
      %v8099 = vld [vmem:[#allocation2 + $0x110] sm:$0xff]
      %v8100 = vld [vmem:[#allocation2 + $0x118] sm:$0xff]
      %v8101 = vadd.f32 %v8053, %v8077
      %v8102 = vadd.f32 %v8054, %v8078
      %v8103 = vadd.f32 %v8055, %v8079
      %v8104 = vadd.f32 %v8056, %v8080
      %v8105 = vadd.f32 %v8057, %v8081
      %v8106 = vadd.f32 %v8058, %v8082
      %v8107 = vadd.f32 %v8059, %v8083
      %v8108 = vadd.f32 %v8060, %v8084
      %v8109 = vadd.f32 %v8061, %v8085
      %v8110 = vadd.f32 %v8062, %v8086
      %v8111 = vadd.f32 %v8063, %v8087
      %v8112 = vadd.f32 %v8064, %v8088
      %v8113 = vadd.f32 %v8065, %v8089
      %v8114 = vadd.f32 %v8066, %v8090
      %v8115 = vadd.f32 %v8067, %v8091
      %v8116 = vadd.f32 %v8068, %v8092
      %v8117 = vadd.f32 %v8069, %v8093
      %v8118 = vadd.f32 %v8070, %v8094
      %v8119 = vadd.f32 %v8071, %v8095
      %v8120 = vadd.f32 %v8072, %v8096
      %v8121 = vadd.f32 %v8073, %v8097
      %v8122 = vadd.f32 %v8074, %v8098
      %v8123 = vadd.f32 %v8075, %v8099
      %v8124 = vadd.f32 %v8076, %v8100
      %v8125 = vpack.c.bf16 %v8102, %v8101
      %v8126 = vpack.c.bf16 %v8104, %v8103
      %v8127 = vpack.c.bf16 %v8106, %v8105
      %v8128 = vpack.c.bf16 %v8108, %v8107
      %v8129 = vpack.c.bf16 %v8110, %v8109
      %v8130 = vpack.c.bf16 %v8112, %v8111
      %v8131 = vpack.c.bf16 %v8114, %v8113
      %v8132 = vpack.c.bf16 %v8116, %v8115
      %v8133 = vpack.c.bf16 %v8118, %v8117
      %v8134 = vpack.c.bf16 %v8120, %v8119
      %v8135 = vpack.c.bf16 %v8122, %v8121
      %v8136 = vpack.c.bf16 %v8124, %v8123
      %v8149 = vunpack.c.l.b16 %v8125
      %v8150 = vunpack.c.h.b16 %v8125
      %v8151 = vunpack.c.l.b16 %v8126
      %v8152 = vunpack.c.h.b16 %v8126
      %v8153 = vunpack.c.l.b16 %v8127
      %v8154 = vunpack.c.h.b16 %v8127
      %v8155 = vunpack.c.l.b16 %v8128
      %v8156 = vunpack.c.h.b16 %v8128
      %v8157 = vunpack.c.l.b16 %v8129
      %v8158 = vunpack.c.h.b16 %v8129
      %v8159 = vunpack.c.l.b16 %v8130
      %v8160 = vunpack.c.h.b16 %v8130
      %v8161 = vunpack.c.l.b16 %v8131
      %v8162 = vunpack.c.h.b16 %v8131
      %v8163 = vunpack.c.l.b16 %v8132
      %v8164 = vunpack.c.h.b16 %v8132
      %v8165 = vunpack.c.l.b16 %v8133
      %v8166 = vunpack.c.h.b16 %v8133
      %v8167 = vunpack.c.l.b16 %v8134
      %v8168 = vunpack.c.h.b16 %v8134
      %v8169 = vunpack.c.l.b16 %v8135
      %v8170 = vunpack.c.h.b16 %v8135
      %v8171 = vunpack.c.l.b16 %v8136
      %v8172 = vunpack.c.h.b16 %v8136
      %v8173 = vpack.c.b16 %v8149, %v8149
      %v8174 = vpack.c.b16 %v8150, %v8150
      %v8175 = vpack.c.b16 %v8151, %v8151
      %v8176 = vpack.c.b16 %v8152, %v8152
      %v8177 = vpack.c.b16 %v8153, %v8153
      %v8178 = vpack.c.b16 %v8154, %v8154
      %v8179 = vpack.c.b16 %v8155, %v8155
      %v8180 = vpack.c.b16 %v8156, %v8156
      %v8181 = vpack.c.b16 %v8157, %v8157
      %v8182 = vpack.c.b16 %v8158, %v8158
      %v8183 = vpack.c.b16 %v8159, %v8159
      %v8184 = vpack.c.b16 %v8160, %v8160
      %v8185 = vpack.c.b16 %v8161, %v8161
      %v8186 = vpack.c.b16 %v8162, %v8162
      %v8187 = vpack.c.b16 %v8163, %v8163
      %v8188 = vpack.c.b16 %v8164, %v8164
      %v8189 = vpack.c.b16 %v8165, %v8165
      %v8190 = vpack.c.b16 %v8166, %v8166
      %v8191 = vpack.c.b16 %v8167, %v8167
      %v8192 = vpack.c.b16 %v8168, %v8168
      %v8193 = vpack.c.b16 %v8169, %v8169
      %v8194 = vpack.c.b16 %v8170, %v8170
      %v8195 = vpack.c.b16 %v8171, %v8171
      %v8196 = vpack.c.b16 %v8172, %v8172
      %8221 = vst.msk [vmem:[%s305] sm:$0xf] %vm348, %v8173
      %8222 = vst.msk [vmem:[%s305 + $0x4] sm:$0xf] %vm348, %v8174
      %8223 = vst.msk [vmem:[%s305 + $0x8] sm:$0xf] %vm348, %v8175
      %8224 = vst.msk [vmem:[%s305 + $0xc] sm:$0xf] %vm348, %v8176
      %8225 = vst.msk [vmem:[%s305 + $0x10] sm:$0xf] %vm348, %v8177
      %8226 = vst.msk [vmem:[%s305 + $0x14] sm:$0xf] %vm348, %v8178
      %8227 = vst.msk [vmem:[%s305 + $0x18] sm:$0xf] %vm348, %v8179
      %8228 = vst.msk [vmem:[%s305 + $0x1c] sm:$0xf] %vm348, %v8180
      %8229 = vst.msk [vmem:[%s305 + $0x20] sm:$0xf] %vm348, %v8181
      %8230 = vst.msk [vmem:[%s305 + $0x24] sm:$0xf] %vm348, %v8182
      %8231 = vst.msk [vmem:[%s305 + $0x28] sm:$0xf] %vm348, %v8183
      %8232 = vst.msk [vmem:[%s305 + $0x2c] sm:$0xf] %vm348, %v8184
      %8233 = vst.msk [vmem:[%s305 + $0x30] sm:$0xf] %vm348, %v8185
      %8234 = vst.msk [vmem:[%s305 + $0x34] sm:$0xf] %vm348, %v8186
      %8235 = vst.msk [vmem:[%s305 + $0x38] sm:$0xf] %vm348, %v8187
      %8236 = vst.msk [vmem:[%s305 + $0x3c] sm:$0xf] %vm348, %v8188
      %8237 = vst.msk [vmem:[%s305 + $0x40] sm:$0xf] %vm348, %v8189
      %8238 = vst.msk [vmem:[%s305 + $0x44] sm:$0xf] %vm348, %v8190
      %8239 = vst.msk [vmem:[%s305 + $0x48] sm:$0xf] %vm348, %v8191
      %8240 = vst.msk [vmem:[%s305 + $0x4c] sm:$0xf] %vm348, %v8192
      %8241 = vst.msk [vmem:[%s305 + $0x50] sm:$0xf] %vm348, %v8193
      %8242 = vst.msk [vmem:[%s305 + $0x54] sm:$0xf] %vm348, %v8194
      %8243 = vst.msk [vmem:[%s305 + $0x58] sm:$0xf] %vm348, %v8195
      %8244 = vst.msk [vmem:[%s305 + $0x5c] sm:$0xf] %vm348, %v8196
      %v8245 = vld [vmem:[#allocation3 + $0x74] sm:$0x8]
      %v8246 = vld [vmem:[#allocation3 + $0x78] sm:$0xf]
      %v8247 = vld [vmem:[#allocation3 + $0x7c] sm:$0xf]
      %v8248 = vld [vmem:[#allocation3 + $0x80] sm:$0xf]
      %v8249 = vld [vmem:[#allocation3 + $0x84] sm:$0xf]
      %v8250 = vld [vmem:[#allocation3 + $0x88] sm:$0xf]
      %v8251 = vld [vmem:[#allocation3 + $0x8c] sm:$0xf]
      %v8252 = vld [vmem:[#allocation3 + $0x90] sm:$0xf]
      %v8253 = vld [vmem:[#allocation3 + $0x94] sm:$0xf]
      %v8254 = vld [vmem:[#allocation3 + $0x98] sm:$0xf]
      %v8255 = vld [vmem:[#allocation3 + $0x9c] sm:$0xf]
      %v8256 = vld [vmem:[#allocation3 + $0xa0] sm:$0xf]
      %v8257 = vld [vmem:[#allocation3 + $0xa4] sm:$0xf]
      %v8258 = vld [vmem:[#allocation3 + $0xa8] sm:$0xf]
      %v8259 = vld [vmem:[#allocation3 + $0xac] sm:$0xf]
      %v8260 = vld [vmem:[#allocation3 + $0xb0] sm:$0xf]
      %v8261 = vld [vmem:[#allocation3 + $0xb4] sm:$0xf]
      %v8262 = vld [vmem:[#allocation3 + $0xb8] sm:$0xf]
      %v8263 = vld [vmem:[#allocation3 + $0xbc] sm:$0xf]
      %v8264 = vld [vmem:[#allocation3 + $0xc0] sm:$0xf]
      %v8265 = vld [vmem:[#allocation3 + $0xc4] sm:$0xf]
      %v8266 = vld [vmem:[#allocation3 + $0xc8] sm:$0xf]
      %v8267 = vld [vmem:[#allocation3 + $0xcc] sm:$0xf]
      %v8268 = vld [vmem:[#allocation3 + $0xd0] sm:$0xf]
      %v8269 = vld [vmem:[#allocation3 + $0xd4] sm:$0x7]
      %v8270 = vld [vmem:[%s6] sm:$0xf]
      %v8271 = vld [vmem:[#allocation3 + $0xd4] sm:$0xf]
      %v8272 = vld [vmem:[%s5628] sm:$0xf]
      %v8297 = vunpack.c.l.b16 %v8246
      %v8298 = vunpack.c.l.b16 %v8247
      %v8299 = vunpack.c.l.b16 %v8248
      %v8300 = vunpack.c.l.b16 %v8249
      %v8301 = vunpack.c.l.b16 %v8250
      %v8302 = vunpack.c.l.b16 %v8251
      %v8303 = vunpack.c.l.b16 %v8252
      %v8304 = vunpack.c.l.b16 %v8253
      %v8305 = vunpack.c.l.b16 %v8254
      %v8306 = vunpack.c.l.b16 %v8255
      %v8307 = vunpack.c.l.b16 %v8256
      %v8308 = vunpack.c.l.b16 %v8257
      %v8309 = vunpack.c.l.b16 %v8258
      %v8310 = vunpack.c.l.b16 %v8259
      %v8311 = vunpack.c.l.b16 %v8260
      %v8312 = vunpack.c.l.b16 %v8261
      %v8313 = vunpack.c.l.b16 %v8262
      %v8314 = vunpack.c.l.b16 %v8263
      %v8315 = vunpack.c.l.b16 %v8264
      %v8316 = vunpack.c.l.b16 %v8265
      %v8317 = vunpack.c.l.b16 %v8266
      %v8318 = vunpack.c.l.b16 %v8267
      %v8319 = vunpack.c.l.b16 %v8268
      %v8320 = vunpack.c.l.b16 %v8271
      %v8321 = vpack.c.b16 %v8298, %v8297
      %v8322 = vpack.c.b16 %v8300, %v8299
      %v8323 = vpack.c.b16 %v8302, %v8301
      %v8324 = vpack.c.b16 %v8304, %v8303
      %v8325 = vpack.c.b16 %v8306, %v8305
      %v8326 = vpack.c.b16 %v8308, %v8307
      %v8327 = vpack.c.b16 %v8310, %v8309
      %v8328 = vpack.c.b16 %v8312, %v8311
      %v8329 = vpack.c.b16 %v8314, %v8313
      %v8330 = vpack.c.b16 %v8316, %v8315
      %v8331 = vpack.c.b16 %v8318, %v8317
      %v8332 = vpack.c.b16 %v8320, %v8319
      %v8334 = vsel %vm335, %v8321, 0
      %v8337 = vsel %vm335, %v8322, 0
      %v8340 = vsel %vm335, %v8323, 0
      %v8343 = vsel %vm335, %v8324, 0
      %v8346 = vsel %vm335, %v8325, 0
      %v8349 = vsel %vm335, %v8326, 0
      %v8352 = vsel %vm335, %v8327, 0
      %v8355 = vsel %vm335, %v8328, 0
      %v8358 = vsel %vm335, %v8329, 0
      %v8361 = vsel %vm335, %v8330, 0
      %v8364 = vsel %vm335, %v8331, 0
      %v8367 = vsel %vm335, %v8332, 0
      %v8370 = vsel %vm1287, %v8272, 0
      %8372 = vmatprep.subr.bf16.mxu0 0
      %8373 = vmatpush1.bf16.msra.mxu0 %v8370
      %8374 = vmatprep.subr.bf16.mxu0 0
      %8375 = vmatpush1.bf16.msra.mxu0 0
      %8376 = vmatprep.subr.bf16.mxu0 0
      %8377 = vmatpush1.bf16.msra.mxu0 0
      %8378 = vmatprep.subr.bf16.mxu0 0
      %8379 = vmatpush1.bf16.msra.mxu0 0
      %8380 = vmatprep.subr.bf16.mxu0 0
      %8381 = vmatpush1.bf16.msra.mxu0 0
      %8382 = vmatprep.subr.bf16.mxu0 0
      %8383 = vmatpush1.bf16.msra.mxu0 0
      %8384 = vmatprep.subr.bf16.mxu0 0
      %8385 = vmatpush1.bf16.msra.mxu0 0
      %8386 = vmatprep.subr.bf16.mxu0 0
      %8387 = vmatpush1.bf16.msra.mxu0 0
      %8388 = vmatprep.subr.bf16.mxu0 0
      %8389 = vmatpush1.bf16.msra.mxu0 0
      %8390 = vmatprep.subr.bf16.mxu0 0
      %8391 = vmatpush1.bf16.msra.mxu0 0
      %8392 = vmatprep.subr.bf16.mxu0 0
      %8393 = vmatpush1.bf16.msra.mxu0 0
      %8394 = vmatprep.subr.bf16.mxu0 0
      %8395 = vmatpush1.bf16.msra.mxu0 0
      %8396 = vmatprep.subr.bf16.mxu0 0
      %8397 = vmatpush1.bf16.msra.mxu0 0
      %8398 = vmatprep.subr.bf16.mxu0 0
      %8399 = vmatpush1.bf16.msra.mxu0 0
      %8400 = vmatprep.subr.bf16.mxu0 0
      %8401 = vmatpush1.bf16.msra.mxu0 0
      %8402 = vmatprep.subr.bf16.mxu0 0
      %8403 = vmatpush1.bf16.msra.mxu0 0
      %8404 = vmatprep.mubr.bf16.mxu0 0
      %8405 = vmatmul.mubr.bf16.gmra.mrb[0].mxu0 %v8334
      %v8406 = vpop.f32.mrb[0].mxu0
      %v8407 = vadd.f32 0.0, %v8406
      %v8408 = vpop.f32.mrb[0].mxu0
      %v8409 = vpop.f32.mrb[0].mxu0
      %v8410 = vadd.f32 0.0, %v8409
      %v8411 = vpop.f32.mrb[0].mxu0
      %8412 = vmatprep.mubr.bf16.mxu0 0
      %8413 = vmatmul.mubr.bf16.gmra.mrb[0].mxu0 %v8337
      %v8414 = vpop.f32.mrb[0].mxu0
      %v8415 = vadd.f32 0.0, %v8414
      %v8416 = vpop.f32.mrb[0].mxu0
      %v8417 = vpop.f32.mrb[0].mxu0
      %v8418 = vadd.f32 0.0, %v8417
      %v8419 = vpop.f32.mrb[0].mxu0
      %8420 = vmatprep.mubr.bf16.mxu0 0
      %8421 = vmatmul.mubr.bf16.gmra.mrb[0].mxu0 %v8340
      %v8422 = vpop.f32.mrb[0].mxu0
      %v8423 = vadd.f32 0.0, %v8422
      %v8424 = vpop.f32.mrb[0].mxu0
      %v8425 = vpop.f32.mrb[0].mxu0
      %v8426 = vadd.f32 0.0, %v8425
      %v8427 = vpop.f32.mrb[0].mxu0
      %8428 = vmatprep.mubr.bf16.mxu0 0
      %8429 = vmatmul.mubr.bf16.gmra.mrb[0].mxu0 %v8343
      %v8430 = vpop.f32.mrb[0].mxu0
      %v8431 = vadd.f32 0.0, %v8430
      %v8432 = vpop.f32.mrb[0].mxu0
      %v8433 = vpop.f32.mrb[0].mxu0
      %v8434 = vadd.f32 0.0, %v8433
      %v8435 = vpop.f32.mrb[0].mxu0
      %8436 = vmatprep.mubr.bf16.mxu0 0
      %8437 = vmatmul.mubr.bf16.gmra.mrb[0].mxu0 %v8346
      %v8438 = vpop.f32.mrb[0].mxu0
      %v8439 = vadd.f32 0.0, %v8438
      %v8440 = vpop.f32.mrb[0].mxu0
      %v8441 = vpop.f32.mrb[0].mxu0
      %v8442 = vadd.f32 0.0, %v8441
      %v8443 = vpop.f32.mrb[0].mxu0
      %8444 = vmatprep.mubr.bf16.mxu0 0
      %8445 = vmatmul.mubr.bf16.gmra.mrb[0].mxu0 %v8349
      %v8446 = vpop.f32.mrb[0].mxu0
      %v8447 = vadd.f32 0.0, %v8446
      %v8448 = vpop.f32.mrb[0].mxu0
      %v8449 = vpop.f32.mrb[0].mxu0
      %v8450 = vadd.f32 0.0, %v8449
      %v8451 = vpop.f32.mrb[0].mxu0
      %8452 = vmatprep.mubr.bf16.mxu0 0
      %8453 = vmatmul.mubr.bf16.gmra.mrb[0].mxu0 %v8352
      %v8454 = vpop.f32.mrb[0].mxu0
      %v8455 = vadd.f32 0.0, %v8454
      %v8456 = vpop.f32.mrb[0].mxu0
      %v8457 = vpop.f32.mrb[0].mxu0
      %v8458 = vadd.f32 0.0, %v8457
      %v8459 = vpop.f32.mrb[0].mxu0
      %8460 = vmatprep.mubr.bf16.mxu0 0
      %8461 = vmatmul.mubr.bf16.gmra.mrb[0].mxu0 %v8355
      %v8462 = vpop.f32.mrb[0].mxu0
      %v8463 = vadd.f32 0.0, %v8462
      %v8464 = vpop.f32.mrb[0].mxu0
      %v8465 = vpop.f32.mrb[0].mxu0
      %v8466 = vadd.f32 0.0, %v8465
      %v8467 = vpop.f32.mrb[0].mxu0
      %8468 = vmatprep.mubr.bf16.mxu0 0
      %8469 = vmatmul.mubr.bf16.gmra.mrb[0].mxu0 %v8358
      %v8470 = vpop.f32.mrb[0].mxu0
      %v8471 = vadd.f32 0.0, %v8470
      %v8472 = vpop.f32.mrb[0].mxu0
      %v8473 = vpop.f32.mrb[0].mxu0
      %v8474 = vadd.f32 0.0, %v8473
      %v8475 = vpop.f32.mrb[0].mxu0
      %8476 = vmatprep.mubr.bf16.mxu0 0
      %8477 = vmatmul.mubr.bf16.gmra.mrb[0].mxu0 %v8361
      %v8478 = vpop.f32.mrb[0].mxu0
      %v8479 = vadd.f32 0.0, %v8478
      %v8480 = vpop.f32.mrb[0].mxu0
      %v8481 = vpop.f32.mrb[0].mxu0
      %v8482 = vadd.f32 0.0, %v8481
      %v8483 = vpop.f32.mrb[0].mxu0
      %8484 = vmatprep.mubr.bf16.mxu0 0
      %8485 = vmatmul.mubr.bf16.gmra.mrb[0].mxu0 %v8364
      %v8486 = vpop.f32.mrb[0].mxu0
      %v8487 = vadd.f32 0.0, %v8486
      %v8488 = vpop.f32.mrb[0].mxu0
      %v8489 = vpop.f32.mrb[0].mxu0
      %v8490 = vadd.f32 0.0, %v8489
      %v8491 = vpop.f32.mrb[0].mxu0
      %8492 = vmatprep.mubr.bf16.mxu0 0
      %8493 = vmatmul.mubr.bf16.gmra.mrb[0].mxu0 %v8367
      %v8494 = vpop.f32.mrb[0].mxu0
      %v8495 = vadd.f32 0.0, %v8494
      %v8496 = vpop.f32.mrb[0].mxu0
      %v8497 = vpop.f32.mrb[0].mxu0
      %v8498 = vadd.f32 0.0, %v8497
      %v8499 = vpop.f32.mrb[0].mxu0
      %8500 = vdwg.mxu0
      %v8503 = vunpack.c.l.b16 %v8245
      %v8504 = vunpack.c.l.b16 %v8269
      %v8505 = vpack.c.b16 %v8297, %v8503
      %v8506 = vpack.c.b16 %v8299, %v8298
      %v8507 = vpack.c.b16 %v8301, %v8300
      %v8508 = vpack.c.b16 %v8303, %v8302
      %v8509 = vpack.c.b16 %v8305, %v8304
      %v8510 = vpack.c.b16 %v8307, %v8306
      %v8511 = vpack.c.b16 %v8309, %v8308
      %v8512 = vpack.c.b16 %v8311, %v8310
      %v8513 = vpack.c.b16 %v8313, %v8312
      %v8514 = vpack.c.b16 %v8315, %v8314
      %v8515 = vpack.c.b16 %v8317, %v8316
      %v8516 = vpack.c.b16 %v8319, %v8318
      %v8517 = vpack.c.b16 %v8504, %v8504
      %v8518 = vrot.slane %v8505, 3
      %v8519 = vrot.slane %v8506, 3
      %v8520 = vsel %vm5875, %v8518, %v8519
      %v8521 = vrot.slane %v8507, 3
      %v8522 = vsel %vm5875, %v8519, %v8521
      %v8523 = vrot.slane %v8508, 3
      %v8524 = vsel %vm5875, %v8521, %v8523
      %v8525 = vrot.slane %v8509, 3
      %v8526 = vsel %vm5875, %v8523, %v8525
      %v8527 = vrot.slane %v8510, 3
      %v8528 = vsel %vm5875, %v8525, %v8527
      %v8529 = vrot.slane %v8511, 3
      %v8530 = vsel %vm5875, %v8527, %v8529
      %v8531 = vrot.slane %v8512, 3
      %v8532 = vsel %vm5875, %v8529, %v8531
      %v8533 = vrot.slane %v8513, 3
      %v8534 = vsel %vm5875, %v8531, %v8533
      %v8535 = vrot.slane %v8514, 3
      %v8536 = vsel %vm5875, %v8533, %v8535
      %v8537 = vrot.slane %v8515, 3
      %v8538 = vsel %vm5875, %v8535, %v8537
      %v8539 = vrot.slane %v8516, 3
      %v8540 = vsel %vm5875, %v8537, %v8539
      %v8541 = vrot.slane %v8517, 3
      %v8542 = vsel %vm5875, %v8539, %v8541
      %v8544 = vsel %vm335, %v8520, 0
      %v8547 = vsel %vm335, %v8522, 0
      %v8550 = vsel %vm335, %v8524, 0
      %v8553 = vsel %vm335, %v8526, 0
      %v8556 = vsel %vm335, %v8528, 0
      %v8559 = vsel %vm335, %v8530, 0
      %v8562 = vsel %vm335, %v8532, 0
      %v8565 = vsel %vm335, %v8534, 0
      %v8568 = vsel %vm335, %v8536, 0
      %v8571 = vsel %vm335, %v8538, 0
      %v8574 = vsel %vm335, %v8540, 0
      %v8577 = vsel %vm335, %v8542, 0
      %v8580 = vsel %vm1287, %v8270, 0
      %8582 = vmatprep.subr.bf16.mxu0 0
      %8583 = vmatpush1.bf16.msra.mxu0 %v8580
      %8584 = vmatprep.subr.bf16.mxu0 0
      %8585 = vmatpush1.bf16.msra.mxu0 0
      %8586 = vmatprep.subr.bf16.mxu0 0
      %8587 = vmatpush1.bf16.msra.mxu0 0
      %8588 = vmatprep.subr.bf16.mxu0 0
      %8589 = vmatpush1.bf16.msra.mxu0 0
      %8590 = vmatprep.subr.bf16.mxu0 0
      %8591 = vmatpush1.bf16.msra.mxu0 0
      %8592 = vmatprep.subr.bf16.mxu0 0
      %8593 = vmatpush1.bf16.msra.mxu0 0
      %8594 = vmatprep.subr.bf16.mxu0 0
      %8595 = vmatpush1.bf16.msra.mxu0 0
      %8596 = vmatprep.subr.bf16.mxu0 0
      %8597 = vmatpush1.bf16.msra.mxu0 0
      %8598 = vmatprep.subr.bf16.mxu0 0
      %8599 = vmatpush1.bf16.msra.mxu0 0
      %8600 = vmatprep.subr.bf16.mxu0 0
      %8601 = vmatpush1.bf16.msra.mxu0 0
      %8602 = vmatprep.subr.bf16.mxu0 0
      %8603 = vmatpush1.bf16.msra.mxu0 0
      %8604 = vmatprep.subr.bf16.mxu0 0
      %8605 = vmatpush1.bf16.msra.mxu0 0
      %8606 = vmatprep.subr.bf16.mxu0 0
      %8607 = vmatpush1.bf16.msra.mxu0 0
      %8608 = vmatprep.subr.bf16.mxu0 0
      %8609 = vmatpush1.bf16.msra.mxu0 0
      %8610 = vmatprep.subr.bf16.mxu0 0
      %8611 = vmatpush1.bf16.msra.mxu0 0
      %8612 = vmatprep.subr.bf16.mxu0 0
      %8613 = vmatpush1.bf16.msra.mxu0 0
      %8614 = vmatprep.mubr.bf16.mxu0 0
      %8615 = vmatmul.mubr.bf16.gmra.mrb[0].mxu0 %v8544
      %v8616 = vpop.f32.mrb[0].mxu0
      %v8617 = vadd.f32 %v8407, %v8616
      %v8618 = vpop.f32.mrb[0].mxu0
      %v8619 = vpop.f32.mrb[0].mxu0
      %v8620 = vadd.f32 %v8410, %v8619
      %v8621 = vpop.f32.mrb[0].mxu0
      %8622 = vmatprep.mubr.bf16.mxu0 0
      %8623 = vmatmul.mubr.bf16.gmra.mrb[0].mxu0 %v8547
      %v8624 = vpop.f32.mrb[0].mxu0
      %v8625 = vadd.f32 %v8415, %v8624
      %v8626 = vpop.f32.mrb[0].mxu0
      %v8627 = vpop.f32.mrb[0].mxu0
      %v8628 = vadd.f32 %v8418, %v8627
      %v8629 = vpop.f32.mrb[0].mxu0
      %8630 = vmatprep.mubr.bf16.mxu0 0
      %8631 = vmatmul.mubr.bf16.gmra.mrb[0].mxu0 %v8550
      %v8632 = vpop.f32.mrb[0].mxu0
      %v8633 = vadd.f32 %v8423, %v8632
      %v8634 = vpop.f32.mrb[0].mxu0
      %v8635 = vpop.f32.mrb[0].mxu0
      %v8636 = vadd.f32 %v8426, %v8635
      %v8637 = vpop.f32.mrb[0].mxu0
      %8638 = vmatprep.mubr.bf16.mxu0 0
      %8639 = vmatmul.mubr.bf16.gmra.mrb[0].mxu0 %v8553
      %v8640 = vpop.f32.mrb[0].mxu0
      %v8641 = vadd.f32 %v8431, %v8640
      %v8642 = vpop.f32.mrb[0].mxu0
      %v8643 = vpop.f32.mrb[0].mxu0
      %v8644 = vadd.f32 %v8434, %v8643
      %v8645 = vpop.f32.mrb[0].mxu0
      %8646 = vmatprep.mubr.bf16.mxu0 0
      %8647 = vmatmul.mubr.bf16.gmra.mrb[0].mxu0 %v8556
      %v8648 = vpop.f32.mrb[0].mxu0
      %v8649 = vadd.f32 %v8439, %v8648
      %v8650 = vpop.f32.mrb[0].mxu0
      %v8651 = vpop.f32.mrb[0].mxu0
      %v8652 = vadd.f32 %v8442, %v8651
      %v8653 = vpop.f32.mrb[0].mxu0
      %8654 = vmatprep.mubr.bf16.mxu0 0
      %8655 = vmatmul.mubr.bf16.gmra.mrb[0].mxu0 %v8559
      %v8656 = vpop.f32.mrb[0].mxu0
      %v8657 = vadd.f32 %v8447, %v8656
      %v8658 = vpop.f32.mrb[0].mxu0
      %v8659 = vpop.f32.mrb[0].mxu0
      %v8660 = vadd.f32 %v8450, %v8659
      %v8661 = vpop.f32.mrb[0].mxu0
      %8662 = vmatprep.mubr.bf16.mxu0 0
      %8663 = vmatmul.mubr.bf16.gmra.mrb[0].mxu0 %v8562
      %v8664 = vpop.f32.mrb[0].mxu0
      %v8665 = vadd.f32 %v8455, %v8664
      %v8666 = vpop.f32.mrb[0].mxu0
      %v8667 = vpop.f32.mrb[0].mxu0
      %v8668 = vadd.f32 %v8458, %v8667
      %v8669 = vpop.f32.mrb[0].mxu0
      %8670 = vmatprep.mubr.bf16.mxu0 0
      %8671 = vmatmul.mubr.bf16.gmra.mrb[0].mxu0 %v8565
      %v8672 = vpop.f32.mrb[0].mxu0
      %v8673 = vadd.f32 %v8463, %v8672
      %v8674 = vpop.f32.mrb[0].mxu0
      %v8675 = vpop.f32.mrb[0].mxu0
      %v8676 = vadd.f32 %v8466, %v8675
      %v8677 = vpop.f32.mrb[0].mxu0
      %8678 = vmatprep.mubr.bf16.mxu0 0
      %8679 = vmatmul.mubr.bf16.gmra.mrb[0].mxu0 %v8568
      %v8680 = vpop.f32.mrb[0].mxu0
      %v8681 = vadd.f32 %v8471, %v8680
      %v8682 = vpop.f32.mrb[0].mxu0
      %v8683 = vpop.f32.mrb[0].mxu0
      %v8684 = vadd.f32 %v8474, %v8683
      %v8685 = vpop.f32.mrb[0].mxu0
      %8686 = vmatprep.mubr.bf16.mxu0 0
      %8687 = vmatmul.mubr.bf16.gmra.mrb[0].mxu0 %v8571
      %v8688 = vpop.f32.mrb[0].mxu0
      %v8689 = vadd.f32 %v8479, %v8688
      %v8690 = vpop.f32.mrb[0].mxu0
      %v8691 = vpop.f32.mrb[0].mxu0
      %v8692 = vadd.f32 %v8482, %v8691
      %v8693 = vpop.f32.mrb[0].mxu0
      %8694 = vmatprep.mubr.bf16.mxu0 0
      %8695 = vmatmul.mubr.bf16.gmra.mrb[0].mxu0 %v8574
      %v8696 = vpop.f32.mrb[0].mxu0
      %v8697 = vadd.f32 %v8487, %v8696
      %v8698 = vpop.f32.mrb[0].mxu0
      %v8699 = vpop.f32.mrb[0].mxu0
      %v8700 = vadd.f32 %v8490, %v8699
      %v8701 = vpop.f32.mrb[0].mxu0
      %8702 = vmatprep.mubr.bf16.mxu0 0
      %8703 = vmatmul.mubr.bf16.gmra.mrb[0].mxu0 %v8577
      %v8704 = vpop.f32.mrb[0].mxu0
      %v8705 = vadd.f32 %v8495, %v8704
      %v8706 = vpop.f32.mrb[0].mxu0
      %v8707 = vpop.f32.mrb[0].mxu0
      %v8708 = vadd.f32 %v8498, %v8707
      %v8709 = vpop.f32.mrb[0].mxu0
      %8710 = vdwg.mxu0
      %v8711 = vld [vmem:[#allocation3 + $0x78] sm:$0xe]
      %v8712 = vld [vmem:[#allocation3 + $0x7c] sm:$0xf]
      %v8713 = vld [vmem:[#allocation3 + $0x80] sm:$0xf]
      %v8714 = vld [vmem:[#allocation3 + $0x84] sm:$0xf]
      %v8715 = vld [vmem:[#allocation3 + $0x88] sm:$0xf]
      %v8716 = vld [vmem:[#allocation3 + $0x8c] sm:$0xf]
      %v8717 = vld [vmem:[#allocation3 + $0x90] sm:$0xf]
      %v8718 = vld [vmem:[#allocation3 + $0x94] sm:$0xf]
      %v8719 = vld [vmem:[#allocation3 + $0x98] sm:$0xf]
      %v8720 = vld [vmem:[#allocation3 + $0x9c] sm:$0xf]
      %v8721 = vld [vmem:[#allocation3 + $0xa0] sm:$0xf]
      %v8722 = vld [vmem:[#allocation3 + $0xa4] sm:$0xf]
      %v8723 = vld [vmem:[#allocation3 + $0xa8] sm:$0xf]
      %v8724 = vld [vmem:[#allocation3 + $0xac] sm:$0xf]
      %v8725 = vld [vmem:[#allocation3 + $0xb0] sm:$0xf]
      %v8726 = vld [vmem:[#allocation3 + $0xb4] sm:$0xf]
      %v8727 = vld [vmem:[#allocation3 + $0xb8] sm:$0xf]
      %v8728 = vld [vmem:[#allocation3 + $0xbc] sm:$0xf]
      %v8729 = vld [vmem:[#allocation3 + $0xc0] sm:$0xf]
      %v8730 = vld [vmem:[#allocation3 + $0xc4] sm:$0xf]
      %v8731 = vld [vmem:[#allocation3 + $0xc8] sm:$0xf]
      %v8732 = vld [vmem:[#allocation3 + $0xcc] sm:$0xf]
      %v8733 = vld [vmem:[#allocation3 + $0xd0] sm:$0xf]
      %v8734 = vld [vmem:[#allocation3 + $0xd4] sm:$0xf]
      %v8735 = vld [vmem:[#allocation3 + $0xd8] sm:$0x1]
      %v8736 = vld [vmem:[%s6094] sm:$0xf]
      %v8762 = vunpack.c.l.b16 %v8711
      %v8763 = vunpack.c.l.b16 %v8712
      %v8764 = vunpack.c.l.b16 %v8713
      %v8765 = vunpack.c.l.b16 %v8714
      %v8766 = vunpack.c.l.b16 %v8715
      %v8767 = vunpack.c.l.b16 %v8716
      %v8768 = vunpack.c.l.b16 %v8717
      %v8769 = vunpack.c.l.b16 %v8718
      %v8770 = vunpack.c.l.b16 %v8719
      %v8771 = vunpack.c.l.b16 %v8720
      %v8772 = vunpack.c.l.b16 %v8721
      %v8773 = vunpack.c.l.b16 %v8722
      %v8774 = vunpack.c.l.b16 %v8723
      %v8775 = vunpack.c.l.b16 %v8724
      %v8776 = vunpack.c.l.b16 %v8725
      %v8777 = vunpack.c.l.b16 %v8726
      %v8778 = vunpack.c.l.b16 %v8727
      %v8779 = vunpack.c.l.b16 %v8728
      %v8780 = vunpack.c.l.b16 %v8729
      %v8781 = vunpack.c.l.b16 %v8730
      %v8782 = vunpack.c.l.b16 %v8731
      %v8783 = vunpack.c.l.b16 %v8732
      %v8784 = vunpack.c.l.b16 %v8733
      %v8785 = vunpack.c.l.b16 %v8734
      %v8786 = vunpack.c.l.b16 %v8735
      %v8787 = vpack.c.b16 %v8763, %v8762
      %v8788 = vpack.c.b16 %v8765, %v8764
      %v8789 = vpack.c.b16 %v8767, %v8766
      %v8790 = vpack.c.b16 %v8769, %v8768
      %v8791 = vpack.c.b16 %v8771, %v8770
      %v8792 = vpack.c.b16 %v8773, %v8772
      %v8793 = vpack.c.b16 %v8775, %v8774
      %v8794 = vpack.c.b16 %v8777, %v8776
      %v8795 = vpack.c.b16 %v8779, %v8778
      %v8796 = vpack.c.b16 %v8781, %v8780
      %v8797 = vpack.c.b16 %v8783, %v8782
      %v8798 = vpack.c.b16 %v8785, %v8784
      %v8799 = vpack.c.b16 %v8786, %v8786
      %v8800 = vrot.slane %v8787, 1
      %v8801 = vrot.slane %v8788, 1
      %v8802 = vsel %vm6159, %v8800, %v8801
      %v8803 = vrot.slane %v8789, 1
      %v8804 = vsel %vm6159, %v8801, %v8803
      %v8805 = vrot.slane %v8790, 1
      %v8806 = vsel %vm6159, %v8803, %v8805
      %v8807 = vrot.slane %v8791, 1
      %v8808 = vsel %vm6159, %v8805, %v8807
      %v8809 = vrot.slane %v8792, 1
      %v8810 = vsel %vm6159, %v8807, %v8809
      %v8811 = vrot.slane %v8793, 1
      %v8812 = vsel %vm6159, %v8809, %v8811
      %v8813 = vrot.slane %v8794, 1
      %v8814 = vsel %vm6159, %v8811, %v8813
      %v8815 = vrot.slane %v8795, 1
      %v8816 = vsel %vm6159, %v8813, %v8815
      %v8817 = vrot.slane %v8796, 1
      %v8818 = vsel %vm6159, %v8815, %v8817
      %v8819 = vrot.slane %v8797, 1
      %v8820 = vsel %vm6159, %v8817, %v8819
      %v8821 = vrot.slane %v8798, 1
      %v8822 = vsel %vm6159, %v8819, %v8821
      %v8823 = vrot.slane %v8799, 1
      %v8824 = vsel %vm6159, %v8821, %v8823
      %v8826 = vsel %vm335, %v8802, 0
      %v8829 = vsel %vm335, %v8804, 0
      %v8832 = vsel %vm335, %v8806, 0
      %v8835 = vsel %vm335, %v8808, 0
      %v8838 = vsel %vm335, %v8810, 0
      %v8841 = vsel %vm335, %v8812, 0
      %v8844 = vsel %vm335, %v8814, 0
      %v8847 = vsel %vm335, %v8816, 0
      %v8850 = vsel %vm335, %v8818, 0
      %v8853 = vsel %vm335, %v8820, 0
      %v8856 = vsel %vm335, %v8822, 0
      %v8859 = vsel %vm335, %v8824, 0
      %v8862 = vsel %vm1287, %v8736, 0
      %8864 = vmatprep.subr.bf16.mxu0 0
      %8865 = vmatpush1.bf16.msra.mxu0 %v8862
      %8866 = vmatprep.subr.bf16.mxu0 0
      %8867 = vmatpush1.bf16.msra.mxu0 0
      %8868 = vmatprep.subr.bf16.mxu0 0
      %8869 = vmatpush1.bf16.msra.mxu0 0
      %8870 = vmatprep.subr.bf16.mxu0 0
      %8871 = vmatpush1.bf16.msra.mxu0 0
      %8872 = vmatprep.subr.bf16.mxu0 0
      %8873 = vmatpush1.bf16.msra.mxu0 0
      %8874 = vmatprep.subr.bf16.mxu0 0
      %8875 = vmatpush1.bf16.msra.mxu0 0
      %8876 = vmatprep.subr.bf16.mxu0 0
      %8877 = vmatpush1.bf16.msra.mxu0 0
      %8878 = vmatprep.subr.bf16.mxu0 0
      %8879 = vmatpush1.bf16.msra.mxu0 0
      %8880 = vmatprep.subr.bf16.mxu0 0
      %8881 = vmatpush1.bf16.msra.mxu0 0
      %8882 = vmatprep.subr.bf16.mxu0 0
      %8883 = vmatpush1.bf16.msra.mxu0 0
      %8884 = vmatprep.subr.bf16.mxu0 0
      %8885 = vmatpush1.bf16.msra.mxu0 0
      %8886 = vmatprep.subr.bf16.mxu0 0
      %8887 = vmatpush1.bf16.msra.mxu0 0
      %8888 = vmatprep.subr.bf16.mxu0 0
      %8889 = vmatpush1.bf16.msra.mxu0 0
      %8890 = vmatprep.subr.bf16.mxu0 0
      %8891 = vmatpush1.bf16.msra.mxu0 0
      %8892 = vmatprep.subr.bf16.mxu0 0
      %8893 = vmatpush1.bf16.msra.mxu0 0
      %8894 = vmatprep.subr.bf16.mxu0 0
      %8895 = vmatpush1.bf16.msra.mxu0 0
      %8896 = vmatprep.mubr.bf16.mxu0 0
      %8897 = vmatmul.mubr.bf16.gmra.mrb[0].mxu0 %v8826
      %v8898 = vpop.f32.mrb[0].mxu0
      %v8899 = vadd.f32 0.0, %v8898
      %v8900 = vpop.f32.mrb[0].mxu0
      %v8901 = vpop.f32.mrb[0].mxu0
      %v8902 = vadd.f32 0.0, %v8901
      %v8903 = vpop.f32.mrb[0].mxu0
      %8904 = vmatprep.mubr.bf16.mxu0 0
      %8905 = vmatmul.mubr.bf16.gmra.mrb[0].mxu0 %v8829
      %v8906 = vpop.f32.mrb[0].mxu0
      %v8907 = vadd.f32 0.0, %v8906
      %v8908 = vpop.f32.mrb[0].mxu0
      %v8909 = vpop.f32.mrb[0].mxu0
      %v8910 = vadd.f32 0.0, %v8909
      %v8911 = vpop.f32.mrb[0].mxu0
      %8912 = vmatprep.mubr.bf16.mxu0 0
      %8913 = vmatmul.mubr.bf16.gmra.mrb[0].mxu0 %v8832
      %v8914 = vpop.f32.mrb[0].mxu0
      %v8915 = vadd.f32 0.0, %v8914
      %v8916 = vpop.f32.mrb[0].mxu0
      %v8917 = vpop.f32.mrb[0].mxu0
      %v8918 = vadd.f32 0.0, %v8917
      %v8919 = vpop.f32.mrb[0].mxu0
      %8920 = vmatprep.mubr.bf16.mxu0 0
      %8921 = vmatmul.mubr.bf16.gmra.mrb[0].mxu0 %v8835
      %v8922 = vpop.f32.mrb[0].mxu0
      %v8923 = vadd.f32 0.0, %v8922
      %v8924 = vpop.f32.mrb[0].mxu0
      %v8925 = vpop.f32.mrb[0].mxu0
      %v8926 = vadd.f32 0.0, %v8925
      %v8927 = vpop.f32.mrb[0].mxu0
      %8928 = vmatprep.mubr.bf16.mxu0 0
      %8929 = vmatmul.mubr.bf16.gmra.mrb[0].mxu0 %v8838
      %v8930 = vpop.f32.mrb[0].mxu0
      %v8931 = vadd.f32 0.0, %v8930
      %v8932 = vpop.f32.mrb[0].mxu0
      %v8933 = vpop.f32.mrb[0].mxu0
      %v8934 = vadd.f32 0.0, %v8933
      %v8935 = vpop.f32.mrb[0].mxu0
      %8936 = vmatprep.mubr.bf16.mxu0 0
      %8937 = vmatmul.mubr.bf16.gmra.mrb[0].mxu0 %v8841
      %v8938 = vpop.f32.mrb[0].mxu0
      %v8939 = vadd.f32 0.0, %v8938
      %v8940 = vpop.f32.mrb[0].mxu0
      %v8941 = vpop.f32.mrb[0].mxu0
      %v8942 = vadd.f32 0.0, %v8941
      %v8943 = vpop.f32.mrb[0].mxu0
      %8944 = vmatprep.mubr.bf16.mxu0 0
      %8945 = vmatmul.mubr.bf16.gmra.mrb[0].mxu0 %v8844
      %v8946 = vpop.f32.mrb[0].mxu0
      %v8947 = vadd.f32 0.0, %v8946
      %v8948 = vpop.f32.mrb[0].mxu0
      %v8949 = vpop.f32.mrb[0].mxu0
      %v8950 = vadd.f32 0.0, %v8949
      %v8951 = vpop.f32.mrb[0].mxu0
      %8952 = vmatprep.mubr.bf16.mxu0 0
      %8953 = vmatmul.mubr.bf16.gmra.mrb[0].mxu0 %v8847
      %v8954 = vpop.f32.mrb[0].mxu0
      %v8955 = vadd.f32 0.0, %v8954
      %v8956 = vpop.f32.mrb[0].mxu0
      %v8957 = vpop.f32.mrb[0].mxu0
      %v8958 = vadd.f32 0.0, %v8957
      %v8959 = vpop.f32.mrb[0].mxu0
      %8960 = vmatprep.mubr.bf16.mxu0 0
      %8961 = vmatmul.mubr.bf16.gmra.mrb[0].mxu0 %v8850
      %v8962 = vpop.f32.mrb[0].mxu0
      %v8963 = vadd.f32 0.0, %v8962
      %v8964 = vpop.f32.mrb[0].mxu0
      %v8965 = vpop.f32.mrb[0].mxu0
      %v8966 = vadd.f32 0.0, %v8965
      %v8967 = vpop.f32.mrb[0].mxu0
      %8968 = vmatprep.mubr.bf16.mxu0 0
      %8969 = vmatmul.mubr.bf16.gmra.mrb[0].mxu0 %v8853
      %v8970 = vpop.f32.mrb[0].mxu0
      %v8971 = vadd.f32 0.0, %v8970
      %v8972 = vpop.f32.mrb[0].mxu0
      %v8973 = vpop.f32.mrb[0].mxu0
      %v8974 = vadd.f32 0.0, %v8973
      %v8975 = vpop.f32.mrb[0].mxu0
      %8976 = vmatprep.mubr.bf16.mxu0 0
      %8977 = vmatmul.mubr.bf16.gmra.mrb[0].mxu0 %v8856
      %v8978 = vpop.f32.mrb[0].mxu0
      %v8979 = vadd.f32 0.0, %v8978
      %v8980 = vpop.f32.mrb[0].mxu0
      %v8981 = vpop.f32.mrb[0].mxu0
      %v8982 = vadd.f32 0.0, %v8981
      %v8983 = vpop.f32.mrb[0].mxu0
      %8984 = vmatprep.mubr.bf16.mxu0 0
      %8985 = vmatmul.mubr.bf16.gmra.mrb[0].mxu0 %v8859
      %v8986 = vpop.f32.mrb[0].mxu0
      %v8987 = vadd.f32 0.0, %v8986
      %v8988 = vpop.f32.mrb[0].mxu0
      %v8989 = vpop.f32.mrb[0].mxu0
      %v8990 = vadd.f32 0.0, %v8989
      %v8991 = vpop.f32.mrb[0].mxu0
      %8992 = vdwg.mxu0
      %v8993 = vadd.f32 %v8617, %v8899
      %v8994 = vadd.f32 %v8620, %v8902
      %v8995 = vadd.f32 %v8625, %v8907
      %v8996 = vadd.f32 %v8628, %v8910
      %v8997 = vadd.f32 %v8633, %v8915
      %v8998 = vadd.f32 %v8636, %v8918
      %v8999 = vadd.f32 %v8641, %v8923
      %v9000 = vadd.f32 %v8644, %v8926
      %v9001 = vadd.f32 %v8649, %v8931
      %v9002 = vadd.f32 %v8652, %v8934
      %v9003 = vadd.f32 %v8657, %v8939
      %v9004 = vadd.f32 %v8660, %v8942
      %v9005 = vadd.f32 %v8665, %v8947
      %v9006 = vadd.f32 %v8668, %v8950
      %v9007 = vadd.f32 %v8673, %v8955
      %v9008 = vadd.f32 %v8676, %v8958
      %v9009 = vadd.f32 %v8681, %v8963
      %v9010 = vadd.f32 %v8684, %v8966
      %v9011 = vadd.f32 %v8689, %v8971
      %v9012 = vadd.f32 %v8692, %v8974
      %v9013 = vadd.f32 %v8697, %v8979
      %v9014 = vadd.f32 %v8700, %v8982
      %v9015 = vadd.f32 %v8705, %v8987
      %v9016 = vadd.f32 %v8708, %v8990
      %v9017 = vld [vmem:[#allocation3 + $0x8c] sm:$0x8]
      %v9018 = vld [vmem:[#allocation3 + $0x90] sm:$0xf]
      %v9019 = vld [vmem:[#allocation3 + $0x94] sm:$0xf]
      %v9020 = vld [vmem:[#allocation3 + $0x98] sm:$0xf]
      %v9021 = vld [vmem:[#allocation3 + $0x9c] sm:$0xf]
      %v9022 = vld [vmem:[#allocation3 + $0xa0] sm:$0xf]
      %v9023 = vld [vmem:[#allocation3 + $0xa4] sm:$0xf]
      %v9024 = vld [vmem:[#allocation3 + $0xa8] sm:$0xf]
      %v9025 = vld [vmem:[#allocation3 + $0xac] sm:$0xf]
      %v9026 = vld [vmem:[#allocation3 + $0xb0] sm:$0xf]
      %v9027 = vld [vmem:[#allocation3 + $0xb4] sm:$0xf]
      %v9028 = vld [vmem:[#allocation3 + $0xb8] sm:$0xf]
      %v9029 = vld [vmem:[#allocation3 + $0xbc] sm:$0xf]
      %v9030 = vld [vmem:[#allocation3 + $0xc0] sm:$0xf]
      %v9031 = vld [vmem:[#allocation3 + $0xc4] sm:$0xf]
      %v9032 = vld [vmem:[#allocation3 + $0xc8] sm:$0xf]
      %v9033 = vld [vmem:[#allocation3 + $0xcc] sm:$0xf]
      %v9034 = vld [vmem:[#allocation3 + $0xd0] sm:$0xf]
      %v9035 = vld [vmem:[#allocation3 + $0xd4] sm:$0xf]
      %v9036 = vld [vmem:[#allocation3 + $0xd8] sm:$0xf]
      %v9037 = vld [vmem:[#allocation3 + $0xdc] sm:$0xf]
      %v9038 = vld [vmem:[#allocation3 + $0xe0] sm:$0xf]
      %v9039 = vld [vmem:[#allocation3 + $0xe4] sm:$0xf]
      %v9040 = vld [vmem:[#allocation3 + $0xe8] sm:$0xf]
      %v9041 = vld [vmem:[#allocation3 + $0xec] sm:$0x7]
      %v9042 = vld [vmem:[%s6402] sm:$0xf]
      %v9068 = vunpack.c.l.b16 %v9017
      %v9069 = vunpack.c.l.b16 %v9018
      %v9070 = vunpack.c.l.b16 %v9019
      %v9071 = vunpack.c.l.b16 %v9020
      %v9072 = vunpack.c.l.b16 %v9021
      %v9073 = vunpack.c.l.b16 %v9022
      %v9074 = vunpack.c.l.b16 %v9023
      %v9075 = vunpack.c.l.b16 %v9024
      %v9076 = vunpack.c.l.b16 %v9025
      %v9077 = vunpack.c.l.b16 %v9026
      %v9078 = vunpack.c.l.b16 %v9027
      %v9079 = vunpack.c.l.b16 %v9028
      %v9080 = vunpack.c.l.b16 %v9029
      %v9081 = vunpack.c.l.b16 %v9030
      %v9082 = vunpack.c.l.b16 %v9031
      %v9083 = vunpack.c.l.b16 %v9032
      %v9084 = vunpack.c.l.b16 %v9033
      %v9085 = vunpack.c.l.b16 %v9034
      %v9086 = vunpack.c.l.b16 %v9035
      %v9087 = vunpack.c.l.b16 %v9036
      %v9088 = vunpack.c.l.b16 %v9037
      %v9089 = vunpack.c.l.b16 %v9038
      %v9090 = vunpack.c.l.b16 %v9039
      %v9091 = vunpack.c.l.b16 %v9040
      %v9092 = vunpack.c.l.b16 %v9041
      %v9093 = vpack.c.b16 %v9069, %v9068
      %v9094 = vpack.c.b16 %v9071, %v9070
      %v9095 = vpack.c.b16 %v9073, %v9072
      %v9096 = vpack.c.b16 %v9075, %v9074
      %v9097 = vpack.c.b16 %v9077, %v9076
      %v9098 = vpack.c.b16 %v9079, %v9078
      %v9099 = vpack.c.b16 %v9081, %v9080
      %v9100 = vpack.c.b16 %v9083, %v9082
      %v9101 = vpack.c.b16 %v9085, %v9084
      %v9102 = vpack.c.b16 %v9087, %v9086
      %v9103 = vpack.c.b16 %v9089, %v9088
      %v9104 = vpack.c.b16 %v9091, %v9090
      %v9105 = vpack.c.b16 %v9092, %v9092
      %v9106 = vrot.slane %v9093, 3
      %v9107 = vrot.slane %v9094, 3
      %v9108 = vsel %vm5875, %v9106, %v9107
      %v9109 = vrot.slane %v9095, 3
      %v9110 = vsel %vm5875, %v9107, %v9109
      %v9111 = vrot.slane %v9096, 3
      %v9112 = vsel %vm5875, %v9109, %v9111
      %v9113 = vrot.slane %v9097, 3
      %v9114 = vsel %vm5875, %v9111, %v9113
      %v9115 = vrot.slane %v9098, 3
      %v9116 = vsel %vm5875, %v9113, %v9115
      %v9117 = vrot.slane %v9099, 3
      %v9118 = vsel %vm5875, %v9115, %v9117
      %v9119 = vrot.slane %v9100, 3
      %v9120 = vsel %vm5875, %v9117, %v9119
      %v9121 = vrot.slane %v9101, 3
      %v9122 = vsel %vm5875, %v9119, %v9121
      %v9123 = vrot.slane %v9102, 3
      %v9124 = vsel %vm5875, %v9121, %v9123
      %v9125 = vrot.slane %v9103, 3
      %v9126 = vsel %vm5875, %v9123, %v9125
      %v9127 = vrot.slane %v9104, 3
      %v9128 = vsel %vm5875, %v9125, %v9127
      %v9129 = vrot.slane %v9105, 3
      %v9130 = vsel %vm5875, %v9127, %v9129
      %v9132 = vsel %vm335, %v9108, 0
      %v9135 = vsel %vm335, %v9110, 0
      %v9138 = vsel %vm335, %v9112, 0
      %v9141 = vsel %vm335, %v9114, 0
      %v9144 = vsel %vm335, %v9116, 0
      %v9147 = vsel %vm335, %v9118, 0
      %v9150 = vsel %vm335, %v9120, 0
      %v9153 = vsel %vm335, %v9122, 0
      %v9156 = vsel %vm335, %v9124, 0
      %v9159 = vsel %vm335, %v9126, 0
      %v9162 = vsel %vm335, %v9128, 0
      %v9165 = vsel %vm335, %v9130, 0
      %v9168 = vsel %vm1287, %v9042, 0
      %9170 = vmatprep.subr.bf16.mxu0 0
      %9171 = vmatpush1.bf16.msra.mxu0 %v9168
      %9172 = vmatprep.subr.bf16.mxu0 0
      %9173 = vmatpush1.bf16.msra.mxu0 0
      %9174 = vmatprep.subr.bf16.mxu0 0
      %9175 = vmatpush1.bf16.msra.mxu0 0
      %9176 = vmatprep.subr.bf16.mxu0 0
      %9177 = vmatpush1.bf16.msra.mxu0 0
      %9178 = vmatprep.subr.bf16.mxu0 0
      %9179 = vmatpush1.bf16.msra.mxu0 0
      %9180 = vmatprep.subr.bf16.mxu0 0
      %9181 = vmatpush1.bf16.msra.mxu0 0
      %9182 = vmatprep.subr.bf16.mxu0 0
      %9183 = vmatpush1.bf16.msra.mxu0 0
      %9184 = vmatprep.subr.bf16.mxu0 0
      %9185 = vmatpush1.bf16.msra.mxu0 0
      %9186 = vmatprep.subr.bf16.mxu0 0
      %9187 = vmatpush1.bf16.msra.mxu0 0
      %9188 = vmatprep.subr.bf16.mxu0 0
      %9189 = vmatpush1.bf16.msra.mxu0 0
      %9190 = vmatprep.subr.bf16.mxu0 0
      %9191 = vmatpush1.bf16.msra.mxu0 0
      %9192 = vmatprep.subr.bf16.mxu0 0
      %9193 = vmatpush1.bf16.msra.mxu0 0
      %9194 = vmatprep.subr.bf16.mxu0 0
      %9195 = vmatpush1.bf16.msra.mxu0 0
      %9196 = vmatprep.subr.bf16.mxu0 0
      %9197 = vmatpush1.bf16.msra.mxu0 0
      %9198 = vmatprep.subr.bf16.mxu0 0
      %9199 = vmatpush1.bf16.msra.mxu0 0
      %9200 = vmatprep.subr.bf16.mxu0 0
      %9201 = vmatpush1.bf16.msra.mxu0 0
      %9202 = vmatprep.mubr.bf16.mxu0 0
      %9203 = vmatmul.mubr.bf16.gmra.mrb[0].mxu0 %v9132
      %v9204 = vpop.f32.mrb[0].mxu0
      %v9205 = vadd.f32 0.0, %v9204
      %v9206 = vpop.f32.mrb[0].mxu0
      %v9207 = vpop.f32.mrb[0].mxu0
      %v9208 = vadd.f32 0.0, %v9207
      %v9209 = vpop.f32.mrb[0].mxu0
      %9210 = vmatprep.mubr.bf16.mxu0 0
      %9211 = vmatmul.mubr.bf16.gmra.mrb[0].mxu0 %v9135
      %v9212 = vpop.f32.mrb[0].mxu0
      %v9213 = vadd.f32 0.0, %v9212
      %v9214 = vpop.f32.mrb[0].mxu0
      %v9215 = vpop.f32.mrb[0].mxu0
      %v9216 = vadd.f32 0.0, %v9215
      %v9217 = vpop.f32.mrb[0].mxu0
      %9218 = vmatprep.mubr.bf16.mxu0 0
      %9219 = vmatmul.mubr.bf16.gmra.mrb[0].mxu0 %v9138
      %v9220 = vpop.f32.mrb[0].mxu0
      %v9221 = vadd.f32 0.0, %v9220
      %v9222 = vpop.f32.mrb[0].mxu0
      %v9223 = vpop.f32.mrb[0].mxu0
      %v9224 = vadd.f32 0.0, %v9223
      %v9225 = vpop.f32.mrb[0].mxu0
      %9226 = vmatprep.mubr.bf16.mxu0 0
      %9227 = vmatmul.mubr.bf16.gmra.mrb[0].mxu0 %v9141
      %v9228 = vpop.f32.mrb[0].mxu0
      %v9229 = vadd.f32 0.0, %v9228
      %v9230 = vpop.f32.mrb[0].mxu0
      %v9231 = vpop.f32.mrb[0].mxu0
      %v9232 = vadd.f32 0.0, %v9231
      %v9233 = vpop.f32.mrb[0].mxu0
      %9234 = vmatprep.mubr.bf16.mxu0 0
      %9235 = vmatmul.mubr.bf16.gmra.mrb[0].mxu0 %v9144
      %v9236 = vpop.f32.mrb[0].mxu0
      %v9237 = vadd.f32 0.0, %v9236
      %v9238 = vpop.f32.mrb[0].mxu0
      %v9239 = vpop.f32.mrb[0].mxu0
      %v9240 = vadd.f32 0.0, %v9239
      %v9241 = vpop.f32.mrb[0].mxu0
      %9242 = vmatprep.mubr.bf16.mxu0 0
      %9243 = vmatmul.mubr.bf16.gmra.mrb[0].mxu0 %v9147
      %v9244 = vpop.f32.mrb[0].mxu0
      %v9245 = vadd.f32 0.0, %v9244
      %v9246 = vpop.f32.mrb[0].mxu0
      %v9247 = vpop.f32.mrb[0].mxu0
      %v9248 = vadd.f32 0.0, %v9247
      %v9249 = vpop.f32.mrb[0].mxu0
      %9250 = vmatprep.mubr.bf16.mxu0 0
      %9251 = vmatmul.mubr.bf16.gmra.mrb[0].mxu0 %v9150
      %v9252 = vpop.f32.mrb[0].mxu0
      %v9253 = vadd.f32 0.0, %v9252
      %v9254 = vpop.f32.mrb[0].mxu0
      %v9255 = vpop.f32.mrb[0].mxu0
      %v9256 = vadd.f32 0.0, %v9255
      %v9257 = vpop.f32.mrb[0].mxu0
      %9258 = vmatprep.mubr.bf16.mxu0 0
      %9259 = vmatmul.mubr.bf16.gmra.mrb[0].mxu0 %v9153
      %v9260 = vpop.f32.mrb[0].mxu0
      %v9261 = vadd.f32 0.0, %v9260
      %v9262 = vpop.f32.mrb[0].mxu0
      %v9263 = vpop.f32.mrb[0].mxu0
      %v9264 = vadd.f32 0.0, %v9263
      %v9265 = vpop.f32.mrb[0].mxu0
      %9266 = vmatprep.mubr.bf16.mxu0 0
      %9267 = vmatmul.mubr.bf16.gmra.mrb[0].mxu0 %v9156
      %v9268 = vpop.f32.mrb[0].mxu0
      %v9269 = vadd.f32 0.0, %v9268
      %v9270 = vpop.f32.mrb[0].mxu0
      %v9271 = vpop.f32.mrb[0].mxu0
      %v9272 = vadd.f32 0.0, %v9271
      %v9273 = vpop.f32.mrb[0].mxu0
      %9274 = vmatprep.mubr.bf16.mxu0 0
      %9275 = vmatmul.mubr.bf16.gmra.mrb[0].mxu0 %v9159
      %v9276 = vpop.f32.mrb[0].mxu0
      %v9277 = vadd.f32 0.0, %v9276
      %v9278 = vpop.f32.mrb[0].mxu0
      %v9279 = vpop.f32.mrb[0].mxu0
      %v9280 = vadd.f32 0.0, %v9279
      %v9281 = vpop.f32.mrb[0].mxu0
      %9282 = vmatprep.mubr.bf16.mxu0 0
      %9283 = vmatmul.mubr.bf16.gmra.mrb[0].mxu0 %v9162
      %v9284 = vpop.f32.mrb[0].mxu0
      %v9285 = vadd.f32 0.0, %v9284
      %v9286 = vpop.f32.mrb[0].mxu0
      %v9287 = vpop.f32.mrb[0].mxu0
      %v9288 = vadd.f32 0.0, %v9287
      %v9289 = vpop.f32.mrb[0].mxu0
      %9290 = vmatprep.mubr.bf16.mxu0 0
      %9291 = vmatmul.mubr.bf16.gmra.mrb[0].mxu0 %v9165
      %v9292 = vpop.f32.mrb[0].mxu0
      %v9293 = vadd.f32 0.0, %v9292
      %v9294 = vpop.f32.mrb[0].mxu0
      %v9295 = vpop.f32.mrb[0].mxu0
      %v9296 = vadd.f32 0.0, %v9295
      %v9297 = vpop.f32.mrb[0].mxu0
      %9298 = vdwg.mxu0
      %v9299 = vadd.f32 %v8993, %v9205
      %v9300 = vadd.f32 %v8994, %v9208
      %v9301 = vadd.f32 %v8995, %v9213
      %v9302 = vadd.f32 %v8996, %v9216
      %v9303 = vadd.f32 %v8997, %v9221
      %v9304 = vadd.f32 %v8998, %v9224
      %v9305 = vadd.f32 %v8999, %v9229
      %v9306 = vadd.f32 %v9000, %v9232
      %v9307 = vadd.f32 %v9001, %v9237
      %v9308 = vadd.f32 %v9002, %v9240
      %v9309 = vadd.f32 %v9003, %v9245
      %v9310 = vadd.f32 %v9004, %v9248
      %v9311 = vadd.f32 %v9005, %v9253
      %v9312 = vadd.f32 %v9006, %v9256
      %v9313 = vadd.f32 %v9007, %v9261
      %v9314 = vadd.f32 %v9008, %v9264
      %v9315 = vadd.f32 %v9009, %v9269
      %v9316 = vadd.f32 %v9010, %v9272
      %v9317 = vadd.f32 %v9011, %v9277
      %v9318 = vadd.f32 %v9012, %v9280
      %v9319 = vadd.f32 %v9013, %v9285
      %v9320 = vadd.f32 %v9014, %v9288
      %v9321 = vadd.f32 %v9015, %v9293
      %v9322 = vadd.f32 %v9016, %v9296
      %v9323 = vld [vmem:[#allocation3 + $0xec] sm:$0xf]
      %v9324 = vld [vmem:[%s6685] sm:$0xf]
      %v9326 = vunpack.c.l.b16 %v9323
      %v9327 = vpack.c.b16 %v9070, %v9069
      %v9328 = vpack.c.b16 %v9072, %v9071
      %v9329 = vpack.c.b16 %v9074, %v9073
      %v9330 = vpack.c.b16 %v9076, %v9075
      %v9331 = vpack.c.b16 %v9078, %v9077
      %v9332 = vpack.c.b16 %v9080, %v9079
      %v9333 = vpack.c.b16 %v9082, %v9081
      %v9334 = vpack.c.b16 %v9084, %v9083
      %v9335 = vpack.c.b16 %v9086, %v9085
      %v9336 = vpack.c.b16 %v9088, %v9087
      %v9337 = vpack.c.b16 %v9090, %v9089
      %v9338 = vpack.c.b16 %v9326, %v9091
      %v9340 = vsel %vm335, %v9327, 0
      %v9343 = vsel %vm335, %v9328, 0
      %v9346 = vsel %vm335, %v9329, 0
      %v9349 = vsel %vm335, %v9330, 0
      %v9352 = vsel %vm335, %v9331, 0
      %v9355 = vsel %vm335, %v9332, 0
      %v9358 = vsel %vm335, %v9333, 0
      %v9361 = vsel %vm335, %v9334, 0
      %v9364 = vsel %vm335, %v9335, 0
      %v9367 = vsel %vm335, %v9336, 0
      %v9370 = vsel %vm335, %v9337, 0
      %v9373 = vsel %vm335, %v9338, 0
      %v9376 = vsel %vm1287, %v9324, 0
      %9378 = vmatprep.subr.bf16.mxu0 0
      %9379 = vmatpush1.bf16.msra.mxu0 %v9376
      %9380 = vmatprep.subr.bf16.mxu0 0
      %9381 = vmatpush1.bf16.msra.mxu0 0
      %9382 = vmatprep.subr.bf16.mxu0 0
      %9383 = vmatpush1.bf16.msra.mxu0 0
      %9384 = vmatprep.subr.bf16.mxu0 0
      %9385 = vmatpush1.bf16.msra.mxu0 0
      %9386 = vmatprep.subr.bf16.mxu0 0
      %9387 = vmatpush1.bf16.msra.mxu0 0
      %9388 = vmatprep.subr.bf16.mxu0 0
      %9389 = vmatpush1.bf16.msra.mxu0 0
      %9390 = vmatprep.subr.bf16.mxu0 0
      %9391 = vmatpush1.bf16.msra.mxu0 0
      %9392 = vmatprep.subr.bf16.mxu0 0
      %9393 = vmatpush1.bf16.msra.mxu0 0
      %9394 = vmatprep.subr.bf16.mxu0 0
      %9395 = vmatpush1.bf16.msra.mxu0 0
      %9396 = vmatprep.subr.bf16.mxu0 0
      %9397 = vmatpush1.bf16.msra.mxu0 0
      %9398 = vmatprep.subr.bf16.mxu0 0
      %9399 = vmatpush1.bf16.msra.mxu0 0
      %9400 = vmatprep.subr.bf16.mxu0 0
      %9401 = vmatpush1.bf16.msra.mxu0 0
      %9402 = vmatprep.subr.bf16.mxu0 0
      %9403 = vmatpush1.bf16.msra.mxu0 0
      %9404 = vmatprep.subr.bf16.mxu0 0
      %9405 = vmatpush1.bf16.msra.mxu0 0
      %9406 = vmatprep.subr.bf16.mxu0 0
      %9407 = vmatpush1.bf16.msra.mxu0 0
      %9408 = vmatprep.subr.bf16.mxu0 0
      %9409 = vmatpush1.bf16.msra.mxu0 0
      %9410 = vmatprep.mubr.bf16.mxu0 0
      %9411 = vmatmul.mubr.bf16.gmra.mrb[0].mxu0 %v9340
      %v9412 = vpop.f32.mrb[0].mxu0
      %v9413 = vadd.f32 0.0, %v9412
      %v9414 = vpop.f32.mrb[0].mxu0
      %v9415 = vpop.f32.mrb[0].mxu0
      %v9416 = vadd.f32 0.0, %v9415
      %v9417 = vpop.f32.mrb[0].mxu0
      %9418 = vmatprep.mubr.bf16.mxu0 0
      %9419 = vmatmul.mubr.bf16.gmra.mrb[0].mxu0 %v9343
      %v9420 = vpop.f32.mrb[0].mxu0
      %v9421 = vadd.f32 0.0, %v9420
      %v9422 = vpop.f32.mrb[0].mxu0
      %v9423 = vpop.f32.mrb[0].mxu0
      %v9424 = vadd.f32 0.0, %v9423
      %v9425 = vpop.f32.mrb[0].mxu0
      %9426 = vmatprep.mubr.bf16.mxu0 0
      %9427 = vmatmul.mubr.bf16.gmra.mrb[0].mxu0 %v9346
      %v9428 = vpop.f32.mrb[0].mxu0
      %v9429 = vadd.f32 0.0, %v9428
      %v9430 = vpop.f32.mrb[0].mxu0
      %v9431 = vpop.f32.mrb[0].mxu0
      %v9432 = vadd.f32 0.0, %v9431
      %v9433 = vpop.f32.mrb[0].mxu0
      %9434 = vmatprep.mubr.bf16.mxu0 0
      %9435 = vmatmul.mubr.bf16.gmra.mrb[0].mxu0 %v9349
      %v9436 = vpop.f32.mrb[0].mxu0
      %v9437 = vadd.f32 0.0, %v9436
      %v9438 = vpop.f32.mrb[0].mxu0
      %v9439 = vpop.f32.mrb[0].mxu0
      %v9440 = vadd.f32 0.0, %v9439
      %v9441 = vpop.f32.mrb[0].mxu0
      %9442 = vmatprep.mubr.bf16.mxu0 0
      %9443 = vmatmul.mubr.bf16.gmra.mrb[0].mxu0 %v9352
      %v9444 = vpop.f32.mrb[0].mxu0
      %v9445 = vadd.f32 0.0, %v9444
      %v9446 = vpop.f32.mrb[0].mxu0
      %v9447 = vpop.f32.mrb[0].mxu0
      %v9448 = vadd.f32 0.0, %v9447
      %v9449 = vpop.f32.mrb[0].mxu0
      %9450 = vmatprep.mubr.bf16.mxu0 0
      %9451 = vmatmul.mubr.bf16.gmra.mrb[0].mxu0 %v9355
      %v9452 = vpop.f32.mrb[0].mxu0
      %v9453 = vadd.f32 0.0, %v9452
      %v9454 = vpop.f32.mrb[0].mxu0
      %v9455 = vpop.f32.mrb[0].mxu0
      %v9456 = vadd.f32 0.0, %v9455
      %v9457 = vpop.f32.mrb[0].mxu0
      %9458 = vmatprep.mubr.bf16.mxu0 0
      %9459 = vmatmul.mubr.bf16.gmra.mrb[0].mxu0 %v9358
      %v9460 = vpop.f32.mrb[0].mxu0
      %v9461 = vadd.f32 0.0, %v9460
      %v9462 = vpop.f32.mrb[0].mxu0
      %v9463 = vpop.f32.mrb[0].mxu0
      %v9464 = vadd.f32 0.0, %v9463
      %v9465 = vpop.f32.mrb[0].mxu0
      %9466 = vmatprep.mubr.bf16.mxu0 0
      %9467 = vmatmul.mubr.bf16.gmra.mrb[0].mxu0 %v9361
      %v9468 = vpop.f32.mrb[0].mxu0
      %v9469 = vadd.f32 0.0, %v9468
      %v9470 = vpop.f32.mrb[0].mxu0
      %v9471 = vpop.f32.mrb[0].mxu0
      %v9472 = vadd.f32 0.0, %v9471
      %v9473 = vpop.f32.mrb[0].mxu0
      %9474 = vmatprep.mubr.bf16.mxu0 0
      %9475 = vmatmul.mubr.bf16.gmra.mrb[0].mxu0 %v9364
      %v9476 = vpop.f32.mrb[0].mxu0
      %v9477 = vadd.f32 0.0, %v9476
      %v9478 = vpop.f32.mrb[0].mxu0
      %v9479 = vpop.f32.mrb[0].mxu0
      %v9480 = vadd.f32 0.0, %v9479
      %v9481 = vpop.f32.mrb[0].mxu0
      %9482 = vmatprep.mubr.bf16.mxu0 0
      %9483 = vmatmul.mubr.bf16.gmra.mrb[0].mxu0 %v9367
      %v9484 = vpop.f32.mrb[0].mxu0
      %v9485 = vadd.f32 0.0, %v9484
      %v9486 = vpop.f32.mrb[0].mxu0
      %v9487 = vpop.f32.mrb[0].mxu0
      %v9488 = vadd.f32 0.0, %v9487
      %v9489 = vpop.f32.mrb[0].mxu0
      %9490 = vmatprep.mubr.bf16.mxu0 0
      %9491 = vmatmul.mubr.bf16.gmra.mrb[0].mxu0 %v9370
      %v9492 = vpop.f32.mrb[0].mxu0
      %v9493 = vadd.f32 0.0, %v9492
      %v9494 = vpop.f32.mrb[0].mxu0
      %v9495 = vpop.f32.mrb[0].mxu0
      %v9496 = vadd.f32 0.0, %v9495
      %v9497 = vpop.f32.mrb[0].mxu0
      %9498 = vmatprep.mubr.bf16.mxu0 0
      %9499 = vmatmul.mubr.bf16.gmra.mrb[0].mxu0 %v9373
      %v9500 = vpop.f32.mrb[0].mxu0
      %v9501 = vadd.f32 0.0, %v9500
      %v9502 = vpop.f32.mrb[0].mxu0
      %v9503 = vpop.f32.mrb[0].mxu0
      %v9504 = vadd.f32 0.0, %v9503
      %v9505 = vpop.f32.mrb[0].mxu0
      %9506 = vdwg.mxu0
      %v9507 = vadd.f32 %v9299, %v9413
      %v9508 = vadd.f32 %v9300, %v9416
      %v9509 = vadd.f32 %v9301, %v9421
      %v9510 = vadd.f32 %v9302, %v9424
      %v9511 = vadd.f32 %v9303, %v9429
      %v9512 = vadd.f32 %v9304, %v9432
      %v9513 = vadd.f32 %v9305, %v9437
      %v9514 = vadd.f32 %v9306, %v9440
      %v9515 = vadd.f32 %v9307, %v9445
      %v9516 = vadd.f32 %v9308, %v9448
      %v9517 = vadd.f32 %v9309, %v9453
      %v9518 = vadd.f32 %v9310, %v9456
      %v9519 = vadd.f32 %v9311, %v9461
      %v9520 = vadd.f32 %v9312, %v9464
      %v9521 = vadd.f32 %v9313, %v9469
      %v9522 = vadd.f32 %v9314, %v9472
      %v9523 = vadd.f32 %v9315, %v9477
      %v9524 = vadd.f32 %v9316, %v9480
      %v9525 = vadd.f32 %v9317, %v9485
      %v9526 = vadd.f32 %v9318, %v9488
      %v9527 = vadd.f32 %v9319, %v9493
      %v9528 = vadd.f32 %v9320, %v9496
      %v9529 = vadd.f32 %v9321, %v9501
      %v9530 = vadd.f32 %v9322, %v9504
      %v9531 = vld [vmem:[#allocation3 + $0x90] sm:$0xe]
      %v9532 = vld [vmem:[#allocation3 + $0x94] sm:$0xf]
      %v9533 = vld [vmem:[#allocation3 + $0x98] sm:$0xf]
      %v9534 = vld [vmem:[#allocation3 + $0x9c] sm:$0xf]
      %v9535 = vld [vmem:[#allocation3 + $0xa0] sm:$0xf]
      %v9536 = vld [vmem:[#allocation3 + $0xa4] sm:$0xf]
      %v9537 = vld [vmem:[#allocation3 + $0xa8] sm:$0xf]
      %v9538 = vld [vmem:[#allocation3 + $0xac] sm:$0xf]
      %v9539 = vld [vmem:[#allocation3 + $0xb0] sm:$0xf]
      %v9540 = vld [vmem:[#allocation3 + $0xb4] sm:$0xf]
      %v9541 = vld [vmem:[#allocation3 + $0xb8] sm:$0xf]
      %v9542 = vld [vmem:[#allocation3 + $0xbc] sm:$0xf]
      %v9543 = vld [vmem:[#allocation3 + $0xc0] sm:$0xf]
      %v9544 = vld [vmem:[#allocation3 + $0xc4] sm:$0xf]
      %v9545 = vld [vmem:[#allocation3 + $0xc8] sm:$0xf]
      %v9546 = vld [vmem:[#allocation3 + $0xcc] sm:$0xf]
      %v9547 = vld [vmem:[#allocation3 + $0xd0] sm:$0xf]
      %v9548 = vld [vmem:[#allocation3 + $0xd4] sm:$0xf]
      %v9549 = vld [vmem:[#allocation3 + $0xd8] sm:$0xf]
      %v9550 = vld [vmem:[#allocation3 + $0xdc] sm:$0xf]
      %v9551 = vld [vmem:[#allocation3 + $0xe0] sm:$0xf]
      %v9552 = vld [vmem:[#allocation3 + $0xe4] sm:$0xf]
      %v9553 = vld [vmem:[#allocation3 + $0xe8] sm:$0xf]
      %v9554 = vld [vmem:[#allocation3 + $0xec] sm:$0xf]
      %v9555 = vld [vmem:[#allocation3 + $0xf0] sm:$0x1]
      %v9556 = vld [vmem:[%s6918] sm:$0xf]
      %v9582 = vunpack.c.l.b16 %v9531
      %v9583 = vunpack.c.l.b16 %v9532
      %v9584 = vunpack.c.l.b16 %v9533
      %v9585 = vunpack.c.l.b16 %v9534
      %v9586 = vunpack.c.l.b16 %v9535
      %v9587 = vunpack.c.l.b16 %v9536
      %v9588 = vunpack.c.l.b16 %v9537
      %v9589 = vunpack.c.l.b16 %v9538
      %v9590 = vunpack.c.l.b16 %v9539
      %v9591 = vunpack.c.l.b16 %v9540
      %v9592 = vunpack.c.l.b16 %v9541
      %v9593 = vunpack.c.l.b16 %v9542
      %v9594 = vunpack.c.l.b16 %v9543
      %v9595 = vunpack.c.l.b16 %v9544
      %v9596 = vunpack.c.l.b16 %v9545
      %v9597 = vunpack.c.l.b16 %v9546
      %v9598 = vunpack.c.l.b16 %v9547
      %v9599 = vunpack.c.l.b16 %v9548
      %v9600 = vunpack.c.l.b16 %v9549
      %v9601 = vunpack.c.l.b16 %v9550
      %v9602 = vunpack.c.l.b16 %v9551
      %v9603 = vunpack.c.l.b16 %v9552
      %v9604 = vunpack.c.l.b16 %v9553
      %v9605 = vunpack.c.l.b16 %v9554
      %v9606 = vunpack.c.l.b16 %v9555
      %v9607 = vpack.c.b16 %v9583, %v9582
      %v9608 = vpack.c.b16 %v9585, %v9584
      %v9609 = vpack.c.b16 %v9587, %v9586
      %v9610 = vpack.c.b16 %v9589, %v9588
      %v9611 = vpack.c.b16 %v9591, %v9590
      %v9612 = vpack.c.b16 %v9593, %v9592
      %v9613 = vpack.c.b16 %v9595, %v9594
      %v9614 = vpack.c.b16 %v9597, %v9596
      %v9615 = vpack.c.b16 %v9599, %v9598
      %v9616 = vpack.c.b16 %v9601, %v9600
      %v9617 = vpack.c.b16 %v9603, %v9602
      %v9618 = vpack.c.b16 %v9605, %v9604
      %v9619 = vpack.c.b16 %v9606, %v9606
      %v9620 = vrot.slane %v9607, 1
      %v9621 = vrot.slane %v9608, 1
      %v9622 = vsel %vm6159, %v9620, %v9621
      %v9623 = vrot.slane %v9609, 1
      %v9624 = vsel %vm6159, %v9621, %v9623
      %v9625 = vrot.slane %v9610, 1
      %v9626 = vsel %vm6159, %v9623, %v9625
      %v9627 = vrot.slane %v9611, 1
      %v9628 = vsel %vm6159, %v9625, %v9627
      %v9629 = vrot.slane %v9612, 1
      %v9630 = vsel %vm6159, %v9627, %v9629
      %v9631 = vrot.slane %v9613, 1
      %v9632 = vsel %vm6159, %v9629, %v9631
      %v9633 = vrot.slane %v9614, 1
      %v9634 = vsel %vm6159, %v9631, %v9633
      %v9635 = vrot.slane %v9615, 1
      %v9636 = vsel %vm6159, %v9633, %v9635
      %v9637 = vrot.slane %v9616, 1
      %v9638 = vsel %vm6159, %v9635, %v9637
      %v9639 = vrot.slane %v9617, 1
      %v9640 = vsel %vm6159, %v9637, %v9639
      %v9641 = vrot.slane %v9618, 1
      %v9642 = vsel %vm6159, %v9639, %v9641
      %v9643 = vrot.slane %v9619, 1
      %v9644 = vsel %vm6159, %v9641, %v9643
      %v9646 = vsel %vm335, %v9622, 0
      %v9649 = vsel %vm335, %v9624, 0
      %v9652 = vsel %vm335, %v9626, 0
      %v9655 = vsel %vm335, %v9628, 0
      %v9658 = vsel %vm335, %v9630, 0
      %v9661 = vsel %vm335, %v9632, 0
      %v9664 = vsel %vm335, %v9634, 0
      %v9667 = vsel %vm335, %v9636, 0
      %v9670 = vsel %vm335, %v9638, 0
      %v9673 = vsel %vm335, %v9640, 0
      %v9676 = vsel %vm335, %v9642, 0
      %v9679 = vsel %vm335, %v9644, 0
      %v9682 = vsel %vm1287, %v9556, 0
      %9684 = vmatprep.subr.bf16.mxu0 0
      %9685 = vmatpush1.bf16.msra.mxu0 %v9682
      %9686 = vmatprep.subr.bf16.mxu0 0
      %9687 = vmatpush1.bf16.msra.mxu0 0
      %9688 = vmatprep.subr.bf16.mxu0 0
      %9689 = vmatpush1.bf16.msra.mxu0 0
      %9690 = vmatprep.subr.bf16.mxu0 0
      %9691 = vmatpush1.bf16.msra.mxu0 0
      %9692 = vmatprep.subr.bf16.mxu0 0
      %9693 = vmatpush1.bf16.msra.mxu0 0
      %9694 = vmatprep.subr.bf16.mxu0 0
      %9695 = vmatpush1.bf16.msra.mxu0 0
      %9696 = vmatprep.subr.bf16.mxu0 0
      %9697 = vmatpush1.bf16.msra.mxu0 0
      %9698 = vmatprep.subr.bf16.mxu0 0
      %9699 = vmatpush1.bf16.msra.mxu0 0
      %9700 = vmatprep.subr.bf16.mxu0 0
      %9701 = vmatpush1.bf16.msra.mxu0 0
      %9702 = vmatprep.subr.bf16.mxu0 0
      %9703 = vmatpush1.bf16.msra.mxu0 0
      %9704 = vmatprep.subr.bf16.mxu0 0
      %9705 = vmatpush1.bf16.msra.mxu0 0
      %9706 = vmatprep.subr.bf16.mxu0 0
      %9707 = vmatpush1.bf16.msra.mxu0 0
      %9708 = vmatprep.subr.bf16.mxu0 0
      %9709 = vmatpush1.bf16.msra.mxu0 0
      %9710 = vmatprep.subr.bf16.mxu0 0
      %9711 = vmatpush1.bf16.msra.mxu0 0
      %9712 = vmatprep.subr.bf16.mxu0 0
      %9713 = vmatpush1.bf16.msra.mxu0 0
      %9714 = vmatprep.subr.bf16.mxu0 0
      %9715 = vmatpush1.bf16.msra.mxu0 0
      %9716 = vmatprep.mubr.bf16.mxu0 0
      %9717 = vmatmul.mubr.bf16.gmra.mrb[0].mxu0 %v9646
      %v9718 = vpop.f32.mrb[0].mxu0
      %v9719 = vadd.f32 0.0, %v9718
      %v9720 = vpop.f32.mrb[0].mxu0
      %v9721 = vpop.f32.mrb[0].mxu0
      %v9722 = vadd.f32 0.0, %v9721
      %v9723 = vpop.f32.mrb[0].mxu0
      %9724 = vmatprep.mubr.bf16.mxu0 0
      %9725 = vmatmul.mubr.bf16.gmra.mrb[0].mxu0 %v9649
      %v9726 = vpop.f32.mrb[0].mxu0
      %v9727 = vadd.f32 0.0, %v9726
      %v9728 = vpop.f32.mrb[0].mxu0
      %v9729 = vpop.f32.mrb[0].mxu0
      %v9730 = vadd.f32 0.0, %v9729
      %v9731 = vpop.f32.mrb[0].mxu0
      %9732 = vmatprep.mubr.bf16.mxu0 0
      %9733 = vmatmul.mubr.bf16.gmra.mrb[0].mxu0 %v9652
      %v9734 = vpop.f32.mrb[0].mxu0
      %v9735 = vadd.f32 0.0, %v9734
      %v9736 = vpop.f32.mrb[0].mxu0
      %v9737 = vpop.f32.mrb[0].mxu0
      %v9738 = vadd.f32 0.0, %v9737
      %v9739 = vpop.f32.mrb[0].mxu0
      %9740 = vmatprep.mubr.bf16.mxu0 0
      %9741 = vmatmul.mubr.bf16.gmra.mrb[0].mxu0 %v9655
      %v9742 = vpop.f32.mrb[0].mxu0
      %v9743 = vadd.f32 0.0, %v9742
      %v9744 = vpop.f32.mrb[0].mxu0
      %v9745 = vpop.f32.mrb[0].mxu0
      %v9746 = vadd.f32 0.0, %v9745
      %v9747 = vpop.f32.mrb[0].mxu0
      %9748 = vmatprep.mubr.bf16.mxu0 0
      %9749 = vmatmul.mubr.bf16.gmra.mrb[0].mxu0 %v9658
      %v9750 = vpop.f32.mrb[0].mxu0
      %v9751 = vadd.f32 0.0, %v9750
      %v9752 = vpop.f32.mrb[0].mxu0
      %v9753 = vpop.f32.mrb[0].mxu0
      %v9754 = vadd.f32 0.0, %v9753
      %v9755 = vpop.f32.mrb[0].mxu0
      %9756 = vmatprep.mubr.bf16.mxu0 0
      %9757 = vmatmul.mubr.bf16.gmra.mrb[0].mxu0 %v9661
      %v9758 = vpop.f32.mrb[0].mxu0
      %v9759 = vadd.f32 0.0, %v9758
      %v9760 = vpop.f32.mrb[0].mxu0
      %v9761 = vpop.f32.mrb[0].mxu0
      %v9762 = vadd.f32 0.0, %v9761
      %v9763 = vpop.f32.mrb[0].mxu0
      %9764 = vmatprep.mubr.bf16.mxu0 0
      %9765 = vmatmul.mubr.bf16.gmra.mrb[0].mxu0 %v9664
      %v9766 = vpop.f32.mrb[0].mxu0
      %v9767 = vadd.f32 0.0, %v9766
      %v9768 = vpop.f32.mrb[0].mxu0
      %v9769 = vpop.f32.mrb[0].mxu0
      %v9770 = vadd.f32 0.0, %v9769
      %v9771 = vpop.f32.mrb[0].mxu0
      %9772 = vmatprep.mubr.bf16.mxu0 0
      %9773 = vmatmul.mubr.bf16.gmra.mrb[0].mxu0 %v9667
      %v9774 = vpop.f32.mrb[0].mxu0
      %v9775 = vadd.f32 0.0, %v9774
      %v9776 = vpop.f32.mrb[0].mxu0
      %v9777 = vpop.f32.mrb[0].mxu0
      %v9778 = vadd.f32 0.0, %v9777
      %v9779 = vpop.f32.mrb[0].mxu0
      %9780 = vmatprep.mubr.bf16.mxu0 0
      %9781 = vmatmul.mubr.bf16.gmra.mrb[0].mxu0 %v9670
      %v9782 = vpop.f32.mrb[0].mxu0
      %v9783 = vadd.f32 0.0, %v9782
      %v9784 = vpop.f32.mrb[0].mxu0
      %v9785 = vpop.f32.mrb[0].mxu0
      %v9786 = vadd.f32 0.0, %v9785
      %v9787 = vpop.f32.mrb[0].mxu0
      %9788 = vmatprep.mubr.bf16.mxu0 0
      %9789 = vmatmul.mubr.bf16.gmra.mrb[0].mxu0 %v9673
      %v9790 = vpop.f32.mrb[0].mxu0
      %v9791 = vadd.f32 0.0, %v9790
      %v9792 = vpop.f32.mrb[0].mxu0
      %v9793 = vpop.f32.mrb[0].mxu0
      %v9794 = vadd.f32 0.0, %v9793
      %v9795 = vpop.f32.mrb[0].mxu0
      %9796 = vmatprep.mubr.bf16.mxu0 0
      %9797 = vmatmul.mubr.bf16.gmra.mrb[0].mxu0 %v9676
      %v9798 = vpop.f32.mrb[0].mxu0
      %v9799 = vadd.f32 0.0, %v9798
      %v9800 = vpop.f32.mrb[0].mxu0
      %v9801 = vpop.f32.mrb[0].mxu0
      %v9802 = vadd.f32 0.0, %v9801
      %v9803 = vpop.f32.mrb[0].mxu0
      %9804 = vmatprep.mubr.bf16.mxu0 0
      %9805 = vmatmul.mubr.bf16.gmra.mrb[0].mxu0 %v9679
      %v9806 = vpop.f32.mrb[0].mxu0
      %v9807 = vadd.f32 0.0, %v9806
      %v9808 = vpop.f32.mrb[0].mxu0
      %v9809 = vpop.f32.mrb[0].mxu0
      %v9810 = vadd.f32 0.0, %v9809
      %v9811 = vpop.f32.mrb[0].mxu0
      %9812 = vdwg.mxu0
      %v9813 = vadd.f32 %v9507, %v9719
      %v9814 = vadd.f32 %v9508, %v9722
      %v9815 = vadd.f32 %v9509, %v9727
      %v9816 = vadd.f32 %v9510, %v9730
      %v9817 = vadd.f32 %v9511, %v9735
      %v9818 = vadd.f32 %v9512, %v9738
      %v9819 = vadd.f32 %v9513, %v9743
      %v9820 = vadd.f32 %v9514, %v9746
      %v9821 = vadd.f32 %v9515, %v9751
      %v9822 = vadd.f32 %v9516, %v9754
      %v9823 = vadd.f32 %v9517, %v9759
      %v9824 = vadd.f32 %v9518, %v9762
      %v9825 = vadd.f32 %v9519, %v9767
      %v9826 = vadd.f32 %v9520, %v9770
      %v9827 = vadd.f32 %v9521, %v9775
      %v9828 = vadd.f32 %v9522, %v9778
      %v9829 = vadd.f32 %v9523, %v9783
      %v9830 = vadd.f32 %v9524, %v9786
      %v9831 = vadd.f32 %v9525, %v9791
      %v9832 = vadd.f32 %v9526, %v9794
      %v9833 = vadd.f32 %v9527, %v9799
      %v9834 = vadd.f32 %v9528, %v9802
      %v9835 = vadd.f32 %v9529, %v9807
      %v9836 = vadd.f32 %v9530, %v9810
      %v9837 = vld [vmem:[#allocation3 + $0xa4] sm:$0x8]
      %v9838 = vld [vmem:[#allocation3 + $0xa8] sm:$0xf]
      %v9839 = vld [vmem:[#allocation3 + $0xac] sm:$0xf]
      %v9840 = vld [vmem:[#allocation3 + $0xb0] sm:$0xf]
      %v9841 = vld [vmem:[#allocation3 + $0xb4] sm:$0xf]
      %v9842 = vld [vmem:[#allocation3 + $0xb8] sm:$0xf]
      %v9843 = vld [vmem:[#allocation3 + $0xbc] sm:$0xf]
      %v9844 = vld [vmem:[#allocation3 + $0xc0] sm:$0xf]
      %v9845 = vld [vmem:[#allocation3 + $0xc4] sm:$0xf]
      %v9846 = vld [vmem:[#allocation3 + $0xc8] sm:$0xf]
      %v9847 = vld [vmem:[#allocation3 + $0xcc] sm:$0xf]
      %v9848 = vld [vmem:[#allocation3 + $0xd0] sm:$0xf]
      %v9849 = vld [vmem:[#allocation3 + $0xd4] sm:$0xf]
      %v9850 = vld [vmem:[#allocation3 + $0xd8] sm:$0xf]
      %v9851 = vld [vmem:[#allocation3 + $0xdc] sm:$0xf]
      %v9852 = vld [vmem:[#allocation3 + $0xe0] sm:$0xf]
      %v9853 = vld [vmem:[#allocation3 + $0xe4] sm:$0xf]
      %v9854 = vld [vmem:[#allocation3 + $0xe8] sm:$0xf]
      %v9855 = vld [vmem:[#allocation3 + $0xec] sm:$0xf]
      %v9856 = vld [vmem:[#allocation3 + $0xf0] sm:$0xf]
      %v9857 = vld [vmem:[#allocation3 + $0xf4] sm:$0xf]
      %v9858 = vld [vmem:[#allocation3 + $0xf8] sm:$0xf]
      %v9859 = vld [vmem:[#allocation3 + $0xfc] sm:$0xf]
      %v9860 = vld [vmem:[#allocation3 + $0x100] sm:$0xf]
      %v9861 = vld [vmem:[#allocation3 + $0x104] sm:$0x7]
      %v9862 = vld [vmem:[%s7225] sm:$0xf]
      %v9888 = vunpack.c.l.b16 %v9837
      %v9889 = vunpack.c.l.b16 %v9838
      %v9890 = vunpack.c.l.b16 %v9839
      %v9891 = vunpack.c.l.b16 %v9840
      %v9892 = vunpack.c.l.b16 %v9841
      %v9893 = vunpack.c.l.b16 %v9842
      %v9894 = vunpack.c.l.b16 %v9843
      %v9895 = vunpack.c.l.b16 %v9844
      %v9896 = vunpack.c.l.b16 %v9845
      %v9897 = vunpack.c.l.b16 %v9846
      %v9898 = vunpack.c.l.b16 %v9847
      %v9899 = vunpack.c.l.b16 %v9848
      %v9900 = vunpack.c.l.b16 %v9849
      %v9901 = vunpack.c.l.b16 %v9850
      %v9902 = vunpack.c.l.b16 %v9851
      %v9903 = vunpack.c.l.b16 %v9852
      %v9904 = vunpack.c.l.b16 %v9853
      %v9905 = vunpack.c.l.b16 %v9854
      %v9906 = vunpack.c.l.b16 %v9855
      %v9907 = vunpack.c.l.b16 %v9856
      %v9908 = vunpack.c.l.b16 %v9857
      %v9909 = vunpack.c.l.b16 %v9858
      %v9910 = vunpack.c.l.b16 %v9859
      %v9911 = vunpack.c.l.b16 %v9860
      %v9912 = vunpack.c.l.b16 %v9861
      %v9913 = vpack.c.b16 %v9889, %v9888
      %v9914 = vpack.c.b16 %v9891, %v9890
      %v9915 = vpack.c.b16 %v9893, %v9892
      %v9916 = vpack.c.b16 %v9895, %v9894
      %v9917 = vpack.c.b16 %v9897, %v9896
      %v9918 = vpack.c.b16 %v9899, %v9898
      %v9919 = vpack.c.b16 %v9901, %v9900
      %v9920 = vpack.c.b16 %v9903, %v9902
      %v9921 = vpack.c.b16 %v9905, %v9904
      %v9922 = vpack.c.b16 %v9907, %v9906
      %v9923 = vpack.c.b16 %v9909, %v9908
      %v9924 = vpack.c.b16 %v9911, %v9910
      %v9925 = vpack.c.b16 %v9912, %v9912
      %v9926 = vrot.slane %v9913, 3
      %v9927 = vrot.slane %v9914, 3
      %v9928 = vsel %vm5875, %v9926, %v9927
      %v9929 = vrot.slane %v9915, 3
      %v9930 = vsel %vm5875, %v9927, %v9929
      %v9931 = vrot.slane %v9916, 3
      %v9932 = vsel %vm5875, %v9929, %v9931
      %v9933 = vrot.slane %v9917, 3
      %v9934 = vsel %vm5875, %v9931, %v9933
      %v9935 = vrot.slane %v9918, 3
      %v9936 = vsel %vm5875, %v9933, %v9935
      %v9937 = vrot.slane %v9919, 3
      %v9938 = vsel %vm5875, %v9935, %v9937
      %v9939 = vrot.slane %v9920, 3
      %v9940 = vsel %vm5875, %v9937, %v9939
      %v9941 = vrot.slane %v9921, 3
      %v9942 = vsel %vm5875, %v9939, %v9941
      %v9943 = vrot.slane %v9922, 3
      %v9944 = vsel %vm5875, %v9941, %v9943
      %v9945 = vrot.slane %v9923, 3
      %v9946 = vsel %vm5875, %v9943, %v9945
      %v9947 = vrot.slane %v9924, 3
      %v9948 = vsel %vm5875, %v9945, %v9947
      %v9949 = vrot.slane %v9925, 3
      %v9950 = vsel %vm5875, %v9947, %v9949
      %v9952 = vsel %vm335, %v9928, 0
      %v9955 = vsel %vm335, %v9930, 0
      %v9958 = vsel %vm335, %v9932, 0
      %v9961 = vsel %vm335, %v9934, 0
      %v9964 = vsel %vm335, %v9936, 0
      %v9967 = vsel %vm335, %v9938, 0
      %v9970 = vsel %vm335, %v9940, 0
      %v9973 = vsel %vm335, %v9942, 0
      %v9976 = vsel %vm335, %v9944, 0
      %v9979 = vsel %vm335, %v9946, 0
      %v9982 = vsel %vm335, %v9948, 0
      %v9985 = vsel %vm335, %v9950, 0
      %v9988 = vsel %vm1287, %v9862, 0
      %9990 = vmatprep.subr.bf16.mxu0 0
      %9991 = vmatpush1.bf16.msra.mxu0 %v9988
      %9992 = vmatprep.subr.bf16.mxu0 0
      %9993 = vmatpush1.bf16.msra.mxu0 0
      %9994 = vmatprep.subr.bf16.mxu0 0
      %9995 = vmatpush1.bf16.msra.mxu0 0
      %9996 = vmatprep.subr.bf16.mxu0 0
      %9997 = vmatpush1.bf16.msra.mxu0 0
      %9998 = vmatprep.subr.bf16.mxu0 0
      %9999 = vmatpush1.bf16.msra.mxu0 0
      %10000 = vmatprep.subr.bf16.mxu0 0
      %10001 = vmatpush1.bf16.msra.mxu0 0
      %10002 = vmatprep.subr.bf16.mxu0 0
      %10003 = vmatpush1.bf16.msra.mxu0 0
      %10004 = vmatprep.subr.bf16.mxu0 0
      %10005 = vmatpush1.bf16.msra.mxu0 0
      %10006 = vmatprep.subr.bf16.mxu0 0
      %10007 = vmatpush1.bf16.msra.mxu0 0
      %10008 = vmatprep.subr.bf16.mxu0 0
      %10009 = vmatpush1.bf16.msra.mxu0 0
      %10010 = vmatprep.subr.bf16.mxu0 0
      %10011 = vmatpush1.bf16.msra.mxu0 0
      %10012 = vmatprep.subr.bf16.mxu0 0
      %10013 = vmatpush1.bf16.msra.mxu0 0
      %10014 = vmatprep.subr.bf16.mxu0 0
      %10015 = vmatpush1.bf16.msra.mxu0 0
      %10016 = vmatprep.subr.bf16.mxu0 0
      %10017 = vmatpush1.bf16.msra.mxu0 0
      %10018 = vmatprep.subr.bf16.mxu0 0
      %10019 = vmatpush1.bf16.msra.mxu0 0
      %10020 = vmatprep.subr.bf16.mxu0 0
      %10021 = vmatpush1.bf16.msra.mxu0 0
      %10022 = vmatprep.mubr.bf16.mxu0 0
      %10023 = vmatmul.mubr.bf16.gmra.mrb[0].mxu0 %v9952
      %v10024 = vpop.f32.mrb[0].mxu0
      %v10025 = vadd.f32 0.0, %v10024
      %v10026 = vpop.f32.mrb[0].mxu0
      %v10027 = vpop.f32.mrb[0].mxu0
      %v10028 = vadd.f32 0.0, %v10027
      %v10029 = vpop.f32.mrb[0].mxu0
      %10030 = vmatprep.mubr.bf16.mxu0 0
      %10031 = vmatmul.mubr.bf16.gmra.mrb[0].mxu0 %v9955
      %v10032 = vpop.f32.mrb[0].mxu0
      %v10033 = vadd.f32 0.0, %v10032
      %v10034 = vpop.f32.mrb[0].mxu0
      %v10035 = vpop.f32.mrb[0].mxu0
      %v10036 = vadd.f32 0.0, %v10035
      %v10037 = vpop.f32.mrb[0].mxu0
      %10038 = vmatprep.mubr.bf16.mxu0 0
      %10039 = vmatmul.mubr.bf16.gmra.mrb[0].mxu0 %v9958
      %v10040 = vpop.f32.mrb[0].mxu0
      %v10041 = vadd.f32 0.0, %v10040
      %v10042 = vpop.f32.mrb[0].mxu0
      %v10043 = vpop.f32.mrb[0].mxu0
      %v10044 = vadd.f32 0.0, %v10043
      %v10045 = vpop.f32.mrb[0].mxu0
      %10046 = vmatprep.mubr.bf16.mxu0 0
      %10047 = vmatmul.mubr.bf16.gmra.mrb[0].mxu0 %v9961
      %v10048 = vpop.f32.mrb[0].mxu0
      %v10049 = vadd.f32 0.0, %v10048
      %v10050 = vpop.f32.mrb[0].mxu0
      %v10051 = vpop.f32.mrb[0].mxu0
      %v10052 = vadd.f32 0.0, %v10051
      %v10053 = vpop.f32.mrb[0].mxu0
      %10054 = vmatprep.mubr.bf16.mxu0 0
      %10055 = vmatmul.mubr.bf16.gmra.mrb[0].mxu0 %v9964
      %v10056 = vpop.f32.mrb[0].mxu0
      %v10057 = vadd.f32 0.0, %v10056
      %v10058 = vpop.f32.mrb[0].mxu0
      %v10059 = vpop.f32.mrb[0].mxu0
      %v10060 = vadd.f32 0.0, %v10059
      %v10061 = vpop.f32.mrb[0].mxu0
      %10062 = vmatprep.mubr.bf16.mxu0 0
      %10063 = vmatmul.mubr.bf16.gmra.mrb[0].mxu0 %v9967
      %v10064 = vpop.f32.mrb[0].mxu0
      %v10065 = vadd.f32 0.0, %v10064
      %v10066 = vpop.f32.mrb[0].mxu0
      %v10067 = vpop.f32.mrb[0].mxu0
      %v10068 = vadd.f32 0.0, %v10067
      %v10069 = vpop.f32.mrb[0].mxu0
      %10070 = vmatprep.mubr.bf16.mxu0 0
      %10071 = vmatmul.mubr.bf16.gmra.mrb[0].mxu0 %v9970
      %v10072 = vpop.f32.mrb[0].mxu0
      %v10073 = vadd.f32 0.0, %v10072
      %v10074 = vpop.f32.mrb[0].mxu0
      %v10075 = vpop.f32.mrb[0].mxu0
      %v10076 = vadd.f32 0.0, %v10075
      %v10077 = vpop.f32.mrb[0].mxu0
      %10078 = vmatprep.mubr.bf16.mxu0 0
      %10079 = vmatmul.mubr.bf16.gmra.mrb[0].mxu0 %v9973
      %v10080 = vpop.f32.mrb[0].mxu0
      %v10081 = vadd.f32 0.0, %v10080
      %v10082 = vpop.f32.mrb[0].mxu0
      %v10083 = vpop.f32.mrb[0].mxu0
      %v10084 = vadd.f32 0.0, %v10083
      %v10085 = vpop.f32.mrb[0].mxu0
      %10086 = vmatprep.mubr.bf16.mxu0 0
      %10087 = vmatmul.mubr.bf16.gmra.mrb[0].mxu0 %v9976
      %v10088 = vpop.f32.mrb[0].mxu0
      %v10089 = vadd.f32 0.0, %v10088
      %v10090 = vpop.f32.mrb[0].mxu0
      %v10091 = vpop.f32.mrb[0].mxu0
      %v10092 = vadd.f32 0.0, %v10091
      %v10093 = vpop.f32.mrb[0].mxu0
      %10094 = vmatprep.mubr.bf16.mxu0 0
      %10095 = vmatmul.mubr.bf16.gmra.mrb[0].mxu0 %v9979
      %v10096 = vpop.f32.mrb[0].mxu0
      %v10097 = vadd.f32 0.0, %v10096
      %v10098 = vpop.f32.mrb[0].mxu0
      %v10099 = vpop.f32.mrb[0].mxu0
      %v10100 = vadd.f32 0.0, %v10099
      %v10101 = vpop.f32.mrb[0].mxu0
      %10102 = vmatprep.mubr.bf16.mxu0 0
      %10103 = vmatmul.mubr.bf16.gmra.mrb[0].mxu0 %v9982
      %v10104 = vpop.f32.mrb[0].mxu0
      %v10105 = vadd.f32 0.0, %v10104
      %v10106 = vpop.f32.mrb[0].mxu0
      %v10107 = vpop.f32.mrb[0].mxu0
      %v10108 = vadd.f32 0.0, %v10107
      %v10109 = vpop.f32.mrb[0].mxu0
      %10110 = vmatprep.mubr.bf16.mxu0 0
      %10111 = vmatmul.mubr.bf16.gmra.mrb[0].mxu0 %v9985
      %v10112 = vpop.f32.mrb[0].mxu0
      %v10113 = vadd.f32 0.0, %v10112
      %v10114 = vpop.f32.mrb[0].mxu0
      %v10115 = vpop.f32.mrb[0].mxu0
      %v10116 = vadd.f32 0.0, %v10115
      %v10117 = vpop.f32.mrb[0].mxu0
      %10118 = vdwg.mxu0
      %v10119 = vadd.f32 %v9813, %v10025
      %v10120 = vadd.f32 %v9814, %v10028
      %v10121 = vadd.f32 %v9815, %v10033
      %v10122 = vadd.f32 %v9816, %v10036
      %v10123 = vadd.f32 %v9817, %v10041
      %v10124 = vadd.f32 %v9818, %v10044
      %v10125 = vadd.f32 %v9819, %v10049
      %v10126 = vadd.f32 %v9820, %v10052
      %v10127 = vadd.f32 %v9821, %v10057
      %v10128 = vadd.f32 %v9822, %v10060
      %v10129 = vadd.f32 %v9823, %v10065
      %v10130 = vadd.f32 %v9824, %v10068
      %v10131 = vadd.f32 %v9825, %v10073
      %v10132 = vadd.f32 %v9826, %v10076
      %v10133 = vadd.f32 %v9827, %v10081
      %v10134 = vadd.f32 %v9828, %v10084
      %v10135 = vadd.f32 %v9829, %v10089
      %v10136 = vadd.f32 %v9830, %v10092
      %v10137 = vadd.f32 %v9831, %v10097
      %v10138 = vadd.f32 %v9832, %v10100
      %v10139 = vadd.f32 %v9833, %v10105
      %v10140 = vadd.f32 %v9834, %v10108
      %v10141 = vadd.f32 %v9835, %v10113
      %v10142 = vadd.f32 %v9836, %v10116
      %v10143 = vld [vmem:[#allocation3 + $0x104] sm:$0xf]
      %v10144 = vld [vmem:[%s7508] sm:$0xf]
      %v10146 = vunpack.c.l.b16 %v10143
      %v10147 = vpack.c.b16 %v9890, %v9889
      %v10148 = vpack.c.b16 %v9892, %v9891
      %v10149 = vpack.c.b16 %v9894, %v9893
      %v10150 = vpack.c.b16 %v9896, %v9895
      %v10151 = vpack.c.b16 %v9898, %v9897
      %v10152 = vpack.c.b16 %v9900, %v9899
      %v10153 = vpack.c.b16 %v9902, %v9901
      %v10154 = vpack.c.b16 %v9904, %v9903
      %v10155 = vpack.c.b16 %v9906, %v9905
      %v10156 = vpack.c.b16 %v9908, %v9907
      %v10157 = vpack.c.b16 %v9910, %v9909
      %v10158 = vpack.c.b16 %v10146, %v9911
      %v10160 = vsel %vm335, %v10147, 0
      %v10163 = vsel %vm335, %v10148, 0
      %v10166 = vsel %vm335, %v10149, 0
      %v10169 = vsel %vm335, %v10150, 0
      %v10172 = vsel %vm335, %v10151, 0
      %v10175 = vsel %vm335, %v10152, 0
      %v10178 = vsel %vm335, %v10153, 0
      %v10181 = vsel %vm335, %v10154, 0
      %v10184 = vsel %vm335, %v10155, 0
      %v10187 = vsel %vm335, %v10156, 0
      %v10190 = vsel %vm335, %v10157, 0
      %v10193 = vsel %vm335, %v10158, 0
      %v10196 = vsel %vm1287, %v10144, 0
      %10198 = vmatprep.subr.bf16.mxu0 0
      %10199 = vmatpush1.bf16.msra.mxu0 %v10196
      %10200 = vmatprep.subr.bf16.mxu0 0
      %10201 = vmatpush1.bf16.msra.mxu0 0
      %10202 = vmatprep.subr.bf16.mxu0 0
      %10203 = vmatpush1.bf16.msra.mxu0 0
      %10204 = vmatprep.subr.bf16.mxu0 0
      %10205 = vmatpush1.bf16.msra.mxu0 0
      %10206 = vmatprep.subr.bf16.mxu0 0
      %10207 = vmatpush1.bf16.msra.mxu0 0
      %10208 = vmatprep.subr.bf16.mxu0 0
      %10209 = vmatpush1.bf16.msra.mxu0 0
      %10210 = vmatprep.subr.bf16.mxu0 0
      %10211 = vmatpush1.bf16.msra.mxu0 0
      %10212 = vmatprep.subr.bf16.mxu0 0
      %10213 = vmatpush1.bf16.msra.mxu0 0
      %10214 = vmatprep.subr.bf16.mxu0 0
      %10215 = vmatpush1.bf16.msra.mxu0 0
      %10216 = vmatprep.subr.bf16.mxu0 0
      %10217 = vmatpush1.bf16.msra.mxu0 0
      %10218 = vmatprep.subr.bf16.mxu0 0
      %10219 = vmatpush1.bf16.msra.mxu0 0
      %10220 = vmatprep.subr.bf16.mxu0 0
      %10221 = vmatpush1.bf16.msra.mxu0 0
      %10222 = vmatprep.subr.bf16.mxu0 0
      %10223 = vmatpush1.bf16.msra.mxu0 0
      %10224 = vmatprep.subr.bf16.mxu0 0
      %10225 = vmatpush1.bf16.msra.mxu0 0
      %10226 = vmatprep.subr.bf16.mxu0 0
      %10227 = vmatpush1.bf16.msra.mxu0 0
      %10228 = vmatprep.subr.bf16.mxu0 0
      %10229 = vmatpush1.bf16.msra.mxu0 0
      %10230 = vmatprep.mubr.bf16.mxu0 0
      %10231 = vmatmul.mubr.bf16.gmra.mrb[0].mxu0 %v10160
      %v10232 = vpop.f32.mrb[0].mxu0
      %v10233 = vadd.f32 0.0, %v10232
      %v10234 = vpop.f32.mrb[0].mxu0
      %v10235 = vpop.f32.mrb[0].mxu0
      %v10236 = vadd.f32 0.0, %v10235
      %v10237 = vpop.f32.mrb[0].mxu0
      %10238 = vmatprep.mubr.bf16.mxu0 0
      %10239 = vmatmul.mubr.bf16.gmra.mrb[0].mxu0 %v10163
      %v10240 = vpop.f32.mrb[0].mxu0
      %v10241 = vadd.f32 0.0, %v10240
      %v10242 = vpop.f32.mrb[0].mxu0
      %v10243 = vpop.f32.mrb[0].mxu0
      %v10244 = vadd.f32 0.0, %v10243
      %v10245 = vpop.f32.mrb[0].mxu0
      %10246 = vmatprep.mubr.bf16.mxu0 0
      %10247 = vmatmul.mubr.bf16.gmra.mrb[0].mxu0 %v10166
      %v10248 = vpop.f32.mrb[0].mxu0
      %v10249 = vadd.f32 0.0, %v10248
      %v10250 = vpop.f32.mrb[0].mxu0
      %v10251 = vpop.f32.mrb[0].mxu0
      %v10252 = vadd.f32 0.0, %v10251
      %v10253 = vpop.f32.mrb[0].mxu0
      %10254 = vmatprep.mubr.bf16.mxu0 0
      %10255 = vmatmul.mubr.bf16.gmra.mrb[0].mxu0 %v10169
      %v10256 = vpop.f32.mrb[0].mxu0
      %v10257 = vadd.f32 0.0, %v10256
      %v10258 = vpop.f32.mrb[0].mxu0
      %v10259 = vpop.f32.mrb[0].mxu0
      %v10260 = vadd.f32 0.0, %v10259
      %v10261 = vpop.f32.mrb[0].mxu0
      %10262 = vmatprep.mubr.bf16.mxu0 0
      %10263 = vmatmul.mubr.bf16.gmra.mrb[0].mxu0 %v10172
      %v10264 = vpop.f32.mrb[0].mxu0
      %v10265 = vadd.f32 0.0, %v10264
      %v10266 = vpop.f32.mrb[0].mxu0
      %v10267 = vpop.f32.mrb[0].mxu0
      %v10268 = vadd.f32 0.0, %v10267
      %v10269 = vpop.f32.mrb[0].mxu0
      %10270 = vmatprep.mubr.bf16.mxu0 0
      %10271 = vmatmul.mubr.bf16.gmra.mrb[0].mxu0 %v10175
      %v10272 = vpop.f32.mrb[0].mxu0
      %v10273 = vadd.f32 0.0, %v10272
      %v10274 = vpop.f32.mrb[0].mxu0
      %v10275 = vpop.f32.mrb[0].mxu0
      %v10276 = vadd.f32 0.0, %v10275
      %v10277 = vpop.f32.mrb[0].mxu0
      %10278 = vmatprep.mubr.bf16.mxu0 0
      %10279 = vmatmul.mubr.bf16.gmra.mrb[0].mxu0 %v10178
      %v10280 = vpop.f32.mrb[0].mxu0
      %v10281 = vadd.f32 0.0, %v10280
      %v10282 = vpop.f32.mrb[0].mxu0
      %v10283 = vpop.f32.mrb[0].mxu0
      %v10284 = vadd.f32 0.0, %v10283
      %v10285 = vpop.f32.mrb[0].mxu0
      %10286 = vmatprep.mubr.bf16.mxu0 0
      %10287 = vmatmul.mubr.bf16.gmra.mrb[0].mxu0 %v10181
      %v10288 = vpop.f32.mrb[0].mxu0
      %v10289 = vadd.f32 0.0, %v10288
      %v10290 = vpop.f32.mrb[0].mxu0
      %v10291 = vpop.f32.mrb[0].mxu0
      %v10292 = vadd.f32 0.0, %v10291
      %v10293 = vpop.f32.mrb[0].mxu0
      %10294 = vmatprep.mubr.bf16.mxu0 0
      %10295 = vmatmul.mubr.bf16.gmra.mrb[0].mxu0 %v10184
      %v10296 = vpop.f32.mrb[0].mxu0
      %v10297 = vadd.f32 0.0, %v10296
      %v10298 = vpop.f32.mrb[0].mxu0
      %v10299 = vpop.f32.mrb[0].mxu0
      %v10300 = vadd.f32 0.0, %v10299
      %v10301 = vpop.f32.mrb[0].mxu0
      %10302 = vmatprep.mubr.bf16.mxu0 0
      %10303 = vmatmul.mubr.bf16.gmra.mrb[0].mxu0 %v10187
      %v10304 = vpop.f32.mrb[0].mxu0
      %v10305 = vadd.f32 0.0, %v10304
      %v10306 = vpop.f32.mrb[0].mxu0
      %v10307 = vpop.f32.mrb[0].mxu0
      %v10308 = vadd.f32 0.0, %v10307
      %v10309 = vpop.f32.mrb[0].mxu0
      %10310 = vmatprep.mubr.bf16.mxu0 0
      %10311 = vmatmul.mubr.bf16.gmra.mrb[0].mxu0 %v10190
      %v10312 = vpop.f32.mrb[0].mxu0
      %v10313 = vadd.f32 0.0, %v10312
      %v10314 = vpop.f32.mrb[0].mxu0
      %v10315 = vpop.f32.mrb[0].mxu0
      %v10316 = vadd.f32 0.0, %v10315
      %v10317 = vpop.f32.mrb[0].mxu0
      %10318 = vmatprep.mubr.bf16.mxu0 0
      %10319 = vmatmul.mubr.bf16.gmra.mrb[0].mxu0 %v10193
      %v10320 = vpop.f32.mrb[0].mxu0
      %v10321 = vadd.f32 0.0, %v10320
      %v10322 = vpop.f32.mrb[0].mxu0
      %v10323 = vpop.f32.mrb[0].mxu0
      %v10324 = vadd.f32 0.0, %v10323
      %v10325 = vpop.f32.mrb[0].mxu0
      %10326 = vdwg.mxu0
      %v10327 = vadd.f32 %v10119, %v10233
      %v10328 = vadd.f32 %v10120, %v10236
      %v10329 = vadd.f32 %v10121, %v10241
      %v10330 = vadd.f32 %v10122, %v10244
      %v10331 = vadd.f32 %v10123, %v10249
      %v10332 = vadd.f32 %v10124, %v10252
      %v10333 = vadd.f32 %v10125, %v10257
      %v10334 = vadd.f32 %v10126, %v10260
      %v10335 = vadd.f32 %v10127, %v10265
      %v10336 = vadd.f32 %v10128, %v10268
      %v10337 = vadd.f32 %v10129, %v10273
      %v10338 = vadd.f32 %v10130, %v10276
      %v10339 = vadd.f32 %v10131, %v10281
      %v10340 = vadd.f32 %v10132, %v10284
      %v10341 = vadd.f32 %v10133, %v10289
      %v10342 = vadd.f32 %v10134, %v10292
      %v10343 = vadd.f32 %v10135, %v10297
      %v10344 = vadd.f32 %v10136, %v10300
      %v10345 = vadd.f32 %v10137, %v10305
      %v10346 = vadd.f32 %v10138, %v10308
      %v10347 = vadd.f32 %v10139, %v10313
      %v10348 = vadd.f32 %v10140, %v10316
      %v10349 = vadd.f32 %v10141, %v10321
      %v10350 = vadd.f32 %v10142, %v10324
      %v10351 = vld [vmem:[#allocation3 + $0xa8] sm:$0xe]
      %v10352 = vld [vmem:[#allocation3 + $0xac] sm:$0xf]
      %v10353 = vld [vmem:[#allocation3 + $0xb0] sm:$0xf]
      %v10354 = vld [vmem:[#allocation3 + $0xb4] sm:$0xf]
      %v10355 = vld [vmem:[#allocation3 + $0xb8] sm:$0xf]
      %v10356 = vld [vmem:[#allocation3 + $0xbc] sm:$0xf]
      %v10357 = vld [vmem:[#allocation3 + $0xc0] sm:$0xf]
      %v10358 = vld [vmem:[#allocation3 + $0xc4] sm:$0xf]
      %v10359 = vld [vmem:[#allocation3 + $0xc8] sm:$0xf]
      %v10360 = vld [vmem:[#allocation3 + $0xcc] sm:$0xf]
      %v10361 = vld [vmem:[#allocation3 + $0xd0] sm:$0xf]
      %v10362 = vld [vmem:[#allocation3 + $0xd4] sm:$0xf]
      %v10363 = vld [vmem:[#allocation3 + $0xd8] sm:$0xf]
      %v10364 = vld [vmem:[#allocation3 + $0xdc] sm:$0xf]
      %v10365 = vld [vmem:[#allocation3 + $0xe0] sm:$0xf]
      %v10366 = vld [vmem:[#allocation3 + $0xe4] sm:$0xf]
      %v10367 = vld [vmem:[#allocation3 + $0xe8] sm:$0xf]
      %v10368 = vld [vmem:[#allocation3 + $0xec] sm:$0xf]
      %v10369 = vld [vmem:[#allocation3 + $0xf0] sm:$0xf]
      %v10370 = vld [vmem:[#allocation3 + $0xf4] sm:$0xf]
      %v10371 = vld [vmem:[#allocation3 + $0xf8] sm:$0xf]
      %v10372 = vld [vmem:[#allocation3 + $0xfc] sm:$0xf]
      %v10373 = vld [vmem:[#allocation3 + $0x100] sm:$0xf]
      %v10374 = vld [vmem:[#allocation3 + $0x104] sm:$0xf]
      %v10375 = vld [vmem:[#allocation3 + $0x108] sm:$0x1]
      %v10376 = vld [vmem:[%s7741] sm:$0xf]
      %v10402 = vunpack.c.l.b16 %v10351
      %v10403 = vunpack.c.l.b16 %v10352
      %v10404 = vunpack.c.l.b16 %v10353
      %v10405 = vunpack.c.l.b16 %v10354
      %v10406 = vunpack.c.l.b16 %v10355
      %v10407 = vunpack.c.l.b16 %v10356
      %v10408 = vunpack.c.l.b16 %v10357
      %v10409 = vunpack.c.l.b16 %v10358
      %v10410 = vunpack.c.l.b16 %v10359
      %v10411 = vunpack.c.l.b16 %v10360
      %v10412 = vunpack.c.l.b16 %v10361
      %v10413 = vunpack.c.l.b16 %v10362
      %v10414 = vunpack.c.l.b16 %v10363
      %v10415 = vunpack.c.l.b16 %v10364
      %v10416 = vunpack.c.l.b16 %v10365
      %v10417 = vunpack.c.l.b16 %v10366
      %v10418 = vunpack.c.l.b16 %v10367
      %v10419 = vunpack.c.l.b16 %v10368
      %v10420 = vunpack.c.l.b16 %v10369
      %v10421 = vunpack.c.l.b16 %v10370
      %v10422 = vunpack.c.l.b16 %v10371
      %v10423 = vunpack.c.l.b16 %v10372
      %v10424 = vunpack.c.l.b16 %v10373
      %v10425 = vunpack.c.l.b16 %v10374
      %v10426 = vunpack.c.l.b16 %v10375
      %v10427 = vpack.c.b16 %v10403, %v10402
      %v10428 = vpack.c.b16 %v10405, %v10404
      %v10429 = vpack.c.b16 %v10407, %v10406
      %v10430 = vpack.c.b16 %v10409, %v10408
      %v10431 = vpack.c.b16 %v10411, %v10410
      %v10432 = vpack.c.b16 %v10413, %v10412
      %v10433 = vpack.c.b16 %v10415, %v10414
      %v10434 = vpack.c.b16 %v10417, %v10416
      %v10435 = vpack.c.b16 %v10419, %v10418
      %v10436 = vpack.c.b16 %v10421, %v10420
      %v10437 = vpack.c.b16 %v10423, %v10422
      %v10438 = vpack.c.b16 %v10425, %v10424
      %v10439 = vpack.c.b16 %v10426, %v10426
      %v10440 = vrot.slane %v10427, 1
      %v10441 = vrot.slane %v10428, 1
      %v10442 = vsel %vm6159, %v10440, %v10441
      %v10443 = vrot.slane %v10429, 1
      %v10444 = vsel %vm6159, %v10441, %v10443
      %v10445 = vrot.slane %v10430, 1
      %v10446 = vsel %vm6159, %v10443, %v10445
      %v10447 = vrot.slane %v10431, 1
      %v10448 = vsel %vm6159, %v10445, %v10447
      %v10449 = vrot.slane %v10432, 1
      %v10450 = vsel %vm6159, %v10447, %v10449
      %v10451 = vrot.slane %v10433, 1
      %v10452 = vsel %vm6159, %v10449, %v10451
      %v10453 = vrot.slane %v10434, 1
      %v10454 = vsel %vm6159, %v10451, %v10453
      %v10455 = vrot.slane %v10435, 1
      %v10456 = vsel %vm6159, %v10453, %v10455
      %v10457 = vrot.slane %v10436, 1
      %v10458 = vsel %vm6159, %v10455, %v10457
      %v10459 = vrot.slane %v10437, 1
      %v10460 = vsel %vm6159, %v10457, %v10459
      %v10461 = vrot.slane %v10438, 1
      %v10462 = vsel %vm6159, %v10459, %v10461
      %v10463 = vrot.slane %v10439, 1
      %v10464 = vsel %vm6159, %v10461, %v10463
      %v10466 = vsel %vm335, %v10442, 0
      %v10469 = vsel %vm335, %v10444, 0
      %v10472 = vsel %vm335, %v10446, 0
      %v10475 = vsel %vm335, %v10448, 0
      %v10478 = vsel %vm335, %v10450, 0
      %v10481 = vsel %vm335, %v10452, 0
      %v10484 = vsel %vm335, %v10454, 0
      %v10487 = vsel %vm335, %v10456, 0
      %v10490 = vsel %vm335, %v10458, 0
      %v10493 = vsel %vm335, %v10460, 0
      %v10496 = vsel %vm335, %v10462, 0
      %v10499 = vsel %vm335, %v10464, 0
      %v10502 = vsel %vm1287, %v10376, 0
      %10504 = vmatprep.subr.bf16.mxu0 0
      %10505 = vmatpush1.bf16.msra.mxu0 %v10502
      %10506 = vmatprep.subr.bf16.mxu0 0
      %10507 = vmatpush1.bf16.msra.mxu0 0
      %10508 = vmatprep.subr.bf16.mxu0 0
      %10509 = vmatpush1.bf16.msra.mxu0 0
      %10510 = vmatprep.subr.bf16.mxu0 0
      %10511 = vmatpush1.bf16.msra.mxu0 0
      %10512 = vmatprep.subr.bf16.mxu0 0
      %10513 = vmatpush1.bf16.msra.mxu0 0
      %10514 = vmatprep.subr.bf16.mxu0 0
      %10515 = vmatpush1.bf16.msra.mxu0 0
      %10516 = vmatprep.subr.bf16.mxu0 0
      %10517 = vmatpush1.bf16.msra.mxu0 0
      %10518 = vmatprep.subr.bf16.mxu0 0
      %10519 = vmatpush1.bf16.msra.mxu0 0
      %10520 = vmatprep.subr.bf16.mxu0 0
      %10521 = vmatpush1.bf16.msra.mxu0 0
      %10522 = vmatprep.subr.bf16.mxu0 0
      %10523 = vmatpush1.bf16.msra.mxu0 0
      %10524 = vmatprep.subr.bf16.mxu0 0
      %10525 = vmatpush1.bf16.msra.mxu0 0
      %10526 = vmatprep.subr.bf16.mxu0 0
      %10527 = vmatpush1.bf16.msra.mxu0 0
      %10528 = vmatprep.subr.bf16.mxu0 0
      %10529 = vmatpush1.bf16.msra.mxu0 0
      %10530 = vmatprep.subr.bf16.mxu0 0
      %10531 = vmatpush1.bf16.msra.mxu0 0
      %10532 = vmatprep.subr.bf16.mxu0 0
      %10533 = vmatpush1.bf16.msra.mxu0 0
      %10534 = vmatprep.subr.bf16.mxu0 0
      %10535 = vmatpush1.bf16.msra.mxu0 0
      %10536 = vmatprep.mubr.bf16.mxu0 0
      %10537 = vmatmul.mubr.bf16.gmra.mrb[0].mxu0 %v10466
      %v10538 = vpop.f32.mrb[0].mxu0
      %v10539 = vadd.f32 0.0, %v10538
      %v10540 = vpop.f32.mrb[0].mxu0
      %v10541 = vpop.f32.mrb[0].mxu0
      %v10542 = vadd.f32 0.0, %v10541
      %v10543 = vpop.f32.mrb[0].mxu0
      %10544 = vmatprep.mubr.bf16.mxu0 0
      %10545 = vmatmul.mubr.bf16.gmra.mrb[0].mxu0 %v10469
      %v10546 = vpop.f32.mrb[0].mxu0
      %v10547 = vadd.f32 0.0, %v10546
      %v10548 = vpop.f32.mrb[0].mxu0
      %v10549 = vpop.f32.mrb[0].mxu0
      %v10550 = vadd.f32 0.0, %v10549
      %v10551 = vpop.f32.mrb[0].mxu0
      %10552 = vmatprep.mubr.bf16.mxu0 0
      %10553 = vmatmul.mubr.bf16.gmra.mrb[0].mxu0 %v10472
      %v10554 = vpop.f32.mrb[0].mxu0
      %v10555 = vadd.f32 0.0, %v10554
      %v10556 = vpop.f32.mrb[0].mxu0
      %v10557 = vpop.f32.mrb[0].mxu0
      %v10558 = vadd.f32 0.0, %v10557
      %v10559 = vpop.f32.mrb[0].mxu0
      %10560 = vmatprep.mubr.bf16.mxu0 0
      %10561 = vmatmul.mubr.bf16.gmra.mrb[0].mxu0 %v10475
      %v10562 = vpop.f32.mrb[0].mxu0
      %v10563 = vadd.f32 0.0, %v10562
      %v10564 = vpop.f32.mrb[0].mxu0
      %v10565 = vpop.f32.mrb[0].mxu0
      %v10566 = vadd.f32 0.0, %v10565
      %v10567 = vpop.f32.mrb[0].mxu0
      %10568 = vmatprep.mubr.bf16.mxu0 0
      %10569 = vmatmul.mubr.bf16.gmra.mrb[0].mxu0 %v10478
      %v10570 = vpop.f32.mrb[0].mxu0
      %v10571 = vadd.f32 0.0, %v10570
      %v10572 = vpop.f32.mrb[0].mxu0
      %v10573 = vpop.f32.mrb[0].mxu0
      %v10574 = vadd.f32 0.0, %v10573
      %v10575 = vpop.f32.mrb[0].mxu0
      %10576 = vmatprep.mubr.bf16.mxu0 0
      %10577 = vmatmul.mubr.bf16.gmra.mrb[0].mxu0 %v10481
      %v10578 = vpop.f32.mrb[0].mxu0
      %v10579 = vadd.f32 0.0, %v10578
      %v10580 = vpop.f32.mrb[0].mxu0
      %v10581 = vpop.f32.mrb[0].mxu0
      %v10582 = vadd.f32 0.0, %v10581
      %v10583 = vpop.f32.mrb[0].mxu0
      %10584 = vmatprep.mubr.bf16.mxu0 0
      %10585 = vmatmul.mubr.bf16.gmra.mrb[0].mxu0 %v10484
      %v10586 = vpop.f32.mrb[0].mxu0
      %v10587 = vadd.f32 0.0, %v10586
      %v10588 = vpop.f32.mrb[0].mxu0
      %v10589 = vpop.f32.mrb[0].mxu0
      %v10590 = vadd.f32 0.0, %v10589
      %v10591 = vpop.f32.mrb[0].mxu0
      %10592 = vmatprep.mubr.bf16.mxu0 0
      %10593 = vmatmul.mubr.bf16.gmra.mrb[0].mxu0 %v10487
      %v10594 = vpop.f32.mrb[0].mxu0
      %v10595 = vadd.f32 0.0, %v10594
      %v10596 = vpop.f32.mrb[0].mxu0
      %v10597 = vpop.f32.mrb[0].mxu0
      %v10598 = vadd.f32 0.0, %v10597
      %v10599 = vpop.f32.mrb[0].mxu0
      %10600 = vmatprep.mubr.bf16.mxu0 0
      %10601 = vmatmul.mubr.bf16.gmra.mrb[0].mxu0 %v10490
      %v10602 = vpop.f32.mrb[0].mxu0
      %v10603 = vadd.f32 0.0, %v10602
      %v10604 = vpop.f32.mrb[0].mxu0
      %v10605 = vpop.f32.mrb[0].mxu0
      %v10606 = vadd.f32 0.0, %v10605
      %v10607 = vpop.f32.mrb[0].mxu0
      %10608 = vmatprep.mubr.bf16.mxu0 0
      %10609 = vmatmul.mubr.bf16.gmra.mrb[0].mxu0 %v10493
      %v10610 = vpop.f32.mrb[0].mxu0
      %v10611 = vadd.f32 0.0, %v10610
      %v10612 = vpop.f32.mrb[0].mxu0
      %v10613 = vpop.f32.mrb[0].mxu0
      %v10614 = vadd.f32 0.0, %v10613
      %v10615 = vpop.f32.mrb[0].mxu0
      %10616 = vmatprep.mubr.bf16.mxu0 0
      %10617 = vmatmul.mubr.bf16.gmra.mrb[0].mxu0 %v10496
      %v10618 = vpop.f32.mrb[0].mxu0
      %v10619 = vadd.f32 0.0, %v10618
      %v10620 = vpop.f32.mrb[0].mxu0
      %v10621 = vpop.f32.mrb[0].mxu0
      %v10622 = vadd.f32 0.0, %v10621
      %v10623 = vpop.f32.mrb[0].mxu0
      %10624 = vmatprep.mubr.bf16.mxu0 0
      %10625 = vmatmul.mubr.bf16.gmra.mrb[0].mxu0 %v10499
      %v10626 = vpop.f32.mrb[0].mxu0
      %v10627 = vadd.f32 0.0, %v10626
      %v10628 = vpop.f32.mrb[0].mxu0
      %v10629 = vpop.f32.mrb[0].mxu0
      %v10630 = vadd.f32 0.0, %v10629
      %v10631 = vpop.f32.mrb[0].mxu0
      %10632 = vdwg.mxu0
      %v10633 = vadd.f32 %v10327, %v10539
      %v10634 = vadd.f32 %v10328, %v10542
      %v10635 = vadd.f32 %v10329, %v10547
      %v10636 = vadd.f32 %v10330, %v10550
      %v10637 = vadd.f32 %v10331, %v10555
      %v10638 = vadd.f32 %v10332, %v10558
      %v10639 = vadd.f32 %v10333, %v10563
      %v10640 = vadd.f32 %v10334, %v10566
      %v10641 = vadd.f32 %v10335, %v10571
      %v10642 = vadd.f32 %v10336, %v10574
      %v10643 = vadd.f32 %v10337, %v10579
      %v10644 = vadd.f32 %v10338, %v10582
      %v10645 = vadd.f32 %v10339, %v10587
      %v10646 = vadd.f32 %v10340, %v10590
      %v10647 = vadd.f32 %v10341, %v10595
      %v10648 = vadd.f32 %v10342, %v10598
      %v10649 = vadd.f32 %v10343, %v10603
      %v10650 = vadd.f32 %v10344, %v10606
      %v10651 = vadd.f32 %v10345, %v10611
      %v10652 = vadd.f32 %v10346, %v10614
      %v10653 = vadd.f32 %v10347, %v10619
      %v10654 = vadd.f32 %v10348, %v10622
      %v10655 = vadd.f32 %v10349, %v10627
      %v10656 = vadd.f32 %v10350, %v10630
      %v10657 = vadd.f32 %v10633, %v8027
      %v10658 = vadd.f32 %v10634, %v8027
      %v10659 = vadd.f32 %v10635, %v8027
      %v10660 = vadd.f32 %v10636, %v8027
      %v10661 = vadd.f32 %v10637, %v8027
      %v10662 = vadd.f32 %v10638, %v8027
      %v10663 = vadd.f32 %v10639, %v8027
      %v10664 = vadd.f32 %v10640, %v8027
      %v10665 = vadd.f32 %v10641, %v8027
      %v10666 = vadd.f32 %v10642, %v8027
      %v10667 = vadd.f32 %v10643, %v8027
      %v10668 = vadd.f32 %v10644, %v8027
      %v10669 = vadd.f32 %v10645, %v8027
      %v10670 = vadd.f32 %v10646, %v8027
      %v10671 = vadd.f32 %v10647, %v8027
      %v10672 = vadd.f32 %v10648, %v8027
      %v10673 = vadd.f32 %v10649, %v8027
      %v10674 = vadd.f32 %v10650, %v8027
      %v10675 = vadd.f32 %v10651, %v8027
      %v10676 = vadd.f32 %v10652, %v8027
      %v10677 = vadd.f32 %v10653, %v8027
      %v10678 = vadd.f32 %v10654, %v8027
      %v10679 = vadd.f32 %v10655, %v8027
      %v10680 = vadd.f32 %v10656, %v8027
      %v10681 = vmax.f32 %v10657, 0.0
      %v10682 = vmax.f32 %v10658, 0.0
      %v10683 = vmax.f32 %v10659, 0.0
      %v10684 = vmax.f32 %v10660, 0.0
      %v10685 = vmax.f32 %v10661, 0.0
      %v10686 = vmax.f32 %v10662, 0.0
      %v10687 = vmax.f32 %v10663, 0.0
      %v10688 = vmax.f32 %v10664, 0.0
      %v10689 = vmax.f32 %v10665, 0.0
      %v10690 = vmax.f32 %v10666, 0.0
      %v10691 = vmax.f32 %v10667, 0.0
      %v10692 = vmax.f32 %v10668, 0.0
      %v10693 = vmax.f32 %v10669, 0.0
      %v10694 = vmax.f32 %v10670, 0.0
      %v10695 = vmax.f32 %v10671, 0.0
      %v10696 = vmax.f32 %v10672, 0.0
      %v10697 = vmax.f32 %v10673, 0.0
      %v10698 = vmax.f32 %v10674, 0.0
      %v10699 = vmax.f32 %v10675, 0.0
      %v10700 = vmax.f32 %v10676, 0.0
      %v10701 = vmax.f32 %v10677, 0.0
      %v10702 = vmax.f32 %v10678, 0.0
      %v10703 = vmax.f32 %v10679, 0.0
      %v10704 = vmax.f32 %v10680, 0.0
      %v10705 = vld [vmem:[#allocation2 + $0x120] sm:$0xff]
      %v10706 = vld [vmem:[#allocation2 + $0x128] sm:$0xff]
      %v10707 = vld [vmem:[#allocation2 + $0x130] sm:$0xff]
      %v10708 = vld [vmem:[#allocation2 + $0x138] sm:$0xff]
      %v10709 = vld [vmem:[#allocation2 + $0x140] sm:$0xff]
      %v10710 = vld [vmem:[#allocation2 + $0x148] sm:$0xff]
      %v10711 = vld [vmem:[#allocation2 + $0x150] sm:$0xff]
      %v10712 = vld [vmem:[#allocation2 + $0x158] sm:$0xff]
      %v10713 = vld [vmem:[#allocation2 + $0x160] sm:$0xff]
      %v10714 = vld [vmem:[#allocation2 + $0x168] sm:$0xff]
      %v10715 = vld [vmem:[#allocation2 + $0x170] sm:$0xff]
      %v10716 = vld [vmem:[#allocation2 + $0x178] sm:$0xff]
      %v10717 = vld [vmem:[#allocation2 + $0x180] sm:$0xff]
      %v10718 = vld [vmem:[#allocation2 + $0x188] sm:$0xff]
      %v10719 = vld [vmem:[#allocation2 + $0x190] sm:$0xff]
      %v10720 = vld [vmem:[#allocation2 + $0x198] sm:$0xff]
      %v10721 = vld [vmem:[#allocation2 + $0x1a0] sm:$0xff]
      %v10722 = vld [vmem:[#allocation2 + $0x1a8] sm:$0xff]
      %v10723 = vld [vmem:[#allocation2 + $0x1b0] sm:$0xff]
      %v10724 = vld [vmem:[#allocation2 + $0x1b8] sm:$0xff]
      %v10725 = vld [vmem:[#allocation2 + $0x1c0] sm:$0xff]
      %v10726 = vld [vmem:[#allocation2 + $0x1c8] sm:$0xff]
      %v10727 = vld [vmem:[#allocation2 + $0x1d0] sm:$0xff]
      %v10728 = vld [vmem:[#allocation2 + $0x1d8] sm:$0xff]
      %v10729 = vadd.f32 %v10681, %v10705
      %v10730 = vadd.f32 %v10682, %v10706
      %v10731 = vadd.f32 %v10683, %v10707
      %v10732 = vadd.f32 %v10684, %v10708
      %v10733 = vadd.f32 %v10685, %v10709
      %v10734 = vadd.f32 %v10686, %v10710
      %v10735 = vadd.f32 %v10687, %v10711
      %v10736 = vadd.f32 %v10688, %v10712
      %v10737 = vadd.f32 %v10689, %v10713
      %v10738 = vadd.f32 %v10690, %v10714
      %v10739 = vadd.f32 %v10691, %v10715
      %v10740 = vadd.f32 %v10692, %v10716
      %v10741 = vadd.f32 %v10693, %v10717
      %v10742 = vadd.f32 %v10694, %v10718
      %v10743 = vadd.f32 %v10695, %v10719
      %v10744 = vadd.f32 %v10696, %v10720
      %v10745 = vadd.f32 %v10697, %v10721
      %v10746 = vadd.f32 %v10698, %v10722
      %v10747 = vadd.f32 %v10699, %v10723
      %v10748 = vadd.f32 %v10700, %v10724
      %v10749 = vadd.f32 %v10701, %v10725
      %v10750 = vadd.f32 %v10702, %v10726
      %v10751 = vadd.f32 %v10703, %v10727
      %v10752 = vadd.f32 %v10704, %v10728
      %v10753 = vpack.c.bf16 %v10730, %v10729
      %v10754 = vpack.c.bf16 %v10732, %v10731
      %v10755 = vpack.c.bf16 %v10734, %v10733
      %v10756 = vpack.c.bf16 %v10736, %v10735
      %v10757 = vpack.c.bf16 %v10738, %v10737
      %v10758 = vpack.c.bf16 %v10740, %v10739
      %v10759 = vpack.c.bf16 %v10742, %v10741
      %v10760 = vpack.c.bf16 %v10744, %v10743
      %v10761 = vpack.c.bf16 %v10746, %v10745
      %v10762 = vpack.c.bf16 %v10748, %v10747
      %v10763 = vpack.c.bf16 %v10750, %v10749
      %v10764 = vpack.c.bf16 %v10752, %v10751
      %v10777 = vunpack.c.l.b16 %v10753
      %v10778 = vunpack.c.h.b16 %v10753
      %v10779 = vunpack.c.l.b16 %v10754
      %v10780 = vunpack.c.h.b16 %v10754
      %v10781 = vunpack.c.l.b16 %v10755
      %v10782 = vunpack.c.h.b16 %v10755
      %v10783 = vunpack.c.l.b16 %v10756
      %v10784 = vunpack.c.h.b16 %v10756
      %v10785 = vunpack.c.l.b16 %v10757
      %v10786 = vunpack.c.h.b16 %v10757
      %v10787 = vunpack.c.l.b16 %v10758
      %v10788 = vunpack.c.h.b16 %v10758
      %v10789 = vunpack.c.l.b16 %v10759
      %v10790 = vunpack.c.h.b16 %v10759
      %v10791 = vunpack.c.l.b16 %v10760
      %v10792 = vunpack.c.h.b16 %v10760
      %v10793 = vunpack.c.l.b16 %v10761
      %v10794 = vunpack.c.h.b16 %v10761
      %v10795 = vunpack.c.l.b16 %v10762
      %v10796 = vunpack.c.h.b16 %v10762
      %v10797 = vunpack.c.l.b16 %v10763
      %v10798 = vunpack.c.h.b16 %v10763
      %v10799 = vunpack.c.l.b16 %v10764
      %v10800 = vunpack.c.h.b16 %v10764
      %v10801 = vpack.c.b16 %v10777, %v10777
      %v10802 = vpack.c.b16 %v10778, %v10778
      %v10803 = vpack.c.b16 %v10779, %v10779
      %v10804 = vpack.c.b16 %v10780, %v10780
      %v10805 = vpack.c.b16 %v10781, %v10781
      %v10806 = vpack.c.b16 %v10782, %v10782
      %v10807 = vpack.c.b16 %v10783, %v10783
      %v10808 = vpack.c.b16 %v10784, %v10784
      %v10809 = vpack.c.b16 %v10785, %v10785
      %v10810 = vpack.c.b16 %v10786, %v10786
      %v10811 = vpack.c.b16 %v10787, %v10787
      %v10812 = vpack.c.b16 %v10788, %v10788
      %v10813 = vpack.c.b16 %v10789, %v10789
      %v10814 = vpack.c.b16 %v10790, %v10790
      %v10815 = vpack.c.b16 %v10791, %v10791
      %v10816 = vpack.c.b16 %v10792, %v10792
      %v10817 = vpack.c.b16 %v10793, %v10793
      %v10818 = vpack.c.b16 %v10794, %v10794
      %v10819 = vpack.c.b16 %v10795, %v10795
      %v10820 = vpack.c.b16 %v10796, %v10796
      %v10821 = vpack.c.b16 %v10797, %v10797
      %v10822 = vpack.c.b16 %v10798, %v10798
      %v10823 = vpack.c.b16 %v10799, %v10799
      %v10824 = vpack.c.b16 %v10800, %v10800
      %10849 = vst.msk [vmem:[%s305 + $0x60] sm:$0xf] %vm348, %v10801
      %10850 = vst.msk [vmem:[%s305 + $0x64] sm:$0xf] %vm348, %v10802
      %10851 = vst.msk [vmem:[%s305 + $0x68] sm:$0xf] %vm348, %v10803
      %10852 = vst.msk [vmem:[%s305 + $0x6c] sm:$0xf] %vm348, %v10804
      %10853 = vst.msk [vmem:[%s305 + $0x70] sm:$0xf] %vm348, %v10805
      %10854 = vst.msk [vmem:[%s305 + $0x74] sm:$0xf] %vm348, %v10806
      %10855 = vst.msk [vmem:[%s305 + $0x78] sm:$0xf] %vm348, %v10807
      %10856 = vst.msk [vmem:[%s305 + $0x7c] sm:$0xf] %vm348, %v10808
      %10857 = vst.msk [vmem:[%s305 + $0x80] sm:$0xf] %vm348, %v10809
      %10858 = vst.msk [vmem:[%s305 + $0x84] sm:$0xf] %vm348, %v10810
      %10859 = vst.msk [vmem:[%s305 + $0x88] sm:$0xf] %vm348, %v10811
      %10860 = vst.msk [vmem:[%s305 + $0x8c] sm:$0xf] %vm348, %v10812
      %10861 = vst.msk [vmem:[%s305 + $0x90] sm:$0xf] %vm348, %v10813
      %10862 = vst.msk [vmem:[%s305 + $0x94] sm:$0xf] %vm348, %v10814
      %10863 = vst.msk [vmem:[%s305 + $0x98] sm:$0xf] %vm348, %v10815
      %10864 = vst.msk [vmem:[%s305 + $0x9c] sm:$0xf] %vm348, %v10816
      %10865 = vst.msk [vmem:[%s305 + $0xa0] sm:$0xf] %vm348, %v10817
      %10866 = vst.msk [vmem:[%s305 + $0xa4] sm:$0xf] %vm348, %v10818
      %10867 = vst.msk [vmem:[%s305 + $0xa8] sm:$0xf] %vm348, %v10819
      %10868 = vst.msk [vmem:[%s305 + $0xac] sm:$0xf] %vm348, %v10820
      %10869 = vst.msk [vmem:[%s305 + $0xb0] sm:$0xf] %vm348, %v10821
      %10870 = vst.msk [vmem:[%s305 + $0xb4] sm:$0xf] %vm348, %v10822
      %10871 = vst.msk [vmem:[%s305 + $0xb8] sm:$0xf] %vm348, %v10823
      %10872 = vst.msk [vmem:[%s305 + $0xbc] sm:$0xf] %vm348, %v10824
      %p10873 = scmp.lt.s32.totalorder %s19, 1
      %s10874 = scalar_select %p10873, %s19, 1
      %s10875 = smul.addr %s10874, 48
      %s10876 = smul.addr %s10875, 4
      %s10877 = scalar_lea.vmem %s8, %s10876
      // Predicated region
      $region53: #{tpu_custom_call.1} parent=51 // pred_check
        %p10878 = pneg %p210
      $region54: #{tpu_custom_call.1} parent=51 // pred_check_branch
        %10880 = sbr.rel (%p10878) target = $region56
      $region55: #{tpu_custom_call.1} parent=51 // pred_region
        _
      $region56: #{tpu_custom_call.1} parent=51 // pred_fallthru
        _
    $region52: #{tpu_custom_call.1} parent=5 // pred_fallthru
      _
    %p10881 = scmp.le.s32.totalorder 2, %s14
    // Predicated region
    $region57: #{tpu_custom_call.1} parent=5 // pred_check
      %p10882 = pneg %p10881
    $region58: #{tpu_custom_call.1} parent=5 // pred_check_branch
      %10884 = sbr.rel (%p10882) target = $region60
    $region59: #{tpu_custom_call.1} parent=5 // pred_region
      %s10885 = ssub.s32 %s14, 2
      // Predicated region
      $region61: #{tpu_custom_call.1} parent=59 // pred_check
        %p10886 = pneg %p216
      $region62: #{tpu_custom_call.1} parent=59 // pred_check_branch
        %10888 = sbr.rel (%p10886) target = $region64
      $region63: #{tpu_custom_call.1} parent=59 // pred_region
        %p10889 = scmp.lt.s32.totalorder %s20, 1
        %s10890 = scalar_select %p10889, %s20, 1
        %s10891 = smul.addr %s10890, 48
        %s10892 = smul.addr %s10891, 4
        %s10893 = scalar_lea.vmem %s8, %s10892
      $region64: #{tpu_custom_call.1} parent=59 // pred_fallthru
        _
    $region60: #{tpu_custom_call.1} parent=5 // pred_fallthru
      _
  $region6: #{tpu_custom_call.1} parent=0 // loop_footer
    %s18 = sadd.s32 1, %s14
  $region7: #{tpu_custom_call.1} parent=0 // loop_footer_branch
    %13 = sbr.rel target = $region3
  $region8: #{tpu_custom_call.1} parent=0 // loop_exit
    _

</llo_original>
